<compile_context>
chip_gen: v5e
topology: v5e:2x2
jax: 0.10.0
libtpu: 0.0.40
codegen_flags: <defaults>
</compile_context>

<pallas_src>
import functools

import jax
import jax.numpy as jnp
from jax import lax
from jax.experimental import pallas as pl
from jax.experimental.pallas import tpu as pltpu

CPAD = 128                    # channel lanes (all channel dims padded to this)
OUT_SUB, OUT_LANE = 8, 128    # output tile
ALIGN = 16                    # bf16 sublane tile -> aligned slab stores


def _round_up(a, b):
    return (a + b - 1) // b * b


# ----------------------------------------------------------------------------
# Fused kernel: conv1(im2col GEMM)+relu -> conv2(9 tap GEMMs)+relu -> GAP -> fc
# One grid step == one block of `bblk` images.
# ----------------------------------------------------------------------------
def _fused_net_kernel(x_ref, w1_ref, b1_ref, w2_ref, b2_ref, fcw_ref, fcb_ref,
                      o_ref, p2_ref, acc_ref, *, h, w, bblk, rows_img, p2_off):
    """
    x_ref  : (bblk*hw1, CPAD) bf16  im2col patches, (H, W+2)-row layout
    w1_ref : (CPAD, CPAD)     bf16  conv1 weight, rows = 9*cin taps (K)
    b1_ref : (1, CPAD)        f32
    w2_ref : (9, CPAD, CPAD)  bf16  per-tap conv2 weights (tap = 3*di + dj)
    b2_ref : (1, CPAD)        f32
    fcw_ref: (1, CPAD)        f32 ; fcb_ref: (1, 1) f32
    o_ref  : (1, 8, 128)      f32  row b = prediction of image b in the block
    p2_ref : (rows2, CPAD)    bf16 VMEM scratch: conv2 input slab (all images)
    acc_ref: (bblk*rows_img, CPAD) f32 VMEM scratch: conv2 accumulator
    """
    wp = w + 2
    hw1 = h * wp                          # conv-output rows per image
    read_bias = p2_off - (wp + 1)         # extra read offset for conv2 taps
    m2 = bblk * rows_img
    rows2 = p2_ref.shape[0]

    # junk-column mask for one image's (H, W+2)-layout rows (conv1 output)
    col1 = lax.broadcasted_iota(jnp.int32, (hw1, 1), 0) % wp
    valid1 = col1 < w
    # per-chunk validity mask used at pooling time
    p_idx = lax.broadcasted_iota(jnp.int32, (rows_img, 1), 0)
    valid2 = (p_idx < hw1) & ((p_idx % wp) < w)

    trail_rows = rows_img - p2_off - hw1

    # ---- conv1 (single GEMM per image) + relu + mask -> p2 slab -------------
    for b in range(bblk):
        cb = b * rows_img
        # halo-only zeroing (unconditional every step: scratch is per-core and
        # persists across iterations; interior is overwritten below)
        p2_ref[pl.ds(cb, p2_off), :] = jnp.zeros((p2_off, CPAD), jnp.bfloat16)
        if trail_rows > 0:
            p2_ref[pl.ds(cb + p2_off + hw1, trail_rows), :] = (
                jnp.zeros((trail_rows, CPAD), jnp.bfloat16))
        xb = x_ref[pl.ds(b * hw1, hw1), :]
        acc1 = jnp.dot(xb, w1_ref[...], preferred_element_type=jnp.float32)
        a1 = jnp.where(valid1, jnp.maximum(acc1 + b1_ref[...], 0.0), 0.0)
        p2_ref[pl.ds(cb + p2_off, hw1), :] = a1.astype(jnp.bfloat16)
    tail_rows = rows2 - m2
    if tail_rows > 0:
        p2_ref[pl.ds(m2, tail_rows), :] = jnp.zeros((tail_rows, CPAD),
                                                    jnp.bfloat16)

    # ---- conv2: 9 accumulating GEMMs on row-shifted ref slices --------------
    for s in range(9):                                       # static, unrolled
        off = read_bias + (s // 3) * wp + (s % 3)
        contrib = jnp.dot(p2_ref[pl.ds(off, m2), :], w2_ref[s],
                          preferred_element_type=jnp.float32)
        if s == 0:
            acc_ref[...] = contrib
        else:
            acc_ref[...] += contrib

    # ---- relu + mask + global-average-pool (per image) + fc(1) --------------
    inv_hw = 1.0 / (h * w)
    pooled_rows = []
    for b in range(bblk):
        chunk = acc_ref[pl.ds(b * rows_img, rows_img), :]
        a2 = jnp.where(valid2, jnp.maximum(chunk + b2_ref[...], 0.0), 0.0)
        pooled_rows.append(jnp.sum(a2, axis=0, keepdims=True))     # (1, CPAD)
    pooled = pooled_rows[0] if bblk == 1 else jnp.concatenate(pooled_rows, 0)
    pooled = pooled * inv_hw                                        # (bblk, CPAD)
    val = jnp.sum(pooled * fcw_ref[...], axis=1, keepdims=True) + fcb_ref[...]

    o_ref[0] = jnp.zeros((OUT_SUB, OUT_LANE), jnp.float32)
    o_ref[0, 0:bblk, :] = jnp.broadcast_to(val, (bblk, OUT_LANE))


# ----------------------------------------------------------------------------
# Boundary-layout helpers (run once, outside the kernel, plain XLA)
# ----------------------------------------------------------------------------
def _prep_input_patches(x):
    """NCHW -> bf16 (N*H*(W+2), CPAD) im2col patches in (H, W+2)-row layout."""
    n, cin, h, w = x.shape
    wp = w + 2
    xs = jnp.transpose(x, (0, 2, 3, 1))                       # N,H,W,C
    xp = jnp.pad(xs, ((0, 0), (1, 1), (1, 1), (0, 0)))        # N,H+2,W+2,C
    taps = [xp[:, di:di + h, dj:dj + w, :]
            for di in range(3) for dj in range(3)]            # 9 x (N,H,W,C)
    pat = jnp.stack(taps, axis=3).reshape(n, h, w, 9 * cin)   # tap-major lanes
    pat = jnp.pad(pat, ((0, 0), (0, 0), (0, wp - w), (0, CPAD - 9 * cin)))
    return pat.reshape(n * h * wp, CPAD).astype(jnp.bfloat16)


def _prep_w1(wt):
    """[C1, Cin, 3, 3] -> bf16 (CPAD, CPAD); row (3*di+dj)*Cin+c = tap weight."""
    c1, cin = wt.shape[0], wt.shape[1]
    m = jnp.transpose(wt, (2, 3, 1, 0)).reshape(9 * cin, c1)
    m = jnp.pad(m, ((0, CPAD - 9 * cin), (0, CPAD - c1)))
    return m.astype(jnp.bfloat16)


def _prep_conv_taps(wt):
    """[Cout, Cin, 3, 3] -> bf16 (9, CPAD, CPAD) per-tap (Cin, Cout) matrices."""
    cout, cin = wt.shape[0], wt.shape[1]
    taps = jnp.transpose(wt, (2, 3, 1, 0)).reshape(9, cin, cout)
    taps = jnp.pad(taps, ((0, 0), (0, CPAD - cin), (0, CPAD - cout)))
    return taps.astype(jnp.bfloat16)


def _prep_row(v):
    return jnp.pad(v, (0, CPAD - v.shape[0])).reshape(1, CPAD).astype(jnp.float32)


def _pick_batch_block(n):
    """Images per grid step: amortize step overhead, keep >=2 steps if possible."""
    for d in (8, 4, 2):
        if n % d == 0 and n // d >= 2:
            return d
    return 1


def init_params(key, cin=4, c1=8, c2=16):
    ks = jax.random.split(key, 6)
    scale = 0.1
    return {
        "conv1_w": scale * jax.random.normal(ks[0], (c1, cin, 3, 3), jnp.float32),
        "conv1_b": scale * jax.random.normal(ks[1], (c1,), jnp.float32),
        "conv2_w": scale * jax.random.normal(ks[2], (c2, c1, 3, 3), jnp.float32),
        "conv2_b": scale * jax.random.normal(ks[3], (c2,), jnp.float32),
        "fc_w": scale * jax.random.normal(ks[4], (1, c2), jnp.float32),
        "fc_b": scale * jax.random.normal(ks[5], (1,), jnp.float32),
    }


@jax.jit
def net_forward(params, x):
    """Pallas implementation of Net.forward. x: NCHW float32. Returns (N, 1)."""
    n, cin, h, w = x.shape
    wp = w + 2
    hw1 = h * wp
    bblk = _pick_batch_block(n)
    num_blocks = n // bblk

    p2_off = _round_up(wp + 1, ALIGN)                   # aligned interior offset
    read_bias = p2_off - (wp + 1)
    rows_img = _round_up(p2_off + hw1 + wp + 1, ALIGN)  # per-image chunk rows
    rows2 = _round_up(bblk * rows_img + read_bias + 2 * wp + 2, ALIGN)

    xcol = _prep_input_patches(x)
    w1 = _prep_w1(params["conv1_w"])
    b1 = _prep_row(params["conv1_b"])
    w2 = _prep_conv_taps(params["conv2_w"])
    b2 = _prep_row(params["conv2_b"])
    fcw = _prep_row(params["fc_w"][0])
    fcb = params["fc_b"].reshape(1, 1).astype(jnp.float32)

    kernel = functools.partial(_fused_net_kernel, h=h, w=w, bblk=bblk,
                               rows_img=rows_img, p2_off=p2_off)

    flops = int(num_blocks * (2 * bblk * hw1 * CPAD * CPAD
                              + 9 * 2 * bblk * rows_img * CPAD * CPAD))
    bytes_accessed = int(xcol.size * 2 + (w1.size + w2.size) * 2
                         + (b1.size + b2.size + fcw.size + fcb.size) * 4
                         + num_blocks * OUT_SUB * OUT_LANE * 4)

    out = pl.pallas_call(
        kernel,
        out_shape=jax.ShapeDtypeStruct((num_blocks, OUT_SUB, OUT_LANE),
                                       jnp.float32),
        grid_spec=pltpu.PrefetchScalarGridSpec(
            num_scalar_prefetch=0,
            grid=(num_blocks,),
            in_specs=[
                pl.BlockSpec((bblk * hw1, CPAD), lambda g: (g, 0)),   # patches
                pl.BlockSpec((CPAD, CPAD), lambda g: (0, 0)),         # conv1 W
                pl.BlockSpec((1, CPAD), lambda g: (0, 0)),            # conv1 b
                pl.BlockSpec((9, CPAD, CPAD), lambda g: (0, 0, 0)),   # conv2 W
                pl.BlockSpec((1, CPAD), lambda g: (0, 0)),            # conv2 b
                pl.BlockSpec((1, CPAD), lambda g: (0, 0)),            # fc W
                pl.BlockSpec((1, 1), lambda g: (0, 0)),               # fc b
            ],
            out_specs=pl.BlockSpec((1, OUT_SUB, OUT_LANE), lambda g: (g, 0, 0)),
            scratch_shapes=[
                pltpu.VMEM((rows2, CPAD), jnp.bfloat16),              # p2 slab
                pltpu.VMEM((bblk * rows_img, CPAD), jnp.float32),     # conv2 acc
            ],
        ),
        compiler_params=pltpu.CompilerParams(
            dimension_semantics=("parallel",),    # batch blocks shard across TCs
            vmem_limit_bytes=32 * 1024 * 1024,
        ),
        cost_estimate=pl.CostEstimate(flops=flops, transcendentals=0,
                                      bytes_accessed=bytes_accessed),
    )(xcol, w1, b1, w2, b2, fcw, fcb)

    preds = out[:, :bblk, 0].reshape(-1, 1)      # (N, 1)
    return preds


def _reference_forward(params, x):
    """Pure-JAX reference of the same architecture (for validation)."""
    dn = ("NCHW", "OIHW", "NCHW")
    y = lax.conv_general_dilated(x, params["conv1_w"], (1, 1), "SAME",
                                 dimension_numbers=dn)
    y = jax.nn.relu(y + params["conv1_b"][None, :, None, None])
    y = lax.conv_general_dilated(y, params["conv2_w"], (1, 1), "SAME",
                                 dimension_numbers=dn)
    y = jax.nn.relu(y + params["conv2_b"][None, :, None, None])
    pooled = y.mean(axis=(2, 3))                             # (N, C2)
    return pooled @ params["fc_w"].T + params["fc_b"][None, :]


if __name__ == "__main__":
    key = jax.random.PRNGKey(0)
    k_x, k_p = jax.random.split(key)
    x = jax.random.normal(k_x, (2, 4, 16, 16), jnp.float32)   # NCHW, like PyTorch
    params = init_params(k_p)

    out = net_forward(params, x)
    jax.block_until_ready(out)
    assert out.shape == (2, 1)

    ref = _reference_forward(params, x)
    max_err = float(jnp.max(jnp.abs(out - ref)))
    assert max_err < 5e-2, f"numerical mismatch vs reference: {max_err}"

    print("KERNEL_OK")
</pallas_src>

<mosaic_0001>
module attributes {stable_mosaic.version = 11 : i64} {
  func.func @_fused_net_kernel(%arg0: i32, %arg1: memref<288x128xbf16, #tpu.memory_space<vmem>>, %arg2: memref<128x128xbf16, #tpu.memory_space<vmem>>, %arg3: memref<1x128xf32, #tpu.memory_space<vmem>>, %arg4: memref<9x128x128xbf16, #tpu.memory_space<vmem>>, %arg5: memref<1x128xf32, #tpu.memory_space<vmem>>, %arg6: memref<1x128xf32, #tpu.memory_space<vmem>>, %arg7: memref<1x1xf32, #tpu.memory_space<vmem>>, %arg8: memref<1x8x128xf32, #tpu.memory_space<vmem>>, %arg9: memref<416x128xbf16, #tpu.memory_space<vmem>>, %arg10: memref<352x128xf32, #tpu.memory_space<vmem>>) attributes {dimension_semantics = [#tpu.dimension_semantics<parallel>], iteration_bounds = array<i64: 2>, scalar_prefetch = 0 : i64, scratch_operands = 2 : i64, tpu.core_type = #tpu.core_type<tc>, window_params = [{transform_indices = @transform_0, window_bounds = array<i64: 288, 128>}, {pipeline_mode = #tpu.pipeline_mode<synchronous>, transform_indices = @transform_1, window_bounds = array<i64: 128, 128>}, {pipeline_mode = #tpu.pipeline_mode<synchronous>, transform_indices = @transform_2, window_bounds = array<i64: 1, 128>}, {pipeline_mode = #tpu.pipeline_mode<synchronous>, transform_indices = @transform_3, window_bounds = array<i64: 9, 128, 128>}, {pipeline_mode = #tpu.pipeline_mode<synchronous>, transform_indices = @transform_4, window_bounds = array<i64: 1, 128>}, {pipeline_mode = #tpu.pipeline_mode<synchronous>, transform_indices = @transform_5, window_bounds = array<i64: 1, 128>}, {pipeline_mode = #tpu.pipeline_mode<synchronous>, transform_indices = @transform_6, window_bounds = array<i64: 1, 1>}, {transform_indices = @transform_7, window_bounds = array<i64: 1, 8, 128>}]} {
    %0 = tpu.iota {dimensions = array<i32: 0>} : vector<288x1xi32>
    %c18_i32 = arith.constant 18 : i32
    %c0_i32 = arith.constant 0 : i32
    %1 = arith.cmpi eq, %c18_i32, %c0_i32 : i32
    %c1_i32 = arith.constant 1 : i32
    %2 = arith.select %1, %c1_i32, %c18_i32 : i32
    %3 = vector.broadcast %2 : i32 to vector<288x1xi32>
    %4 = arith.remsi %0, %3 : vector<288x1xi32>
    %c0_i32_0 = arith.constant 0 : i32
    %5 = vector.broadcast %c0_i32_0 : i32 to vector<288x1xi32>
    %6 = arith.cmpi ne, %4, %5 : vector<288x1xi32>
    %c0_i32_1 = arith.constant 0 : i32
    %7 = vector.broadcast %c0_i32_1 : i32 to vector<288x1xi32>
    %8 = arith.cmpi slt, %4, %7 : vector<288x1xi32>
    %c0_i32_2 = arith.constant 0 : i32
    %9 = arith.cmpi slt, %2, %c0_i32_2 : i32
    %10 = vector.broadcast %9 : i1 to vector<288x1xi1>
    %11 = vector.broadcast %10 : vector<288x1xi1> to vector<288x1xi1>
    %12 = arith.xori %8, %11 : vector<288x1xi1>
    %13 = arith.andi %12, %6 : vector<288x1xi1>
    %14 = vector.broadcast %2 : i32 to vector<288x1xi32>
    %15 = arith.addi %4, %14 : vector<288x1xi32>
    %16 = arith.select %13, %15, %4 : vector<288x1xi1>, vector<288x1xi32>
    %c16_i32 = arith.constant 16 : i32
    %17 = vector.broadcast %c16_i32 : i32 to vector<288x1xi32>
    %18 = arith.cmpi slt, %16, %17 : vector<288x1xi32>
    %19 = tpu.iota {dimensions = array<i32: 0>} : vector<352x1xi32>
    %c288_i32 = arith.constant 288 : i32
    %20 = vector.broadcast %c288_i32 : i32 to vector<352x1xi32>
    %21 = arith.cmpi slt, %19, %20 : vector<352x1xi32>
    %c18_i32_3 = arith.constant 18 : i32
    %c0_i32_4 = arith.constant 0 : i32
    %22 = arith.cmpi eq, %c18_i32_3, %c0_i32_4 : i32
    %c1_i32_5 = arith.constant 1 : i32
    %23 = arith.select %22, %c1_i32_5, %c18_i32_3 : i32
    %24 = vector.broadcast %23 : i32 to vector<352x1xi32>
    %25 = arith.remsi %19, %24 : vector<352x1xi32>
    %c0_i32_6 = arith.constant 0 : i32
    %26 = vector.broadcast %c0_i32_6 : i32 to vector<352x1xi32>
    %27 = arith.cmpi ne, %25, %26 : vector<352x1xi32>
    %c0_i32_7 = arith.constant 0 : i32
    %28 = vector.broadcast %c0_i32_7 : i32 to vector<352x1xi32>
    %29 = arith.cmpi slt, %25, %28 : vector<352x1xi32>
    %c0_i32_8 = arith.constant 0 : i32
    %30 = arith.cmpi slt, %23, %c0_i32_8 : i32
    %31 = vector.broadcast %30 : i1 to vector<352x1xi1>
    %32 = vector.broadcast %31 : vector<352x1xi1> to vector<352x1xi1>
    %33 = arith.xori %29, %32 : vector<352x1xi1>
    %34 = arith.andi %33, %27 : vector<352x1xi1>
    %35 = vector.broadcast %23 : i32 to vector<352x1xi32>
    %36 = arith.addi %25, %35 : vector<352x1xi32>
    %37 = arith.select %34, %36, %25 : vector<352x1xi1>, vector<352x1xi32>
    %c16_i32_9 = arith.constant 16 : i32
    %38 = vector.broadcast %c16_i32_9 : i32 to vector<352x1xi32>
    %39 = arith.cmpi slt, %37, %38 : vector<352x1xi32>
    %40 = arith.andi %21, %39 : vector<352x1xi1>
    %cst = arith.constant 0.000000e+00 : bf16
    %41 = vector.broadcast %cst : bf16 to vector<32x128xbf16>
    %c0 = arith.constant 0 : index
    %c0_10 = arith.constant 0 : index
    %42 = vector.load %arg9[%c0, %c0_10] : memref<416x128xbf16, #tpu.memory_space<vmem>>, vector<32x128xbf16>
    tpu.vector_store %arg9[%c0, %c0_10], %41 {strides = array<i32>} : memref<416x128xbf16, #tpu.memory_space<vmem>>, vector<32x128xbf16>,
    %cst_11 = arith.constant 0.000000e+00 : bf16
    %43 = vector.broadcast %cst_11 : bf16 to vector<32x128xbf16>
    %c320 = arith.constant 320 : index
    %c0_12 = arith.constant 0 : index
    %44 = vector.load %arg9[%c320, %c0_12] : memref<416x128xbf16, #tpu.memory_space<vmem>>, vector<32x128xbf16>
    tpu.vector_store %arg9[%c320, %c0_12], %43 {strides = array<i32>} : memref<416x128xbf16, #tpu.memory_space<vmem>>, vector<32x128xbf16>,
    %c0_13 = arith.constant 0 : index
    %c0_14 = arith.constant 0 : index
    %45 = vector.load %arg1[%c0_13, %c0_14] : memref<288x128xbf16, #tpu.memory_space<vmem>>, vector<288x128xbf16>
    %c0_15 = arith.constant 0 : index
    %c0_16 = arith.constant 0 : index
    %46 = vector.load %arg2[%c0_15, %c0_16] : memref<128x128xbf16, #tpu.memory_space<vmem>>, vector<128x128xbf16>
    %cst_17 = arith.constant dense<0.000000e+00> : vector<288x128xf32>
    %47 = tpu.matmul %45, %46, %cst_17 {dimension_numbers = #tpu.dot_dimension_numbers<[1], [0], [0], [1], [0, 0, 1, 1], [], []>} : vector<288x128xbf16>, vector<128x128xbf16>, vector<288x128xf32> -> vector<288x128xf32>
    %c0_18 = arith.constant 0 : index
    %c0_19 = arith.constant 0 : index
    %48 = vector.load %arg3[%c0_18, %c0_19] : memref<1x128xf32, #tpu.memory_space<vmem>>, vector<1x128xf32>
    %49 = vector.broadcast %48 : vector<1x128xf32> to vector<288x128xf32>
    %50 = arith.addf %47, %49 : vector<288x128xf32>
    %cst_20 = arith.constant 0.000000e+00 : f32
    %51 = vector.broadcast %cst_20 : f32 to vector<288x128xf32>
    %52 = arith.maximumf %50, %51 : vector<288x128xf32>
    %cst_21 = arith.constant 0.000000e+00 : f32
    %53 = vector.shape_cast %18 : vector<288x1xi1> to vector<288x1xi1>
    %54 = vector.broadcast %53 : vector<288x1xi1> to vector<288x128xi1>
    %55 = vector.broadcast %cst_21 : f32 to vector<288x128xf32>
    %56 = arith.select %54, %52, %55 : vector<288x128xi1>, vector<288x128xf32>
    %57 = arith.truncf %56 : vector<288x128xf32> to vector<288x128xbf16>
    %c32 = arith.constant 32 : index
    %c0_22 = arith.constant 0 : index
    %58 = vector.load %arg9[%c32, %c0_22] : memref<416x128xbf16, #tpu.memory_space<vmem>>, vector<288x128xbf16>
    tpu.vector_store %arg9[%c32, %c0_22], %57 {strides = array<i32>} : memref<416x128xbf16, #tpu.memory_space<vmem>>, vector<288x128xbf16>,
    %cst_23 = arith.constant 0.000000e+00 : bf16
    %59 = vector.broadcast %cst_23 : bf16 to vector<64x128xbf16>
    %c352 = arith.constant 352 : index
    %c0_24 = arith.constant 0 : index
    %60 = vector.load %arg9[%c352, %c0_24] : memref<416x128xbf16, #tpu.memory_space<vmem>>, vector<64x128xbf16>
    tpu.vector_store %arg9[%c352, %c0_24], %59 {strides = array<i32>} : memref<416x128xbf16, #tpu.memory_space<vmem>>, vector<64x128xbf16>,
    %c13 = arith.constant 13 : index
    %c0_25 = arith.constant 0 : index
    %61 = vector.load %arg9[%c13, %c0_25] : memref<416x128xbf16, #tpu.memory_space<vmem>>, vector<352x128xbf16>
    %c0_26 = arith.constant 0 : index
    %c0_27 = arith.constant 0 : index
    %c0_28 = arith.constant 0 : index
    %62 = vector.load %arg4[%c0_26, %c0_27, %c0_28] : memref<9x128x128xbf16, #tpu.memory_space<vmem>>, vector<1x128x128xbf16>
    %63 = vector.shape_cast %62 : vector<1x128x128xbf16> to vector<128x128xbf16>
    %cst_29 = arith.constant dense<0.000000e+00> : vector<352x128xf32>
    %64 = tpu.matmul %61, %63, %cst_29 {dimension_numbers = #tpu.dot_dimension_numbers<[1], [0], [0], [1], [0, 0, 1, 1], [], []>} : vector<352x128xbf16>, vector<128x128xbf16>, vector<352x128xf32> -> vector<352x128xf32>
    %c0_30 = arith.constant 0 : index
    %c0_31 = arith.constant 0 : index
    %65 = vector.load %arg10[%c0_30, %c0_31] : memref<352x128xf32, #tpu.memory_space<vmem>>, vector<352x128xf32>
    tpu.vector_store %arg10[%c0_30, %c0_31], %64 {strides = array<i32>} : memref<352x128xf32, #tpu.memory_space<vmem>>, vector<352x128xf32>,
    %c14 = arith.constant 14 : index
    %c0_32 = arith.constant 0 : index
    %66 = vector.load %arg9[%c14, %c0_32] : memref<416x128xbf16, #tpu.memory_space<vmem>>, vector<352x128xbf16>
    %c1 = arith.constant 1 : index
    %c0_33 = arith.constant 0 : index
    %c0_34 = arith.constant 0 : index
    %67 = vector.load %arg4[%c1, %c0_33, %c0_34] : memref<9x128x128xbf16, #tpu.memory_space<vmem>>, vector<1x128x128xbf16>
    %68 = vector.shape_cast %67 : vector<1x128x128xbf16> to vector<128x128xbf16>
    %cst_35 = arith.constant dense<0.000000e+00> : vector<352x128xf32>
    %69 = tpu.matmul %66, %68, %cst_35 {dimension_numbers = #tpu.dot_dimension_numbers<[1], [0], [0], [1], [0, 0, 1, 1], [], []>} : vector<352x128xbf16>, vector<128x128xbf16>, vector<352x128xf32> -> vector<352x128xf32>
    %c0_36 = arith.constant 0 : index
    %c0_37 = arith.constant 0 : index
    %70 = vector.load %arg10[%c0_36, %c0_37] : memref<352x128xf32, #tpu.memory_space<vmem>>, vector<352x128xf32>
    %71 = arith.addf %70, %69 : vector<352x128xf32>
    %c0_38 = arith.constant 0 : index
    %c0_39 = arith.constant 0 : index
    %72 = vector.load %arg10[%c0_38, %c0_39] : memref<352x128xf32, #tpu.memory_space<vmem>>, vector<352x128xf32>
    tpu.vector_store %arg10[%c0_38, %c0_39], %71 {strides = array<i32>} : memref<352x128xf32, #tpu.memory_space<vmem>>, vector<352x128xf32>,
    %c15 = arith.constant 15 : index
    %c0_40 = arith.constant 0 : index
    %73 = vector.load %arg9[%c15, %c0_40] : memref<416x128xbf16, #tpu.memory_space<vmem>>, vector<352x128xbf16>
    %c2 = arith.constant 2 : index
    %c0_41 = arith.constant 0 : index
    %c0_42 = arith.constant 0 : index
    %74 = vector.load %arg4[%c2, %c0_41, %c0_42] : memref<9x128x128xbf16, #tpu.memory_space<vmem>>, vector<1x128x128xbf16>
    %75 = vector.shape_cast %74 : vector<1x128x128xbf16> to vector<128x128xbf16>
    %cst_43 = arith.constant dense<0.000000e+00> : vector<352x128xf32>
    %76 = tpu.matmul %73, %75, %cst_43 {dimension_numbers = #tpu.dot_dimension_numbers<[1], [0], [0], [1], [0, 0, 1, 1], [], []>} : vector<352x128xbf16>, vector<128x128xbf16>, vector<352x128xf32> -> vector<352x128xf32>
    %c0_44 = arith.constant 0 : index
    %c0_45 = arith.constant 0 : index
    %77 = vector.load %arg10[%c0_44, %c0_45] : memref<352x128xf32, #tpu.memory_space<vmem>>, vector<352x128xf32>
    %78 = arith.addf %77, %76 : vector<352x128xf32>
    %c0_46 = arith.constant 0 : index
    %c0_47 = arith.constant 0 : index
    %79 = vector.load %arg10[%c0_46, %c0_47] : memref<352x128xf32, #tpu.memory_space<vmem>>, vector<352x128xf32>
    tpu.vector_store %arg10[%c0_46, %c0_47], %78 {strides = array<i32>} : memref<352x128xf32, #tpu.memory_space<vmem>>, vector<352x128xf32>,
    %c31 = arith.constant 31 : index
    %c0_48 = arith.constant 0 : index
    %80 = vector.load %arg9[%c31, %c0_48] : memref<416x128xbf16, #tpu.memory_space<vmem>>, vector<352x128xbf16>
    %c3 = arith.constant 3 : index
    %c0_49 = arith.constant 0 : index
    %c0_50 = arith.constant 0 : index
    %81 = vector.load %arg4[%c3, %c0_49, %c0_50] : memref<9x128x128xbf16, #tpu.memory_space<vmem>>, vector<1x128x128xbf16>
    %82 = vector.shape_cast %81 : vector<1x128x128xbf16> to vector<128x128xbf16>
    %cst_51 = arith.constant dense<0.000000e+00> : vector<352x128xf32>
    %83 = tpu.matmul %80, %82, %cst_51 {dimension_numbers = #tpu.dot_dimension_numbers<[1], [0], [0], [1], [0, 0, 1, 1], [], []>} : vector<352x128xbf16>, vector<128x128xbf16>, vector<352x128xf32> -> vector<352x128xf32>
    %c0_52 = arith.constant 0 : index
    %c0_53 = arith.constant 0 : index
    %84 = vector.load %arg10[%c0_52, %c0_53] : memref<352x128xf32, #tpu.memory_space<vmem>>, vector<352x128xf32>
    %85 = arith.addf %84, %83 : vector<352x128xf32>
    %c0_54 = arith.constant 0 : index
    %c0_55 = arith.constant 0 : index
    %86 = vector.load %arg10[%c0_54, %c0_55] : memref<352x128xf32, #tpu.memory_space<vmem>>, vector<352x128xf32>
    tpu.vector_store %arg10[%c0_54, %c0_55], %85 {strides = array<i32>} : memref<352x128xf32, #tpu.memory_space<vmem>>, vector<352x128xf32>,
    %c32_56 = arith.constant 32 : index
    %c0_57 = arith.constant 0 : index
    %87 = vector.load %arg9[%c32_56, %c0_57] : memref<416x128xbf16, #tpu.memory_space<vmem>>, vector<352x128xbf16>
    %c4 = arith.constant 4 : index
    %c0_58 = arith.constant 0 : index
    %c0_59 = arith.constant 0 : index
    %88 = vector.load %arg4[%c4, %c0_58, %c0_59] : memref<9x128x128xbf16, #tpu.memory_space<vmem>>, vector<1x128x128xbf16>
    %89 = vector.shape_cast %88 : vector<1x128x128xbf16> to vector<128x128xbf16>
    %cst_60 = arith.constant dense<0.000000e+00> : vector<352x128xf32>
    %90 = tpu.matmul %87, %89, %cst_60 {dimension_numbers = #tpu.dot_dimension_numbers<[1], [0], [0], [1], [0, 0, 1, 1], [], []>} : vector<352x128xbf16>, vector<128x128xbf16>, vector<352x128xf32> -> vector<352x128xf32>
    %c0_61 = arith.constant 0 : index
    %c0_62 = arith.constant 0 : index
    %91 = vector.load %arg10[%c0_61, %c0_62] : memref<352x128xf32, #tpu.memory_space<vmem>>, vector<352x128xf32>
    %92 = arith.addf %91, %90 : vector<352x128xf32>
    %c0_63 = arith.constant 0 : index
    %c0_64 = arith.constant 0 : index
    %93 = vector.load %arg10[%c0_63, %c0_64] : memref<352x128xf32, #tpu.memory_space<vmem>>, vector<352x128xf32>
    tpu.vector_store %arg10[%c0_63, %c0_64], %92 {strides = array<i32>} : memref<352x128xf32, #tpu.memory_space<vmem>>, vector<352x128xf32>,
    %c33 = arith.constant 33 : index
    %c0_65 = arith.constant 0 : index
    %94 = vector.load %arg9[%c33, %c0_65] : memref<416x128xbf16, #tpu.memory_space<vmem>>, vector<352x128xbf16>
    %c5 = arith.constant 5 : index
    %c0_66 = arith.constant 0 : index
    %c0_67 = arith.constant 0 : index
    %95 = vector.load %arg4[%c5, %c0_66, %c0_67] : memref<9x128x128xbf16, #tpu.memory_space<vmem>>, vector<1x128x128xbf16>
    %96 = vector.shape_cast %95 : vector<1x128x128xbf16> to vector<128x128xbf16>
    %cst_68 = arith.constant dense<0.000000e+00> : vector<352x128xf32>
    %97 = tpu.matmul %94, %96, %cst_68 {dimension_numbers = #tpu.dot_dimension_numbers<[1], [0], [0], [1], [0, 0, 1, 1], [], []>} : vector<352x128xbf16>, vector<128x128xbf16>, vector<352x128xf32> -> vector<352x128xf32>
    %c0_69 = arith.constant 0 : index
    %c0_70 = arith.constant 0 : index
    %98 = vector.load %arg10[%c0_69, %c0_70] : memref<352x128xf32, #tpu.memory_space<vmem>>, vector<352x128xf32>
    %99 = arith.addf %98, %97 : vector<352x128xf32>
    %c0_71 = arith.constant 0 : index
    %c0_72 = arith.constant 0 : index
    %100 = vector.load %arg10[%c0_71, %c0_72] : memref<352x128xf32, #tpu.memory_space<vmem>>, vector<352x128xf32>
    tpu.vector_store %arg10[%c0_71, %c0_72], %99 {strides = array<i32>} : memref<352x128xf32, #tpu.memory_space<vmem>>, vector<352x128xf32>,
    %c49 = arith.constant 49 : index
    %c0_73 = arith.constant 0 : index
    %101 = vector.load %arg9[%c49, %c0_73] : memref<416x128xbf16, #tpu.memory_space<vmem>>, vector<352x128xbf16>
    %c6 = arith.constant 6 : index
    %c0_74 = arith.constant 0 : index
    %c0_75 = arith.constant 0 : index
    %102 = vector.load %arg4[%c6, %c0_74, %c0_75] : memref<9x128x128xbf16, #tpu.memory_space<vmem>>, vector<1x128x128xbf16>
    %103 = vector.shape_cast %102 : vector<1x128x128xbf16> to vector<128x128xbf16>
    %cst_76 = arith.constant dense<0.000000e+00> : vector<352x128xf32>
    %104 = tpu.matmul %101, %103, %cst_76 {dimension_numbers = #tpu.dot_dimension_numbers<[1], [0], [0], [1], [0, 0, 1, 1], [], []>} : vector<352x128xbf16>, vector<128x128xbf16>, vector<352x128xf32> -> vector<352x128xf32>
    %c0_77 = arith.constant 0 : index
    %c0_78 = arith.constant 0 : index
    %105 = vector.load %arg10[%c0_77, %c0_78] : memref<352x128xf32, #tpu.memory_space<vmem>>, vector<352x128xf32>
    %106 = arith.addf %105, %104 : vector<352x128xf32>
    %c0_79 = arith.constant 0 : index
    %c0_80 = arith.constant 0 : index
    %107 = vector.load %arg10[%c0_79, %c0_80] : memref<352x128xf32, #tpu.memory_space<vmem>>, vector<352x128xf32>
    tpu.vector_store %arg10[%c0_79, %c0_80], %106 {strides = array<i32>} : memref<352x128xf32, #tpu.memory_space<vmem>>, vector<352x128xf32>,
    %c50 = arith.constant 50 : index
    %c0_81 = arith.constant 0 : index
    %108 = vector.load %arg9[%c50, %c0_81] : memref<416x128xbf16, #tpu.memory_space<vmem>>, vector<352x128xbf16>
    %c7 = arith.constant 7 : index
    %c0_82 = arith.constant 0 : index
    %c0_83 = arith.constant 0 : index
    %109 = vector.load %arg4[%c7, %c0_82, %c0_83] : memref<9x128x128xbf16, #tpu.memory_space<vmem>>, vector<1x128x128xbf16>
    %110 = vector.shape_cast %109 : vector<1x128x128xbf16> to vector<128x128xbf16>
    %cst_84 = arith.constant dense<0.000000e+00> : vector<352x128xf32>
    %111 = tpu.matmul %108, %110, %cst_84 {dimension_numbers = #tpu.dot_dimension_numbers<[1], [0], [0], [1], [0, 0, 1, 1], [], []>} : vector<352x128xbf16>, vector<128x128xbf16>, vector<352x128xf32> -> vector<352x128xf32>
    %c0_85 = arith.constant 0 : index
    %c0_86 = arith.constant 0 : index
    %112 = vector.load %arg10[%c0_85, %c0_86] : memref<352x128xf32, #tpu.memory_space<vmem>>, vector<352x128xf32>
    %113 = arith.addf %112, %111 : vector<352x128xf32>
    %c0_87 = arith.constant 0 : index
    %c0_88 = arith.constant 0 : index
    %114 = vector.load %arg10[%c0_87, %c0_88] : memref<352x128xf32, #tpu.memory_space<vmem>>, vector<352x128xf32>
    tpu.vector_store %arg10[%c0_87, %c0_88], %113 {strides = array<i32>} : memref<352x128xf32, #tpu.memory_space<vmem>>, vector<352x128xf32>,
    %c51 = arith.constant 51 : index
    %c0_89 = arith.constant 0 : index
    %115 = vector.load %arg9[%c51, %c0_89] : memref<416x128xbf16, #tpu.memory_space<vmem>>, vector<352x128xbf16>
    %c8 = arith.constant 8 : index
    %c0_90 = arith.constant 0 : index
    %c0_91 = arith.constant 0 : index
    %116 = vector.load %arg4[%c8, %c0_90, %c0_91] : memref<9x128x128xbf16, #tpu.memory_space<vmem>>, vector<1x128x128xbf16>
    %117 = vector.shape_cast %116 : vector<1x128x128xbf16> to vector<128x128xbf16>
    %cst_92 = arith.constant dense<0.000000e+00> : vector<352x128xf32>
    %118 = tpu.matmul %115, %117, %cst_92 {dimension_numbers = #tpu.dot_dimension_numbers<[1], [0], [0], [1], [0, 0, 1, 1], [], []>} : vector<352x128xbf16>, vector<128x128xbf16>, vector<352x128xf32> -> vector<352x128xf32>
    %c0_93 = arith.constant 0 : index
    %c0_94 = arith.constant 0 : index
    %119 = vector.load %arg10[%c0_93, %c0_94] : memref<352x128xf32, #tpu.memory_space<vmem>>, vector<352x128xf32>
    %120 = arith.addf %119, %118 : vector<352x128xf32>
    %c0_95 = arith.constant 0 : index
    %c0_96 = arith.constant 0 : index
    %121 = vector.load %arg10[%c0_95, %c0_96] : memref<352x128xf32, #tpu.memory_space<vmem>>, vector<352x128xf32>
    tpu.vector_store %arg10[%c0_95, %c0_96], %120 {strides = array<i32>} : memref<352x128xf32, #tpu.memory_space<vmem>>, vector<352x128xf32>,
    %c0_97 = arith.constant 0 : index
    %c0_98 = arith.constant 0 : index
    %122 = vector.load %arg10[%c0_97, %c0_98] : memref<352x128xf32, #tpu.memory_space<vmem>>, vector<352x128xf32>
    %c0_99 = arith.constant 0 : index
    %c0_100 = arith.constant 0 : index
    %123 = vector.load %arg5[%c0_99, %c0_100] : memref<1x128xf32, #tpu.memory_space<vmem>>, vector<1x128xf32>
    %124 = vector.broadcast %123 : vector<1x128xf32> to vector<352x128xf32>
    %125 = arith.addf %122, %124 : vector<352x128xf32>
    %cst_101 = arith.constant 0.000000e+00 : f32
    %126 = vector.broadcast %cst_101 : f32 to vector<352x128xf32>
    %127 = arith.maximumf %125, %126 : vector<352x128xf32>
    %cst_102 = arith.constant 0.000000e+00 : f32
    %128 = vector.shape_cast %40 : vector<352x1xi1> to vector<352x1xi1>
    %129 = vector.broadcast %128 : vector<352x1xi1> to vector<352x128xi1>
    %130 = vector.broadcast %cst_102 : f32 to vector<352x128xf32>
    %131 = arith.select %129, %127, %130 : vector<352x128xi1>, vector<352x128xf32>
    %cst_103 = arith.constant dense<0.000000e+00> : vector<128xf32>
    %132 = vector.multi_reduction <add>, %131, %cst_103 [0] : vector<352x128xf32> to vector<128xf32>
    %133 = vector.shape_cast %132 : vector<128xf32> to vector<1x128xf32>
    %cst_104 = arith.constant 3.906250e-03 : f32
    %134 = vector.broadcast %cst_104 : f32 to vector<1x128xf32>
    %135 = arith.mulf %133, %134 : vector<1x128xf32>
    %c0_105 = arith.constant 0 : index
    %c0_106 = arith.constant 0 : index
    %136 = vector.load %arg6[%c0_105, %c0_106] : memref<1x128xf32, #tpu.memory_space<vmem>>, vector<1x128xf32>
    %137 = arith.mulf %135, %136 : vector<1x128xf32>
    %cst_107 = arith.constant dense<0.000000e+00> : vector<1xf32>
    %138 = vector.multi_reduction <add>, %137, %cst_107 [1] : vector<1x128xf32> to vector<1xf32>
    %139 = vector.shape_cast %138 : vector<1xf32> to vector<1x1xf32>
    %c0_108 = arith.constant 0 : index
    %c0_109 = arith.constant 0 : index
    %140 = vector.load %arg7[%c0_108, %c0_109] : memref<1x1xf32, #tpu.memory_space<vmem>>, vector<1x1xf32>
    %141 = arith.addf %139, %140 : vector<1x1xf32>
    %cst_110 = arith.constant 0.000000e+00 : f32
    %142 = vector.broadcast %cst_110 : f32 to vector<8x128xf32>
    %c0_111 = arith.constant 0 : index
    %c0_112 = arith.constant 0 : index
    %c0_113 = arith.constant 0 : index
    %143 = vector.load %arg8[%c0_111, %c0_112, %c0_113] : memref<1x8x128xf32, #tpu.memory_space<vmem>>, vector<1x8x128xf32>
    %144 = vector.shape_cast %143 : vector<1x8x128xf32> to vector<8x128xf32>
    %145 = vector.shape_cast %142 : vector<8x128xf32> to vector<1x8x128xf32>
    tpu.vector_store %arg8[%c0_111, %c0_112, %c0_113], %145 {strides = array<i32>} : memref<1x8x128xf32, #tpu.memory_space<vmem>>, vector<1x8x128xf32>,
    %146 = vector.shape_cast %141 : vector<1x1xf32> to vector<1x1xf32>
    %147 = vector.broadcast %146 : vector<1x1xf32> to vector<1x128xf32>
    %c0_114 = arith.constant 0 : index
    %c0_115 = arith.constant 0 : index
    %c0_116 = arith.constant 0 : index
    %148 = vector.load %arg8[%c0_114, %c0_115, %c0_116] : memref<1x8x128xf32, #tpu.memory_space<vmem>>, vector<1x1x128xf32>
    %149 = vector.shape_cast %148 : vector<1x1x128xf32> to vector<1x128xf32>
    %150 = vector.shape_cast %147 : vector<1x128xf32> to vector<1x1x128xf32>
    tpu.vector_store %arg8[%c0_114, %c0_115, %c0_116], %150 {strides = array<i32>} : memref<1x8x128xf32, #tpu.memory_space<vmem>>, vector<1x1x128xf32>,
    return
  }
  func.func @transform_0(%arg0: i32) -> (i32, i32) {
    %c0_i32 = arith.constant 0 : i32
    %c0_i32_0 = arith.constant 0 : i32
    return %arg0, %c0_i32 : i32, i32
  }
  func.func @transform_1(%arg0: i32) -> (i32, i32) {
    %c0_i32 = arith.constant 0 : i32
    %c0_i32_0 = arith.constant 0 : i32
    %c0_i32_1 = arith.constant 0 : i32
    return %c0_i32, %c0_i32_0 : i32, i32
  }
  func.func @transform_2(%arg0: i32) -> (i32, i32) {
    %c0_i32 = arith.constant 0 : i32
    %c0_i32_0 = arith.constant 0 : i32
    %c0_i32_1 = arith.constant 0 : i32
    return %c0_i32, %c0_i32_0 : i32, i32
  }
  func.func @transform_3(%arg0: i32) -> (i32, i32, i32) {
    %c0_i32 = arith.constant 0 : i32
    %c0_i32_0 = arith.constant 0 : i32
    %c0_i32_1 = arith.constant 0 : i32
    %c0_i32_2 = arith.constant 0 : i32
    return %c0_i32, %c0_i32_0, %c0_i32_1 : i32, i32, i32
  }
  func.func @transform_4(%arg0: i32) -> (i32, i32) {
    %c0_i32 = arith.constant 0 : i32
    %c0_i32_0 = arith.constant 0 : i32
    %c0_i32_1 = arith.constant 0 : i32
    return %c0_i32, %c0_i32_0 : i32, i32
  }
  func.func @transform_5(%arg0: i32) -> (i32, i32) {
    %c0_i32 = arith.constant 0 : i32
    %c0_i32_0 = arith.constant 0 : i32
    %c0_i32_1 = arith.constant 0 : i32
    return %c0_i32, %c0_i32_0 : i32, i32
  }
  func.func @transform_6(%arg0: i32) -> (i32, i32) {
    %c0_i32 = arith.constant 0 : i32
    %c0_i32_0 = arith.constant 0 : i32
    %c0_i32_1 = arith.constant 0 : i32
    return %c0_i32, %c0_i32_0 : i32, i32
  }
  func.func @transform_7(%arg0: i32) -> (i32, i32, i32) {
    %c0_i32 = arith.constant 0 : i32
    %c0_i32_0 = arith.constant 0 : i32
    %c0_i32_1 = arith.constant 0 : i32
    return %arg0, %c0_i32, %c0_i32_0 : i32, i32, i32
  }
}

</mosaic_0001>

<llo_original>
// kernel: net_forward.1
$region0: #{net_forward.1}
  #allocation0 [shape = 'u32[]', space=smem, size = 0x4, offset = 0x4, fixed_abs, tag = 'smem constant byte address 0x4 - core index']
  #allocation1 [shape = 'u32[72,128]{1,0:T(1,128)}', space=vmem, size = 0x9000, scoped, tag = 'internal scratch']
  #allocation2 [shape = 'bf16[416,128]{1,0:T(8,128)(2,1)}', space=vmem, size = 0x1a000, scoped, tag = 'scratch operand']
  #allocation3 [shape = 'f32[352,128]{1,0:T(8,128)}', space=vmem, size = 0x2c000, scoped, tag = 'scratch operand']
  #allocation4 [shape = 'f32[1,1]{1,0:T(1,128)S(1)}', space=vmem, size = 0x200, scoped, tag = 'scoped memory for net_forward.1']
  %s0 = inlined_call_operand.vmem [shape: bf16[576,128], index: 0, kind: input, shape index: {}]
  %s1 = inlined_call_operand.vmem [shape: bf16[128,128], index: 1, kind: input, shape index: {}]
  %s2 = inlined_call_operand.vmem [shape: f32[1,128], index: 2, kind: input, shape index: {}]
  %s3 = inlined_call_operand.vmem [shape: bf16[9,128,128], index: 3, kind: input, shape index: {}]
  %s4 = inlined_call_operand.vmem [shape: f32[1,128], index: 4, kind: input, shape index: {}]
  %s5 = inlined_call_operand.vmem [shape: f32[1,128], index: 5, kind: input, shape index: {}]
  %s6 = inlined_call_operand.<no memory space> [shape: f32[1,1], index: 6, kind: input, shape index: {}]
  %s7 = inlined_call_operand.vmem [shape: f32[2,8,128], index: 7, kind: output, shape index: {}]
  %s8 = sld [smem:[#allocation0]]
  $region61: #{net_forward.1} parent=0
    _
  %s10 = ssub.s32 1, %s8
  %s11 = scalar_select 0, %s10, %s8
  %v12 = vstv %s6
  %13 = vst [vmem:[#allocation4] sm:$0x1] %v12
  loop: start=0, step=1, limit=4
  $region2: #{net_forward.1} parent=0 // loop_pre_header
    _
  $region3: #{net_forward.1} parent=0 // loop_header
    %s15 = sphi 0, %s19
    %p16 = scmp.ge.s32.totalorder %s15, 4
    %s25 = sphi 0, %s27
    %s28 = sphi 0, %s25
    %s29 = sphi 0, %s28
    %s45 = sphi 0, %s29
    %s49 = sphi 0, %s49
    %s51 = sphi 0, %s49
    %s52 = sphi 0, %s51
    %s66 = sphi 0, %s52
    %s70 = sphi 0, %s70
    %s72 = sphi 0, %s70
    %s73 = sphi 0, %s72
    %s87 = sphi 0, %s73
    %s91 = sphi 0, %s91
    %s93 = sphi 0, %s91
    %s94 = sphi 0, %s93
    %s108 = sphi 0, %s94
    %s112 = sphi 0, %s112
    %s114 = sphi 0, %s112
    %s115 = sphi 0, %s114
    %s129 = sphi 0, %s115
    %s133 = sphi 0, %s133
    %s135 = sphi 0, %s133
    %s136 = sphi 0, %s135
    %s150 = sphi 0, %s136
    %s154 = sphi 0, %s154
    %s156 = sphi 0, %s154
    %s157 = sphi 0, %s156
    %s171 = sphi 0, %s157
    %s177 = sphi 0, %s179
    %s180 = sphi 0, %s177
    %s181 = sphi 0, %s180
    %s197 = sphi 0, %s181
  $region4: #{net_forward.1} parent=0 // loop_header_branch
    %18 = sbr.rel (%p16) target = $region8
  $region5: #{net_forward.1} parent=0 // loop_body
    %s20 = ssub.s32 %s15, 1
    %s21 = ssub.s32 %s15, 2
    %s22 = sadd.s32 %s15, 1
    %s23 = ssub.s32 %s15, %s22
    %p24 = scmp.eq.s32.totalorder %s23, 0
    %s26 = sadd.s32 %s25, 1
    %s27 = scalar_select %p24, %s25, %s26
    %p30 = pneg %p24
    %p31 = scmp.eq.s32.totalorder %s15, 1
    %p32 = por %p30, %p31
    %p33 = scmp.ne.s32.totalorder %s25, %s28
    %p34 = scmp.eq.s32.totalorder %s15, 0
    %p35 = por %p33, %p34
    %p36 = scmp.ne.s32.totalorder %s25, %s28
    %p37 = scmp.eq.s32.totalorder %s20, 1
    %p38 = por %p36, %p37
    %p39 = scmp.ne.s32.totalorder %s28, %s29
    %p40 = scmp.eq.s32.totalorder %s20, 0
    %p41 = por %p39, %p40
    %p42 = scmp.ne.s32.totalorder %s28, %s29
    %p43 = scmp.eq.s32.totalorder %s21, 1
    %p44 = por %p42, %p43
    %p46 = scmp.ne.s32.totalorder %s29, %s45
    %p47 = scmp.eq.s32.totalorder %s21, 0
    %p48 = por %p46, %p47
    %s50 = sadd.s32 %s49, 1
    %p53 = scmp.eq.s32.totalorder %s15, 1
    %p54 = scmp.ne.s32.totalorder %s49, %s51
    %p55 = scmp.eq.s32.totalorder %s15, 0
    %p56 = por %p54, %p55
    %p57 = scmp.ne.s32.totalorder %s49, %s51
    %p58 = scmp.eq.s32.totalorder %s20, 1
    %p59 = por %p57, %p58
    %p60 = scmp.ne.s32.totalorder %s51, %s52
    %p61 = scmp.eq.s32.totalorder %s20, 0
    %p62 = por %p60, %p61
    %p63 = scmp.ne.s32.totalorder %s51, %s52
    %p64 = scmp.eq.s32.totalorder %s21, 1
    %p65 = por %p63, %p64
    %p67 = scmp.ne.s32.totalorder %s52, %s66
    %p68 = scmp.eq.s32.totalorder %s21, 0
    %p69 = por %p67, %p68
    %s71 = sadd.s32 %s70, 1
    %p74 = scmp.eq.s32.totalorder %s15, 1
    %p75 = scmp.ne.s32.totalorder %s70, %s72
    %p76 = scmp.eq.s32.totalorder %s15, 0
    %p77 = por %p75, %p76
    %p78 = scmp.ne.s32.totalorder %s70, %s72
    %p79 = scmp.eq.s32.totalorder %s20, 1
    %p80 = por %p78, %p79
    %p81 = scmp.ne.s32.totalorder %s72, %s73
    %p82 = scmp.eq.s32.totalorder %s20, 0
    %p83 = por %p81, %p82
    %p84 = scmp.ne.s32.totalorder %s72, %s73
    %p85 = scmp.eq.s32.totalorder %s21, 1
    %p86 = por %p84, %p85
    %p88 = scmp.ne.s32.totalorder %s73, %s87
    %p89 = scmp.eq.s32.totalorder %s21, 0
    %p90 = por %p88, %p89
    %s92 = sadd.s32 %s91, 1
    %p95 = scmp.eq.s32.totalorder %s15, 1
    %p96 = scmp.ne.s32.totalorder %s91, %s93
    %p97 = scmp.eq.s32.totalorder %s15, 0
    %p98 = por %p96, %p97
    %p99 = scmp.ne.s32.totalorder %s91, %s93
    %p100 = scmp.eq.s32.totalorder %s20, 1
    %p101 = por %p99, %p100
    %p102 = scmp.ne.s32.totalorder %s93, %s94
    %p103 = scmp.eq.s32.totalorder %s20, 0
    %p104 = por %p102, %p103
    %p105 = scmp.ne.s32.totalorder %s93, %s94
    %p106 = scmp.eq.s32.totalorder %s21, 1
    %p107 = por %p105, %p106
    %p109 = scmp.ne.s32.totalorder %s94, %s108
    %p110 = scmp.eq.s32.totalorder %s21, 0
    %p111 = por %p109, %p110
    %s113 = sadd.s32 %s112, 1
    %p116 = scmp.eq.s32.totalorder %s15, 1
    %p117 = scmp.ne.s32.totalorder %s112, %s114
    %p118 = scmp.eq.s32.totalorder %s15, 0
    %p119 = por %p117, %p118
    %p120 = scmp.ne.s32.totalorder %s112, %s114
    %p121 = scmp.eq.s32.totalorder %s20, 1
    %p122 = por %p120, %p121
    %p123 = scmp.ne.s32.totalorder %s114, %s115
    %p124 = scmp.eq.s32.totalorder %s20, 0
    %p125 = por %p123, %p124
    %p126 = scmp.ne.s32.totalorder %s114, %s115
    %p127 = scmp.eq.s32.totalorder %s21, 1
    %p128 = por %p126, %p127
    %p130 = scmp.ne.s32.totalorder %s115, %s129
    %p131 = scmp.eq.s32.totalorder %s21, 0
    %p132 = por %p130, %p131
    %s134 = sadd.s32 %s133, 1
    %p137 = scmp.eq.s32.totalorder %s15, 1
    %p138 = scmp.ne.s32.totalorder %s133, %s135
    %p139 = scmp.eq.s32.totalorder %s15, 0
    %p140 = por %p138, %p139
    %p141 = scmp.ne.s32.totalorder %s133, %s135
    %p142 = scmp.eq.s32.totalorder %s20, 1
    %p143 = por %p141, %p142
    %p144 = scmp.ne.s32.totalorder %s135, %s136
    %p145 = scmp.eq.s32.totalorder %s20, 0
    %p146 = por %p144, %p145
    %p147 = scmp.ne.s32.totalorder %s135, %s136
    %p148 = scmp.eq.s32.totalorder %s21, 1
    %p149 = por %p147, %p148
    %p151 = scmp.ne.s32.totalorder %s136, %s150
    %p152 = scmp.eq.s32.totalorder %s21, 0
    %p153 = por %p151, %p152
    %s155 = sadd.s32 %s154, 1
    %p158 = scmp.eq.s32.totalorder %s15, 1
    %p159 = scmp.ne.s32.totalorder %s154, %s156
    %p160 = scmp.eq.s32.totalorder %s15, 0
    %p161 = por %p159, %p160
    %p162 = scmp.ne.s32.totalorder %s154, %s156
    %p163 = scmp.eq.s32.totalorder %s20, 1
    %p164 = por %p162, %p163
    %p165 = scmp.ne.s32.totalorder %s156, %s157
    %p166 = scmp.eq.s32.totalorder %s20, 0
    %p167 = por %p165, %p166
    %p168 = scmp.ne.s32.totalorder %s156, %s157
    %p169 = scmp.eq.s32.totalorder %s21, 1
    %p170 = por %p168, %p169
    %p172 = scmp.ne.s32.totalorder %s157, %s171
    %p173 = scmp.eq.s32.totalorder %s21, 0
    %p174 = por %p172, %p173
    %s175 = ssub.s32 %s15, %s22
    %p176 = scmp.eq.s32.totalorder %s175, 0
    %s178 = sadd.s32 %s177, 1
    %s179 = scalar_select %p176, %s177, %s178
    %p182 = pneg %p176
    %p183 = scmp.eq.s32.totalorder %s15, 1
    %p184 = por %p182, %p183
    %p185 = scmp.ne.s32.totalorder %s177, %s180
    %p186 = scmp.eq.s32.totalorder %s15, 0
    %p187 = por %p185, %p186
    %p188 = scmp.ne.s32.totalorder %s177, %s180
    %p189 = scmp.eq.s32.totalorder %s20, 1
    %p190 = por %p188, %p189
    %p191 = scmp.ne.s32.totalorder %s180, %s181
    %p192 = scmp.eq.s32.totalorder %s20, 0
    %p193 = por %p191, %p192
    %p194 = scmp.ne.s32.totalorder %s180, %s181
    %p195 = scmp.eq.s32.totalorder %s21, 1
    %p196 = por %p194, %p195
    %p198 = scmp.ne.s32.totalorder %s181, %s197
    %p199 = scmp.eq.s32.totalorder %s21, 0
    %p200 = por %p198, %p199
    %p201 = scmp.le.s32.totalorder 1, %s15
    %p202 = scmp.lt.s32.totalorder %s15, 3
    %p203 = pnand %p201, %p202
    %p204 = pneg %p203
    // Predicated region
    $region9: #{net_forward.1} parent=5 // pred_check
      _
    $region10: #{net_forward.1} parent=5 // pred_check_branch
      %206 = sbr.rel (%p203) target = $region12
    $region11: #{net_forward.1} parent=5 // pred_region
      %s207 = ssub.s32 %s15, 1
      // Predicated region
      $region13: #{net_forward.1} parent=11 // pred_check
        %p208 = pneg %p62
      $region14: #{net_forward.1} parent=11 // pred_check_branch
        %210 = sbr.rel (%p208) target = $region16
      $region15: #{net_forward.1} parent=11 // pred_region
        _
      $region16: #{net_forward.1} parent=11 // pred_fallthru
        _
      // Predicated region
      $region17: #{net_forward.1} parent=11 // pred_check
        %p211 = pneg %p83
      $region18: #{net_forward.1} parent=11 // pred_check_branch
        %213 = sbr.rel (%p211) target = $region20
      $region19: #{net_forward.1} parent=11 // pred_region
        _
      $region20: #{net_forward.1} parent=11 // pred_fallthru
        _
      // Predicated region
      $region21: #{net_forward.1} parent=11 // pred_check
        %p214 = pneg %p104
      $region22: #{net_forward.1} parent=11 // pred_check_branch
        %216 = sbr.rel (%p214) target = $region24
      $region23: #{net_forward.1} parent=11 // pred_region
        _
      $region24: #{net_forward.1} parent=11 // pred_fallthru
        _
      // Predicated region
      $region25: #{net_forward.1} parent=11 // pred_check
        %p217 = pneg %p125
      $region26: #{net_forward.1} parent=11 // pred_check_branch
        %219 = sbr.rel (%p217) target = $region28
      $region27: #{net_forward.1} parent=11 // pred_region
        _
      $region28: #{net_forward.1} parent=11 // pred_fallthru
        _
      // Predicated region
      $region29: #{net_forward.1} parent=11 // pred_check
        %p220 = pneg %p146
      $region30: #{net_forward.1} parent=11 // pred_check_branch
        %222 = sbr.rel (%p220) target = $region32
      $region31: #{net_forward.1} parent=11 // pred_region
        _
      $region32: #{net_forward.1} parent=11 // pred_fallthru
        _
      // Predicated region
      $region33: #{net_forward.1} parent=11 // pred_check
        %p223 = pneg %p167
      $region34: #{net_forward.1} parent=11 // pred_check_branch
        %225 = sbr.rel (%p223) target = $region36
      $region35: #{net_forward.1} parent=11 // pred_region
        _
      $region36: #{net_forward.1} parent=11 // pred_fallthru
        _
    $region12: #{net_forward.1} parent=5 // pred_fallthru
      _
    %p226 = scmp.lt.s32.totalorder %s15, 2
    // Predicated region
    $region37: #{net_forward.1} parent=5 // pred_check
      %p227 = pneg %p226
    $region38: #{net_forward.1} parent=5 // pred_check_branch
      %229 = sbr.rel (%p227) target = $region40
    $region39: #{net_forward.1} parent=5 // pred_region
      // Predicated region
      $region41: #{net_forward.1} parent=39 // pred_check
        %p230 = pneg %p35
      $region42: #{net_forward.1} parent=39 // pred_check_branch
        %232 = sbr.rel (%p230) target = $region44
      $region43: #{net_forward.1} parent=39 // pred_region
        %s233 = smul.u32 36, %s15
        %p234 = scmp.lt.s32.totalorder %s233, 71
        %s235 = scalar_select %p234, %s233, 71
        %s236 = smul.addr %s235, 4
        %s237 = scalar_lea.vmem %s0, %s236
        %s238 = smul.u32 36, %s15
      $region44: #{net_forward.1} parent=39 // pred_fallthru
        _
    $region40: #{net_forward.1} parent=5 // pred_fallthru
      _
    %p239 = scmp.le.s32.totalorder 1, %s15
    %p240 = scmp.lt.s32.totalorder %s15, 3
    %p241 = pnand %p239, %p240
    %p242 = pneg %p241
    // Predicated region
    $region45: #{net_forward.1} parent=5 // pred_check
      _
    $region46: #{net_forward.1} parent=5 // pred_check_branch
      %244 = sbr.rel (%p241) target = $region48
    $region47: #{net_forward.1} parent=5 // pred_region
      %s245 = ssub.s32 %s15, 1
      %s246 = smul.u32 36, %s20
      %p247 = scmp.lt.s32.totalorder %s246, 71
      %s248 = scalar_select %p247, %s246, 71
      %s249 = smul.addr %s248, 4
      %s250 = scalar_lea.vmem %s0, %s249
      %p251 = pneg %p41
      %p252 = pneg %p38
      %p253 = pneg %p62
      %p254 = pneg %p59
      %p255 = pneg %p83
      %p256 = pneg %p80
      %p257 = pneg %p104
      %p258 = pneg %p101
      %p259 = pneg %p125
      %p260 = pneg %p122
      %p261 = pneg %p146
      %p262 = pneg %p143
      %p263 = pneg %p167
      %p264 = pneg %p164
      %p265 = pneg %p193
      %p266 = pneg %p190
      %p267 = scmp.lt.s32.totalorder %s20, 1
      %s268 = scalar_select %p267, %s20, 1
      %s269 = smul.addr %s268, 8
      %s270 = scalar_lea.vmem %s7, %s269
      %s271 = smul.u32 36, %s20
      %p272 = scmp.lt.s32.totalorder %s271, 71
      %s273 = scalar_select %p272, %s271, 71
      %s274 = smul.addr %s273, 4
      %s275 = scalar_lea.vmem %s0, %s274
      %s276 = smul.u32 36, %s20
      %p277 = scmp.lt.s32.totalorder %s20, 1
      %s278 = scalar_select %p277, %s20, 1
      %s279 = smul.addr %s278, 8
      %s280 = scalar_lea.vmem %s7, %s279
      %v282 = vlaneseq
      %v283 = vshrl.u32 %v282, 7
      %v284 = vadd.s32 %v283, 8
      %v285 = vadd.s32 %v283, 16
      %v286 = vadd.s32 %v283, 24
      %v287 = vadd.s32 %v283, 32
      %v288 = vadd.s32 %v283, 40
      %v289 = vadd.s32 %v283, 48
      %v290 = vadd.s32 %v283, 56
      %v291 = vadd.s32 %v283, 64
      %v292 = vadd.s32 %v283, 72
      %v293 = vadd.s32 %v283, 80
      %v294 = vadd.s32 %v283, 88
      %v295 = vadd.s32 %v283, 96
      %v296 = vadd.s32 %v283, 104
      %v297 = vadd.s32 %v283, 112
      %v298 = vadd.s32 %v283, 120
      %v299 = vadd.s32 %v283, 128
      %v300 = vadd.s32 %v283, 136
      %v301 = vadd.s32 %v283, 144
      %v302 = vadd.s32 %v283, 152
      %v303 = vadd.s32 %v283, 160
      %v304 = vadd.s32 %v283, 168
      %v305 = vadd.s32 %v283, 176
      %v306 = vadd.s32 %v283, 184
      %v307 = vadd.s32 %v283, 192
      %v308 = vadd.s32 %v283, 200
      %v309 = vadd.s32 %v283, 208
      %v310 = vadd.s32 %v283, 216
      %v311 = vadd.s32 %v283, 224
      %v312 = vadd.s32 %v283, 232
      %v313 = vadd.s32 %v283, 240
      %v314 = vadd.s32 %v283, 248
      %v315 = vadd.s32 %v283, 256
      %v316 = vadd.s32 %v283, 264
      %v317 = vadd.s32 %v283, 272
      %v318 = vadd.s32 %v283, 280
      %vm319 = vcmp.lt.s32.totalorder %v283, 0
      %v320 = vsub.s32 0, %v283
      %v321 = vsel %vm319, %v320, %v283
      %v322 = vand.u32 %v321, 65535
      %v323 = vshrl.u32 %v321, 16
      %v325 = vmul.u32 %v322, 14564
      %v326 = vmul.u32 %v322, 58254
      %v327 = vmul.u32 %v323, 14564
      %v328 = vmul.u32 %v323, 58254
      %v329 = vshll.u32 %v326, 16
      %v330 = vshrl.u32 %v326, 16
      %v331 = vshll.u32 %v327, 16
      %v332 = vshrl.u32 %v327, 16
      %vm333 = vc.u32 %v325, %v329
      %v334 = vsel %vm333, 1, 0
      %v335 = vadd.s32 %v325, %v329
      %v336 = vadd.s32 %v328, %v334
      %vm337 = vc.u32 %v335, %v331
      %v338 = vsel %vm337, 1, 0
      %v339 = vadd.s32 %v335, %v331
      %v340 = vadd.s32 %v336, %v338
      %v341 = vadd.s32 %v340, %v330
      %v342 = vadd.s32 %v341, %v332
      %v343 = vshrl.u32 %v342, 4
      %v344 = vmul.u32 %v343, 18
      %v345 = vsub.s32 %v321, %v344
      %v346 = vsub.s32 0, %v345
      %v347 = vsel %vm319, %v346, %v345
      %vm348 = vcmp.lt.s32.totalorder %v284, 0
      %v349 = vsub.s32 0, %v284
      %v350 = vsel %vm348, %v349, %v284
      %v351 = vand.u32 %v350, 65535
      %v352 = vshrl.u32 %v350, 16
      %v354 = vmul.u32 %v351, 14564
      %v355 = vmul.u32 %v351, 58254
      %v356 = vmul.u32 %v352, 14564
      %v357 = vmul.u32 %v352, 58254
      %v358 = vshll.u32 %v355, 16
      %v359 = vshrl.u32 %v355, 16
      %v360 = vshll.u32 %v356, 16
      %v361 = vshrl.u32 %v356, 16
      %vm362 = vc.u32 %v354, %v358
      %v363 = vsel %vm362, 1, 0
      %v364 = vadd.s32 %v354, %v358
      %v365 = vadd.s32 %v357, %v363
      %vm366 = vc.u32 %v364, %v360
      %v367 = vsel %vm366, 1, 0
      %v368 = vadd.s32 %v364, %v360
      %v369 = vadd.s32 %v365, %v367
      %v370 = vadd.s32 %v369, %v359
      %v371 = vadd.s32 %v370, %v361
      %v372 = vshrl.u32 %v371, 4
      %v373 = vmul.u32 %v372, 18
      %v374 = vsub.s32 %v350, %v373
      %v375 = vsub.s32 0, %v374
      %v376 = vsel %vm348, %v375, %v374
      %vm377 = vcmp.lt.s32.totalorder %v285, 0
      %v378 = vsub.s32 0, %v285
      %v379 = vsel %vm377, %v378, %v285
      %v380 = vand.u32 %v379, 65535
      %v381 = vshrl.u32 %v379, 16
      %v383 = vmul.u32 %v380, 14564
      %v384 = vmul.u32 %v380, 58254
      %v385 = vmul.u32 %v381, 14564
      %v386 = vmul.u32 %v381, 58254
      %v387 = vshll.u32 %v384, 16
      %v388 = vshrl.u32 %v384, 16
      %v389 = vshll.u32 %v385, 16
      %v390 = vshrl.u32 %v385, 16
      %vm391 = vc.u32 %v383, %v387
      %v392 = vsel %vm391, 1, 0
      %v393 = vadd.s32 %v383, %v387
      %v394 = vadd.s32 %v386, %v392
      %vm395 = vc.u32 %v393, %v389
      %v396 = vsel %vm395, 1, 0
      %v397 = vadd.s32 %v393, %v389
      %v398 = vadd.s32 %v394, %v396
      %v399 = vadd.s32 %v398, %v388
      %v400 = vadd.s32 %v399, %v390
      %v401 = vshrl.u32 %v400, 4
      %v402 = vmul.u32 %v401, 18
      %v403 = vsub.s32 %v379, %v402
      %v404 = vsub.s32 0, %v403
      %v405 = vsel %vm377, %v404, %v403
      %vm406 = vcmp.lt.s32.totalorder %v286, 0
      %v407 = vsub.s32 0, %v286
      %v408 = vsel %vm406, %v407, %v286
      %v409 = vand.u32 %v408, 65535
      %v410 = vshrl.u32 %v408, 16
      %v412 = vmul.u32 %v409, 14564
      %v413 = vmul.u32 %v409, 58254
      %v414 = vmul.u32 %v410, 14564
      %v415 = vmul.u32 %v410, 58254
      %v416 = vshll.u32 %v413, 16
      %v417 = vshrl.u32 %v413, 16
      %v418 = vshll.u32 %v414, 16
      %v419 = vshrl.u32 %v414, 16
      %vm420 = vc.u32 %v412, %v416
      %v421 = vsel %vm420, 1, 0
      %v422 = vadd.s32 %v412, %v416
      %v423 = vadd.s32 %v415, %v421
      %vm424 = vc.u32 %v422, %v418
      %v425 = vsel %vm424, 1, 0
      %v426 = vadd.s32 %v422, %v418
      %v427 = vadd.s32 %v423, %v425
      %v428 = vadd.s32 %v427, %v417
      %v429 = vadd.s32 %v428, %v419
      %v430 = vshrl.u32 %v429, 4
      %v431 = vmul.u32 %v430, 18
      %v432 = vsub.s32 %v408, %v431
      %v433 = vsub.s32 0, %v432
      %v434 = vsel %vm406, %v433, %v432
      %vm435 = vcmp.lt.s32.totalorder %v287, 0
      %v436 = vsub.s32 0, %v287
      %v437 = vsel %vm435, %v436, %v287
      %v438 = vand.u32 %v437, 65535
      %v439 = vshrl.u32 %v437, 16
      %v441 = vmul.u32 %v438, 14564
      %v442 = vmul.u32 %v438, 58254
      %v443 = vmul.u32 %v439, 14564
      %v444 = vmul.u32 %v439, 58254
      %v445 = vshll.u32 %v442, 16
      %v446 = vshrl.u32 %v442, 16
      %v447 = vshll.u32 %v443, 16
      %v448 = vshrl.u32 %v443, 16
      %vm449 = vc.u32 %v441, %v445
      %v450 = vsel %vm449, 1, 0
      %v451 = vadd.s32 %v441, %v445
      %v452 = vadd.s32 %v444, %v450
      %vm453 = vc.u32 %v451, %v447
      %v454 = vsel %vm453, 1, 0
      %v455 = vadd.s32 %v451, %v447
      %v456 = vadd.s32 %v452, %v454
      %v457 = vadd.s32 %v456, %v446
      %v458 = vadd.s32 %v457, %v448
      %v459 = vshrl.u32 %v458, 4
      %v460 = vmul.u32 %v459, 18
      %v461 = vsub.s32 %v437, %v460
      %v462 = vsub.s32 0, %v461
      %v463 = vsel %vm435, %v462, %v461
      %vm464 = vcmp.lt.s32.totalorder %v288, 0
      %v465 = vsub.s32 0, %v288
      %v466 = vsel %vm464, %v465, %v288
      %v467 = vand.u32 %v466, 65535
      %v468 = vshrl.u32 %v466, 16
      %v470 = vmul.u32 %v467, 14564
      %v471 = vmul.u32 %v467, 58254
      %v472 = vmul.u32 %v468, 14564
      %v473 = vmul.u32 %v468, 58254
      %v474 = vshll.u32 %v471, 16
      %v475 = vshrl.u32 %v471, 16
      %v476 = vshll.u32 %v472, 16
      %v477 = vshrl.u32 %v472, 16
      %vm478 = vc.u32 %v470, %v474
      %v479 = vsel %vm478, 1, 0
      %v480 = vadd.s32 %v470, %v474
      %v481 = vadd.s32 %v473, %v479
      %vm482 = vc.u32 %v480, %v476
      %v483 = vsel %vm482, 1, 0
      %v484 = vadd.s32 %v480, %v476
      %v485 = vadd.s32 %v481, %v483
      %v486 = vadd.s32 %v485, %v475
      %v487 = vadd.s32 %v486, %v477
      %v488 = vshrl.u32 %v487, 4
      %v489 = vmul.u32 %v488, 18
      %v490 = vsub.s32 %v466, %v489
      %v491 = vsub.s32 0, %v490
      %v492 = vsel %vm464, %v491, %v490
      %vm493 = vcmp.lt.s32.totalorder %v289, 0
      %v494 = vsub.s32 0, %v289
      %v495 = vsel %vm493, %v494, %v289
      %v496 = vand.u32 %v495, 65535
      %v497 = vshrl.u32 %v495, 16
      %v499 = vmul.u32 %v496, 14564
      %v500 = vmul.u32 %v496, 58254
      %v501 = vmul.u32 %v497, 14564
      %v502 = vmul.u32 %v497, 58254
      %v503 = vshll.u32 %v500, 16
      %v504 = vshrl.u32 %v500, 16
      %v505 = vshll.u32 %v501, 16
      %v506 = vshrl.u32 %v501, 16
      %vm507 = vc.u32 %v499, %v503
      %v508 = vsel %vm507, 1, 0
      %v509 = vadd.s32 %v499, %v503
      %v510 = vadd.s32 %v502, %v508
      %vm511 = vc.u32 %v509, %v505
      %v512 = vsel %vm511, 1, 0
      %v513 = vadd.s32 %v509, %v505
      %v514 = vadd.s32 %v510, %v512
      %v515 = vadd.s32 %v514, %v504
      %v516 = vadd.s32 %v515, %v506
      %v517 = vshrl.u32 %v516, 4
      %v518 = vmul.u32 %v517, 18
      %v519 = vsub.s32 %v495, %v518
      %v520 = vsub.s32 0, %v519
      %v521 = vsel %vm493, %v520, %v519
      %vm522 = vcmp.lt.s32.totalorder %v290, 0
      %v523 = vsub.s32 0, %v290
      %v524 = vsel %vm522, %v523, %v290
      %v525 = vand.u32 %v524, 65535
      %v526 = vshrl.u32 %v524, 16
      %v528 = vmul.u32 %v525, 14564
      %v529 = vmul.u32 %v525, 58254
      %v530 = vmul.u32 %v526, 14564
      %v531 = vmul.u32 %v526, 58254
      %v532 = vshll.u32 %v529, 16
      %v533 = vshrl.u32 %v529, 16
      %v534 = vshll.u32 %v530, 16
      %v535 = vshrl.u32 %v530, 16
      %vm536 = vc.u32 %v528, %v532
      %v537 = vsel %vm536, 1, 0
      %v538 = vadd.s32 %v528, %v532
      %v539 = vadd.s32 %v531, %v537
      %vm540 = vc.u32 %v538, %v534
      %v541 = vsel %vm540, 1, 0
      %v542 = vadd.s32 %v538, %v534
      %v543 = vadd.s32 %v539, %v541
      %v544 = vadd.s32 %v543, %v533
      %v545 = vadd.s32 %v544, %v535
      %v546 = vshrl.u32 %v545, 4
      %v547 = vmul.u32 %v546, 18
      %v548 = vsub.s32 %v524, %v547
      %v549 = vsub.s32 0, %v548
      %v550 = vsel %vm522, %v549, %v548
      %vm551 = vcmp.lt.s32.totalorder %v291, 0
      %v552 = vsub.s32 0, %v291
      %v553 = vsel %vm551, %v552, %v291
      %v554 = vand.u32 %v553, 65535
      %v555 = vshrl.u32 %v553, 16
      %v557 = vmul.u32 %v554, 14564
      %v558 = vmul.u32 %v554, 58254
      %v559 = vmul.u32 %v555, 14564
      %v560 = vmul.u32 %v555, 58254
      %v561 = vshll.u32 %v558, 16
      %v562 = vshrl.u32 %v558, 16
      %v563 = vshll.u32 %v559, 16
      %v564 = vshrl.u32 %v559, 16
      %vm565 = vc.u32 %v557, %v561
      %v566 = vsel %vm565, 1, 0
      %v567 = vadd.s32 %v557, %v561
      %v568 = vadd.s32 %v560, %v566
      %vm569 = vc.u32 %v567, %v563
      %v570 = vsel %vm569, 1, 0
      %v571 = vadd.s32 %v567, %v563
      %v572 = vadd.s32 %v568, %v570
      %v573 = vadd.s32 %v572, %v562
      %v574 = vadd.s32 %v573, %v564
      %v575 = vshrl.u32 %v574, 4
      %v576 = vmul.u32 %v575, 18
      %v577 = vsub.s32 %v553, %v576
      %v578 = vsub.s32 0, %v577
      %v579 = vsel %vm551, %v578, %v577
      %vm580 = vcmp.lt.s32.totalorder %v292, 0
      %v581 = vsub.s32 0, %v292
      %v582 = vsel %vm580, %v581, %v292
      %v583 = vand.u32 %v582, 65535
      %v584 = vshrl.u32 %v582, 16
      %v586 = vmul.u32 %v583, 14564
      %v587 = vmul.u32 %v583, 58254
      %v588 = vmul.u32 %v584, 14564
      %v589 = vmul.u32 %v584, 58254
      %v590 = vshll.u32 %v587, 16
      %v591 = vshrl.u32 %v587, 16
      %v592 = vshll.u32 %v588, 16
      %v593 = vshrl.u32 %v588, 16
      %vm594 = vc.u32 %v586, %v590
      %v595 = vsel %vm594, 1, 0
      %v596 = vadd.s32 %v586, %v590
      %v597 = vadd.s32 %v589, %v595
      %vm598 = vc.u32 %v596, %v592
      %v599 = vsel %vm598, 1, 0
      %v600 = vadd.s32 %v596, %v592
      %v601 = vadd.s32 %v597, %v599
      %v602 = vadd.s32 %v601, %v591
      %v603 = vadd.s32 %v602, %v593
      %v604 = vshrl.u32 %v603, 4
      %v605 = vmul.u32 %v604, 18
      %v606 = vsub.s32 %v582, %v605
      %v607 = vsub.s32 0, %v606
      %v608 = vsel %vm580, %v607, %v606
      %vm609 = vcmp.lt.s32.totalorder %v293, 0
      %v610 = vsub.s32 0, %v293
      %v611 = vsel %vm609, %v610, %v293
      %v612 = vand.u32 %v611, 65535
      %v613 = vshrl.u32 %v611, 16
      %v615 = vmul.u32 %v612, 14564
      %v616 = vmul.u32 %v612, 58254
      %v617 = vmul.u32 %v613, 14564
      %v618 = vmul.u32 %v613, 58254
      %v619 = vshll.u32 %v616, 16
      %v620 = vshrl.u32 %v616, 16
      %v621 = vshll.u32 %v617, 16
      %v622 = vshrl.u32 %v617, 16
      %vm623 = vc.u32 %v615, %v619
      %v624 = vsel %vm623, 1, 0
      %v625 = vadd.s32 %v615, %v619
      %v626 = vadd.s32 %v618, %v624
      %vm627 = vc.u32 %v625, %v621
      %v628 = vsel %vm627, 1, 0
      %v629 = vadd.s32 %v625, %v621
      %v630 = vadd.s32 %v626, %v628
      %v631 = vadd.s32 %v630, %v620
      %v632 = vadd.s32 %v631, %v622
      %v633 = vshrl.u32 %v632, 4
      %v634 = vmul.u32 %v633, 18
      %v635 = vsub.s32 %v611, %v634
      %v636 = vsub.s32 0, %v635
      %v637 = vsel %vm609, %v636, %v635
      %vm638 = vcmp.lt.s32.totalorder %v294, 0
      %v639 = vsub.s32 0, %v294
      %v640 = vsel %vm638, %v639, %v294
      %v641 = vand.u32 %v640, 65535
      %v642 = vshrl.u32 %v640, 16
      %v644 = vmul.u32 %v641, 14564
      %v645 = vmul.u32 %v641, 58254
      %v646 = vmul.u32 %v642, 14564
      %v647 = vmul.u32 %v642, 58254
      %v648 = vshll.u32 %v645, 16
      %v649 = vshrl.u32 %v645, 16
      %v650 = vshll.u32 %v646, 16
      %v651 = vshrl.u32 %v646, 16
      %vm652 = vc.u32 %v644, %v648
      %v653 = vsel %vm652, 1, 0
      %v654 = vadd.s32 %v644, %v648
      %v655 = vadd.s32 %v647, %v653
      %vm656 = vc.u32 %v654, %v650
      %v657 = vsel %vm656, 1, 0
      %v658 = vadd.s32 %v654, %v650
      %v659 = vadd.s32 %v655, %v657
      %v660 = vadd.s32 %v659, %v649
      %v661 = vadd.s32 %v660, %v651
      %v662 = vshrl.u32 %v661, 4
      %v663 = vmul.u32 %v662, 18
      %v664 = vsub.s32 %v640, %v663
      %v665 = vsub.s32 0, %v664
      %v666 = vsel %vm638, %v665, %v664
      %vm667 = vcmp.lt.s32.totalorder %v295, 0
      %v668 = vsub.s32 0, %v295
      %v669 = vsel %vm667, %v668, %v295
      %v670 = vand.u32 %v669, 65535
      %v671 = vshrl.u32 %v669, 16
      %v673 = vmul.u32 %v670, 14564
      %v674 = vmul.u32 %v670, 58254
      %v675 = vmul.u32 %v671, 14564
      %v676 = vmul.u32 %v671, 58254
      %v677 = vshll.u32 %v674, 16
      %v678 = vshrl.u32 %v674, 16
      %v679 = vshll.u32 %v675, 16
      %v680 = vshrl.u32 %v675, 16
      %vm681 = vc.u32 %v673, %v677
      %v682 = vsel %vm681, 1, 0
      %v683 = vadd.s32 %v673, %v677
      %v684 = vadd.s32 %v676, %v682
      %vm685 = vc.u32 %v683, %v679
      %v686 = vsel %vm685, 1, 0
      %v687 = vadd.s32 %v683, %v679
      %v688 = vadd.s32 %v684, %v686
      %v689 = vadd.s32 %v688, %v678
      %v690 = vadd.s32 %v689, %v680
      %v691 = vshrl.u32 %v690, 4
      %v692 = vmul.u32 %v691, 18
      %v693 = vsub.s32 %v669, %v692
      %v694 = vsub.s32 0, %v693
      %v695 = vsel %vm667, %v694, %v693
      %vm696 = vcmp.lt.s32.totalorder %v296, 0
      %v697 = vsub.s32 0, %v296
      %v698 = vsel %vm696, %v697, %v296
      %v699 = vand.u32 %v698, 65535
      %v700 = vshrl.u32 %v698, 16
      %v702 = vmul.u32 %v699, 14564
      %v703 = vmul.u32 %v699, 58254
      %v704 = vmul.u32 %v700, 14564
      %v705 = vmul.u32 %v700, 58254
      %v706 = vshll.u32 %v703, 16
      %v707 = vshrl.u32 %v703, 16
      %v708 = vshll.u32 %v704, 16
      %v709 = vshrl.u32 %v704, 16
      %vm710 = vc.u32 %v702, %v706
      %v711 = vsel %vm710, 1, 0
      %v712 = vadd.s32 %v702, %v706
      %v713 = vadd.s32 %v705, %v711
      %vm714 = vc.u32 %v712, %v708
      %v715 = vsel %vm714, 1, 0
      %v716 = vadd.s32 %v712, %v708
      %v717 = vadd.s32 %v713, %v715
      %v718 = vadd.s32 %v717, %v707
      %v719 = vadd.s32 %v718, %v709
      %v720 = vshrl.u32 %v719, 4
      %v721 = vmul.u32 %v720, 18
      %v722 = vsub.s32 %v698, %v721
      %v723 = vsub.s32 0, %v722
      %v724 = vsel %vm696, %v723, %v722
      %vm725 = vcmp.lt.s32.totalorder %v297, 0
      %v726 = vsub.s32 0, %v297
      %v727 = vsel %vm725, %v726, %v297
      %v728 = vand.u32 %v727, 65535
      %v729 = vshrl.u32 %v727, 16
      %v731 = vmul.u32 %v728, 14564
      %v732 = vmul.u32 %v728, 58254
      %v733 = vmul.u32 %v729, 14564
      %v734 = vmul.u32 %v729, 58254
      %v735 = vshll.u32 %v732, 16
      %v736 = vshrl.u32 %v732, 16
      %v737 = vshll.u32 %v733, 16
      %v738 = vshrl.u32 %v733, 16
      %vm739 = vc.u32 %v731, %v735
      %v740 = vsel %vm739, 1, 0
      %v741 = vadd.s32 %v731, %v735
      %v742 = vadd.s32 %v734, %v740
      %vm743 = vc.u32 %v741, %v737
      %v744 = vsel %vm743, 1, 0
      %v745 = vadd.s32 %v741, %v737
      %v746 = vadd.s32 %v742, %v744
      %v747 = vadd.s32 %v746, %v736
      %v748 = vadd.s32 %v747, %v738
      %v749 = vshrl.u32 %v748, 4
      %v750 = vmul.u32 %v749, 18
      %v751 = vsub.s32 %v727, %v750
      %v752 = vsub.s32 0, %v751
      %v753 = vsel %vm725, %v752, %v751
      %vm754 = vcmp.lt.s32.totalorder %v298, 0
      %v755 = vsub.s32 0, %v298
      %v756 = vsel %vm754, %v755, %v298
      %v757 = vand.u32 %v756, 65535
      %v758 = vshrl.u32 %v756, 16
      %v760 = vmul.u32 %v757, 14564
      %v761 = vmul.u32 %v757, 58254
      %v762 = vmul.u32 %v758, 14564
      %v763 = vmul.u32 %v758, 58254
      %v764 = vshll.u32 %v761, 16
      %v765 = vshrl.u32 %v761, 16
      %v766 = vshll.u32 %v762, 16
      %v767 = vshrl.u32 %v762, 16
      %vm768 = vc.u32 %v760, %v764
      %v769 = vsel %vm768, 1, 0
      %v770 = vadd.s32 %v760, %v764
      %v771 = vadd.s32 %v763, %v769
      %vm772 = vc.u32 %v770, %v766
      %v773 = vsel %vm772, 1, 0
      %v774 = vadd.s32 %v770, %v766
      %v775 = vadd.s32 %v771, %v773
      %v776 = vadd.s32 %v775, %v765
      %v777 = vadd.s32 %v776, %v767
      %v778 = vshrl.u32 %v777, 4
      %v779 = vmul.u32 %v778, 18
      %v780 = vsub.s32 %v756, %v779
      %v781 = vsub.s32 0, %v780
      %v782 = vsel %vm754, %v781, %v780
      %vm783 = vcmp.lt.s32.totalorder %v299, 0
      %v784 = vsub.s32 0, %v299
      %v785 = vsel %vm783, %v784, %v299
      %v786 = vand.u32 %v785, 65535
      %v787 = vshrl.u32 %v785, 16
      %v789 = vmul.u32 %v786, 14564
      %v790 = vmul.u32 %v786, 58254
      %v791 = vmul.u32 %v787, 14564
      %v792 = vmul.u32 %v787, 58254
      %v793 = vshll.u32 %v790, 16
      %v794 = vshrl.u32 %v790, 16
      %v795 = vshll.u32 %v791, 16
      %v796 = vshrl.u32 %v791, 16
      %vm797 = vc.u32 %v789, %v793
      %v798 = vsel %vm797, 1, 0
      %v799 = vadd.s32 %v789, %v793
      %v800 = vadd.s32 %v792, %v798
      %vm801 = vc.u32 %v799, %v795
      %v802 = vsel %vm801, 1, 0
      %v803 = vadd.s32 %v799, %v795
      %v804 = vadd.s32 %v800, %v802
      %v805 = vadd.s32 %v804, %v794
      %v806 = vadd.s32 %v805, %v796
      %v807 = vshrl.u32 %v806, 4
      %v808 = vmul.u32 %v807, 18
      %v809 = vsub.s32 %v785, %v808
      %v810 = vsub.s32 0, %v809
      %v811 = vsel %vm783, %v810, %v809
      %vm812 = vcmp.lt.s32.totalorder %v300, 0
      %v813 = vsub.s32 0, %v300
      %v814 = vsel %vm812, %v813, %v300
      %v815 = vand.u32 %v814, 65535
      %v816 = vshrl.u32 %v814, 16
      %v818 = vmul.u32 %v815, 14564
      %v819 = vmul.u32 %v815, 58254
      %v820 = vmul.u32 %v816, 14564
      %v821 = vmul.u32 %v816, 58254
      %v822 = vshll.u32 %v819, 16
      %v823 = vshrl.u32 %v819, 16
      %v824 = vshll.u32 %v820, 16
      %v825 = vshrl.u32 %v820, 16
      %vm826 = vc.u32 %v818, %v822
      %v827 = vsel %vm826, 1, 0
      %v828 = vadd.s32 %v818, %v822
      %v829 = vadd.s32 %v821, %v827
      %vm830 = vc.u32 %v828, %v824
      %v831 = vsel %vm830, 1, 0
      %v832 = vadd.s32 %v828, %v824
      %v833 = vadd.s32 %v829, %v831
      %v834 = vadd.s32 %v833, %v823
      %v835 = vadd.s32 %v834, %v825
      %v836 = vshrl.u32 %v835, 4
      %v837 = vmul.u32 %v836, 18
      %v838 = vsub.s32 %v814, %v837
      %v839 = vsub.s32 0, %v838
      %v840 = vsel %vm812, %v839, %v838
      %vm841 = vcmp.lt.s32.totalorder %v301, 0
      %v842 = vsub.s32 0, %v301
      %v843 = vsel %vm841, %v842, %v301
      %v844 = vand.u32 %v843, 65535
      %v845 = vshrl.u32 %v843, 16
      %v847 = vmul.u32 %v844, 14564
      %v848 = vmul.u32 %v844, 58254
      %v849 = vmul.u32 %v845, 14564
      %v850 = vmul.u32 %v845, 58254
      %v851 = vshll.u32 %v848, 16
      %v852 = vshrl.u32 %v848, 16
      %v853 = vshll.u32 %v849, 16
      %v854 = vshrl.u32 %v849, 16
      %vm855 = vc.u32 %v847, %v851
      %v856 = vsel %vm855, 1, 0
      %v857 = vadd.s32 %v847, %v851
      %v858 = vadd.s32 %v850, %v856
      %vm859 = vc.u32 %v857, %v853
      %v860 = vsel %vm859, 1, 0
      %v861 = vadd.s32 %v857, %v853
      %v862 = vadd.s32 %v858, %v860
      %v863 = vadd.s32 %v862, %v852
      %v864 = vadd.s32 %v863, %v854
      %v865 = vshrl.u32 %v864, 4
      %v866 = vmul.u32 %v865, 18
      %v867 = vsub.s32 %v843, %v866
      %v868 = vsub.s32 0, %v867
      %v869 = vsel %vm841, %v868, %v867
      %vm870 = vcmp.lt.s32.totalorder %v302, 0
      %v871 = vsub.s32 0, %v302
      %v872 = vsel %vm870, %v871, %v302
      %v873 = vand.u32 %v872, 65535
      %v874 = vshrl.u32 %v872, 16
      %v876 = vmul.u32 %v873, 14564
      %v877 = vmul.u32 %v873, 58254
      %v878 = vmul.u32 %v874, 14564
      %v879 = vmul.u32 %v874, 58254
      %v880 = vshll.u32 %v877, 16
      %v881 = vshrl.u32 %v877, 16
      %v882 = vshll.u32 %v878, 16
      %v883 = vshrl.u32 %v878, 16
      %vm884 = vc.u32 %v876, %v880
      %v885 = vsel %vm884, 1, 0
      %v886 = vadd.s32 %v876, %v880
      %v887 = vadd.s32 %v879, %v885
      %vm888 = vc.u32 %v886, %v882
      %v889 = vsel %vm888, 1, 0
      %v890 = vadd.s32 %v886, %v882
      %v891 = vadd.s32 %v887, %v889
      %v892 = vadd.s32 %v891, %v881
      %v893 = vadd.s32 %v892, %v883
      %v894 = vshrl.u32 %v893, 4
      %v895 = vmul.u32 %v894, 18
      %v896 = vsub.s32 %v872, %v895
      %v897 = vsub.s32 0, %v896
      %v898 = vsel %vm870, %v897, %v896
      %vm899 = vcmp.lt.s32.totalorder %v303, 0
      %v900 = vsub.s32 0, %v303
      %v901 = vsel %vm899, %v900, %v303
      %v902 = vand.u32 %v901, 65535
      %v903 = vshrl.u32 %v901, 16
      %v905 = vmul.u32 %v902, 14564
      %v906 = vmul.u32 %v902, 58254
      %v907 = vmul.u32 %v903, 14564
      %v908 = vmul.u32 %v903, 58254
      %v909 = vshll.u32 %v906, 16
      %v910 = vshrl.u32 %v906, 16
      %v911 = vshll.u32 %v907, 16
      %v912 = vshrl.u32 %v907, 16
      %vm913 = vc.u32 %v905, %v909
      %v914 = vsel %vm913, 1, 0
      %v915 = vadd.s32 %v905, %v909
      %v916 = vadd.s32 %v908, %v914
      %vm917 = vc.u32 %v915, %v911
      %v918 = vsel %vm917, 1, 0
      %v919 = vadd.s32 %v915, %v911
      %v920 = vadd.s32 %v916, %v918
      %v921 = vadd.s32 %v920, %v910
      %v922 = vadd.s32 %v921, %v912
      %v923 = vshrl.u32 %v922, 4
      %v924 = vmul.u32 %v923, 18
      %v925 = vsub.s32 %v901, %v924
      %v926 = vsub.s32 0, %v925
      %v927 = vsel %vm899, %v926, %v925
      %vm928 = vcmp.lt.s32.totalorder %v304, 0
      %v929 = vsub.s32 0, %v304
      %v930 = vsel %vm928, %v929, %v304
      %v931 = vand.u32 %v930, 65535
      %v932 = vshrl.u32 %v930, 16
      %v934 = vmul.u32 %v931, 14564
      %v935 = vmul.u32 %v931, 58254
      %v936 = vmul.u32 %v932, 14564
      %v937 = vmul.u32 %v932, 58254
      %v938 = vshll.u32 %v935, 16
      %v939 = vshrl.u32 %v935, 16
      %v940 = vshll.u32 %v936, 16
      %v941 = vshrl.u32 %v936, 16
      %vm942 = vc.u32 %v934, %v938
      %v943 = vsel %vm942, 1, 0
      %v944 = vadd.s32 %v934, %v938
      %v945 = vadd.s32 %v937, %v943
      %vm946 = vc.u32 %v944, %v940
      %v947 = vsel %vm946, 1, 0
      %v948 = vadd.s32 %v944, %v940
      %v949 = vadd.s32 %v945, %v947
      %v950 = vadd.s32 %v949, %v939
      %v951 = vadd.s32 %v950, %v941
      %v952 = vshrl.u32 %v951, 4
      %v953 = vmul.u32 %v952, 18
      %v954 = vsub.s32 %v930, %v953
      %v955 = vsub.s32 0, %v954
      %v956 = vsel %vm928, %v955, %v954
      %vm957 = vcmp.lt.s32.totalorder %v305, 0
      %v958 = vsub.s32 0, %v305
      %v959 = vsel %vm957, %v958, %v305
      %v960 = vand.u32 %v959, 65535
      %v961 = vshrl.u32 %v959, 16
      %v963 = vmul.u32 %v960, 14564
      %v964 = vmul.u32 %v960, 58254
      %v965 = vmul.u32 %v961, 14564
      %v966 = vmul.u32 %v961, 58254
      %v967 = vshll.u32 %v964, 16
      %v968 = vshrl.u32 %v964, 16
      %v969 = vshll.u32 %v965, 16
      %v970 = vshrl.u32 %v965, 16
      %vm971 = vc.u32 %v963, %v967
      %v972 = vsel %vm971, 1, 0
      %v973 = vadd.s32 %v963, %v967
      %v974 = vadd.s32 %v966, %v972
      %vm975 = vc.u32 %v973, %v969
      %v976 = vsel %vm975, 1, 0
      %v977 = vadd.s32 %v973, %v969
      %v978 = vadd.s32 %v974, %v976
      %v979 = vadd.s32 %v978, %v968
      %v980 = vadd.s32 %v979, %v970
      %v981 = vshrl.u32 %v980, 4
      %v982 = vmul.u32 %v981, 18
      %v983 = vsub.s32 %v959, %v982
      %v984 = vsub.s32 0, %v983
      %v985 = vsel %vm957, %v984, %v983
      %vm986 = vcmp.lt.s32.totalorder %v306, 0
      %v987 = vsub.s32 0, %v306
      %v988 = vsel %vm986, %v987, %v306
      %v989 = vand.u32 %v988, 65535
      %v990 = vshrl.u32 %v988, 16
      %v992 = vmul.u32 %v989, 14564
      %v993 = vmul.u32 %v989, 58254
      %v994 = vmul.u32 %v990, 14564
      %v995 = vmul.u32 %v990, 58254
      %v996 = vshll.u32 %v993, 16
      %v997 = vshrl.u32 %v993, 16
      %v998 = vshll.u32 %v994, 16
      %v999 = vshrl.u32 %v994, 16
      %vm1000 = vc.u32 %v992, %v996
      %v1001 = vsel %vm1000, 1, 0
      %v1002 = vadd.s32 %v992, %v996
      %v1003 = vadd.s32 %v995, %v1001
      %vm1004 = vc.u32 %v1002, %v998
      %v1005 = vsel %vm1004, 1, 0
      %v1006 = vadd.s32 %v1002, %v998
      %v1007 = vadd.s32 %v1003, %v1005
      %v1008 = vadd.s32 %v1007, %v997
      %v1009 = vadd.s32 %v1008, %v999
      %v1010 = vshrl.u32 %v1009, 4
      %v1011 = vmul.u32 %v1010, 18
      %v1012 = vsub.s32 %v988, %v1011
      %v1013 = vsub.s32 0, %v1012
      %v1014 = vsel %vm986, %v1013, %v1012
      %vm1015 = vcmp.lt.s32.totalorder %v307, 0
      %v1016 = vsub.s32 0, %v307
      %v1017 = vsel %vm1015, %v1016, %v307
      %v1018 = vand.u32 %v1017, 65535
      %v1019 = vshrl.u32 %v1017, 16
      %v1021 = vmul.u32 %v1018, 14564
      %v1022 = vmul.u32 %v1018, 58254
      %v1023 = vmul.u32 %v1019, 14564
      %v1024 = vmul.u32 %v1019, 58254
      %v1025 = vshll.u32 %v1022, 16
      %v1026 = vshrl.u32 %v1022, 16
      %v1027 = vshll.u32 %v1023, 16
      %v1028 = vshrl.u32 %v1023, 16
      %vm1029 = vc.u32 %v1021, %v1025
      %v1030 = vsel %vm1029, 1, 0
      %v1031 = vadd.s32 %v1021, %v1025
      %v1032 = vadd.s32 %v1024, %v1030
      %vm1033 = vc.u32 %v1031, %v1027
      %v1034 = vsel %vm1033, 1, 0
      %v1035 = vadd.s32 %v1031, %v1027
      %v1036 = vadd.s32 %v1032, %v1034
      %v1037 = vadd.s32 %v1036, %v1026
      %v1038 = vadd.s32 %v1037, %v1028
      %v1039 = vshrl.u32 %v1038, 4
      %v1040 = vmul.u32 %v1039, 18
      %v1041 = vsub.s32 %v1017, %v1040
      %v1042 = vsub.s32 0, %v1041
      %v1043 = vsel %vm1015, %v1042, %v1041
      %vm1044 = vcmp.lt.s32.totalorder %v308, 0
      %v1045 = vsub.s32 0, %v308
      %v1046 = vsel %vm1044, %v1045, %v308
      %v1047 = vand.u32 %v1046, 65535
      %v1048 = vshrl.u32 %v1046, 16
      %v1050 = vmul.u32 %v1047, 14564
      %v1051 = vmul.u32 %v1047, 58254
      %v1052 = vmul.u32 %v1048, 14564
      %v1053 = vmul.u32 %v1048, 58254
      %v1054 = vshll.u32 %v1051, 16
      %v1055 = vshrl.u32 %v1051, 16
      %v1056 = vshll.u32 %v1052, 16
      %v1057 = vshrl.u32 %v1052, 16
      %vm1058 = vc.u32 %v1050, %v1054
      %v1059 = vsel %vm1058, 1, 0
      %v1060 = vadd.s32 %v1050, %v1054
      %v1061 = vadd.s32 %v1053, %v1059
      %vm1062 = vc.u32 %v1060, %v1056
      %v1063 = vsel %vm1062, 1, 0
      %v1064 = vadd.s32 %v1060, %v1056
      %v1065 = vadd.s32 %v1061, %v1063
      %v1066 = vadd.s32 %v1065, %v1055
      %v1067 = vadd.s32 %v1066, %v1057
      %v1068 = vshrl.u32 %v1067, 4
      %v1069 = vmul.u32 %v1068, 18
      %v1070 = vsub.s32 %v1046, %v1069
      %v1071 = vsub.s32 0, %v1070
      %v1072 = vsel %vm1044, %v1071, %v1070
      %vm1073 = vcmp.lt.s32.totalorder %v309, 0
      %v1074 = vsub.s32 0, %v309
      %v1075 = vsel %vm1073, %v1074, %v309
      %v1076 = vand.u32 %v1075, 65535
      %v1077 = vshrl.u32 %v1075, 16
      %v1079 = vmul.u32 %v1076, 14564
      %v1080 = vmul.u32 %v1076, 58254
      %v1081 = vmul.u32 %v1077, 14564
      %v1082 = vmul.u32 %v1077, 58254
      %v1083 = vshll.u32 %v1080, 16
      %v1084 = vshrl.u32 %v1080, 16
      %v1085 = vshll.u32 %v1081, 16
      %v1086 = vshrl.u32 %v1081, 16
      %vm1087 = vc.u32 %v1079, %v1083
      %v1088 = vsel %vm1087, 1, 0
      %v1089 = vadd.s32 %v1079, %v1083
      %v1090 = vadd.s32 %v1082, %v1088
      %vm1091 = vc.u32 %v1089, %v1085
      %v1092 = vsel %vm1091, 1, 0
      %v1093 = vadd.s32 %v1089, %v1085
      %v1094 = vadd.s32 %v1090, %v1092
      %v1095 = vadd.s32 %v1094, %v1084
      %v1096 = vadd.s32 %v1095, %v1086
      %v1097 = vshrl.u32 %v1096, 4
      %v1098 = vmul.u32 %v1097, 18
      %v1099 = vsub.s32 %v1075, %v1098
      %v1100 = vsub.s32 0, %v1099
      %v1101 = vsel %vm1073, %v1100, %v1099
      %vm1102 = vcmp.lt.s32.totalorder %v310, 0
      %v1103 = vsub.s32 0, %v310
      %v1104 = vsel %vm1102, %v1103, %v310
      %v1105 = vand.u32 %v1104, 65535
      %v1106 = vshrl.u32 %v1104, 16
      %v1108 = vmul.u32 %v1105, 14564
      %v1109 = vmul.u32 %v1105, 58254
      %v1110 = vmul.u32 %v1106, 14564
      %v1111 = vmul.u32 %v1106, 58254
      %v1112 = vshll.u32 %v1109, 16
      %v1113 = vshrl.u32 %v1109, 16
      %v1114 = vshll.u32 %v1110, 16
      %v1115 = vshrl.u32 %v1110, 16
      %vm1116 = vc.u32 %v1108, %v1112
      %v1117 = vsel %vm1116, 1, 0
      %v1118 = vadd.s32 %v1108, %v1112
      %v1119 = vadd.s32 %v1111, %v1117
      %vm1120 = vc.u32 %v1118, %v1114
      %v1121 = vsel %vm1120, 1, 0
      %v1122 = vadd.s32 %v1118, %v1114
      %v1123 = vadd.s32 %v1119, %v1121
      %v1124 = vadd.s32 %v1123, %v1113
      %v1125 = vadd.s32 %v1124, %v1115
      %v1126 = vshrl.u32 %v1125, 4
      %v1127 = vmul.u32 %v1126, 18
      %v1128 = vsub.s32 %v1104, %v1127
      %v1129 = vsub.s32 0, %v1128
      %v1130 = vsel %vm1102, %v1129, %v1128
      %vm1131 = vcmp.lt.s32.totalorder %v311, 0
      %v1132 = vsub.s32 0, %v311
      %v1133 = vsel %vm1131, %v1132, %v311
      %v1134 = vand.u32 %v1133, 65535
      %v1135 = vshrl.u32 %v1133, 16
      %v1137 = vmul.u32 %v1134, 14564
      %v1138 = vmul.u32 %v1134, 58254
      %v1139 = vmul.u32 %v1135, 14564
      %v1140 = vmul.u32 %v1135, 58254
      %v1141 = vshll.u32 %v1138, 16
      %v1142 = vshrl.u32 %v1138, 16
      %v1143 = vshll.u32 %v1139, 16
      %v1144 = vshrl.u32 %v1139, 16
      %vm1145 = vc.u32 %v1137, %v1141
      %v1146 = vsel %vm1145, 1, 0
      %v1147 = vadd.s32 %v1137, %v1141
      %v1148 = vadd.s32 %v1140, %v1146
      %vm1149 = vc.u32 %v1147, %v1143
      %v1150 = vsel %vm1149, 1, 0
      %v1151 = vadd.s32 %v1147, %v1143
      %v1152 = vadd.s32 %v1148, %v1150
      %v1153 = vadd.s32 %v1152, %v1142
      %v1154 = vadd.s32 %v1153, %v1144
      %v1155 = vshrl.u32 %v1154, 4
      %v1156 = vmul.u32 %v1155, 18
      %v1157 = vsub.s32 %v1133, %v1156
      %v1158 = vsub.s32 0, %v1157
      %v1159 = vsel %vm1131, %v1158, %v1157
      %vm1160 = vcmp.lt.s32.totalorder %v312, 0
      %v1161 = vsub.s32 0, %v312
      %v1162 = vsel %vm1160, %v1161, %v312
      %v1163 = vand.u32 %v1162, 65535
      %v1164 = vshrl.u32 %v1162, 16
      %v1166 = vmul.u32 %v1163, 14564
      %v1167 = vmul.u32 %v1163, 58254
      %v1168 = vmul.u32 %v1164, 14564
      %v1169 = vmul.u32 %v1164, 58254
      %v1170 = vshll.u32 %v1167, 16
      %v1171 = vshrl.u32 %v1167, 16
      %v1172 = vshll.u32 %v1168, 16
      %v1173 = vshrl.u32 %v1168, 16
      %vm1174 = vc.u32 %v1166, %v1170
      %v1175 = vsel %vm1174, 1, 0
      %v1176 = vadd.s32 %v1166, %v1170
      %v1177 = vadd.s32 %v1169, %v1175
      %vm1178 = vc.u32 %v1176, %v1172
      %v1179 = vsel %vm1178, 1, 0
      %v1180 = vadd.s32 %v1176, %v1172
      %v1181 = vadd.s32 %v1177, %v1179
      %v1182 = vadd.s32 %v1181, %v1171
      %v1183 = vadd.s32 %v1182, %v1173
      %v1184 = vshrl.u32 %v1183, 4
      %v1185 = vmul.u32 %v1184, 18
      %v1186 = vsub.s32 %v1162, %v1185
      %v1187 = vsub.s32 0, %v1186
      %v1188 = vsel %vm1160, %v1187, %v1186
      %vm1189 = vcmp.lt.s32.totalorder %v313, 0
      %v1190 = vsub.s32 0, %v313
      %v1191 = vsel %vm1189, %v1190, %v313
      %v1192 = vand.u32 %v1191, 65535
      %v1193 = vshrl.u32 %v1191, 16
      %v1195 = vmul.u32 %v1192, 14564
      %v1196 = vmul.u32 %v1192, 58254
      %v1197 = vmul.u32 %v1193, 14564
      %v1198 = vmul.u32 %v1193, 58254
      %v1199 = vshll.u32 %v1196, 16
      %v1200 = vshrl.u32 %v1196, 16
      %v1201 = vshll.u32 %v1197, 16
      %v1202 = vshrl.u32 %v1197, 16
      %vm1203 = vc.u32 %v1195, %v1199
      %v1204 = vsel %vm1203, 1, 0
      %v1205 = vadd.s32 %v1195, %v1199
      %v1206 = vadd.s32 %v1198, %v1204
      %vm1207 = vc.u32 %v1205, %v1201
      %v1208 = vsel %vm1207, 1, 0
      %v1209 = vadd.s32 %v1205, %v1201
      %v1210 = vadd.s32 %v1206, %v1208
      %v1211 = vadd.s32 %v1210, %v1200
      %v1212 = vadd.s32 %v1211, %v1202
      %v1213 = vshrl.u32 %v1212, 4
      %v1214 = vmul.u32 %v1213, 18
      %v1215 = vsub.s32 %v1191, %v1214
      %v1216 = vsub.s32 0, %v1215
      %v1217 = vsel %vm1189, %v1216, %v1215
      %vm1218 = vcmp.lt.s32.totalorder %v314, 0
      %v1219 = vsub.s32 0, %v314
      %v1220 = vsel %vm1218, %v1219, %v314
      %v1221 = vand.u32 %v1220, 65535
      %v1222 = vshrl.u32 %v1220, 16
      %v1224 = vmul.u32 %v1221, 14564
      %v1225 = vmul.u32 %v1221, 58254
      %v1226 = vmul.u32 %v1222, 14564
      %v1227 = vmul.u32 %v1222, 58254
      %v1228 = vshll.u32 %v1225, 16
      %v1229 = vshrl.u32 %v1225, 16
      %v1230 = vshll.u32 %v1226, 16
      %v1231 = vshrl.u32 %v1226, 16
      %vm1232 = vc.u32 %v1224, %v1228
      %v1233 = vsel %vm1232, 1, 0
      %v1234 = vadd.s32 %v1224, %v1228
      %v1235 = vadd.s32 %v1227, %v1233
      %vm1236 = vc.u32 %v1234, %v1230
      %v1237 = vsel %vm1236, 1, 0
      %v1238 = vadd.s32 %v1234, %v1230
      %v1239 = vadd.s32 %v1235, %v1237
      %v1240 = vadd.s32 %v1239, %v1229
      %v1241 = vadd.s32 %v1240, %v1231
      %v1242 = vshrl.u32 %v1241, 4
      %v1243 = vmul.u32 %v1242, 18
      %v1244 = vsub.s32 %v1220, %v1243
      %v1245 = vsub.s32 0, %v1244
      %v1246 = vsel %vm1218, %v1245, %v1244
      %vm1247 = vcmp.lt.s32.totalorder %v315, 0
      %v1248 = vsub.s32 0, %v315
      %v1249 = vsel %vm1247, %v1248, %v315
      %v1250 = vand.u32 %v1249, 65535
      %v1251 = vshrl.u32 %v1249, 16
      %v1253 = vmul.u32 %v1250, 14564
      %v1254 = vmul.u32 %v1250, 58254
      %v1255 = vmul.u32 %v1251, 14564
      %v1256 = vmul.u32 %v1251, 58254
      %v1257 = vshll.u32 %v1254, 16
      %v1258 = vshrl.u32 %v1254, 16
      %v1259 = vshll.u32 %v1255, 16
      %v1260 = vshrl.u32 %v1255, 16
      %vm1261 = vc.u32 %v1253, %v1257
      %v1262 = vsel %vm1261, 1, 0
      %v1263 = vadd.s32 %v1253, %v1257
      %v1264 = vadd.s32 %v1256, %v1262
      %vm1265 = vc.u32 %v1263, %v1259
      %v1266 = vsel %vm1265, 1, 0
      %v1267 = vadd.s32 %v1263, %v1259
      %v1268 = vadd.s32 %v1264, %v1266
      %v1269 = vadd.s32 %v1268, %v1258
      %v1270 = vadd.s32 %v1269, %v1260
      %v1271 = vshrl.u32 %v1270, 4
      %v1272 = vmul.u32 %v1271, 18
      %v1273 = vsub.s32 %v1249, %v1272
      %v1274 = vsub.s32 0, %v1273
      %v1275 = vsel %vm1247, %v1274, %v1273
      %vm1276 = vcmp.lt.s32.totalorder %v316, 0
      %v1277 = vsub.s32 0, %v316
      %v1278 = vsel %vm1276, %v1277, %v316
      %v1279 = vand.u32 %v1278, 65535
      %v1280 = vshrl.u32 %v1278, 16
      %v1282 = vmul.u32 %v1279, 14564
      %v1283 = vmul.u32 %v1279, 58254
      %v1284 = vmul.u32 %v1280, 14564
      %v1285 = vmul.u32 %v1280, 58254
      %v1286 = vshll.u32 %v1283, 16
      %v1287 = vshrl.u32 %v1283, 16
      %v1288 = vshll.u32 %v1284, 16
      %v1289 = vshrl.u32 %v1284, 16
      %vm1290 = vc.u32 %v1282, %v1286
      %v1291 = vsel %vm1290, 1, 0
      %v1292 = vadd.s32 %v1282, %v1286
      %v1293 = vadd.s32 %v1285, %v1291
      %vm1294 = vc.u32 %v1292, %v1288
      %v1295 = vsel %vm1294, 1, 0
      %v1296 = vadd.s32 %v1292, %v1288
      %v1297 = vadd.s32 %v1293, %v1295
      %v1298 = vadd.s32 %v1297, %v1287
      %v1299 = vadd.s32 %v1298, %v1289
      %v1300 = vshrl.u32 %v1299, 4
      %v1301 = vmul.u32 %v1300, 18
      %v1302 = vsub.s32 %v1278, %v1301
      %v1303 = vsub.s32 0, %v1302
      %v1304 = vsel %vm1276, %v1303, %v1302
      %vm1305 = vcmp.lt.s32.totalorder %v317, 0
      %v1306 = vsub.s32 0, %v317
      %v1307 = vsel %vm1305, %v1306, %v317
      %v1308 = vand.u32 %v1307, 65535
      %v1309 = vshrl.u32 %v1307, 16
      %v1311 = vmul.u32 %v1308, 14564
      %v1312 = vmul.u32 %v1308, 58254
      %v1313 = vmul.u32 %v1309, 14564
      %v1314 = vmul.u32 %v1309, 58254
      %v1315 = vshll.u32 %v1312, 16
      %v1316 = vshrl.u32 %v1312, 16
      %v1317 = vshll.u32 %v1313, 16
      %v1318 = vshrl.u32 %v1313, 16
      %vm1319 = vc.u32 %v1311, %v1315
      %v1320 = vsel %vm1319, 1, 0
      %v1321 = vadd.s32 %v1311, %v1315
      %v1322 = vadd.s32 %v1314, %v1320
      %vm1323 = vc.u32 %v1321, %v1317
      %v1324 = vsel %vm1323, 1, 0
      %v1325 = vadd.s32 %v1321, %v1317
      %v1326 = vadd.s32 %v1322, %v1324
      %v1327 = vadd.s32 %v1326, %v1316
      %v1328 = vadd.s32 %v1327, %v1318
      %v1329 = vshrl.u32 %v1328, 4
      %v1330 = vmul.u32 %v1329, 18
      %v1331 = vsub.s32 %v1307, %v1330
      %v1332 = vsub.s32 0, %v1331
      %v1333 = vsel %vm1305, %v1332, %v1331
      %vm1334 = vcmp.lt.s32.totalorder %v318, 0
      %v1335 = vsub.s32 0, %v318
      %v1336 = vsel %vm1334, %v1335, %v318
      %v1337 = vand.u32 %v1336, 65535
      %v1338 = vshrl.u32 %v1336, 16
      %v1340 = vmul.u32 %v1337, 14564
      %v1341 = vmul.u32 %v1337, 58254
      %v1342 = vmul.u32 %v1338, 14564
      %v1343 = vmul.u32 %v1338, 58254
      %v1344 = vshll.u32 %v1341, 16
      %v1345 = vshrl.u32 %v1341, 16
      %v1346 = vshll.u32 %v1342, 16
      %v1347 = vshrl.u32 %v1342, 16
      %vm1348 = vc.u32 %v1340, %v1344
      %v1349 = vsel %vm1348, 1, 0
      %v1350 = vadd.s32 %v1340, %v1344
      %v1351 = vadd.s32 %v1343, %v1349
      %vm1352 = vc.u32 %v1350, %v1346
      %v1353 = vsel %vm1352, 1, 0
      %v1354 = vadd.s32 %v1350, %v1346
      %v1355 = vadd.s32 %v1351, %v1353
      %v1356 = vadd.s32 %v1355, %v1345
      %v1357 = vadd.s32 %v1356, %v1347
      %v1358 = vshrl.u32 %v1357, 4
      %v1359 = vmul.u32 %v1358, 18
      %v1360 = vsub.s32 %v1336, %v1359
      %v1361 = vsub.s32 0, %v1360
      %v1362 = vsel %vm1334, %v1361, %v1360
      %vm1363 = vcmp.ne.s32.totalorder %v347, 0
      %vm1364 = vcmp.ne.s32.totalorder %v376, 0
      %vm1365 = vcmp.ne.s32.totalorder %v405, 0
      %vm1366 = vcmp.ne.s32.totalorder %v434, 0
      %vm1367 = vcmp.ne.s32.totalorder %v463, 0
      %vm1368 = vcmp.ne.s32.totalorder %v492, 0
      %vm1369 = vcmp.ne.s32.totalorder %v521, 0
      %vm1370 = vcmp.ne.s32.totalorder %v550, 0
      %vm1371 = vcmp.ne.s32.totalorder %v579, 0
      %vm1372 = vcmp.ne.s32.totalorder %v608, 0
      %vm1373 = vcmp.ne.s32.totalorder %v637, 0
      %vm1374 = vcmp.ne.s32.totalorder %v666, 0
      %vm1375 = vcmp.ne.s32.totalorder %v695, 0
      %vm1376 = vcmp.ne.s32.totalorder %v724, 0
      %vm1377 = vcmp.ne.s32.totalorder %v753, 0
      %vm1378 = vcmp.ne.s32.totalorder %v782, 0
      %vm1379 = vcmp.ne.s32.totalorder %v811, 0
      %vm1380 = vcmp.ne.s32.totalorder %v840, 0
      %vm1381 = vcmp.ne.s32.totalorder %v869, 0
      %vm1382 = vcmp.ne.s32.totalorder %v898, 0
      %vm1383 = vcmp.ne.s32.totalorder %v927, 0
      %vm1384 = vcmp.ne.s32.totalorder %v956, 0
      %vm1385 = vcmp.ne.s32.totalorder %v985, 0
      %vm1386 = vcmp.ne.s32.totalorder %v1014, 0
      %vm1387 = vcmp.ne.s32.totalorder %v1043, 0
      %vm1388 = vcmp.ne.s32.totalorder %v1072, 0
      %vm1389 = vcmp.ne.s32.totalorder %v1101, 0
      %vm1390 = vcmp.ne.s32.totalorder %v1130, 0
      %vm1391 = vcmp.ne.s32.totalorder %v1159, 0
      %vm1392 = vcmp.ne.s32.totalorder %v1188, 0
      %vm1393 = vcmp.ne.s32.totalorder %v1217, 0
      %vm1394 = vcmp.ne.s32.totalorder %v1246, 0
      %vm1395 = vcmp.ne.s32.totalorder %v1275, 0
      %vm1396 = vcmp.ne.s32.totalorder %v1304, 0
      %vm1397 = vcmp.ne.s32.totalorder %v1333, 0
      %vm1398 = vcmp.ne.s32.totalorder %v1362, 0
      %vm1399 = vcmp.lt.s32.totalorder %v347, 0
      %vm1400 = vcmp.lt.s32.totalorder %v376, 0
      %vm1401 = vcmp.lt.s32.totalorder %v405, 0
      %vm1402 = vcmp.lt.s32.totalorder %v434, 0
      %vm1403 = vcmp.lt.s32.totalorder %v463, 0
      %vm1404 = vcmp.lt.s32.totalorder %v492, 0
      %vm1405 = vcmp.lt.s32.totalorder %v521, 0
      %vm1406 = vcmp.lt.s32.totalorder %v550, 0
      %vm1407 = vcmp.lt.s32.totalorder %v579, 0
      %vm1408 = vcmp.lt.s32.totalorder %v608, 0
      %vm1409 = vcmp.lt.s32.totalorder %v637, 0
      %vm1410 = vcmp.lt.s32.totalorder %v666, 0
      %vm1411 = vcmp.lt.s32.totalorder %v695, 0
      %vm1412 = vcmp.lt.s32.totalorder %v724, 0
      %vm1413 = vcmp.lt.s32.totalorder %v753, 0
      %vm1414 = vcmp.lt.s32.totalorder %v782, 0
      %vm1415 = vcmp.lt.s32.totalorder %v811, 0
      %vm1416 = vcmp.lt.s32.totalorder %v840, 0
      %vm1417 = vcmp.lt.s32.totalorder %v869, 0
      %vm1418 = vcmp.lt.s32.totalorder %v898, 0
      %vm1419 = vcmp.lt.s32.totalorder %v927, 0
      %vm1420 = vcmp.lt.s32.totalorder %v956, 0
      %vm1421 = vcmp.lt.s32.totalorder %v985, 0
      %vm1422 = vcmp.lt.s32.totalorder %v1014, 0
      %vm1423 = vcmp.lt.s32.totalorder %v1043, 0
      %vm1424 = vcmp.lt.s32.totalorder %v1072, 0
      %vm1425 = vcmp.lt.s32.totalorder %v1101, 0
      %vm1426 = vcmp.lt.s32.totalorder %v1130, 0
      %vm1427 = vcmp.lt.s32.totalorder %v1159, 0
      %vm1428 = vcmp.lt.s32.totalorder %v1188, 0
      %vm1429 = vcmp.lt.s32.totalorder %v1217, 0
      %vm1430 = vcmp.lt.s32.totalorder %v1246, 0
      %vm1431 = vcmp.lt.s32.totalorder %v1275, 0
      %vm1432 = vcmp.lt.s32.totalorder %v1304, 0
      %vm1433 = vcmp.lt.s32.totalorder %v1333, 0
      %vm1434 = vcmp.lt.s32.totalorder %v1362, 0
      %vm1435 = vmand %vm1399, %vm1363
      %vm1436 = vmand %vm1400, %vm1364
      %vm1437 = vmand %vm1401, %vm1365
      %vm1438 = vmand %vm1402, %vm1366
      %vm1439 = vmand %vm1403, %vm1367
      %vm1440 = vmand %vm1404, %vm1368
      %vm1441 = vmand %vm1405, %vm1369
      %vm1442 = vmand %vm1406, %vm1370
      %vm1443 = vmand %vm1407, %vm1371
      %vm1444 = vmand %vm1408, %vm1372
      %vm1445 = vmand %vm1409, %vm1373
      %vm1446 = vmand %vm1410, %vm1374
      %vm1447 = vmand %vm1411, %vm1375
      %vm1448 = vmand %vm1412, %vm1376
      %vm1449 = vmand %vm1413, %vm1377
      %vm1450 = vmand %vm1414, %vm1378
      %vm1451 = vmand %vm1415, %vm1379
      %vm1452 = vmand %vm1416, %vm1380
      %vm1453 = vmand %vm1417, %vm1381
      %vm1454 = vmand %vm1418, %vm1382
      %vm1455 = vmand %vm1419, %vm1383
      %vm1456 = vmand %vm1420, %vm1384
      %vm1457 = vmand %vm1421, %vm1385
      %vm1458 = vmand %vm1422, %vm1386
      %vm1459 = vmand %vm1423, %vm1387
      %vm1460 = vmand %vm1424, %vm1388
      %vm1461 = vmand %vm1425, %vm1389
      %vm1462 = vmand %vm1426, %vm1390
      %vm1463 = vmand %vm1427, %vm1391
      %vm1464 = vmand %vm1428, %vm1392
      %vm1465 = vmand %vm1429, %vm1393
      %vm1466 = vmand %vm1430, %vm1394
      %vm1467 = vmand %vm1431, %vm1395
      %vm1468 = vmand %vm1432, %vm1396
      %vm1469 = vmand %vm1433, %vm1397
      %vm1470 = vmand %vm1434, %vm1398
      %v1471 = vadd.s32 %v347, 18
      %v1472 = vadd.s32 %v376, 18
      %v1473 = vadd.s32 %v405, 18
      %v1474 = vadd.s32 %v434, 18
      %v1475 = vadd.s32 %v463, 18
      %v1476 = vadd.s32 %v492, 18
      %v1477 = vadd.s32 %v521, 18
      %v1478 = vadd.s32 %v550, 18
      %v1479 = vadd.s32 %v579, 18
      %v1480 = vadd.s32 %v608, 18
      %v1481 = vadd.s32 %v637, 18
      %v1482 = vadd.s32 %v666, 18
      %v1483 = vadd.s32 %v695, 18
      %v1484 = vadd.s32 %v724, 18
      %v1485 = vadd.s32 %v753, 18
      %v1486 = vadd.s32 %v782, 18
      %v1487 = vadd.s32 %v811, 18
      %v1488 = vadd.s32 %v840, 18
      %v1489 = vadd.s32 %v869, 18
      %v1490 = vadd.s32 %v898, 18
      %v1491 = vadd.s32 %v927, 18
      %v1492 = vadd.s32 %v956, 18
      %v1493 = vadd.s32 %v985, 18
      %v1494 = vadd.s32 %v1014, 18
      %v1495 = vadd.s32 %v1043, 18
      %v1496 = vadd.s32 %v1072, 18
      %v1497 = vadd.s32 %v1101, 18
      %v1498 = vadd.s32 %v1130, 18
      %v1499 = vadd.s32 %v1159, 18
      %v1500 = vadd.s32 %v1188, 18
      %v1501 = vadd.s32 %v1217, 18
      %v1502 = vadd.s32 %v1246, 18
      %v1503 = vadd.s32 %v1275, 18
      %v1504 = vadd.s32 %v1304, 18
      %v1505 = vadd.s32 %v1333, 18
      %v1506 = vadd.s32 %v1362, 18
      %v1507 = vsel %vm1435, %v1471, %v347
      %v1508 = vsel %vm1436, %v1472, %v376
      %v1509 = vsel %vm1437, %v1473, %v405
      %v1510 = vsel %vm1438, %v1474, %v434
      %v1511 = vsel %vm1439, %v1475, %v463
      %v1512 = vsel %vm1440, %v1476, %v492
      %v1513 = vsel %vm1441, %v1477, %v521
      %v1514 = vsel %vm1442, %v1478, %v550
      %v1515 = vsel %vm1443, %v1479, %v579
      %v1516 = vsel %vm1444, %v1480, %v608
      %v1517 = vsel %vm1445, %v1481, %v637
      %v1518 = vsel %vm1446, %v1482, %v666
      %v1519 = vsel %vm1447, %v1483, %v695
      %v1520 = vsel %vm1448, %v1484, %v724
      %v1521 = vsel %vm1449, %v1485, %v753
      %v1522 = vsel %vm1450, %v1486, %v782
      %v1523 = vsel %vm1451, %v1487, %v811
      %v1524 = vsel %vm1452, %v1488, %v840
      %v1525 = vsel %vm1453, %v1489, %v869
      %v1526 = vsel %vm1454, %v1490, %v898
      %v1527 = vsel %vm1455, %v1491, %v927
      %v1528 = vsel %vm1456, %v1492, %v956
      %v1529 = vsel %vm1457, %v1493, %v985
      %v1530 = vsel %vm1458, %v1494, %v1014
      %v1531 = vsel %vm1459, %v1495, %v1043
      %v1532 = vsel %vm1460, %v1496, %v1072
      %v1533 = vsel %vm1461, %v1497, %v1101
      %v1534 = vsel %vm1462, %v1498, %v1130
      %v1535 = vsel %vm1463, %v1499, %v1159
      %v1536 = vsel %vm1464, %v1500, %v1188
      %v1537 = vsel %vm1465, %v1501, %v1217
      %v1538 = vsel %vm1466, %v1502, %v1246
      %v1539 = vsel %vm1467, %v1503, %v1275
      %v1540 = vsel %vm1468, %v1504, %v1304
      %v1541 = vsel %vm1469, %v1505, %v1333
      %v1542 = vsel %vm1470, %v1506, %v1362
      %vm1543 = vcmp.lt.s32.totalorder %v1507, 16
      %vm1544 = vcmp.lt.s32.totalorder %v1508, 16
      %vm1545 = vcmp.lt.s32.totalorder %v1509, 16
      %vm1546 = vcmp.lt.s32.totalorder %v1510, 16
      %vm1547 = vcmp.lt.s32.totalorder %v1511, 16
      %vm1548 = vcmp.lt.s32.totalorder %v1512, 16
      %vm1549 = vcmp.lt.s32.totalorder %v1513, 16
      %vm1550 = vcmp.lt.s32.totalorder %v1514, 16
      %vm1551 = vcmp.lt.s32.totalorder %v1515, 16
      %vm1552 = vcmp.lt.s32.totalorder %v1516, 16
      %vm1553 = vcmp.lt.s32.totalorder %v1517, 16
      %vm1554 = vcmp.lt.s32.totalorder %v1518, 16
      %vm1555 = vcmp.lt.s32.totalorder %v1519, 16
      %vm1556 = vcmp.lt.s32.totalorder %v1520, 16
      %vm1557 = vcmp.lt.s32.totalorder %v1521, 16
      %vm1558 = vcmp.lt.s32.totalorder %v1522, 16
      %vm1559 = vcmp.lt.s32.totalorder %v1523, 16
      %vm1560 = vcmp.lt.s32.totalorder %v1524, 16
      %vm1561 = vcmp.lt.s32.totalorder %v1525, 16
      %vm1562 = vcmp.lt.s32.totalorder %v1526, 16
      %vm1563 = vcmp.lt.s32.totalorder %v1527, 16
      %vm1564 = vcmp.lt.s32.totalorder %v1528, 16
      %vm1565 = vcmp.lt.s32.totalorder %v1529, 16
      %vm1566 = vcmp.lt.s32.totalorder %v1530, 16
      %vm1567 = vcmp.lt.s32.totalorder %v1531, 16
      %vm1568 = vcmp.lt.s32.totalorder %v1532, 16
      %vm1569 = vcmp.lt.s32.totalorder %v1533, 16
      %vm1570 = vcmp.lt.s32.totalorder %v1534, 16
      %vm1571 = vcmp.lt.s32.totalorder %v1535, 16
      %vm1572 = vcmp.lt.s32.totalorder %v1536, 16
      %vm1573 = vcmp.lt.s32.totalorder %v1537, 16
      %vm1574 = vcmp.lt.s32.totalorder %v1538, 16
      %vm1575 = vcmp.lt.s32.totalorder %v1539, 16
      %vm1576 = vcmp.lt.s32.totalorder %v1540, 16
      %vm1577 = vcmp.lt.s32.totalorder %v1541, 16
      %vm1578 = vcmp.lt.s32.totalorder %v1542, 16
      %v1579 = vadd.s32 %v283, 288
      %v1580 = vadd.s32 %v283, 296
      %v1581 = vadd.s32 %v283, 304
      %v1582 = vadd.s32 %v283, 312
      %v1583 = vadd.s32 %v283, 320
      %v1584 = vadd.s32 %v283, 328
      %v1585 = vadd.s32 %v283, 336
      %v1586 = vadd.s32 %v283, 344
      %vm1587 = vcmp.lt.s32.totalorder %v283, 288
      %vm1588 = vcmp.lt.s32.totalorder %v284, 288
      %vm1589 = vcmp.lt.s32.totalorder %v285, 288
      %vm1590 = vcmp.lt.s32.totalorder %v286, 288
      %vm1591 = vcmp.lt.s32.totalorder %v287, 288
      %vm1592 = vcmp.lt.s32.totalorder %v288, 288
      %vm1593 = vcmp.lt.s32.totalorder %v289, 288
      %vm1594 = vcmp.lt.s32.totalorder %v290, 288
      %vm1595 = vcmp.lt.s32.totalorder %v291, 288
      %vm1596 = vcmp.lt.s32.totalorder %v292, 288
      %vm1597 = vcmp.lt.s32.totalorder %v293, 288
      %vm1598 = vcmp.lt.s32.totalorder %v294, 288
      %vm1599 = vcmp.lt.s32.totalorder %v295, 288
      %vm1600 = vcmp.lt.s32.totalorder %v296, 288
      %vm1601 = vcmp.lt.s32.totalorder %v297, 288
      %vm1602 = vcmp.lt.s32.totalorder %v298, 288
      %vm1603 = vcmp.lt.s32.totalorder %v299, 288
      %vm1604 = vcmp.lt.s32.totalorder %v300, 288
      %vm1605 = vcmp.lt.s32.totalorder %v301, 288
      %vm1606 = vcmp.lt.s32.totalorder %v302, 288
      %vm1607 = vcmp.lt.s32.totalorder %v303, 288
      %vm1608 = vcmp.lt.s32.totalorder %v304, 288
      %vm1609 = vcmp.lt.s32.totalorder %v305, 288
      %vm1610 = vcmp.lt.s32.totalorder %v306, 288
      %vm1611 = vcmp.lt.s32.totalorder %v307, 288
      %vm1612 = vcmp.lt.s32.totalorder %v308, 288
      %vm1613 = vcmp.lt.s32.totalorder %v309, 288
      %vm1614 = vcmp.lt.s32.totalorder %v310, 288
      %vm1615 = vcmp.lt.s32.totalorder %v311, 288
      %vm1616 = vcmp.lt.s32.totalorder %v312, 288
      %vm1617 = vcmp.lt.s32.totalorder %v313, 288
      %vm1618 = vcmp.lt.s32.totalorder %v314, 288
      %vm1619 = vcmp.lt.s32.totalorder %v315, 288
      %vm1620 = vcmp.lt.s32.totalorder %v316, 288
      %vm1621 = vcmp.lt.s32.totalorder %v317, 288
      %vm1622 = vcmp.lt.s32.totalorder %v318, 288
      %vm1623 = vcmp.lt.s32.totalorder %v1579, 288
      %vm1624 = vcmp.lt.s32.totalorder %v1580, 288
      %vm1625 = vcmp.lt.s32.totalorder %v1581, 288
      %vm1626 = vcmp.lt.s32.totalorder %v1582, 288
      %vm1627 = vcmp.lt.s32.totalorder %v1583, 288
      %vm1628 = vcmp.lt.s32.totalorder %v1584, 288
      %vm1629 = vcmp.lt.s32.totalorder %v1585, 288
      %vm1630 = vcmp.lt.s32.totalorder %v1586, 288
      %vm1631 = vcmp.lt.s32.totalorder %v1579, 0
      %v1632 = vsub.s32 0, %v1579
      %v1633 = vsel %vm1631, %v1632, %v1579
      %v1634 = vand.u32 %v1633, 65535
      %v1635 = vshrl.u32 %v1633, 16
      %v1637 = vmul.u32 %v1634, 14564
      %v1638 = vmul.u32 %v1634, 58254
      %v1639 = vmul.u32 %v1635, 14564
      %v1640 = vmul.u32 %v1635, 58254
      %v1641 = vshll.u32 %v1638, 16
      %v1642 = vshrl.u32 %v1638, 16
      %v1643 = vshll.u32 %v1639, 16
      %v1644 = vshrl.u32 %v1639, 16
      %vm1645 = vc.u32 %v1637, %v1641
      %v1646 = vsel %vm1645, 1, 0
      %v1647 = vadd.s32 %v1637, %v1641
      %v1648 = vadd.s32 %v1640, %v1646
      %vm1649 = vc.u32 %v1647, %v1643
      %v1650 = vsel %vm1649, 1, 0
      %v1651 = vadd.s32 %v1647, %v1643
      %v1652 = vadd.s32 %v1648, %v1650
      %v1653 = vadd.s32 %v1652, %v1642
      %v1654 = vadd.s32 %v1653, %v1644
      %v1655 = vshrl.u32 %v1654, 4
      %v1656 = vmul.u32 %v1655, 18
      %v1657 = vsub.s32 %v1633, %v1656
      %v1658 = vsub.s32 0, %v1657
      %v1659 = vsel %vm1631, %v1658, %v1657
      %vm1660 = vcmp.lt.s32.totalorder %v1580, 0
      %v1661 = vsub.s32 0, %v1580
      %v1662 = vsel %vm1660, %v1661, %v1580
      %v1663 = vand.u32 %v1662, 65535
      %v1664 = vshrl.u32 %v1662, 16
      %v1666 = vmul.u32 %v1663, 14564
      %v1667 = vmul.u32 %v1663, 58254
      %v1668 = vmul.u32 %v1664, 14564
      %v1669 = vmul.u32 %v1664, 58254
      %v1670 = vshll.u32 %v1667, 16
      %v1671 = vshrl.u32 %v1667, 16
      %v1672 = vshll.u32 %v1668, 16
      %v1673 = vshrl.u32 %v1668, 16
      %vm1674 = vc.u32 %v1666, %v1670
      %v1675 = vsel %vm1674, 1, 0
      %v1676 = vadd.s32 %v1666, %v1670
      %v1677 = vadd.s32 %v1669, %v1675
      %vm1678 = vc.u32 %v1676, %v1672
      %v1679 = vsel %vm1678, 1, 0
      %v1680 = vadd.s32 %v1676, %v1672
      %v1681 = vadd.s32 %v1677, %v1679
      %v1682 = vadd.s32 %v1681, %v1671
      %v1683 = vadd.s32 %v1682, %v1673
      %v1684 = vshrl.u32 %v1683, 4
      %v1685 = vmul.u32 %v1684, 18
      %v1686 = vsub.s32 %v1662, %v1685
      %v1687 = vsub.s32 0, %v1686
      %v1688 = vsel %vm1660, %v1687, %v1686
      %vm1689 = vcmp.lt.s32.totalorder %v1581, 0
      %v1690 = vsub.s32 0, %v1581
      %v1691 = vsel %vm1689, %v1690, %v1581
      %v1692 = vand.u32 %v1691, 65535
      %v1693 = vshrl.u32 %v1691, 16
      %v1695 = vmul.u32 %v1692, 14564
      %v1696 = vmul.u32 %v1692, 58254
      %v1697 = vmul.u32 %v1693, 14564
      %v1698 = vmul.u32 %v1693, 58254
      %v1699 = vshll.u32 %v1696, 16
      %v1700 = vshrl.u32 %v1696, 16
      %v1701 = vshll.u32 %v1697, 16
      %v1702 = vshrl.u32 %v1697, 16
      %vm1703 = vc.u32 %v1695, %v1699
      %v1704 = vsel %vm1703, 1, 0
      %v1705 = vadd.s32 %v1695, %v1699
      %v1706 = vadd.s32 %v1698, %v1704
      %vm1707 = vc.u32 %v1705, %v1701
      %v1708 = vsel %vm1707, 1, 0
      %v1709 = vadd.s32 %v1705, %v1701
      %v1710 = vadd.s32 %v1706, %v1708
      %v1711 = vadd.s32 %v1710, %v1700
      %v1712 = vadd.s32 %v1711, %v1702
      %v1713 = vshrl.u32 %v1712, 4
      %v1714 = vmul.u32 %v1713, 18
      %v1715 = vsub.s32 %v1691, %v1714
      %v1716 = vsub.s32 0, %v1715
      %v1717 = vsel %vm1689, %v1716, %v1715
      %vm1718 = vcmp.lt.s32.totalorder %v1582, 0
      %v1719 = vsub.s32 0, %v1582
      %v1720 = vsel %vm1718, %v1719, %v1582
      %v1721 = vand.u32 %v1720, 65535
      %v1722 = vshrl.u32 %v1720, 16
      %v1724 = vmul.u32 %v1721, 14564
      %v1725 = vmul.u32 %v1721, 58254
      %v1726 = vmul.u32 %v1722, 14564
      %v1727 = vmul.u32 %v1722, 58254
      %v1728 = vshll.u32 %v1725, 16
      %v1729 = vshrl.u32 %v1725, 16
      %v1730 = vshll.u32 %v1726, 16
      %v1731 = vshrl.u32 %v1726, 16
      %vm1732 = vc.u32 %v1724, %v1728
      %v1733 = vsel %vm1732, 1, 0
      %v1734 = vadd.s32 %v1724, %v1728
      %v1735 = vadd.s32 %v1727, %v1733
      %vm1736 = vc.u32 %v1734, %v1730
      %v1737 = vsel %vm1736, 1, 0
      %v1738 = vadd.s32 %v1734, %v1730
      %v1739 = vadd.s32 %v1735, %v1737
      %v1740 = vadd.s32 %v1739, %v1729
      %v1741 = vadd.s32 %v1740, %v1731
      %v1742 = vshrl.u32 %v1741, 4
      %v1743 = vmul.u32 %v1742, 18
      %v1744 = vsub.s32 %v1720, %v1743
      %v1745 = vsub.s32 0, %v1744
      %v1746 = vsel %vm1718, %v1745, %v1744
      %vm1747 = vcmp.lt.s32.totalorder %v1583, 0
      %v1748 = vsub.s32 0, %v1583
      %v1749 = vsel %vm1747, %v1748, %v1583
      %v1750 = vand.u32 %v1749, 65535
      %v1751 = vshrl.u32 %v1749, 16
      %v1753 = vmul.u32 %v1750, 14564
      %v1754 = vmul.u32 %v1750, 58254
      %v1755 = vmul.u32 %v1751, 14564
      %v1756 = vmul.u32 %v1751, 58254
      %v1757 = vshll.u32 %v1754, 16
      %v1758 = vshrl.u32 %v1754, 16
      %v1759 = vshll.u32 %v1755, 16
      %v1760 = vshrl.u32 %v1755, 16
      %vm1761 = vc.u32 %v1753, %v1757
      %v1762 = vsel %vm1761, 1, 0
      %v1763 = vadd.s32 %v1753, %v1757
      %v1764 = vadd.s32 %v1756, %v1762
      %vm1765 = vc.u32 %v1763, %v1759
      %v1766 = vsel %vm1765, 1, 0
      %v1767 = vadd.s32 %v1763, %v1759
      %v1768 = vadd.s32 %v1764, %v1766
      %v1769 = vadd.s32 %v1768, %v1758
      %v1770 = vadd.s32 %v1769, %v1760
      %v1771 = vshrl.u32 %v1770, 4
      %v1772 = vmul.u32 %v1771, 18
      %v1773 = vsub.s32 %v1749, %v1772
      %v1774 = vsub.s32 0, %v1773
      %v1775 = vsel %vm1747, %v1774, %v1773
      %vm1776 = vcmp.lt.s32.totalorder %v1584, 0
      %v1777 = vsub.s32 0, %v1584
      %v1778 = vsel %vm1776, %v1777, %v1584
      %v1779 = vand.u32 %v1778, 65535
      %v1780 = vshrl.u32 %v1778, 16
      %v1782 = vmul.u32 %v1779, 14564
      %v1783 = vmul.u32 %v1779, 58254
      %v1784 = vmul.u32 %v1780, 14564
      %v1785 = vmul.u32 %v1780, 58254
      %v1786 = vshll.u32 %v1783, 16
      %v1787 = vshrl.u32 %v1783, 16
      %v1788 = vshll.u32 %v1784, 16
      %v1789 = vshrl.u32 %v1784, 16
      %vm1790 = vc.u32 %v1782, %v1786
      %v1791 = vsel %vm1790, 1, 0
      %v1792 = vadd.s32 %v1782, %v1786
      %v1793 = vadd.s32 %v1785, %v1791
      %vm1794 = vc.u32 %v1792, %v1788
      %v1795 = vsel %vm1794, 1, 0
      %v1796 = vadd.s32 %v1792, %v1788
      %v1797 = vadd.s32 %v1793, %v1795
      %v1798 = vadd.s32 %v1797, %v1787
      %v1799 = vadd.s32 %v1798, %v1789
      %v1800 = vshrl.u32 %v1799, 4
      %v1801 = vmul.u32 %v1800, 18
      %v1802 = vsub.s32 %v1778, %v1801
      %v1803 = vsub.s32 0, %v1802
      %v1804 = vsel %vm1776, %v1803, %v1802
      %vm1805 = vcmp.lt.s32.totalorder %v1585, 0
      %v1806 = vsub.s32 0, %v1585
      %v1807 = vsel %vm1805, %v1806, %v1585
      %v1808 = vand.u32 %v1807, 65535
      %v1809 = vshrl.u32 %v1807, 16
      %v1811 = vmul.u32 %v1808, 14564
      %v1812 = vmul.u32 %v1808, 58254
      %v1813 = vmul.u32 %v1809, 14564
      %v1814 = vmul.u32 %v1809, 58254
      %v1815 = vshll.u32 %v1812, 16
      %v1816 = vshrl.u32 %v1812, 16
      %v1817 = vshll.u32 %v1813, 16
      %v1818 = vshrl.u32 %v1813, 16
      %vm1819 = vc.u32 %v1811, %v1815
      %v1820 = vsel %vm1819, 1, 0
      %v1821 = vadd.s32 %v1811, %v1815
      %v1822 = vadd.s32 %v1814, %v1820
      %vm1823 = vc.u32 %v1821, %v1817
      %v1824 = vsel %vm1823, 1, 0
      %v1825 = vadd.s32 %v1821, %v1817
      %v1826 = vadd.s32 %v1822, %v1824
      %v1827 = vadd.s32 %v1826, %v1816
      %v1828 = vadd.s32 %v1827, %v1818
      %v1829 = vshrl.u32 %v1828, 4
      %v1830 = vmul.u32 %v1829, 18
      %v1831 = vsub.s32 %v1807, %v1830
      %v1832 = vsub.s32 0, %v1831
      %v1833 = vsel %vm1805, %v1832, %v1831
      %vm1834 = vcmp.lt.s32.totalorder %v1586, 0
      %v1835 = vsub.s32 0, %v1586
      %v1836 = vsel %vm1834, %v1835, %v1586
      %v1837 = vand.u32 %v1836, 65535
      %v1838 = vshrl.u32 %v1836, 16
      %v1840 = vmul.u32 %v1837, 14564
      %v1841 = vmul.u32 %v1837, 58254
      %v1842 = vmul.u32 %v1838, 14564
      %v1843 = vmul.u32 %v1838, 58254
      %v1844 = vshll.u32 %v1841, 16
      %v1845 = vshrl.u32 %v1841, 16
      %v1846 = vshll.u32 %v1842, 16
      %v1847 = vshrl.u32 %v1842, 16
      %vm1848 = vc.u32 %v1840, %v1844
      %v1849 = vsel %vm1848, 1, 0
      %v1850 = vadd.s32 %v1840, %v1844
      %v1851 = vadd.s32 %v1843, %v1849
      %vm1852 = vc.u32 %v1850, %v1846
      %v1853 = vsel %vm1852, 1, 0
      %v1854 = vadd.s32 %v1850, %v1846
      %v1855 = vadd.s32 %v1851, %v1853
      %v1856 = vadd.s32 %v1855, %v1845
      %v1857 = vadd.s32 %v1856, %v1847
      %v1858 = vshrl.u32 %v1857, 4
      %v1859 = vmul.u32 %v1858, 18
      %v1860 = vsub.s32 %v1836, %v1859
      %v1861 = vsub.s32 0, %v1860
      %v1862 = vsel %vm1834, %v1861, %v1860
      %vm1863 = vcmp.ne.s32.totalorder %v1659, 0
      %vm1864 = vcmp.ne.s32.totalorder %v1688, 0
      %vm1865 = vcmp.ne.s32.totalorder %v1717, 0
      %vm1866 = vcmp.ne.s32.totalorder %v1746, 0
      %vm1867 = vcmp.ne.s32.totalorder %v1775, 0
      %vm1868 = vcmp.ne.s32.totalorder %v1804, 0
      %vm1869 = vcmp.ne.s32.totalorder %v1833, 0
      %vm1870 = vcmp.ne.s32.totalorder %v1862, 0
      %vm1871 = vcmp.lt.s32.totalorder %v1659, 0
      %vm1872 = vcmp.lt.s32.totalorder %v1688, 0
      %vm1873 = vcmp.lt.s32.totalorder %v1717, 0
      %vm1874 = vcmp.lt.s32.totalorder %v1746, 0
      %vm1875 = vcmp.lt.s32.totalorder %v1775, 0
      %vm1876 = vcmp.lt.s32.totalorder %v1804, 0
      %vm1877 = vcmp.lt.s32.totalorder %v1833, 0
      %vm1878 = vcmp.lt.s32.totalorder %v1862, 0
      %vm1879 = vmand %vm1871, %vm1863
      %vm1880 = vmand %vm1872, %vm1864
      %vm1881 = vmand %vm1873, %vm1865
      %vm1882 = vmand %vm1874, %vm1866
      %vm1883 = vmand %vm1875, %vm1867
      %vm1884 = vmand %vm1876, %vm1868
      %vm1885 = vmand %vm1877, %vm1869
      %vm1886 = vmand %vm1878, %vm1870
      %v1887 = vadd.s32 %v1659, 18
      %v1888 = vadd.s32 %v1688, 18
      %v1889 = vadd.s32 %v1717, 18
      %v1890 = vadd.s32 %v1746, 18
      %v1891 = vadd.s32 %v1775, 18
      %v1892 = vadd.s32 %v1804, 18
      %v1893 = vadd.s32 %v1833, 18
      %v1894 = vadd.s32 %v1862, 18
      %v1895 = vsel %vm1879, %v1887, %v1659
      %v1896 = vsel %vm1880, %v1888, %v1688
      %v1897 = vsel %vm1881, %v1889, %v1717
      %v1898 = vsel %vm1882, %v1890, %v1746
      %v1899 = vsel %vm1883, %v1891, %v1775
      %v1900 = vsel %vm1884, %v1892, %v1804
      %v1901 = vsel %vm1885, %v1893, %v1833
      %v1902 = vsel %vm1886, %v1894, %v1862
      %vm1903 = vcmp.lt.s32.totalorder %v1895, 16
      %vm1904 = vcmp.lt.s32.totalorder %v1896, 16
      %vm1905 = vcmp.lt.s32.totalorder %v1897, 16
      %vm1906 = vcmp.lt.s32.totalorder %v1898, 16
      %vm1907 = vcmp.lt.s32.totalorder %v1899, 16
      %vm1908 = vcmp.lt.s32.totalorder %v1900, 16
      %vm1909 = vcmp.lt.s32.totalorder %v1901, 16
      %vm1910 = vcmp.lt.s32.totalorder %v1902, 16
      %vm1911 = vmand %vm1587, %vm1543
      %vm1912 = vmand %vm1588, %vm1544
      %vm1913 = vmand %vm1589, %vm1545
      %vm1914 = vmand %vm1590, %vm1546
      %vm1915 = vmand %vm1591, %vm1547
      %vm1916 = vmand %vm1592, %vm1548
      %vm1917 = vmand %vm1593, %vm1549
      %vm1918 = vmand %vm1594, %vm1550
      %vm1919 = vmand %vm1595, %vm1551
      %vm1920 = vmand %vm1596, %vm1552
      %vm1921 = vmand %vm1597, %vm1553
      %vm1922 = vmand %vm1598, %vm1554
      %vm1923 = vmand %vm1599, %vm1555
      %vm1924 = vmand %vm1600, %vm1556
      %vm1925 = vmand %vm1601, %vm1557
      %vm1926 = vmand %vm1602, %vm1558
      %vm1927 = vmand %vm1603, %vm1559
      %vm1928 = vmand %vm1604, %vm1560
      %vm1929 = vmand %vm1605, %vm1561
      %vm1930 = vmand %vm1606, %vm1562
      %vm1931 = vmand %vm1607, %vm1563
      %vm1932 = vmand %vm1608, %vm1564
      %vm1933 = vmand %vm1609, %vm1565
      %vm1934 = vmand %vm1610, %vm1566
      %vm1935 = vmand %vm1611, %vm1567
      %vm1936 = vmand %vm1612, %vm1568
      %vm1937 = vmand %vm1613, %vm1569
      %vm1938 = vmand %vm1614, %vm1570
      %vm1939 = vmand %vm1615, %vm1571
      %vm1940 = vmand %vm1616, %vm1572
      %vm1941 = vmand %vm1617, %vm1573
      %vm1942 = vmand %vm1618, %vm1574
      %vm1943 = vmand %vm1619, %vm1575
      %vm1944 = vmand %vm1620, %vm1576
      %vm1945 = vmand %vm1621, %vm1577
      %vm1946 = vmand %vm1622, %vm1578
      %vm1947 = vmand %vm1623, %vm1903
      %vm1948 = vmand %vm1624, %vm1904
      %vm1949 = vmand %vm1625, %vm1905
      %vm1950 = vmand %vm1626, %vm1906
      %vm1951 = vmand %vm1627, %vm1907
      %vm1952 = vmand %vm1628, %vm1908
      %vm1953 = vmand %vm1629, %vm1909
      %vm1954 = vmand %vm1630, %vm1910
      %1955 = vst [vmem:[#allocation2] sm:$0xf] 0
      %1956 = vst [vmem:[#allocation2 + $0x4] sm:$0xf] 0
      %1957 = vst [vmem:[#allocation2 + $0x8] sm:$0xf] 0
      %1958 = vst [vmem:[#allocation2 + $0xc] sm:$0xf] 0
      %1959 = vst [vmem:[#allocation2 + $0xa0] sm:$0xf] 0
      %1960 = vst [vmem:[#allocation2 + $0xa4] sm:$0xf] 0
      %1961 = vst [vmem:[#allocation2 + $0xa8] sm:$0xf] 0
      %1962 = vst [vmem:[#allocation2 + $0xac] sm:$0xf] 0
      %v1963 = vld [vmem:[%s275] sm:$0xf]
      %v1964 = vld [vmem:[%s275 + $0x4] sm:$0xf]
      %v1965 = vld [vmem:[%s275 + $0x8] sm:$0xf]
      %v1966 = vld [vmem:[%s275 + $0xc] sm:$0xf]
      %v1967 = vld [vmem:[%s275 + $0x10] sm:$0xf]
      %v1968 = vld [vmem:[%s275 + $0x14] sm:$0xf]
      %v1969 = vld [vmem:[%s275 + $0x18] sm:$0xf]
      %v1970 = vld [vmem:[%s275 + $0x1c] sm:$0xf]
      %v1971 = vld [vmem:[%s275 + $0x20] sm:$0xf]
      %v1972 = vld [vmem:[%s275 + $0x24] sm:$0xf]
      %v1973 = vld [vmem:[%s275 + $0x28] sm:$0xf]
      %v1974 = vld [vmem:[%s275 + $0x2c] sm:$0xf]
      %v1975 = vld [vmem:[%s275 + $0x30] sm:$0xf]
      %v1976 = vld [vmem:[%s275 + $0x34] sm:$0xf]
      %v1977 = vld [vmem:[%s275 + $0x38] sm:$0xf]
      %v1978 = vld [vmem:[%s275 + $0x3c] sm:$0xf]
      %v1979 = vld [vmem:[%s275 + $0x40] sm:$0xf]
      %v1980 = vld [vmem:[%s275 + $0x44] sm:$0xf]
      %v1981 = vld [vmem:[%s275 + $0x48] sm:$0xf]
      %v1982 = vld [vmem:[%s275 + $0x4c] sm:$0xf]
      %v1983 = vld [vmem:[%s275 + $0x50] sm:$0xf]
      %v1984 = vld [vmem:[%s275 + $0x54] sm:$0xf]
      %v1985 = vld [vmem:[%s275 + $0x58] sm:$0xf]
      %v1986 = vld [vmem:[%s275 + $0x5c] sm:$0xf]
      %v1987 = vld [vmem:[%s275 + $0x60] sm:$0xf]
      %v1988 = vld [vmem:[%s275 + $0x64] sm:$0xf]
      %v1989 = vld [vmem:[%s275 + $0x68] sm:$0xf]
      %v1990 = vld [vmem:[%s275 + $0x6c] sm:$0xf]
      %v1991 = vld [vmem:[%s275 + $0x70] sm:$0xf]
      %v1992 = vld [vmem:[%s275 + $0x74] sm:$0xf]
      %v1993 = vld [vmem:[%s275 + $0x78] sm:$0xf]
      %v1994 = vld [vmem:[%s275 + $0x7c] sm:$0xf]
      %v1995 = vld [vmem:[%s275 + $0x80] sm:$0xf]
      %v1996 = vld [vmem:[%s275 + $0x84] sm:$0xf]
      %v1997 = vld [vmem:[%s275 + $0x88] sm:$0xf]
      %v1998 = vld [vmem:[%s275 + $0x8c] sm:$0xf]
      %v1999 = vld [vmem:[%s1] sm:$0xf]
      %v2000 = vld [vmem:[%s1 + $0x4] sm:$0xf]
      %v2001 = vld [vmem:[%s1 + $0x8] sm:$0xf]
      %v2002 = vld [vmem:[%s1 + $0xc] sm:$0xf]
      %v2003 = vld [vmem:[%s1 + $0x10] sm:$0xf]
      %v2004 = vld [vmem:[%s1 + $0x14] sm:$0xf]
      %v2005 = vld [vmem:[%s1 + $0x18] sm:$0xf]
      %v2006 = vld [vmem:[%s1 + $0x1c] sm:$0xf]
      %v2007 = vld [vmem:[%s1 + $0x20] sm:$0xf]
      %v2008 = vld [vmem:[%s1 + $0x24] sm:$0xf]
      %v2009 = vld [vmem:[%s1 + $0x28] sm:$0xf]
      %v2010 = vld [vmem:[%s1 + $0x2c] sm:$0xf]
      %v2011 = vld [vmem:[%s1 + $0x30] sm:$0xf]
      %v2012 = vld [vmem:[%s1 + $0x34] sm:$0xf]
      %v2013 = vld [vmem:[%s1 + $0x38] sm:$0xf]
      %v2014 = vld [vmem:[%s1 + $0x3c] sm:$0xf]
      %v2015 = vld [vmem:[%s2] sm:$0x1]
      %v2017 = vperm.slane %v2015, 0
      %v2055 = vunpack.c.l.b16 %v1963
      %v2056 = vunpack.c.l.b16 %v1964
      %v2057 = vunpack.c.l.b16 %v1965
      %v2058 = vunpack.c.l.b16 %v1966
      %v2059 = vunpack.c.l.b16 %v1967
      %v2060 = vunpack.c.l.b16 %v1968
      %v2061 = vunpack.c.l.b16 %v1969
      %v2062 = vunpack.c.l.b16 %v1970
      %v2063 = vunpack.c.l.b16 %v1971
      %v2064 = vunpack.c.l.b16 %v1972
      %v2065 = vunpack.c.l.b16 %v1973
      %v2066 = vunpack.c.l.b16 %v1974
      %v2067 = vunpack.c.l.b16 %v1975
      %v2068 = vunpack.c.l.b16 %v1976
      %v2069 = vunpack.c.l.b16 %v1977
      %v2070 = vunpack.c.l.b16 %v1978
      %v2071 = vunpack.c.l.b16 %v1979
      %v2072 = vunpack.c.l.b16 %v1980
      %v2073 = vunpack.c.l.b16 %v1981
      %v2074 = vunpack.c.l.b16 %v1982
      %v2075 = vunpack.c.l.b16 %v1983
      %v2076 = vunpack.c.l.b16 %v1984
      %v2077 = vunpack.c.l.b16 %v1985
      %v2078 = vunpack.c.l.b16 %v1986
      %v2079 = vunpack.c.l.b16 %v1987
      %v2080 = vunpack.c.l.b16 %v1988
      %v2081 = vunpack.c.l.b16 %v1989
      %v2082 = vunpack.c.l.b16 %v1990
      %v2083 = vunpack.c.l.b16 %v1991
      %v2084 = vunpack.c.l.b16 %v1992
      %v2085 = vunpack.c.l.b16 %v1993
      %v2086 = vunpack.c.l.b16 %v1994
      %v2087 = vunpack.c.l.b16 %v1995
      %v2088 = vunpack.c.l.b16 %v1996
      %v2089 = vunpack.c.l.b16 %v1997
      %v2090 = vunpack.c.l.b16 %v1998
      %v2091 = vpack.c.b16 %v2056, %v2055
      %v2092 = vpack.c.b16 %v2058, %v2057
      %v2093 = vpack.c.b16 %v2060, %v2059
      %v2094 = vpack.c.b16 %v2062, %v2061
      %v2095 = vpack.c.b16 %v2064, %v2063
      %v2096 = vpack.c.b16 %v2066, %v2065
      %v2097 = vpack.c.b16 %v2068, %v2067
      %v2098 = vpack.c.b16 %v2070, %v2069
      %v2099 = vpack.c.b16 %v2072, %v2071
      %v2100 = vpack.c.b16 %v2074, %v2073
      %v2101 = vpack.c.b16 %v2076, %v2075
      %v2102 = vpack.c.b16 %v2078, %v2077
      %v2103 = vpack.c.b16 %v2080, %v2079
      %v2104 = vpack.c.b16 %v2082, %v2081
      %v2105 = vpack.c.b16 %v2084, %v2083
      %v2106 = vpack.c.b16 %v2086, %v2085
      %v2107 = vpack.c.b16 %v2088, %v2087
      %v2108 = vpack.c.b16 %v2090, %v2089
      %v2143 = vunpack.c.l.b16 %v1999
      %v2144 = vunpack.c.l.b16 %v2000
      %v2145 = vunpack.c.l.b16 %v2001
      %v2146 = vunpack.c.l.b16 %v2002
      %v2147 = vunpack.c.l.b16 %v2003
      %v2148 = vunpack.c.l.b16 %v2004
      %v2149 = vunpack.c.l.b16 %v2005
      %v2150 = vunpack.c.l.b16 %v2006
      %v2151 = vunpack.c.l.b16 %v2007
      %v2152 = vunpack.c.l.b16 %v2008
      %v2153 = vunpack.c.l.b16 %v2009
      %v2154 = vunpack.c.l.b16 %v2010
      %v2155 = vunpack.c.l.b16 %v2011
      %v2156 = vunpack.c.l.b16 %v2012
      %v2157 = vunpack.c.l.b16 %v2013
      %v2158 = vunpack.c.l.b16 %v2014
      %v2159 = vpack.c.b16 %v2144, %v2143
      %v2160 = vpack.c.b16 %v2146, %v2145
      %v2161 = vpack.c.b16 %v2148, %v2147
      %v2162 = vpack.c.b16 %v2150, %v2149
      %v2163 = vpack.c.b16 %v2152, %v2151
      %v2164 = vpack.c.b16 %v2154, %v2153
      %v2165 = vpack.c.b16 %v2156, %v2155
      %v2166 = vpack.c.b16 %v2158, %v2157
      %2175 = vmatpush.bf16.msra.mxu0 %v2166
      %2176 = vmatpush.bf16.msra.mxu0 %v2165
      %2177 = vmatpush.bf16.msra.mxu0 %v2164
      %2178 = vmatpush.bf16.msra.mxu0 %v2163
      %2179 = vmatpush.bf16.msra.mxu0 %v2162
      %2180 = vmatpush.bf16.msra.mxu0 %v2161
      %2181 = vmatpush.bf16.msra.mxu0 %v2160
      %2182 = vmatpush.bf16.msra.mxu0 %v2159
      %2183 = vmatmul.bf16.gmra.mxu0 %v2091
      %v2184 = vpop.f32.mrf.mxu0
      %v2185 = vadd.f32 %v2017, %v2184
      %v2186 = vpop.f32.mrf.mxu0
      %v2187 = vadd.f32 %v2017, %v2186
      %2188 = vmatmul.bf16.gmra.mxu0 %v2092
      %v2189 = vpop.f32.mrf.mxu0
      %v2190 = vadd.f32 %v2017, %v2189
      %v2191 = vpop.f32.mrf.mxu0
      %v2192 = vadd.f32 %v2017, %v2191
      %2193 = vmatmul.bf16.gmra.mxu0 %v2093
      %v2194 = vpop.f32.mrf.mxu0
      %v2195 = vadd.f32 %v2017, %v2194
      %v2196 = vpop.f32.mrf.mxu0
      %v2197 = vadd.f32 %v2017, %v2196
      %2198 = vmatmul.bf16.gmra.mxu0 %v2094
      %v2199 = vpop.f32.mrf.mxu0
      %v2200 = vadd.f32 %v2017, %v2199
      %v2201 = vpop.f32.mrf.mxu0
      %v2202 = vadd.f32 %v2017, %v2201
      %2203 = vmatmul.bf16.gmra.mxu0 %v2095
      %v2204 = vpop.f32.mrf.mxu0
      %v2205 = vadd.f32 %v2017, %v2204
      %v2206 = vpop.f32.mrf.mxu0
      %v2207 = vadd.f32 %v2017, %v2206
      %2208 = vmatmul.bf16.gmra.mxu0 %v2096
      %v2209 = vpop.f32.mrf.mxu0
      %v2210 = vadd.f32 %v2017, %v2209
      %v2211 = vpop.f32.mrf.mxu0
      %v2212 = vadd.f32 %v2017, %v2211
      %2213 = vmatmul.bf16.gmra.mxu0 %v2097
      %v2214 = vpop.f32.mrf.mxu0
      %v2215 = vadd.f32 %v2017, %v2214
      %v2216 = vpop.f32.mrf.mxu0
      %v2217 = vadd.f32 %v2017, %v2216
      %2218 = vmatmul.bf16.gmra.mxu0 %v2098
      %v2219 = vpop.f32.mrf.mxu0
      %v2220 = vadd.f32 %v2017, %v2219
      %v2221 = vpop.f32.mrf.mxu0
      %v2222 = vadd.f32 %v2017, %v2221
      %2223 = vmatmul.bf16.gmra.mxu0 %v2099
      %v2224 = vpop.f32.mrf.mxu0
      %v2225 = vadd.f32 %v2017, %v2224
      %v2226 = vpop.f32.mrf.mxu0
      %v2227 = vadd.f32 %v2017, %v2226
      %2228 = vmatmul.bf16.gmra.mxu0 %v2100
      %v2229 = vpop.f32.mrf.mxu0
      %v2230 = vadd.f32 %v2017, %v2229
      %v2231 = vpop.f32.mrf.mxu0
      %v2232 = vadd.f32 %v2017, %v2231
      %2233 = vmatmul.bf16.gmra.mxu0 %v2101
      %v2234 = vpop.f32.mrf.mxu0
      %v2235 = vadd.f32 %v2017, %v2234
      %v2236 = vpop.f32.mrf.mxu0
      %v2237 = vadd.f32 %v2017, %v2236
      %2238 = vmatmul.bf16.gmra.mxu0 %v2102
      %v2239 = vpop.f32.mrf.mxu0
      %v2240 = vadd.f32 %v2017, %v2239
      %v2241 = vpop.f32.mrf.mxu0
      %v2242 = vadd.f32 %v2017, %v2241
      %2243 = vmatmul.bf16.gmra.mxu0 %v2103
      %v2244 = vpop.f32.mrf.mxu0
      %v2245 = vadd.f32 %v2017, %v2244
      %v2246 = vpop.f32.mrf.mxu0
      %v2247 = vadd.f32 %v2017, %v2246
      %2248 = vmatmul.bf16.gmra.mxu0 %v2104
      %v2249 = vpop.f32.mrf.mxu0
      %v2250 = vadd.f32 %v2017, %v2249
      %v2251 = vpop.f32.mrf.mxu0
      %v2252 = vadd.f32 %v2017, %v2251
      %2253 = vmatmul.bf16.gmra.mxu0 %v2105
      %v2254 = vpop.f32.mrf.mxu0
      %v2255 = vadd.f32 %v2017, %v2254
      %v2256 = vpop.f32.mrf.mxu0
      %v2257 = vadd.f32 %v2017, %v2256
      %2258 = vmatmul.bf16.gmra.mxu0 %v2106
      %v2259 = vpop.f32.mrf.mxu0
      %v2260 = vadd.f32 %v2017, %v2259
      %v2261 = vpop.f32.mrf.mxu0
      %v2262 = vadd.f32 %v2017, %v2261
      %2263 = vmatmul.bf16.gmra.mxu0 %v2107
      %v2264 = vpop.f32.mrf.mxu0
      %v2265 = vadd.f32 %v2017, %v2264
      %v2266 = vpop.f32.mrf.mxu0
      %v2267 = vadd.f32 %v2017, %v2266
      %2268 = vmatmul.bf16.gmra.mxu0 %v2108
      %v2269 = vpop.f32.mrf.mxu0
      %v2270 = vadd.f32 %v2017, %v2269
      %v2271 = vpop.f32.mrf.mxu0
      %v2272 = vadd.f32 %v2017, %v2271
      %2273 = vdwg.mxu0
      %v2274 = vmax.f32 %v2185, 0.0
      %v2275 = vmax.f32 %v2187, 0.0
      %v2276 = vmax.f32 %v2190, 0.0
      %v2277 = vmax.f32 %v2192, 0.0
      %v2278 = vmax.f32 %v2195, 0.0
      %v2279 = vmax.f32 %v2197, 0.0
      %v2280 = vmax.f32 %v2200, 0.0
      %v2281 = vmax.f32 %v2202, 0.0
      %v2282 = vmax.f32 %v2205, 0.0
      %v2283 = vmax.f32 %v2207, 0.0
      %v2284 = vmax.f32 %v2210, 0.0
      %v2285 = vmax.f32 %v2212, 0.0
      %v2286 = vmax.f32 %v2215, 0.0
      %v2287 = vmax.f32 %v2217, 0.0
      %v2288 = vmax.f32 %v2220, 0.0
      %v2289 = vmax.f32 %v2222, 0.0
      %v2290 = vmax.f32 %v2225, 0.0
      %v2291 = vmax.f32 %v2227, 0.0
      %v2292 = vmax.f32 %v2230, 0.0
      %v2293 = vmax.f32 %v2232, 0.0
      %v2294 = vmax.f32 %v2235, 0.0
      %v2295 = vmax.f32 %v2237, 0.0
      %v2296 = vmax.f32 %v2240, 0.0
      %v2297 = vmax.f32 %v2242, 0.0
      %v2298 = vmax.f32 %v2245, 0.0
      %v2299 = vmax.f32 %v2247, 0.0
      %v2300 = vmax.f32 %v2250, 0.0
      %v2301 = vmax.f32 %v2252, 0.0
      %v2302 = vmax.f32 %v2255, 0.0
      %v2303 = vmax.f32 %v2257, 0.0
      %v2304 = vmax.f32 %v2260, 0.0
      %v2305 = vmax.f32 %v2262, 0.0
      %v2306 = vmax.f32 %v2265, 0.0
      %v2307 = vmax.f32 %v2267, 0.0
      %v2308 = vmax.f32 %v2270, 0.0
      %v2309 = vmax.f32 %v2272, 0.0
      %v2310 = vsel %vm1543, 1, 0
      %v2311 = vsel %vm1544, 1, 0
      %v2312 = vsel %vm1545, 1, 0
      %v2313 = vsel %vm1546, 1, 0
      %v2314 = vsel %vm1547, 1, 0
      %v2315 = vsel %vm1548, 1, 0
      %v2316 = vsel %vm1549, 1, 0
      %v2317 = vsel %vm1550, 1, 0
      %v2318 = vsel %vm1551, 1, 0
      %v2319 = vsel %vm1552, 1, 0
      %v2320 = vsel %vm1553, 1, 0
      %v2321 = vsel %vm1554, 1, 0
      %v2322 = vsel %vm1555, 1, 0
      %v2323 = vsel %vm1556, 1, 0
      %v2324 = vsel %vm1557, 1, 0
      %v2325 = vsel %vm1558, 1, 0
      %v2326 = vsel %vm1559, 1, 0
      %v2327 = vsel %vm1560, 1, 0
      %v2328 = vsel %vm1561, 1, 0
      %v2329 = vsel %vm1562, 1, 0
      %v2330 = vsel %vm1563, 1, 0
      %v2331 = vsel %vm1564, 1, 0
      %v2332 = vsel %vm1565, 1, 0
      %v2333 = vsel %vm1566, 1, 0
      %v2334 = vsel %vm1567, 1, 0
      %v2335 = vsel %vm1568, 1, 0
      %v2336 = vsel %vm1569, 1, 0
      %v2337 = vsel %vm1570, 1, 0
      %v2338 = vsel %vm1571, 1, 0
      %v2339 = vsel %vm1572, 1, 0
      %v2340 = vsel %vm1573, 1, 0
      %v2341 = vsel %vm1574, 1, 0
      %v2342 = vsel %vm1575, 1, 0
      %v2343 = vsel %vm1576, 1, 0
      %v2344 = vsel %vm1577, 1, 0
      %v2345 = vsel %vm1578, 1, 0
      %vm2346 = vcmp.eq.s32.totalorder %v2310, 1
      %vm2347 = vcmp.eq.s32.totalorder %v2311, 1
      %vm2348 = vcmp.eq.s32.totalorder %v2312, 1
      %vm2349 = vcmp.eq.s32.totalorder %v2313, 1
      %vm2350 = vcmp.eq.s32.totalorder %v2314, 1
      %vm2351 = vcmp.eq.s32.totalorder %v2315, 1
      %vm2352 = vcmp.eq.s32.totalorder %v2316, 1
      %vm2353 = vcmp.eq.s32.totalorder %v2317, 1
      %vm2354 = vcmp.eq.s32.totalorder %v2318, 1
      %vm2355 = vcmp.eq.s32.totalorder %v2319, 1
      %vm2356 = vcmp.eq.s32.totalorder %v2320, 1
      %vm2357 = vcmp.eq.s32.totalorder %v2321, 1
      %vm2358 = vcmp.eq.s32.totalorder %v2322, 1
      %vm2359 = vcmp.eq.s32.totalorder %v2323, 1
      %vm2360 = vcmp.eq.s32.totalorder %v2324, 1
      %vm2361 = vcmp.eq.s32.totalorder %v2325, 1
      %vm2362 = vcmp.eq.s32.totalorder %v2326, 1
      %vm2363 = vcmp.eq.s32.totalorder %v2327, 1
      %vm2364 = vcmp.eq.s32.totalorder %v2328, 1
      %vm2365 = vcmp.eq.s32.totalorder %v2329, 1
      %vm2366 = vcmp.eq.s32.totalorder %v2330, 1
      %vm2367 = vcmp.eq.s32.totalorder %v2331, 1
      %vm2368 = vcmp.eq.s32.totalorder %v2332, 1
      %vm2369 = vcmp.eq.s32.totalorder %v2333, 1
      %vm2370 = vcmp.eq.s32.totalorder %v2334, 1
      %vm2371 = vcmp.eq.s32.totalorder %v2335, 1
      %vm2372 = vcmp.eq.s32.totalorder %v2336, 1
      %vm2373 = vcmp.eq.s32.totalorder %v2337, 1
      %vm2374 = vcmp.eq.s32.totalorder %v2338, 1
      %vm2375 = vcmp.eq.s32.totalorder %v2339, 1
      %vm2376 = vcmp.eq.s32.totalorder %v2340, 1
      %vm2377 = vcmp.eq.s32.totalorder %v2341, 1
      %vm2378 = vcmp.eq.s32.totalorder %v2342, 1
      %vm2379 = vcmp.eq.s32.totalorder %v2343, 1
      %vm2380 = vcmp.eq.s32.totalorder %v2344, 1
      %vm2381 = vcmp.eq.s32.totalorder %v2345, 1
      %v2382 = vsel %vm2346, %v2274, 0.0
      %v2383 = vsel %vm2347, %v2275, 0.0
      %v2384 = vsel %vm2348, %v2276, 0.0
      %v2385 = vsel %vm2349, %v2277, 0.0
      %v2386 = vsel %vm2350, %v2278, 0.0
      %v2387 = vsel %vm2351, %v2279, 0.0
      %v2388 = vsel %vm2352, %v2280, 0.0
      %v2389 = vsel %vm2353, %v2281, 0.0
      %v2390 = vsel %vm2354, %v2282, 0.0
      %v2391 = vsel %vm2355, %v2283, 0.0
      %v2392 = vsel %vm2356, %v2284, 0.0
      %v2393 = vsel %vm2357, %v2285, 0.0
      %v2394 = vsel %vm2358, %v2286, 0.0
      %v2395 = vsel %vm2359, %v2287, 0.0
      %v2396 = vsel %vm2360, %v2288, 0.0
      %v2397 = vsel %vm2361, %v2289, 0.0
      %v2398 = vsel %vm2362, %v2290, 0.0
      %v2399 = vsel %vm2363, %v2291, 0.0
      %v2400 = vsel %vm2364, %v2292, 0.0
      %v2401 = vsel %vm2365, %v2293, 0.0
      %v2402 = vsel %vm2366, %v2294, 0.0
      %v2403 = vsel %vm2367, %v2295, 0.0
      %v2404 = vsel %vm2368, %v2296, 0.0
      %v2405 = vsel %vm2369, %v2297, 0.0
      %v2406 = vsel %vm2370, %v2298, 0.0
      %v2407 = vsel %vm2371, %v2299, 0.0
      %v2408 = vsel %vm2372, %v2300, 0.0
      %v2409 = vsel %vm2373, %v2301, 0.0
      %v2410 = vsel %vm2374, %v2302, 0.0
      %v2411 = vsel %vm2375, %v2303, 0.0
      %v2412 = vsel %vm2376, %v2304, 0.0
      %v2413 = vsel %vm2377, %v2305, 0.0
      %v2414 = vsel %vm2378, %v2306, 0.0
      %v2415 = vsel %vm2379, %v2307, 0.0
      %v2416 = vsel %vm2380, %v2308, 0.0
      %v2417 = vsel %vm2381, %v2309, 0.0
      %v2418 = vpack.c.bf16 %v2382, %v2382
      %v2419 = vpack.c.bf16 %v2383, %v2383
      %v2420 = vpack.c.bf16 %v2384, %v2384
      %v2421 = vpack.c.bf16 %v2385, %v2385
      %v2422 = vpack.c.bf16 %v2386, %v2386
      %v2423 = vpack.c.bf16 %v2387, %v2387
      %v2424 = vpack.c.bf16 %v2388, %v2388
      %v2425 = vpack.c.bf16 %v2389, %v2389
      %v2426 = vpack.c.bf16 %v2390, %v2390
      %v2427 = vpack.c.bf16 %v2391, %v2391
      %v2428 = vpack.c.bf16 %v2392, %v2392
      %v2429 = vpack.c.bf16 %v2393, %v2393
      %v2430 = vpack.c.bf16 %v2394, %v2394
      %v2431 = vpack.c.bf16 %v2395, %v2395
      %v2432 = vpack.c.bf16 %v2396, %v2396
      %v2433 = vpack.c.bf16 %v2397, %v2397
      %v2434 = vpack.c.bf16 %v2398, %v2398
      %v2435 = vpack.c.bf16 %v2399, %v2399
      %v2436 = vpack.c.bf16 %v2400, %v2400
      %v2437 = vpack.c.bf16 %v2401, %v2401
      %v2438 = vpack.c.bf16 %v2402, %v2402
      %v2439 = vpack.c.bf16 %v2403, %v2403
      %v2440 = vpack.c.bf16 %v2404, %v2404
      %v2441 = vpack.c.bf16 %v2405, %v2405
      %v2442 = vpack.c.bf16 %v2406, %v2406
      %v2443 = vpack.c.bf16 %v2407, %v2407
      %v2444 = vpack.c.bf16 %v2408, %v2408
      %v2445 = vpack.c.bf16 %v2409, %v2409
      %v2446 = vpack.c.bf16 %v2410, %v2410
      %v2447 = vpack.c.bf16 %v2411, %v2411
      %v2448 = vpack.c.bf16 %v2412, %v2412
      %v2449 = vpack.c.bf16 %v2413, %v2413
      %v2450 = vpack.c.bf16 %v2414, %v2414
      %v2451 = vpack.c.bf16 %v2415, %v2415
      %v2452 = vpack.c.bf16 %v2416, %v2416
      %v2453 = vpack.c.bf16 %v2417, %v2417
      %2454 = vst [vmem:[#allocation2 + $0x10] sm:$0xf] %v2418
      %2455 = vst [vmem:[#allocation2 + $0x14] sm:$0xf] %v2419
      %2456 = vst [vmem:[#allocation2 + $0x18] sm:$0xf] %v2420
      %2457 = vst [vmem:[#allocation2 + $0x1c] sm:$0xf] %v2421
      %2458 = vst [vmem:[#allocation2 + $0x20] sm:$0xf] %v2422
      %2459 = vst [vmem:[#allocation2 + $0x24] sm:$0xf] %v2423
      %2460 = vst [vmem:[#allocation2 + $0x28] sm:$0xf] %v2424
      %2461 = vst [vmem:[#allocation2 + $0x2c] sm:$0xf] %v2425
      %2462 = vst [vmem:[#allocation2 + $0x30] sm:$0xf] %v2426
      %2463 = vst [vmem:[#allocation2 + $0x34] sm:$0xf] %v2427
      %2464 = vst [vmem:[#allocation2 + $0x38] sm:$0xf] %v2428
      %2465 = vst [vmem:[#allocation2 + $0x3c] sm:$0xf] %v2429
      %2466 = vst [vmem:[#allocation2 + $0x40] sm:$0xf] %v2430
      %2467 = vst [vmem:[#allocation2 + $0x44] sm:$0xf] %v2431
      %2468 = vst [vmem:[#allocation2 + $0x48] sm:$0xf] %v2432
      %2469 = vst [vmem:[#allocation2 + $0x4c] sm:$0xf] %v2433
      %2470 = vst [vmem:[#allocation2 + $0x50] sm:$0xf] %v2434
      %2471 = vst [vmem:[#allocation2 + $0x54] sm:$0xf] %v2435
      %2472 = vst [vmem:[#allocation2 + $0x58] sm:$0xf] %v2436
      %2473 = vst [vmem:[#allocation2 + $0x5c] sm:$0xf] %v2437
      %2474 = vst [vmem:[#allocation2 + $0x60] sm:$0xf] %v2438
      %2475 = vst [vmem:[#allocation2 + $0x64] sm:$0xf] %v2439
      %2476 = vst [vmem:[#allocation2 + $0x68] sm:$0xf] %v2440
      %2477 = vst [vmem:[#allocation2 + $0x6c] sm:$0xf] %v2441
      %2478 = vst [vmem:[#allocation2 + $0x70] sm:$0xf] %v2442
      %2479 = vst [vmem:[#allocation2 + $0x74] sm:$0xf] %v2443
      %2480 = vst [vmem:[#allocation2 + $0x78] sm:$0xf] %v2444
      %2481 = vst [vmem:[#allocation2 + $0x7c] sm:$0xf] %v2445
      %2482 = vst [vmem:[#allocation2 + $0x80] sm:$0xf] %v2446
      %2483 = vst [vmem:[#allocation2 + $0x84] sm:$0xf] %v2447
      %2484 = vst [vmem:[#allocation2 + $0x88] sm:$0xf] %v2448
      %2485 = vst [vmem:[#allocation2 + $0x8c] sm:$0xf] %v2449
      %2486 = vst [vmem:[#allocation2 + $0x90] sm:$0xf] %v2450
      %2487 = vst [vmem:[#allocation2 + $0x94] sm:$0xf] %v2451
      %2488 = vst [vmem:[#allocation2 + $0x98] sm:$0xf] %v2452
      %2489 = vst [vmem:[#allocation2 + $0x9c] sm:$0xf] %v2453
      %2490 = vst [vmem:[#allocation2 + $0xb0] sm:$0xf] 0
      %2491 = vst [vmem:[#allocation2 + $0xb4] sm:$0xf] 0
      %2492 = vst [vmem:[#allocation2 + $0xb8] sm:$0xf] 0
      %2493 = vst [vmem:[#allocation2 + $0xbc] sm:$0xf] 0
      %2494 = vst [vmem:[#allocation2 + $0xc0] sm:$0xf] 0
      %2495 = vst [vmem:[#allocation2 + $0xc4] sm:$0xf] 0
      %2496 = vst [vmem:[#allocation2 + $0xc8] sm:$0xf] 0
      %2497 = vst [vmem:[#allocation2 + $0xcc] sm:$0xf] 0
      %v2498 = vld [vmem:[#allocation2 + $0x4] sm:$0xc]
      %v2499 = vld [vmem:[#allocation2 + $0x8] sm:$0xf]
      %v2500 = vld [vmem:[#allocation2 + $0xc] sm:$0xf]
      %v2501 = vld [vmem:[#allocation2 + $0x10] sm:$0xf]
      %v2502 = vld [vmem:[#allocation2 + $0x14] sm:$0xf]
      %v2503 = vld [vmem:[#allocation2 + $0x18] sm:$0xf]
      %v2504 = vld [vmem:[#allocation2 + $0x1c] sm:$0xf]
      %v2505 = vld [vmem:[#allocation2 + $0x20] sm:$0xf]
      %v2506 = vld [vmem:[#allocation2 + $0x24] sm:$0xf]
      %v2507 = vld [vmem:[#allocation2 + $0x28] sm:$0xf]
      %v2508 = vld [vmem:[#allocation2 + $0x2c] sm:$0xf]
      %v2509 = vld [vmem:[#allocation2 + $0x30] sm:$0xf]
      %v2510 = vld [vmem:[#allocation2 + $0x34] sm:$0xf]
      %v2511 = vld [vmem:[#allocation2 + $0x38] sm:$0xf]
      %v2512 = vld [vmem:[#allocation2 + $0x3c] sm:$0xf]
      %v2513 = vld [vmem:[#allocation2 + $0x40] sm:$0xf]
      %v2514 = vld [vmem:[#allocation2 + $0x44] sm:$0xf]
      %v2515 = vld [vmem:[#allocation2 + $0x48] sm:$0xf]
      %v2516 = vld [vmem:[#allocation2 + $0x4c] sm:$0xf]
      %v2517 = vld [vmem:[#allocation2 + $0x50] sm:$0xf]
      %v2518 = vld [vmem:[#allocation2 + $0x54] sm:$0xf]
      %v2519 = vld [vmem:[#allocation2 + $0x58] sm:$0xf]
      %v2520 = vld [vmem:[#allocation2 + $0x5c] sm:$0xf]
      %v2521 = vld [vmem:[#allocation2 + $0x60] sm:$0xf]
      %v2522 = vld [vmem:[#allocation2 + $0x64] sm:$0xf]
      %v2523 = vld [vmem:[#allocation2 + $0x68] sm:$0xf]
      %v2524 = vld [vmem:[#allocation2 + $0x6c] sm:$0xf]
      %v2525 = vld [vmem:[#allocation2 + $0x70] sm:$0xf]
      %v2526 = vld [vmem:[#allocation2 + $0x74] sm:$0xf]
      %v2527 = vld [vmem:[#allocation2 + $0x78] sm:$0xf]
      %v2528 = vld [vmem:[#allocation2 + $0x7c] sm:$0xf]
      %v2529 = vld [vmem:[#allocation2 + $0x80] sm:$0xf]
      %v2530 = vld [vmem:[#allocation2 + $0x84] sm:$0xf]
      %v2531 = vld [vmem:[#allocation2 + $0x88] sm:$0xf]
      %v2532 = vld [vmem:[#allocation2 + $0x8c] sm:$0xf]
      %v2533 = vld [vmem:[#allocation2 + $0x90] sm:$0xf]
      %v2534 = vld [vmem:[#allocation2 + $0x94] sm:$0xf]
      %v2535 = vld [vmem:[#allocation2 + $0x98] sm:$0xf]
      %v2536 = vld [vmem:[#allocation2 + $0x9c] sm:$0xf]
      %v2537 = vld [vmem:[#allocation2 + $0xa0] sm:$0xf]
      %v2538 = vld [vmem:[#allocation2 + $0xa4] sm:$0xf]
      %v2539 = vld [vmem:[#allocation2 + $0xa8] sm:$0xf]
      %v2540 = vld [vmem:[#allocation2 + $0xac] sm:$0xf]
      %v2541 = vld [vmem:[#allocation2 + $0xb0] sm:$0xf]
      %v2542 = vld [vmem:[#allocation2 + $0xb4] sm:$0x7]
      %v2543 = vld [vmem:[%s3] sm:$0xf]
      %v2544 = vld [vmem:[%s3 + $0x4] sm:$0xf]
      %v2545 = vld [vmem:[%s3 + $0x8] sm:$0xf]
      %v2546 = vld [vmem:[%s3 + $0xc] sm:$0xf]
      %v2547 = vld [vmem:[%s3 + $0x10] sm:$0xf]
      %v2548 = vld [vmem:[%s3 + $0x14] sm:$0xf]
      %v2549 = vld [vmem:[%s3 + $0x18] sm:$0xf]
      %v2550 = vld [vmem:[%s3 + $0x1c] sm:$0xf]
      %v2551 = vld [vmem:[%s3 + $0x20] sm:$0xf]
      %v2552 = vld [vmem:[%s3 + $0x24] sm:$0xf]
      %v2553 = vld [vmem:[%s3 + $0x28] sm:$0xf]
      %v2554 = vld [vmem:[%s3 + $0x2c] sm:$0xf]
      %v2555 = vld [vmem:[%s3 + $0x30] sm:$0xf]
      %v2556 = vld [vmem:[%s3 + $0x34] sm:$0xf]
      %v2557 = vld [vmem:[%s3 + $0x38] sm:$0xf]
      %v2558 = vld [vmem:[%s3 + $0x3c] sm:$0xf]
      %v2604 = vunpack.c.l.b16 %v2498
      %v2605 = vunpack.c.l.b16 %v2499
      %v2606 = vunpack.c.l.b16 %v2500
      %v2607 = vunpack.c.l.b16 %v2501
      %v2608 = vunpack.c.l.b16 %v2502
      %v2609 = vunpack.c.l.b16 %v2503
      %v2610 = vunpack.c.l.b16 %v2504
      %v2611 = vunpack.c.l.b16 %v2505
      %v2612 = vunpack.c.l.b16 %v2506
      %v2613 = vunpack.c.l.b16 %v2507
      %v2614 = vunpack.c.l.b16 %v2508
      %v2615 = vunpack.c.l.b16 %v2509
      %v2616 = vunpack.c.l.b16 %v2510
      %v2617 = vunpack.c.l.b16 %v2511
      %v2618 = vunpack.c.l.b16 %v2512
      %v2619 = vunpack.c.l.b16 %v2513
      %v2620 = vunpack.c.l.b16 %v2514
      %v2621 = vunpack.c.l.b16 %v2515
      %v2622 = vunpack.c.l.b16 %v2516
      %v2623 = vunpack.c.l.b16 %v2517
      %v2624 = vunpack.c.l.b16 %v2518
      %v2625 = vunpack.c.l.b16 %v2519
      %v2626 = vunpack.c.l.b16 %v2520
      %v2627 = vunpack.c.l.b16 %v2521
      %v2628 = vunpack.c.l.b16 %v2522
      %v2629 = vunpack.c.l.b16 %v2523
      %v2630 = vunpack.c.l.b16 %v2524
      %v2631 = vunpack.c.l.b16 %v2525
      %v2632 = vunpack.c.l.b16 %v2526
      %v2633 = vunpack.c.l.b16 %v2527
      %v2634 = vunpack.c.l.b16 %v2528
      %v2635 = vunpack.c.l.b16 %v2529
      %v2636 = vunpack.c.l.b16 %v2530
      %v2637 = vunpack.c.l.b16 %v2531
      %v2638 = vunpack.c.l.b16 %v2532
      %v2639 = vunpack.c.l.b16 %v2533
      %v2640 = vunpack.c.l.b16 %v2534
      %v2641 = vunpack.c.l.b16 %v2535
      %v2642 = vunpack.c.l.b16 %v2536
      %v2643 = vunpack.c.l.b16 %v2537
      %v2644 = vunpack.c.l.b16 %v2538
      %v2645 = vunpack.c.l.b16 %v2539
      %v2646 = vunpack.c.l.b16 %v2540
      %v2647 = vunpack.c.l.b16 %v2541
      %v2648 = vunpack.c.l.b16 %v2542
      %v2649 = vpack.c.b16 %v2605, %v2604
      %v2650 = vpack.c.b16 %v2607, %v2606
      %v2651 = vpack.c.b16 %v2609, %v2608
      %v2652 = vpack.c.b16 %v2611, %v2610
      %v2653 = vpack.c.b16 %v2613, %v2612
      %v2654 = vpack.c.b16 %v2615, %v2614
      %v2655 = vpack.c.b16 %v2617, %v2616
      %v2656 = vpack.c.b16 %v2619, %v2618
      %v2657 = vpack.c.b16 %v2621, %v2620
      %v2658 = vpack.c.b16 %v2623, %v2622
      %v2659 = vpack.c.b16 %v2625, %v2624
      %v2660 = vpack.c.b16 %v2627, %v2626
      %v2661 = vpack.c.b16 %v2629, %v2628
      %v2662 = vpack.c.b16 %v2631, %v2630
      %v2663 = vpack.c.b16 %v2633, %v2632
      %v2664 = vpack.c.b16 %v2635, %v2634
      %v2665 = vpack.c.b16 %v2637, %v2636
      %v2666 = vpack.c.b16 %v2639, %v2638
      %v2667 = vpack.c.b16 %v2641, %v2640
      %v2668 = vpack.c.b16 %v2643, %v2642
      %v2669 = vpack.c.b16 %v2645, %v2644
      %v2670 = vpack.c.b16 %v2647, %v2646
      %v2671 = vpack.c.b16 %v2648, %v2648
      %vm2672 = vsmask.f32 5376
      %v2674 = vshrl.u32 %v2649, 16
      %v2676 = vrot.slane %v2674, 2
      %v2677 = vshll.u32 %v2649, 16
      %v2679 = vrot.slane %v2677, 3
      %v2680 = vor.u32 %v2676, %v2679
      %v2682 = vshrl.u32 %v2650, 16
      %v2684 = vrot.slane %v2682, 2
      %v2685 = vshll.u32 %v2650, 16
      %v2687 = vrot.slane %v2685, 3
      %v2688 = vor.u32 %v2684, %v2687
      %v2689 = vsel %vm2672, %v2680, %v2688
      %v2691 = vshrl.u32 %v2651, 16
      %v2693 = vrot.slane %v2691, 2
      %v2694 = vshll.u32 %v2651, 16
      %v2696 = vrot.slane %v2694, 3
      %v2697 = vor.u32 %v2693, %v2696
      %v2698 = vsel %vm2672, %v2688, %v2697
      %v2700 = vshrl.u32 %v2652, 16
      %v2702 = vrot.slane %v2700, 2
      %v2703 = vshll.u32 %v2652, 16
      %v2705 = vrot.slane %v2703, 3
      %v2706 = vor.u32 %v2702, %v2705
      %v2707 = vsel %vm2672, %v2697, %v2706
      %v2709 = vshrl.u32 %v2653, 16
      %v2711 = vrot.slane %v2709, 2
      %v2712 = vshll.u32 %v2653, 16
      %v2714 = vrot.slane %v2712, 3
      %v2715 = vor.u32 %v2711, %v2714
      %v2716 = vsel %vm2672, %v2706, %v2715
      %v2718 = vshrl.u32 %v2654, 16
      %v2720 = vrot.slane %v2718, 2
      %v2721 = vshll.u32 %v2654, 16
      %v2723 = vrot.slane %v2721, 3
      %v2724 = vor.u32 %v2720, %v2723
      %v2725 = vsel %vm2672, %v2715, %v2724
      %v2727 = vshrl.u32 %v2655, 16
      %v2729 = vrot.slane %v2727, 2
      %v2730 = vshll.u32 %v2655, 16
      %v2732 = vrot.slane %v2730, 3
      %v2733 = vor.u32 %v2729, %v2732
      %v2734 = vsel %vm2672, %v2724, %v2733
      %v2736 = vshrl.u32 %v2656, 16
      %v2738 = vrot.slane %v2736, 2
      %v2739 = vshll.u32 %v2656, 16
      %v2741 = vrot.slane %v2739, 3
      %v2742 = vor.u32 %v2738, %v2741
      %v2743 = vsel %vm2672, %v2733, %v2742
      %v2745 = vshrl.u32 %v2657, 16
      %v2747 = vrot.slane %v2745, 2
      %v2748 = vshll.u32 %v2657, 16
      %v2750 = vrot.slane %v2748, 3
      %v2751 = vor.u32 %v2747, %v2750
      %v2752 = vsel %vm2672, %v2742, %v2751
      %v2754 = vshrl.u32 %v2658, 16
      %v2756 = vrot.slane %v2754, 2
      %v2757 = vshll.u32 %v2658, 16
      %v2759 = vrot.slane %v2757, 3
      %v2760 = vor.u32 %v2756, %v2759
      %v2761 = vsel %vm2672, %v2751, %v2760
      %v2763 = vshrl.u32 %v2659, 16
      %v2765 = vrot.slane %v2763, 2
      %v2766 = vshll.u32 %v2659, 16
      %v2768 = vrot.slane %v2766, 3
      %v2769 = vor.u32 %v2765, %v2768
      %v2770 = vsel %vm2672, %v2760, %v2769
      %v2772 = vshrl.u32 %v2660, 16
      %v2774 = vrot.slane %v2772, 2
      %v2775 = vshll.u32 %v2660, 16
      %v2777 = vrot.slane %v2775, 3
      %v2778 = vor.u32 %v2774, %v2777
      %v2779 = vsel %vm2672, %v2769, %v2778
      %v2781 = vshrl.u32 %v2661, 16
      %v2783 = vrot.slane %v2781, 2
      %v2784 = vshll.u32 %v2661, 16
      %v2786 = vrot.slane %v2784, 3
      %v2787 = vor.u32 %v2783, %v2786
      %v2788 = vsel %vm2672, %v2778, %v2787
      %v2790 = vshrl.u32 %v2662, 16
      %v2792 = vrot.slane %v2790, 2
      %v2793 = vshll.u32 %v2662, 16
      %v2795 = vrot.slane %v2793, 3
      %v2796 = vor.u32 %v2792, %v2795
      %v2797 = vsel %vm2672, %v2787, %v2796
      %v2799 = vshrl.u32 %v2663, 16
      %v2801 = vrot.slane %v2799, 2
      %v2802 = vshll.u32 %v2663, 16
      %v2804 = vrot.slane %v2802, 3
      %v2805 = vor.u32 %v2801, %v2804
      %v2806 = vsel %vm2672, %v2796, %v2805
      %v2808 = vshrl.u32 %v2664, 16
      %v2810 = vrot.slane %v2808, 2
      %v2811 = vshll.u32 %v2664, 16
      %v2813 = vrot.slane %v2811, 3
      %v2814 = vor.u32 %v2810, %v2813
      %v2815 = vsel %vm2672, %v2805, %v2814
      %v2817 = vshrl.u32 %v2665, 16
      %v2819 = vrot.slane %v2817, 2
      %v2820 = vshll.u32 %v2665, 16
      %v2822 = vrot.slane %v2820, 3
      %v2823 = vor.u32 %v2819, %v2822
      %v2824 = vsel %vm2672, %v2814, %v2823
      %v2826 = vshrl.u32 %v2666, 16
      %v2828 = vrot.slane %v2826, 2
      %v2829 = vshll.u32 %v2666, 16
      %v2831 = vrot.slane %v2829, 3
      %v2832 = vor.u32 %v2828, %v2831
      %v2833 = vsel %vm2672, %v2823, %v2832
      %v2835 = vshrl.u32 %v2667, 16
      %v2837 = vrot.slane %v2835, 2
      %v2838 = vshll.u32 %v2667, 16
      %v2840 = vrot.slane %v2838, 3
      %v2841 = vor.u32 %v2837, %v2840
      %v2842 = vsel %vm2672, %v2832, %v2841
      %v2844 = vshrl.u32 %v2668, 16
      %v2846 = vrot.slane %v2844, 2
      %v2847 = vshll.u32 %v2668, 16
      %v2849 = vrot.slane %v2847, 3
      %v2850 = vor.u32 %v2846, %v2849
      %v2851 = vsel %vm2672, %v2841, %v2850
      %v2853 = vshrl.u32 %v2669, 16
      %v2855 = vrot.slane %v2853, 2
      %v2856 = vshll.u32 %v2669, 16
      %v2858 = vrot.slane %v2856, 3
      %v2859 = vor.u32 %v2855, %v2858
      %v2860 = vsel %vm2672, %v2850, %v2859
      %v2862 = vshrl.u32 %v2670, 16
      %v2864 = vrot.slane %v2862, 2
      %v2865 = vshll.u32 %v2670, 16
      %v2867 = vrot.slane %v2865, 3
      %v2868 = vor.u32 %v2864, %v2867
      %v2869 = vsel %vm2672, %v2859, %v2868
      %v2871 = vshrl.u32 %v2671, 16
      %v2873 = vrot.slane %v2871, 2
      %v2874 = vshll.u32 %v2671, 16
      %v2876 = vrot.slane %v2874, 3
      %v2877 = vor.u32 %v2873, %v2876
      %v2878 = vsel %vm2672, %v2868, %v2877
      %v2917 = vunpack.c.l.b16 %v2543
      %v2918 = vunpack.c.l.b16 %v2544
      %v2919 = vunpack.c.l.b16 %v2545
      %v2920 = vunpack.c.l.b16 %v2546
      %v2921 = vunpack.c.l.b16 %v2547
      %v2922 = vunpack.c.l.b16 %v2548
      %v2923 = vunpack.c.l.b16 %v2549
      %v2924 = vunpack.c.l.b16 %v2550
      %v2925 = vunpack.c.l.b16 %v2551
      %v2926 = vunpack.c.l.b16 %v2552
      %v2927 = vunpack.c.l.b16 %v2553
      %v2928 = vunpack.c.l.b16 %v2554
      %v2929 = vunpack.c.l.b16 %v2555
      %v2930 = vunpack.c.l.b16 %v2556
      %v2931 = vunpack.c.l.b16 %v2557
      %v2932 = vunpack.c.l.b16 %v2558
      %v2933 = vpack.c.b16 %v2918, %v2917
      %v2934 = vpack.c.b16 %v2920, %v2919
      %v2935 = vpack.c.b16 %v2922, %v2921
      %v2936 = vpack.c.b16 %v2924, %v2923
      %v2937 = vpack.c.b16 %v2926, %v2925
      %v2938 = vpack.c.b16 %v2928, %v2927
      %v2939 = vpack.c.b16 %v2930, %v2929
      %v2940 = vpack.c.b16 %v2932, %v2931
      %2949 = vmatpush.bf16.msra.mxu0 %v2940
      %2950 = vmatpush.bf16.msra.mxu0 %v2939
      %2951 = vmatpush.bf16.msra.mxu0 %v2938
      %2952 = vmatpush.bf16.msra.mxu0 %v2937
      %2953 = vmatpush.bf16.msra.mxu0 %v2936
      %2954 = vmatpush.bf16.msra.mxu0 %v2935
      %2955 = vmatpush.bf16.msra.mxu0 %v2934
      %2956 = vmatpush.bf16.msra.mxu0 %v2933
      %2957 = vmatmul.bf16.gmra.mxu0 %v2689
      %v2958 = vpop.f32.mrf.mxu0
      %v2959 = vadd.f32 0.0, %v2958
      %v2960 = vpop.f32.mrf.mxu0
      %v2961 = vadd.f32 0.0, %v2960
      %2962 = vmatmul.bf16.gmra.mxu0 %v2698
      %v2963 = vpop.f32.mrf.mxu0
      %v2964 = vadd.f32 0.0, %v2963
      %v2965 = vpop.f32.mrf.mxu0
      %v2966 = vadd.f32 0.0, %v2965
      %2967 = vmatmul.bf16.gmra.mxu0 %v2707
      %v2968 = vpop.f32.mrf.mxu0
      %v2969 = vadd.f32 0.0, %v2968
      %v2970 = vpop.f32.mrf.mxu0
      %v2971 = vadd.f32 0.0, %v2970
      %2972 = vmatmul.bf16.gmra.mxu0 %v2716
      %v2973 = vpop.f32.mrf.mxu0
      %v2974 = vadd.f32 0.0, %v2973
      %v2975 = vpop.f32.mrf.mxu0
      %v2976 = vadd.f32 0.0, %v2975
      %2977 = vmatmul.bf16.gmra.mxu0 %v2725
      %v2978 = vpop.f32.mrf.mxu0
      %v2979 = vadd.f32 0.0, %v2978
      %v2980 = vpop.f32.mrf.mxu0
      %v2981 = vadd.f32 0.0, %v2980
      %2982 = vmatmul.bf16.gmra.mxu0 %v2734
      %v2983 = vpop.f32.mrf.mxu0
      %v2984 = vadd.f32 0.0, %v2983
      %v2985 = vpop.f32.mrf.mxu0
      %v2986 = vadd.f32 0.0, %v2985
      %2987 = vmatmul.bf16.gmra.mxu0 %v2743
      %v2988 = vpop.f32.mrf.mxu0
      %v2989 = vadd.f32 0.0, %v2988
      %v2990 = vpop.f32.mrf.mxu0
      %v2991 = vadd.f32 0.0, %v2990
      %2992 = vmatmul.bf16.gmra.mxu0 %v2752
      %v2993 = vpop.f32.mrf.mxu0
      %v2994 = vadd.f32 0.0, %v2993
      %v2995 = vpop.f32.mrf.mxu0
      %v2996 = vadd.f32 0.0, %v2995
      %2997 = vmatmul.bf16.gmra.mxu0 %v2761
      %v2998 = vpop.f32.mrf.mxu0
      %v2999 = vadd.f32 0.0, %v2998
      %v3000 = vpop.f32.mrf.mxu0
      %v3001 = vadd.f32 0.0, %v3000
      %3002 = vmatmul.bf16.gmra.mxu0 %v2770
      %v3003 = vpop.f32.mrf.mxu0
      %v3004 = vadd.f32 0.0, %v3003
      %v3005 = vpop.f32.mrf.mxu0
      %v3006 = vadd.f32 0.0, %v3005
      %3007 = vmatmul.bf16.gmra.mxu0 %v2779
      %v3008 = vpop.f32.mrf.mxu0
      %v3009 = vadd.f32 0.0, %v3008
      %v3010 = vpop.f32.mrf.mxu0
      %v3011 = vadd.f32 0.0, %v3010
      %3012 = vmatmul.bf16.gmra.mxu0 %v2788
      %v3013 = vpop.f32.mrf.mxu0
      %v3014 = vadd.f32 0.0, %v3013
      %v3015 = vpop.f32.mrf.mxu0
      %v3016 = vadd.f32 0.0, %v3015
      %3017 = vmatmul.bf16.gmra.mxu0 %v2797
      %v3018 = vpop.f32.mrf.mxu0
      %v3019 = vadd.f32 0.0, %v3018
      %v3020 = vpop.f32.mrf.mxu0
      %v3021 = vadd.f32 0.0, %v3020
      %3022 = vmatmul.bf16.gmra.mxu0 %v2806
      %v3023 = vpop.f32.mrf.mxu0
      %v3024 = vadd.f32 0.0, %v3023
      %v3025 = vpop.f32.mrf.mxu0
      %v3026 = vadd.f32 0.0, %v3025
      %3027 = vmatmul.bf16.gmra.mxu0 %v2815
      %v3028 = vpop.f32.mrf.mxu0
      %v3029 = vadd.f32 0.0, %v3028
      %v3030 = vpop.f32.mrf.mxu0
      %v3031 = vadd.f32 0.0, %v3030
      %3032 = vmatmul.bf16.gmra.mxu0 %v2824
      %v3033 = vpop.f32.mrf.mxu0
      %v3034 = vadd.f32 0.0, %v3033
      %v3035 = vpop.f32.mrf.mxu0
      %v3036 = vadd.f32 0.0, %v3035
      %3037 = vmatmul.bf16.gmra.mxu0 %v2833
      %v3038 = vpop.f32.mrf.mxu0
      %v3039 = vadd.f32 0.0, %v3038
      %v3040 = vpop.f32.mrf.mxu0
      %v3041 = vadd.f32 0.0, %v3040
      %3042 = vmatmul.bf16.gmra.mxu0 %v2842
      %v3043 = vpop.f32.mrf.mxu0
      %v3044 = vadd.f32 0.0, %v3043
      %v3045 = vpop.f32.mrf.mxu0
      %v3046 = vadd.f32 0.0, %v3045
      %3047 = vmatmul.bf16.gmra.mxu0 %v2851
      %v3048 = vpop.f32.mrf.mxu0
      %v3049 = vadd.f32 0.0, %v3048
      %v3050 = vpop.f32.mrf.mxu0
      %v3051 = vadd.f32 0.0, %v3050
      %3052 = vmatmul.bf16.gmra.mxu0 %v2860
      %v3053 = vpop.f32.mrf.mxu0
      %v3054 = vadd.f32 0.0, %v3053
      %v3055 = vpop.f32.mrf.mxu0
      %v3056 = vadd.f32 0.0, %v3055
      %3057 = vmatmul.bf16.gmra.mxu0 %v2869
      %v3058 = vpop.f32.mrf.mxu0
      %v3059 = vadd.f32 0.0, %v3058
      %v3060 = vpop.f32.mrf.mxu0
      %v3061 = vadd.f32 0.0, %v3060
      %3062 = vmatmul.bf16.gmra.mxu0 %v2878
      %v3063 = vpop.f32.mrf.mxu0
      %v3064 = vadd.f32 0.0, %v3063
      %v3065 = vpop.f32.mrf.mxu0
      %v3066 = vadd.f32 0.0, %v3065
      %3067 = vdwg.mxu0
      %3068 = vst [vmem:[#allocation3] sm:$0xff] %v2959
      %3069 = vst [vmem:[#allocation3 + $0x8] sm:$0xff] %v2961
      %3070 = vst [vmem:[#allocation3 + $0x10] sm:$0xff] %v2964
      %3071 = vst [vmem:[#allocation3 + $0x18] sm:$0xff] %v2966
      %3072 = vst [vmem:[#allocation3 + $0x20] sm:$0xff] %v2969
      %3073 = vst [vmem:[#allocation3 + $0x28] sm:$0xff] %v2971
      %3074 = vst [vmem:[#allocation3 + $0x30] sm:$0xff] %v2974
      %3075 = vst [vmem:[#allocation3 + $0x38] sm:$0xff] %v2976
      %3076 = vst [vmem:[#allocation3 + $0x40] sm:$0xff] %v2979
      %3077 = vst [vmem:[#allocation3 + $0x48] sm:$0xff] %v2981
      %3078 = vst [vmem:[#allocation3 + $0x50] sm:$0xff] %v2984
      %3079 = vst [vmem:[#allocation3 + $0x58] sm:$0xff] %v2986
      %3080 = vst [vmem:[#allocation3 + $0x60] sm:$0xff] %v2989
      %3081 = vst [vmem:[#allocation3 + $0x68] sm:$0xff] %v2991
      %3082 = vst [vmem:[#allocation3 + $0x70] sm:$0xff] %v2994
      %3083 = vst [vmem:[#allocation3 + $0x78] sm:$0xff] %v2996
      %3084 = vst [vmem:[#allocation3 + $0x80] sm:$0xff] %v2999
      %3085 = vst [vmem:[#allocation3 + $0x88] sm:$0xff] %v3001
      %3086 = vst [vmem:[#allocation3 + $0x90] sm:$0xff] %v3004
      %3087 = vst [vmem:[#allocation3 + $0x98] sm:$0xff] %v3006
      %3088 = vst [vmem:[#allocation3 + $0xa0] sm:$0xff] %v3009
      %3089 = vst [vmem:[#allocation3 + $0xa8] sm:$0xff] %v3011
      %3090 = vst [vmem:[#allocation3 + $0xb0] sm:$0xff] %v3014
      %3091 = vst [vmem:[#allocation3 + $0xb8] sm:$0xff] %v3016
      %3092 = vst [vmem:[#allocation3 + $0xc0] sm:$0xff] %v3019
      %3093 = vst [vmem:[#allocation3 + $0xc8] sm:$0xff] %v3021
      %3094 = vst [vmem:[#allocation3 + $0xd0] sm:$0xff] %v3024
      %3095 = vst [vmem:[#allocation3 + $0xd8] sm:$0xff] %v3026
      %3096 = vst [vmem:[#allocation3 + $0xe0] sm:$0xff] %v3029
      %3097 = vst [vmem:[#allocation3 + $0xe8] sm:$0xff] %v3031
      %3098 = vst [vmem:[#allocation3 + $0xf0] sm:$0xff] %v3034
      %3099 = vst [vmem:[#allocation3 + $0xf8] sm:$0xff] %v3036
      %3100 = vst [vmem:[#allocation3 + $0x100] sm:$0xff] %v3039
      %3101 = vst [vmem:[#allocation3 + $0x108] sm:$0xff] %v3041
      %3102 = vst [vmem:[#allocation3 + $0x110] sm:$0xff] %v3044
      %3103 = vst [vmem:[#allocation3 + $0x118] sm:$0xff] %v3046
      %3104 = vst [vmem:[#allocation3 + $0x120] sm:$0xff] %v3049
      %3105 = vst [vmem:[#allocation3 + $0x128] sm:$0xff] %v3051
      %3106 = vst [vmem:[#allocation3 + $0x130] sm:$0xff] %v3054
      %3107 = vst [vmem:[#allocation3 + $0x138] sm:$0xff] %v3056
      %3108 = vst [vmem:[#allocation3 + $0x140] sm:$0xff] %v3059
      %3109 = vst [vmem:[#allocation3 + $0x148] sm:$0xff] %v3061
      %3110 = vst [vmem:[#allocation3 + $0x150] sm:$0xff] %v3064
      %3111 = vst [vmem:[#allocation3 + $0x158] sm:$0xff] %v3066
      %v3112 = vld [vmem:[#allocation2 + $0x4] sm:$0x8]
      %v3113 = vld [vmem:[#allocation2 + $0x8] sm:$0xf]
      %v3114 = vld [vmem:[#allocation2 + $0xc] sm:$0xf]
      %v3115 = vld [vmem:[#allocation2 + $0x10] sm:$0xf]
      %v3116 = vld [vmem:[#allocation2 + $0x14] sm:$0xf]
      %v3117 = vld [vmem:[#allocation2 + $0x18] sm:$0xf]
      %v3118 = vld [vmem:[#allocation2 + $0x1c] sm:$0xf]
      %v3119 = vld [vmem:[#allocation2 + $0x20] sm:$0xf]
      %v3120 = vld [vmem:[#allocation2 + $0x24] sm:$0xf]
      %v3121 = vld [vmem:[#allocation2 + $0x28] sm:$0xf]
      %v3122 = vld [vmem:[#allocation2 + $0x2c] sm:$0xf]
      %v3123 = vld [vmem:[#allocation2 + $0x30] sm:$0xf]
      %v3124 = vld [vmem:[#allocation2 + $0x34] sm:$0xf]
      %v3125 = vld [vmem:[#allocation2 + $0x38] sm:$0xf]
      %v3126 = vld [vmem:[#allocation2 + $0x3c] sm:$0xf]
      %v3127 = vld [vmem:[#allocation2 + $0x40] sm:$0xf]
      %v3128 = vld [vmem:[#allocation2 + $0x44] sm:$0xf]
      %v3129 = vld [vmem:[#allocation2 + $0x48] sm:$0xf]
      %v3130 = vld [vmem:[#allocation2 + $0x4c] sm:$0xf]
      %v3131 = vld [vmem:[#allocation2 + $0x50] sm:$0xf]
      %v3132 = vld [vmem:[#allocation2 + $0x54] sm:$0xf]
      %v3133 = vld [vmem:[#allocation2 + $0x58] sm:$0xf]
      %v3134 = vld [vmem:[#allocation2 + $0x5c] sm:$0xf]
      %v3135 = vld [vmem:[#allocation2 + $0x60] sm:$0xf]
      %v3136 = vld [vmem:[#allocation2 + $0x64] sm:$0xf]
      %v3137 = vld [vmem:[#allocation2 + $0x68] sm:$0xf]
      %v3138 = vld [vmem:[#allocation2 + $0x6c] sm:$0xf]
      %v3139 = vld [vmem:[#allocation2 + $0x70] sm:$0xf]
      %v3140 = vld [vmem:[#allocation2 + $0x74] sm:$0xf]
      %v3141 = vld [vmem:[#allocation2 + $0x78] sm:$0xf]
      %v3142 = vld [vmem:[#allocation2 + $0x7c] sm:$0xf]
      %v3143 = vld [vmem:[#allocation2 + $0x80] sm:$0xf]
      %v3144 = vld [vmem:[#allocation2 + $0x84] sm:$0xf]
      %v3145 = vld [vmem:[#allocation2 + $0x88] sm:$0xf]
      %v3146 = vld [vmem:[#allocation2 + $0x8c] sm:$0xf]
      %v3147 = vld [vmem:[#allocation2 + $0x90] sm:$0xf]
      %v3148 = vld [vmem:[#allocation2 + $0x94] sm:$0xf]
      %v3149 = vld [vmem:[#allocation2 + $0x98] sm:$0xf]
      %v3150 = vld [vmem:[#allocation2 + $0x9c] sm:$0xf]
      %v3151 = vld [vmem:[#allocation2 + $0xa0] sm:$0xf]
      %v3152 = vld [vmem:[#allocation2 + $0xa4] sm:$0xf]
      %v3153 = vld [vmem:[#allocation2 + $0xa8] sm:$0xf]
      %v3154 = vld [vmem:[#allocation2 + $0xac] sm:$0xf]
      %v3155 = vld [vmem:[#allocation2 + $0xb0] sm:$0xf]
      %v3156 = vld [vmem:[#allocation2 + $0xb4] sm:$0x7]
      %s3157 = scalar_lea.vmem %s3, 64
      %v3158 = vld [vmem:[%s3157] sm:$0xf]
      %v3159 = vld [vmem:[%s3157 + $0x4] sm:$0xf]
      %v3160 = vld [vmem:[%s3157 + $0x8] sm:$0xf]
      %v3161 = vld [vmem:[%s3157 + $0xc] sm:$0xf]
      %v3162 = vld [vmem:[%s3157 + $0x10] sm:$0xf]
      %v3163 = vld [vmem:[%s3157 + $0x14] sm:$0xf]
      %v3164 = vld [vmem:[%s3157 + $0x18] sm:$0xf]
      %v3165 = vld [vmem:[%s3157 + $0x1c] sm:$0xf]
      %v3166 = vld [vmem:[%s3157 + $0x20] sm:$0xf]
      %v3167 = vld [vmem:[%s3157 + $0x24] sm:$0xf]
      %v3168 = vld [vmem:[%s3157 + $0x28] sm:$0xf]
      %v3169 = vld [vmem:[%s3157 + $0x2c] sm:$0xf]
      %v3170 = vld [vmem:[%s3157 + $0x30] sm:$0xf]
      %v3171 = vld [vmem:[%s3157 + $0x34] sm:$0xf]
      %v3172 = vld [vmem:[%s3157 + $0x38] sm:$0xf]
      %v3173 = vld [vmem:[%s3157 + $0x3c] sm:$0xf]
      %v3219 = vunpack.c.l.b16 %v3112
      %v3220 = vunpack.c.l.b16 %v3113
      %v3221 = vunpack.c.l.b16 %v3114
      %v3222 = vunpack.c.l.b16 %v3115
      %v3223 = vunpack.c.l.b16 %v3116
      %v3224 = vunpack.c.l.b16 %v3117
      %v3225 = vunpack.c.l.b16 %v3118
      %v3226 = vunpack.c.l.b16 %v3119
      %v3227 = vunpack.c.l.b16 %v3120
      %v3228 = vunpack.c.l.b16 %v3121
      %v3229 = vunpack.c.l.b16 %v3122
      %v3230 = vunpack.c.l.b16 %v3123
      %v3231 = vunpack.c.l.b16 %v3124
      %v3232 = vunpack.c.l.b16 %v3125
      %v3233 = vunpack.c.l.b16 %v3126
      %v3234 = vunpack.c.l.b16 %v3127
      %v3235 = vunpack.c.l.b16 %v3128
      %v3236 = vunpack.c.l.b16 %v3129
      %v3237 = vunpack.c.l.b16 %v3130
      %v3238 = vunpack.c.l.b16 %v3131
      %v3239 = vunpack.c.l.b16 %v3132
      %v3240 = vunpack.c.l.b16 %v3133
      %v3241 = vunpack.c.l.b16 %v3134
      %v3242 = vunpack.c.l.b16 %v3135
      %v3243 = vunpack.c.l.b16 %v3136
      %v3244 = vunpack.c.l.b16 %v3137
      %v3245 = vunpack.c.l.b16 %v3138
      %v3246 = vunpack.c.l.b16 %v3139
      %v3247 = vunpack.c.l.b16 %v3140
      %v3248 = vunpack.c.l.b16 %v3141
      %v3249 = vunpack.c.l.b16 %v3142
      %v3250 = vunpack.c.l.b16 %v3143
      %v3251 = vunpack.c.l.b16 %v3144
      %v3252 = vunpack.c.l.b16 %v3145
      %v3253 = vunpack.c.l.b16 %v3146
      %v3254 = vunpack.c.l.b16 %v3147
      %v3255 = vunpack.c.l.b16 %v3148
      %v3256 = vunpack.c.l.b16 %v3149
      %v3257 = vunpack.c.l.b16 %v3150
      %v3258 = vunpack.c.l.b16 %v3151
      %v3259 = vunpack.c.l.b16 %v3152
      %v3260 = vunpack.c.l.b16 %v3153
      %v3261 = vunpack.c.l.b16 %v3154
      %v3262 = vunpack.c.l.b16 %v3155
      %v3263 = vunpack.c.l.b16 %v3156
      %v3264 = vpack.c.b16 %v3220, %v3219
      %v3265 = vpack.c.b16 %v3222, %v3221
      %v3266 = vpack.c.b16 %v3224, %v3223
      %v3267 = vpack.c.b16 %v3226, %v3225
      %v3268 = vpack.c.b16 %v3228, %v3227
      %v3269 = vpack.c.b16 %v3230, %v3229
      %v3270 = vpack.c.b16 %v3232, %v3231
      %v3271 = vpack.c.b16 %v3234, %v3233
      %v3272 = vpack.c.b16 %v3236, %v3235
      %v3273 = vpack.c.b16 %v3238, %v3237
      %v3274 = vpack.c.b16 %v3240, %v3239
      %v3275 = vpack.c.b16 %v3242, %v3241
      %v3276 = vpack.c.b16 %v3244, %v3243
      %v3277 = vpack.c.b16 %v3246, %v3245
      %v3278 = vpack.c.b16 %v3248, %v3247
      %v3279 = vpack.c.b16 %v3250, %v3249
      %v3280 = vpack.c.b16 %v3252, %v3251
      %v3281 = vpack.c.b16 %v3254, %v3253
      %v3282 = vpack.c.b16 %v3256, %v3255
      %v3283 = vpack.c.b16 %v3258, %v3257
      %v3284 = vpack.c.b16 %v3260, %v3259
      %v3285 = vpack.c.b16 %v3262, %v3261
      %v3286 = vpack.c.b16 %v3263, %v3263
      %vm3287 = vcmask 1044480
      %v3288 = vrot.slane %v3264, 3
      %v3289 = vrot.slane %v3265, 3
      %v3290 = vsel %vm3287, %v3288, %v3289
      %v3291 = vrot.slane %v3266, 3
      %v3292 = vsel %vm3287, %v3289, %v3291
      %v3293 = vrot.slane %v3267, 3
      %v3294 = vsel %vm3287, %v3291, %v3293
      %v3295 = vrot.slane %v3268, 3
      %v3296 = vsel %vm3287, %v3293, %v3295
      %v3297 = vrot.slane %v3269, 3
      %v3298 = vsel %vm3287, %v3295, %v3297
      %v3299 = vrot.slane %v3270, 3
      %v3300 = vsel %vm3287, %v3297, %v3299
      %v3301 = vrot.slane %v3271, 3
      %v3302 = vsel %vm3287, %v3299, %v3301
      %v3303 = vrot.slane %v3272, 3
      %v3304 = vsel %vm3287, %v3301, %v3303
      %v3305 = vrot.slane %v3273, 3
      %v3306 = vsel %vm3287, %v3303, %v3305
      %v3307 = vrot.slane %v3274, 3
      %v3308 = vsel %vm3287, %v3305, %v3307
      %v3309 = vrot.slane %v3275, 3
      %v3310 = vsel %vm3287, %v3307, %v3309
      %v3311 = vrot.slane %v3276, 3
      %v3312 = vsel %vm3287, %v3309, %v3311
      %v3313 = vrot.slane %v3277, 3
      %v3314 = vsel %vm3287, %v3311, %v3313
      %v3315 = vrot.slane %v3278, 3
      %v3316 = vsel %vm3287, %v3313, %v3315
      %v3317 = vrot.slane %v3279, 3
      %v3318 = vsel %vm3287, %v3315, %v3317
      %v3319 = vrot.slane %v3280, 3
      %v3320 = vsel %vm3287, %v3317, %v3319
      %v3321 = vrot.slane %v3281, 3
      %v3322 = vsel %vm3287, %v3319, %v3321
      %v3323 = vrot.slane %v3282, 3
      %v3324 = vsel %vm3287, %v3321, %v3323
      %v3325 = vrot.slane %v3283, 3
      %v3326 = vsel %vm3287, %v3323, %v3325
      %v3327 = vrot.slane %v3284, 3
      %v3328 = vsel %vm3287, %v3325, %v3327
      %v3329 = vrot.slane %v3285, 3
      %v3330 = vsel %vm3287, %v3327, %v3329
      %v3331 = vrot.slane %v3286, 3
      %v3332 = vsel %vm3287, %v3329, %v3331
      %v3371 = vunpack.c.l.b16 %v3158
      %v3372 = vunpack.c.l.b16 %v3159
      %v3373 = vunpack.c.l.b16 %v3160
      %v3374 = vunpack.c.l.b16 %v3161
      %v3375 = vunpack.c.l.b16 %v3162
      %v3376 = vunpack.c.l.b16 %v3163
      %v3377 = vunpack.c.l.b16 %v3164
      %v3378 = vunpack.c.l.b16 %v3165
      %v3379 = vunpack.c.l.b16 %v3166
      %v3380 = vunpack.c.l.b16 %v3167
      %v3381 = vunpack.c.l.b16 %v3168
      %v3382 = vunpack.c.l.b16 %v3169
      %v3383 = vunpack.c.l.b16 %v3170
      %v3384 = vunpack.c.l.b16 %v3171
      %v3385 = vunpack.c.l.b16 %v3172
      %v3386 = vunpack.c.l.b16 %v3173
      %v3387 = vpack.c.b16 %v3372, %v3371
      %v3388 = vpack.c.b16 %v3374, %v3373
      %v3389 = vpack.c.b16 %v3376, %v3375
      %v3390 = vpack.c.b16 %v3378, %v3377
      %v3391 = vpack.c.b16 %v3380, %v3379
      %v3392 = vpack.c.b16 %v3382, %v3381
      %v3393 = vpack.c.b16 %v3384, %v3383
      %v3394 = vpack.c.b16 %v3386, %v3385
      %3403 = vmatpush.bf16.msra.mxu0 %v3394
      %3404 = vmatpush.bf16.msra.mxu0 %v3393
      %3405 = vmatpush.bf16.msra.mxu0 %v3392
      %3406 = vmatpush.bf16.msra.mxu0 %v3391
      %3407 = vmatpush.bf16.msra.mxu0 %v3390
      %3408 = vmatpush.bf16.msra.mxu0 %v3389
      %3409 = vmatpush.bf16.msra.mxu0 %v3388
      %3410 = vmatpush.bf16.msra.mxu0 %v3387
      %3411 = vmatmul.bf16.gmra.mxu0 %v3290
      %v3412 = vpop.f32.mrf.mxu0
      %v3413 = vadd.f32 0.0, %v3412
      %v3414 = vpop.f32.mrf.mxu0
      %v3415 = vadd.f32 0.0, %v3414
      %3416 = vmatmul.bf16.gmra.mxu0 %v3292
      %v3417 = vpop.f32.mrf.mxu0
      %v3418 = vadd.f32 0.0, %v3417
      %v3419 = vpop.f32.mrf.mxu0
      %v3420 = vadd.f32 0.0, %v3419
      %3421 = vmatmul.bf16.gmra.mxu0 %v3294
      %v3422 = vpop.f32.mrf.mxu0
      %v3423 = vadd.f32 0.0, %v3422
      %v3424 = vpop.f32.mrf.mxu0
      %v3425 = vadd.f32 0.0, %v3424
      %3426 = vmatmul.bf16.gmra.mxu0 %v3296
      %v3427 = vpop.f32.mrf.mxu0
      %v3428 = vadd.f32 0.0, %v3427
      %v3429 = vpop.f32.mrf.mxu0
      %v3430 = vadd.f32 0.0, %v3429
      %3431 = vmatmul.bf16.gmra.mxu0 %v3298
      %v3432 = vpop.f32.mrf.mxu0
      %v3433 = vadd.f32 0.0, %v3432
      %v3434 = vpop.f32.mrf.mxu0
      %v3435 = vadd.f32 0.0, %v3434
      %3436 = vmatmul.bf16.gmra.mxu0 %v3300
      %v3437 = vpop.f32.mrf.mxu0
      %v3438 = vadd.f32 0.0, %v3437
      %v3439 = vpop.f32.mrf.mxu0
      %v3440 = vadd.f32 0.0, %v3439
      %3441 = vmatmul.bf16.gmra.mxu0 %v3302
      %v3442 = vpop.f32.mrf.mxu0
      %v3443 = vadd.f32 0.0, %v3442
      %v3444 = vpop.f32.mrf.mxu0
      %v3445 = vadd.f32 0.0, %v3444
      %3446 = vmatmul.bf16.gmra.mxu0 %v3304
      %v3447 = vpop.f32.mrf.mxu0
      %v3448 = vadd.f32 0.0, %v3447
      %v3449 = vpop.f32.mrf.mxu0
      %v3450 = vadd.f32 0.0, %v3449
      %3451 = vmatmul.bf16.gmra.mxu0 %v3306
      %v3452 = vpop.f32.mrf.mxu0
      %v3453 = vadd.f32 0.0, %v3452
      %v3454 = vpop.f32.mrf.mxu0
      %v3455 = vadd.f32 0.0, %v3454
      %3456 = vmatmul.bf16.gmra.mxu0 %v3308
      %v3457 = vpop.f32.mrf.mxu0
      %v3458 = vadd.f32 0.0, %v3457
      %v3459 = vpop.f32.mrf.mxu0
      %v3460 = vadd.f32 0.0, %v3459
      %3461 = vmatmul.bf16.gmra.mxu0 %v3310
      %v3462 = vpop.f32.mrf.mxu0
      %v3463 = vadd.f32 0.0, %v3462
      %v3464 = vpop.f32.mrf.mxu0
      %v3465 = vadd.f32 0.0, %v3464
      %3466 = vmatmul.bf16.gmra.mxu0 %v3312
      %v3467 = vpop.f32.mrf.mxu0
      %v3468 = vadd.f32 0.0, %v3467
      %v3469 = vpop.f32.mrf.mxu0
      %v3470 = vadd.f32 0.0, %v3469
      %3471 = vmatmul.bf16.gmra.mxu0 %v3314
      %v3472 = vpop.f32.mrf.mxu0
      %v3473 = vadd.f32 0.0, %v3472
      %v3474 = vpop.f32.mrf.mxu0
      %v3475 = vadd.f32 0.0, %v3474
      %3476 = vmatmul.bf16.gmra.mxu0 %v3316
      %v3477 = vpop.f32.mrf.mxu0
      %v3478 = vadd.f32 0.0, %v3477
      %v3479 = vpop.f32.mrf.mxu0
      %v3480 = vadd.f32 0.0, %v3479
      %3481 = vmatmul.bf16.gmra.mxu0 %v3318
      %v3482 = vpop.f32.mrf.mxu0
      %v3483 = vadd.f32 0.0, %v3482
      %v3484 = vpop.f32.mrf.mxu0
      %v3485 = vadd.f32 0.0, %v3484
      %3486 = vmatmul.bf16.gmra.mxu0 %v3320
      %v3487 = vpop.f32.mrf.mxu0
      %v3488 = vadd.f32 0.0, %v3487
      %v3489 = vpop.f32.mrf.mxu0
      %v3490 = vadd.f32 0.0, %v3489
      %3491 = vmatmul.bf16.gmra.mxu0 %v3322
      %v3492 = vpop.f32.mrf.mxu0
      %v3493 = vadd.f32 0.0, %v3492
      %v3494 = vpop.f32.mrf.mxu0
      %v3495 = vadd.f32 0.0, %v3494
      %3496 = vmatmul.bf16.gmra.mxu0 %v3324
      %v3497 = vpop.f32.mrf.mxu0
      %v3498 = vadd.f32 0.0, %v3497
      %v3499 = vpop.f32.mrf.mxu0
      %v3500 = vadd.f32 0.0, %v3499
      %3501 = vmatmul.bf16.gmra.mxu0 %v3326
      %v3502 = vpop.f32.mrf.mxu0
      %v3503 = vadd.f32 0.0, %v3502
      %v3504 = vpop.f32.mrf.mxu0
      %v3505 = vadd.f32 0.0, %v3504
      %3506 = vmatmul.bf16.gmra.mxu0 %v3328
      %v3507 = vpop.f32.mrf.mxu0
      %v3508 = vadd.f32 0.0, %v3507
      %v3509 = vpop.f32.mrf.mxu0
      %v3510 = vadd.f32 0.0, %v3509
      %3511 = vmatmul.bf16.gmra.mxu0 %v3330
      %v3512 = vpop.f32.mrf.mxu0
      %v3513 = vadd.f32 0.0, %v3512
      %v3514 = vpop.f32.mrf.mxu0
      %v3515 = vadd.f32 0.0, %v3514
      %3516 = vmatmul.bf16.gmra.mxu0 %v3332
      %v3517 = vpop.f32.mrf.mxu0
      %v3518 = vadd.f32 0.0, %v3517
      %v3519 = vpop.f32.mrf.mxu0
      %v3520 = vadd.f32 0.0, %v3519
      %3521 = vdwg.mxu0
      %v3522 = vld [vmem:[#allocation3] sm:$0xff]
      %v3523 = vld [vmem:[#allocation3 + $0x8] sm:$0xff]
      %v3524 = vld [vmem:[#allocation3 + $0x10] sm:$0xff]
      %v3525 = vld [vmem:[#allocation3 + $0x18] sm:$0xff]
      %v3526 = vld [vmem:[#allocation3 + $0x20] sm:$0xff]
      %v3527 = vld [vmem:[#allocation3 + $0x28] sm:$0xff]
      %v3528 = vld [vmem:[#allocation3 + $0x30] sm:$0xff]
      %v3529 = vld [vmem:[#allocation3 + $0x38] sm:$0xff]
      %v3530 = vld [vmem:[#allocation3 + $0x40] sm:$0xff]
      %v3531 = vld [vmem:[#allocation3 + $0x48] sm:$0xff]
      %v3532 = vld [vmem:[#allocation3 + $0x50] sm:$0xff]
      %v3533 = vld [vmem:[#allocation3 + $0x58] sm:$0xff]
      %v3534 = vld [vmem:[#allocation3 + $0x60] sm:$0xff]
      %v3535 = vld [vmem:[#allocation3 + $0x68] sm:$0xff]
      %v3536 = vld [vmem:[#allocation3 + $0x70] sm:$0xff]
      %v3537 = vld [vmem:[#allocation3 + $0x78] sm:$0xff]
      %v3538 = vld [vmem:[#allocation3 + $0x80] sm:$0xff]
      %v3539 = vld [vmem:[#allocation3 + $0x88] sm:$0xff]
      %v3540 = vld [vmem:[#allocation3 + $0x90] sm:$0xff]
      %v3541 = vld [vmem:[#allocation3 + $0x98] sm:$0xff]
      %v3542 = vld [vmem:[#allocation3 + $0xa0] sm:$0xff]
      %v3543 = vld [vmem:[#allocation3 + $0xa8] sm:$0xff]
      %v3544 = vld [vmem:[#allocation3 + $0xb0] sm:$0xff]
      %v3545 = vld [vmem:[#allocation3 + $0xb8] sm:$0xff]
      %v3546 = vld [vmem:[#allocation3 + $0xc0] sm:$0xff]
      %v3547 = vld [vmem:[#allocation3 + $0xc8] sm:$0xff]
      %v3548 = vld [vmem:[#allocation3 + $0xd0] sm:$0xff]
      %v3549 = vld [vmem:[#allocation3 + $0xd8] sm:$0xff]
      %v3550 = vld [vmem:[#allocation3 + $0xe0] sm:$0xff]
      %v3551 = vld [vmem:[#allocation3 + $0xe8] sm:$0xff]
      %v3552 = vld [vmem:[#allocation3 + $0xf0] sm:$0xff]
      %v3553 = vld [vmem:[#allocation3 + $0xf8] sm:$0xff]
      %v3554 = vld [vmem:[#allocation3 + $0x100] sm:$0xff]
      %v3555 = vld [vmem:[#allocation3 + $0x108] sm:$0xff]
      %v3556 = vld [vmem:[#allocation3 + $0x110] sm:$0xff]
      %v3557 = vld [vmem:[#allocation3 + $0x118] sm:$0xff]
      %v3558 = vld [vmem:[#allocation3 + $0x120] sm:$0xff]
      %v3559 = vld [vmem:[#allocation3 + $0x128] sm:$0xff]
      %v3560 = vld [vmem:[#allocation3 + $0x130] sm:$0xff]
      %v3561 = vld [vmem:[#allocation3 + $0x138] sm:$0xff]
      %v3562 = vld [vmem:[#allocation3 + $0x140] sm:$0xff]
      %v3563 = vld [vmem:[#allocation3 + $0x148] sm:$0xff]
      %v3564 = vld [vmem:[#allocation3 + $0x150] sm:$0xff]
      %v3565 = vld [vmem:[#allocation3 + $0x158] sm:$0xff]
      %v3566 = vadd.f32 %v3522, %v3413
      %v3567 = vadd.f32 %v3523, %v3415
      %v3568 = vadd.f32 %v3524, %v3418
      %v3569 = vadd.f32 %v3525, %v3420
      %v3570 = vadd.f32 %v3526, %v3423
      %v3571 = vadd.f32 %v3527, %v3425
      %v3572 = vadd.f32 %v3528, %v3428
      %v3573 = vadd.f32 %v3529, %v3430
      %v3574 = vadd.f32 %v3530, %v3433
      %v3575 = vadd.f32 %v3531, %v3435
      %v3576 = vadd.f32 %v3532, %v3438
      %v3577 = vadd.f32 %v3533, %v3440
      %v3578 = vadd.f32 %v3534, %v3443
      %v3579 = vadd.f32 %v3535, %v3445
      %v3580 = vadd.f32 %v3536, %v3448
      %v3581 = vadd.f32 %v3537, %v3450
      %v3582 = vadd.f32 %v3538, %v3453
      %v3583 = vadd.f32 %v3539, %v3455
      %v3584 = vadd.f32 %v3540, %v3458
      %v3585 = vadd.f32 %v3541, %v3460
      %v3586 = vadd.f32 %v3542, %v3463
      %v3587 = vadd.f32 %v3543, %v3465
      %v3588 = vadd.f32 %v3544, %v3468
      %v3589 = vadd.f32 %v3545, %v3470
      %v3590 = vadd.f32 %v3546, %v3473
      %v3591 = vadd.f32 %v3547, %v3475
      %v3592 = vadd.f32 %v3548, %v3478
      %v3593 = vadd.f32 %v3549, %v3480
      %v3594 = vadd.f32 %v3550, %v3483
      %v3595 = vadd.f32 %v3551, %v3485
      %v3596 = vadd.f32 %v3552, %v3488
      %v3597 = vadd.f32 %v3553, %v3490
      %v3598 = vadd.f32 %v3554, %v3493
      %v3599 = vadd.f32 %v3555, %v3495
      %v3600 = vadd.f32 %v3556, %v3498
      %v3601 = vadd.f32 %v3557, %v3500
      %v3602 = vadd.f32 %v3558, %v3503
      %v3603 = vadd.f32 %v3559, %v3505
      %v3604 = vadd.f32 %v3560, %v3508
      %v3605 = vadd.f32 %v3561, %v3510
      %v3606 = vadd.f32 %v3562, %v3513
      %v3607 = vadd.f32 %v3563, %v3515
      %v3608 = vadd.f32 %v3564, %v3518
      %v3609 = vadd.f32 %v3565, %v3520
      %3610 = vst [vmem:[#allocation3] sm:$0xff] %v3566
      %3611 = vst [vmem:[#allocation3 + $0x8] sm:$0xff] %v3567
      %3612 = vst [vmem:[#allocation3 + $0x10] sm:$0xff] %v3568
      %3613 = vst [vmem:[#allocation3 + $0x18] sm:$0xff] %v3569
      %3614 = vst [vmem:[#allocation3 + $0x20] sm:$0xff] %v3570
      %3615 = vst [vmem:[#allocation3 + $0x28] sm:$0xff] %v3571
      %3616 = vst [vmem:[#allocation3 + $0x30] sm:$0xff] %v3572
      %3617 = vst [vmem:[#allocation3 + $0x38] sm:$0xff] %v3573
      %3618 = vst [vmem:[#allocation3 + $0x40] sm:$0xff] %v3574
      %3619 = vst [vmem:[#allocation3 + $0x48] sm:$0xff] %v3575
      %3620 = vst [vmem:[#allocation3 + $0x50] sm:$0xff] %v3576
      %3621 = vst [vmem:[#allocation3 + $0x58] sm:$0xff] %v3577
      %3622 = vst [vmem:[#allocation3 + $0x60] sm:$0xff] %v3578
      %3623 = vst [vmem:[#allocation3 + $0x68] sm:$0xff] %v3579
      %3624 = vst [vmem:[#allocation3 + $0x70] sm:$0xff] %v3580
      %3625 = vst [vmem:[#allocation3 + $0x78] sm:$0xff] %v3581
      %3626 = vst [vmem:[#allocation3 + $0x80] sm:$0xff] %v3582
      %3627 = vst [vmem:[#allocation3 + $0x88] sm:$0xff] %v3583
      %3628 = vst [vmem:[#allocation3 + $0x90] sm:$0xff] %v3584
      %3629 = vst [vmem:[#allocation3 + $0x98] sm:$0xff] %v3585
      %3630 = vst [vmem:[#allocation3 + $0xa0] sm:$0xff] %v3586
      %3631 = vst [vmem:[#allocation3 + $0xa8] sm:$0xff] %v3587
      %3632 = vst [vmem:[#allocation3 + $0xb0] sm:$0xff] %v3588
      %3633 = vst [vmem:[#allocation3 + $0xb8] sm:$0xff] %v3589
      %3634 = vst [vmem:[#allocation3 + $0xc0] sm:$0xff] %v3590
      %3635 = vst [vmem:[#allocation3 + $0xc8] sm:$0xff] %v3591
      %3636 = vst [vmem:[#allocation3 + $0xd0] sm:$0xff] %v3592
      %3637 = vst [vmem:[#allocation3 + $0xd8] sm:$0xff] %v3593
      %3638 = vst [vmem:[#allocation3 + $0xe0] sm:$0xff] %v3594
      %3639 = vst [vmem:[#allocation3 + $0xe8] sm:$0xff] %v3595
      %3640 = vst [vmem:[#allocation3 + $0xf0] sm:$0xff] %v3596
      %3641 = vst [vmem:[#allocation3 + $0xf8] sm:$0xff] %v3597
      %3642 = vst [vmem:[#allocation3 + $0x100] sm:$0xff] %v3598
      %3643 = vst [vmem:[#allocation3 + $0x108] sm:$0xff] %v3599
      %3644 = vst [vmem:[#allocation3 + $0x110] sm:$0xff] %v3600
      %3645 = vst [vmem:[#allocation3 + $0x118] sm:$0xff] %v3601
      %3646 = vst [vmem:[#allocation3 + $0x120] sm:$0xff] %v3602
      %3647 = vst [vmem:[#allocation3 + $0x128] sm:$0xff] %v3603
      %3648 = vst [vmem:[#allocation3 + $0x130] sm:$0xff] %v3604
      %3649 = vst [vmem:[#allocation3 + $0x138] sm:$0xff] %v3605
      %3650 = vst [vmem:[#allocation3 + $0x140] sm:$0xff] %v3606
      %3651 = vst [vmem:[#allocation3 + $0x148] sm:$0xff] %v3607
      %3652 = vst [vmem:[#allocation3 + $0x150] sm:$0xff] %v3608
      %3653 = vst [vmem:[#allocation3 + $0x158] sm:$0xff] %v3609
      %v3654 = vld [vmem:[#allocation2 + $0x4] sm:$0x8]
      %v3655 = vld [vmem:[#allocation2 + $0x8] sm:$0xf]
      %v3656 = vld [vmem:[#allocation2 + $0xc] sm:$0xf]
      %v3657 = vld [vmem:[#allocation2 + $0x10] sm:$0xf]
      %v3658 = vld [vmem:[#allocation2 + $0x14] sm:$0xf]
      %v3659 = vld [vmem:[#allocation2 + $0x18] sm:$0xf]
      %v3660 = vld [vmem:[#allocation2 + $0x1c] sm:$0xf]
      %v3661 = vld [vmem:[#allocation2 + $0x20] sm:$0xf]
      %v3662 = vld [vmem:[#allocation2 + $0x24] sm:$0xf]
      %v3663 = vld [vmem:[#allocation2 + $0x28] sm:$0xf]
      %v3664 = vld [vmem:[#allocation2 + $0x2c] sm:$0xf]
      %v3665 = vld [vmem:[#allocation2 + $0x30] sm:$0xf]
      %v3666 = vld [vmem:[#allocation2 + $0x34] sm:$0xf]
      %v3667 = vld [vmem:[#allocation2 + $0x38] sm:$0xf]
      %v3668 = vld [vmem:[#allocation2 + $0x3c] sm:$0xf]
      %v3669 = vld [vmem:[#allocation2 + $0x40] sm:$0xf]
      %v3670 = vld [vmem:[#allocation2 + $0x44] sm:$0xf]
      %v3671 = vld [vmem:[#allocation2 + $0x48] sm:$0xf]
      %v3672 = vld [vmem:[#allocation2 + $0x4c] sm:$0xf]
      %v3673 = vld [vmem:[#allocation2 + $0x50] sm:$0xf]
      %v3674 = vld [vmem:[#allocation2 + $0x54] sm:$0xf]
      %v3675 = vld [vmem:[#allocation2 + $0x58] sm:$0xf]
      %v3676 = vld [vmem:[#allocation2 + $0x5c] sm:$0xf]
      %v3677 = vld [vmem:[#allocation2 + $0x60] sm:$0xf]
      %v3678 = vld [vmem:[#allocation2 + $0x64] sm:$0xf]
      %v3679 = vld [vmem:[#allocation2 + $0x68] sm:$0xf]
      %v3680 = vld [vmem:[#allocation2 + $0x6c] sm:$0xf]
      %v3681 = vld [vmem:[#allocation2 + $0x70] sm:$0xf]
      %v3682 = vld [vmem:[#allocation2 + $0x74] sm:$0xf]
      %v3683 = vld [vmem:[#allocation2 + $0x78] sm:$0xf]
      %v3684 = vld [vmem:[#allocation2 + $0x7c] sm:$0xf]
      %v3685 = vld [vmem:[#allocation2 + $0x80] sm:$0xf]
      %v3686 = vld [vmem:[#allocation2 + $0x84] sm:$0xf]
      %v3687 = vld [vmem:[#allocation2 + $0x88] sm:$0xf]
      %v3688 = vld [vmem:[#allocation2 + $0x8c] sm:$0xf]
      %v3689 = vld [vmem:[#allocation2 + $0x90] sm:$0xf]
      %v3690 = vld [vmem:[#allocation2 + $0x94] sm:$0xf]
      %v3691 = vld [vmem:[#allocation2 + $0x98] sm:$0xf]
      %v3692 = vld [vmem:[#allocation2 + $0x9c] sm:$0xf]
      %v3693 = vld [vmem:[#allocation2 + $0xa0] sm:$0xf]
      %v3694 = vld [vmem:[#allocation2 + $0xa4] sm:$0xf]
      %v3695 = vld [vmem:[#allocation2 + $0xa8] sm:$0xf]
      %v3696 = vld [vmem:[#allocation2 + $0xac] sm:$0xf]
      %v3697 = vld [vmem:[#allocation2 + $0xb0] sm:$0xf]
      %v3698 = vld [vmem:[#allocation2 + $0xb4] sm:$0xf]
      %s3699 = scalar_lea.vmem %s3, 128
      %v3700 = vld [vmem:[%s3699] sm:$0xf]
      %v3701 = vld [vmem:[%s3699 + $0x4] sm:$0xf]
      %v3702 = vld [vmem:[%s3699 + $0x8] sm:$0xf]
      %v3703 = vld [vmem:[%s3699 + $0xc] sm:$0xf]
      %v3704 = vld [vmem:[%s3699 + $0x10] sm:$0xf]
      %v3705 = vld [vmem:[%s3699 + $0x14] sm:$0xf]
      %v3706 = vld [vmem:[%s3699 + $0x18] sm:$0xf]
      %v3707 = vld [vmem:[%s3699 + $0x1c] sm:$0xf]
      %v3708 = vld [vmem:[%s3699 + $0x20] sm:$0xf]
      %v3709 = vld [vmem:[%s3699 + $0x24] sm:$0xf]
      %v3710 = vld [vmem:[%s3699 + $0x28] sm:$0xf]
      %v3711 = vld [vmem:[%s3699 + $0x2c] sm:$0xf]
      %v3712 = vld [vmem:[%s3699 + $0x30] sm:$0xf]
      %v3713 = vld [vmem:[%s3699 + $0x34] sm:$0xf]
      %v3714 = vld [vmem:[%s3699 + $0x38] sm:$0xf]
      %v3715 = vld [vmem:[%s3699 + $0x3c] sm:$0xf]
      %v3761 = vunpack.c.l.b16 %v3654
      %v3762 = vunpack.c.l.b16 %v3655
      %v3763 = vunpack.c.l.b16 %v3656
      %v3764 = vunpack.c.l.b16 %v3657
      %v3765 = vunpack.c.l.b16 %v3658
      %v3766 = vunpack.c.l.b16 %v3659
      %v3767 = vunpack.c.l.b16 %v3660
      %v3768 = vunpack.c.l.b16 %v3661
      %v3769 = vunpack.c.l.b16 %v3662
      %v3770 = vunpack.c.l.b16 %v3663
      %v3771 = vunpack.c.l.b16 %v3664
      %v3772 = vunpack.c.l.b16 %v3665
      %v3773 = vunpack.c.l.b16 %v3666
      %v3774 = vunpack.c.l.b16 %v3667
      %v3775 = vunpack.c.l.b16 %v3668
      %v3776 = vunpack.c.l.b16 %v3669
      %v3777 = vunpack.c.l.b16 %v3670
      %v3778 = vunpack.c.l.b16 %v3671
      %v3779 = vunpack.c.l.b16 %v3672
      %v3780 = vunpack.c.l.b16 %v3673
      %v3781 = vunpack.c.l.b16 %v3674
      %v3782 = vunpack.c.l.b16 %v3675
      %v3783 = vunpack.c.l.b16 %v3676
      %v3784 = vunpack.c.l.b16 %v3677
      %v3785 = vunpack.c.l.b16 %v3678
      %v3786 = vunpack.c.l.b16 %v3679
      %v3787 = vunpack.c.l.b16 %v3680
      %v3788 = vunpack.c.l.b16 %v3681
      %v3789 = vunpack.c.l.b16 %v3682
      %v3790 = vunpack.c.l.b16 %v3683
      %v3791 = vunpack.c.l.b16 %v3684
      %v3792 = vunpack.c.l.b16 %v3685
      %v3793 = vunpack.c.l.b16 %v3686
      %v3794 = vunpack.c.l.b16 %v3687
      %v3795 = vunpack.c.l.b16 %v3688
      %v3796 = vunpack.c.l.b16 %v3689
      %v3797 = vunpack.c.l.b16 %v3690
      %v3798 = vunpack.c.l.b16 %v3691
      %v3799 = vunpack.c.l.b16 %v3692
      %v3800 = vunpack.c.l.b16 %v3693
      %v3801 = vunpack.c.l.b16 %v3694
      %v3802 = vunpack.c.l.b16 %v3695
      %v3803 = vunpack.c.l.b16 %v3696
      %v3804 = vunpack.c.l.b16 %v3697
      %v3805 = vunpack.c.l.b16 %v3698
      %v3806 = vpack.c.b16 %v3762, %v3761
      %v3807 = vpack.c.b16 %v3764, %v3763
      %v3808 = vpack.c.b16 %v3766, %v3765
      %v3809 = vpack.c.b16 %v3768, %v3767
      %v3810 = vpack.c.b16 %v3770, %v3769
      %v3811 = vpack.c.b16 %v3772, %v3771
      %v3812 = vpack.c.b16 %v3774, %v3773
      %v3813 = vpack.c.b16 %v3776, %v3775
      %v3814 = vpack.c.b16 %v3778, %v3777
      %v3815 = vpack.c.b16 %v3780, %v3779
      %v3816 = vpack.c.b16 %v3782, %v3781
      %v3817 = vpack.c.b16 %v3784, %v3783
      %v3818 = vpack.c.b16 %v3786, %v3785
      %v3819 = vpack.c.b16 %v3788, %v3787
      %v3820 = vpack.c.b16 %v3790, %v3789
      %v3821 = vpack.c.b16 %v3792, %v3791
      %v3822 = vpack.c.b16 %v3794, %v3793
      %v3823 = vpack.c.b16 %v3796, %v3795
      %v3824 = vpack.c.b16 %v3798, %v3797
      %v3825 = vpack.c.b16 %v3800, %v3799
      %v3826 = vpack.c.b16 %v3802, %v3801
      %v3827 = vpack.c.b16 %v3804, %v3803
      %v3828 = vpack.c.b16 %v3805, %v3805
      %vm3829 = vsmask.f32 4352
      %v3831 = vshrl.u32 %v3806, 16
      %v3833 = vrot.slane %v3831, 3
      %v3834 = vshll.u32 %v3806, 16
      %v3836 = vrot.slane %v3834, 4
      %v3837 = vor.u32 %v3833, %v3836
      %v3839 = vshrl.u32 %v3807, 16
      %v3841 = vrot.slane %v3839, 3
      %v3842 = vshll.u32 %v3807, 16
      %v3844 = vrot.slane %v3842, 4
      %v3845 = vor.u32 %v3841, %v3844
      %v3846 = vsel %vm3829, %v3837, %v3845
      %v3848 = vshrl.u32 %v3808, 16
      %v3850 = vrot.slane %v3848, 3
      %v3851 = vshll.u32 %v3808, 16
      %v3853 = vrot.slane %v3851, 4
      %v3854 = vor.u32 %v3850, %v3853
      %v3855 = vsel %vm3829, %v3845, %v3854
      %v3857 = vshrl.u32 %v3809, 16
      %v3859 = vrot.slane %v3857, 3
      %v3860 = vshll.u32 %v3809, 16
      %v3862 = vrot.slane %v3860, 4
      %v3863 = vor.u32 %v3859, %v3862
      %v3864 = vsel %vm3829, %v3854, %v3863
      %v3866 = vshrl.u32 %v3810, 16
      %v3868 = vrot.slane %v3866, 3
      %v3869 = vshll.u32 %v3810, 16
      %v3871 = vrot.slane %v3869, 4
      %v3872 = vor.u32 %v3868, %v3871
      %v3873 = vsel %vm3829, %v3863, %v3872
      %v3875 = vshrl.u32 %v3811, 16
      %v3877 = vrot.slane %v3875, 3
      %v3878 = vshll.u32 %v3811, 16
      %v3880 = vrot.slane %v3878, 4
      %v3881 = vor.u32 %v3877, %v3880
      %v3882 = vsel %vm3829, %v3872, %v3881
      %v3884 = vshrl.u32 %v3812, 16
      %v3886 = vrot.slane %v3884, 3
      %v3887 = vshll.u32 %v3812, 16
      %v3889 = vrot.slane %v3887, 4
      %v3890 = vor.u32 %v3886, %v3889
      %v3891 = vsel %vm3829, %v3881, %v3890
      %v3893 = vshrl.u32 %v3813, 16
      %v3895 = vrot.slane %v3893, 3
      %v3896 = vshll.u32 %v3813, 16
      %v3898 = vrot.slane %v3896, 4
      %v3899 = vor.u32 %v3895, %v3898
      %v3900 = vsel %vm3829, %v3890, %v3899
      %v3902 = vshrl.u32 %v3814, 16
      %v3904 = vrot.slane %v3902, 3
      %v3905 = vshll.u32 %v3814, 16
      %v3907 = vrot.slane %v3905, 4
      %v3908 = vor.u32 %v3904, %v3907
      %v3909 = vsel %vm3829, %v3899, %v3908
      %v3911 = vshrl.u32 %v3815, 16
      %v3913 = vrot.slane %v3911, 3
      %v3914 = vshll.u32 %v3815, 16
      %v3916 = vrot.slane %v3914, 4
      %v3917 = vor.u32 %v3913, %v3916
      %v3918 = vsel %vm3829, %v3908, %v3917
      %v3920 = vshrl.u32 %v3816, 16
      %v3922 = vrot.slane %v3920, 3
      %v3923 = vshll.u32 %v3816, 16
      %v3925 = vrot.slane %v3923, 4
      %v3926 = vor.u32 %v3922, %v3925
      %v3927 = vsel %vm3829, %v3917, %v3926
      %v3929 = vshrl.u32 %v3817, 16
      %v3931 = vrot.slane %v3929, 3
      %v3932 = vshll.u32 %v3817, 16
      %v3934 = vrot.slane %v3932, 4
      %v3935 = vor.u32 %v3931, %v3934
      %v3936 = vsel %vm3829, %v3926, %v3935
      %v3938 = vshrl.u32 %v3818, 16
      %v3940 = vrot.slane %v3938, 3
      %v3941 = vshll.u32 %v3818, 16
      %v3943 = vrot.slane %v3941, 4
      %v3944 = vor.u32 %v3940, %v3943
      %v3945 = vsel %vm3829, %v3935, %v3944
      %v3947 = vshrl.u32 %v3819, 16
      %v3949 = vrot.slane %v3947, 3
      %v3950 = vshll.u32 %v3819, 16
      %v3952 = vrot.slane %v3950, 4
      %v3953 = vor.u32 %v3949, %v3952
      %v3954 = vsel %vm3829, %v3944, %v3953
      %v3956 = vshrl.u32 %v3820, 16
      %v3958 = vrot.slane %v3956, 3
      %v3959 = vshll.u32 %v3820, 16
      %v3961 = vrot.slane %v3959, 4
      %v3962 = vor.u32 %v3958, %v3961
      %v3963 = vsel %vm3829, %v3953, %v3962
      %v3965 = vshrl.u32 %v3821, 16
      %v3967 = vrot.slane %v3965, 3
      %v3968 = vshll.u32 %v3821, 16
      %v3970 = vrot.slane %v3968, 4
      %v3971 = vor.u32 %v3967, %v3970
      %v3972 = vsel %vm3829, %v3962, %v3971
      %v3974 = vshrl.u32 %v3822, 16
      %v3976 = vrot.slane %v3974, 3
      %v3977 = vshll.u32 %v3822, 16
      %v3979 = vrot.slane %v3977, 4
      %v3980 = vor.u32 %v3976, %v3979
      %v3981 = vsel %vm3829, %v3971, %v3980
      %v3983 = vshrl.u32 %v3823, 16
      %v3985 = vrot.slane %v3983, 3
      %v3986 = vshll.u32 %v3823, 16
      %v3988 = vrot.slane %v3986, 4
      %v3989 = vor.u32 %v3985, %v3988
      %v3990 = vsel %vm3829, %v3980, %v3989
      %v3992 = vshrl.u32 %v3824, 16
      %v3994 = vrot.slane %v3992, 3
      %v3995 = vshll.u32 %v3824, 16
      %v3997 = vrot.slane %v3995, 4
      %v3998 = vor.u32 %v3994, %v3997
      %v3999 = vsel %vm3829, %v3989, %v3998
      %v4001 = vshrl.u32 %v3825, 16
      %v4003 = vrot.slane %v4001, 3
      %v4004 = vshll.u32 %v3825, 16
      %v4006 = vrot.slane %v4004, 4
      %v4007 = vor.u32 %v4003, %v4006
      %v4008 = vsel %vm3829, %v3998, %v4007
      %v4010 = vshrl.u32 %v3826, 16
      %v4012 = vrot.slane %v4010, 3
      %v4013 = vshll.u32 %v3826, 16
      %v4015 = vrot.slane %v4013, 4
      %v4016 = vor.u32 %v4012, %v4015
      %v4017 = vsel %vm3829, %v4007, %v4016
      %v4019 = vshrl.u32 %v3827, 16
      %v4021 = vrot.slane %v4019, 3
      %v4022 = vshll.u32 %v3827, 16
      %v4024 = vrot.slane %v4022, 4
      %v4025 = vor.u32 %v4021, %v4024
      %v4026 = vsel %vm3829, %v4016, %v4025
      %v4028 = vshrl.u32 %v3828, 16
      %v4030 = vrot.slane %v4028, 3
      %v4031 = vshll.u32 %v3828, 16
      %v4033 = vrot.slane %v4031, 4
      %v4034 = vor.u32 %v4030, %v4033
      %v4035 = vsel %vm3829, %v4025, %v4034
      %v4074 = vunpack.c.l.b16 %v3700
      %v4075 = vunpack.c.l.b16 %v3701
      %v4076 = vunpack.c.l.b16 %v3702
      %v4077 = vunpack.c.l.b16 %v3703
      %v4078 = vunpack.c.l.b16 %v3704
      %v4079 = vunpack.c.l.b16 %v3705
      %v4080 = vunpack.c.l.b16 %v3706
      %v4081 = vunpack.c.l.b16 %v3707
      %v4082 = vunpack.c.l.b16 %v3708
      %v4083 = vunpack.c.l.b16 %v3709
      %v4084 = vunpack.c.l.b16 %v3710
      %v4085 = vunpack.c.l.b16 %v3711
      %v4086 = vunpack.c.l.b16 %v3712
      %v4087 = vunpack.c.l.b16 %v3713
      %v4088 = vunpack.c.l.b16 %v3714
      %v4089 = vunpack.c.l.b16 %v3715
      %v4090 = vpack.c.b16 %v4075, %v4074
      %v4091 = vpack.c.b16 %v4077, %v4076
      %v4092 = vpack.c.b16 %v4079, %v4078
      %v4093 = vpack.c.b16 %v4081, %v4080
      %v4094 = vpack.c.b16 %v4083, %v4082
      %v4095 = vpack.c.b16 %v4085, %v4084
      %v4096 = vpack.c.b16 %v4087, %v4086
      %v4097 = vpack.c.b16 %v4089, %v4088
      %4106 = vmatpush.bf16.msra.mxu0 %v4097
      %4107 = vmatpush.bf16.msra.mxu0 %v4096
      %4108 = vmatpush.bf16.msra.mxu0 %v4095
      %4109 = vmatpush.bf16.msra.mxu0 %v4094
      %4110 = vmatpush.bf16.msra.mxu0 %v4093
      %4111 = vmatpush.bf16.msra.mxu0 %v4092
      %4112 = vmatpush.bf16.msra.mxu0 %v4091
      %4113 = vmatpush.bf16.msra.mxu0 %v4090
      %4114 = vmatmul.bf16.gmra.mxu0 %v3846
      %v4115 = vpop.f32.mrf.mxu0
      %v4116 = vadd.f32 0.0, %v4115
      %v4117 = vpop.f32.mrf.mxu0
      %v4118 = vadd.f32 0.0, %v4117
      %4119 = vmatmul.bf16.gmra.mxu0 %v3855
      %v4120 = vpop.f32.mrf.mxu0
      %v4121 = vadd.f32 0.0, %v4120
      %v4122 = vpop.f32.mrf.mxu0
      %v4123 = vadd.f32 0.0, %v4122
      %4124 = vmatmul.bf16.gmra.mxu0 %v3864
      %v4125 = vpop.f32.mrf.mxu0
      %v4126 = vadd.f32 0.0, %v4125
      %v4127 = vpop.f32.mrf.mxu0
      %v4128 = vadd.f32 0.0, %v4127
      %4129 = vmatmul.bf16.gmra.mxu0 %v3873
      %v4130 = vpop.f32.mrf.mxu0
      %v4131 = vadd.f32 0.0, %v4130
      %v4132 = vpop.f32.mrf.mxu0
      %v4133 = vadd.f32 0.0, %v4132
      %4134 = vmatmul.bf16.gmra.mxu0 %v3882
      %v4135 = vpop.f32.mrf.mxu0
      %v4136 = vadd.f32 0.0, %v4135
      %v4137 = vpop.f32.mrf.mxu0
      %v4138 = vadd.f32 0.0, %v4137
      %4139 = vmatmul.bf16.gmra.mxu0 %v3891
      %v4140 = vpop.f32.mrf.mxu0
      %v4141 = vadd.f32 0.0, %v4140
      %v4142 = vpop.f32.mrf.mxu0
      %v4143 = vadd.f32 0.0, %v4142
      %4144 = vmatmul.bf16.gmra.mxu0 %v3900
      %v4145 = vpop.f32.mrf.mxu0
      %v4146 = vadd.f32 0.0, %v4145
      %v4147 = vpop.f32.mrf.mxu0
      %v4148 = vadd.f32 0.0, %v4147
      %4149 = vmatmul.bf16.gmra.mxu0 %v3909
      %v4150 = vpop.f32.mrf.mxu0
      %v4151 = vadd.f32 0.0, %v4150
      %v4152 = vpop.f32.mrf.mxu0
      %v4153 = vadd.f32 0.0, %v4152
      %4154 = vmatmul.bf16.gmra.mxu0 %v3918
      %v4155 = vpop.f32.mrf.mxu0
      %v4156 = vadd.f32 0.0, %v4155
      %v4157 = vpop.f32.mrf.mxu0
      %v4158 = vadd.f32 0.0, %v4157
      %4159 = vmatmul.bf16.gmra.mxu0 %v3927
      %v4160 = vpop.f32.mrf.mxu0
      %v4161 = vadd.f32 0.0, %v4160
      %v4162 = vpop.f32.mrf.mxu0
      %v4163 = vadd.f32 0.0, %v4162
      %4164 = vmatmul.bf16.gmra.mxu0 %v3936
      %v4165 = vpop.f32.mrf.mxu0
      %v4166 = vadd.f32 0.0, %v4165
      %v4167 = vpop.f32.mrf.mxu0
      %v4168 = vadd.f32 0.0, %v4167
      %4169 = vmatmul.bf16.gmra.mxu0 %v3945
      %v4170 = vpop.f32.mrf.mxu0
      %v4171 = vadd.f32 0.0, %v4170
      %v4172 = vpop.f32.mrf.mxu0
      %v4173 = vadd.f32 0.0, %v4172
      %4174 = vmatmul.bf16.gmra.mxu0 %v3954
      %v4175 = vpop.f32.mrf.mxu0
      %v4176 = vadd.f32 0.0, %v4175
      %v4177 = vpop.f32.mrf.mxu0
      %v4178 = vadd.f32 0.0, %v4177
      %4179 = vmatmul.bf16.gmra.mxu0 %v3963
      %v4180 = vpop.f32.mrf.mxu0
      %v4181 = vadd.f32 0.0, %v4180
      %v4182 = vpop.f32.mrf.mxu0
      %v4183 = vadd.f32 0.0, %v4182
      %4184 = vmatmul.bf16.gmra.mxu0 %v3972
      %v4185 = vpop.f32.mrf.mxu0
      %v4186 = vadd.f32 0.0, %v4185
      %v4187 = vpop.f32.mrf.mxu0
      %v4188 = vadd.f32 0.0, %v4187
      %4189 = vmatmul.bf16.gmra.mxu0 %v3981
      %v4190 = vpop.f32.mrf.mxu0
      %v4191 = vadd.f32 0.0, %v4190
      %v4192 = vpop.f32.mrf.mxu0
      %v4193 = vadd.f32 0.0, %v4192
      %4194 = vmatmul.bf16.gmra.mxu0 %v3990
      %v4195 = vpop.f32.mrf.mxu0
      %v4196 = vadd.f32 0.0, %v4195
      %v4197 = vpop.f32.mrf.mxu0
      %v4198 = vadd.f32 0.0, %v4197
      %4199 = vmatmul.bf16.gmra.mxu0 %v3999
      %v4200 = vpop.f32.mrf.mxu0
      %v4201 = vadd.f32 0.0, %v4200
      %v4202 = vpop.f32.mrf.mxu0
      %v4203 = vadd.f32 0.0, %v4202
      %4204 = vmatmul.bf16.gmra.mxu0 %v4008
      %v4205 = vpop.f32.mrf.mxu0
      %v4206 = vadd.f32 0.0, %v4205
      %v4207 = vpop.f32.mrf.mxu0
      %v4208 = vadd.f32 0.0, %v4207
      %4209 = vmatmul.bf16.gmra.mxu0 %v4017
      %v4210 = vpop.f32.mrf.mxu0
      %v4211 = vadd.f32 0.0, %v4210
      %v4212 = vpop.f32.mrf.mxu0
      %v4213 = vadd.f32 0.0, %v4212
      %4214 = vmatmul.bf16.gmra.mxu0 %v4026
      %v4215 = vpop.f32.mrf.mxu0
      %v4216 = vadd.f32 0.0, %v4215
      %v4217 = vpop.f32.mrf.mxu0
      %v4218 = vadd.f32 0.0, %v4217
      %4219 = vmatmul.bf16.gmra.mxu0 %v4035
      %v4220 = vpop.f32.mrf.mxu0
      %v4221 = vadd.f32 0.0, %v4220
      %v4222 = vpop.f32.mrf.mxu0
      %v4223 = vadd.f32 0.0, %v4222
      %4224 = vdwg.mxu0
      %v4225 = vld [vmem:[#allocation3] sm:$0xff]
      %v4226 = vld [vmem:[#allocation3 + $0x8] sm:$0xff]
      %v4227 = vld [vmem:[#allocation3 + $0x10] sm:$0xff]
      %v4228 = vld [vmem:[#allocation3 + $0x18] sm:$0xff]
      %v4229 = vld [vmem:[#allocation3 + $0x20] sm:$0xff]
      %v4230 = vld [vmem:[#allocation3 + $0x28] sm:$0xff]
      %v4231 = vld [vmem:[#allocation3 + $0x30] sm:$0xff]
      %v4232 = vld [vmem:[#allocation3 + $0x38] sm:$0xff]
      %v4233 = vld [vmem:[#allocation3 + $0x40] sm:$0xff]
      %v4234 = vld [vmem:[#allocation3 + $0x48] sm:$0xff]
      %v4235 = vld [vmem:[#allocation3 + $0x50] sm:$0xff]
      %v4236 = vld [vmem:[#allocation3 + $0x58] sm:$0xff]
      %v4237 = vld [vmem:[#allocation3 + $0x60] sm:$0xff]
      %v4238 = vld [vmem:[#allocation3 + $0x68] sm:$0xff]
      %v4239 = vld [vmem:[#allocation3 + $0x70] sm:$0xff]
      %v4240 = vld [vmem:[#allocation3 + $0x78] sm:$0xff]
      %v4241 = vld [vmem:[#allocation3 + $0x80] sm:$0xff]
      %v4242 = vld [vmem:[#allocation3 + $0x88] sm:$0xff]
      %v4243 = vld [vmem:[#allocation3 + $0x90] sm:$0xff]
      %v4244 = vld [vmem:[#allocation3 + $0x98] sm:$0xff]
      %v4245 = vld [vmem:[#allocation3 + $0xa0] sm:$0xff]
      %v4246 = vld [vmem:[#allocation3 + $0xa8] sm:$0xff]
      %v4247 = vld [vmem:[#allocation3 + $0xb0] sm:$0xff]
      %v4248 = vld [vmem:[#allocation3 + $0xb8] sm:$0xff]
      %v4249 = vld [vmem:[#allocation3 + $0xc0] sm:$0xff]
      %v4250 = vld [vmem:[#allocation3 + $0xc8] sm:$0xff]
      %v4251 = vld [vmem:[#allocation3 + $0xd0] sm:$0xff]
      %v4252 = vld [vmem:[#allocation3 + $0xd8] sm:$0xff]
      %v4253 = vld [vmem:[#allocation3 + $0xe0] sm:$0xff]
      %v4254 = vld [vmem:[#allocation3 + $0xe8] sm:$0xff]
      %v4255 = vld [vmem:[#allocation3 + $0xf0] sm:$0xff]
      %v4256 = vld [vmem:[#allocation3 + $0xf8] sm:$0xff]
      %v4257 = vld [vmem:[#allocation3 + $0x100] sm:$0xff]
      %v4258 = vld [vmem:[#allocation3 + $0x108] sm:$0xff]
      %v4259 = vld [vmem:[#allocation3 + $0x110] sm:$0xff]
      %v4260 = vld [vmem:[#allocation3 + $0x118] sm:$0xff]
      %v4261 = vld [vmem:[#allocation3 + $0x120] sm:$0xff]
      %v4262 = vld [vmem:[#allocation3 + $0x128] sm:$0xff]
      %v4263 = vld [vmem:[#allocation3 + $0x130] sm:$0xff]
      %v4264 = vld [vmem:[#allocation3 + $0x138] sm:$0xff]
      %v4265 = vld [vmem:[#allocation3 + $0x140] sm:$0xff]
      %v4266 = vld [vmem:[#allocation3 + $0x148] sm:$0xff]
      %v4267 = vld [vmem:[#allocation3 + $0x150] sm:$0xff]
      %v4268 = vld [vmem:[#allocation3 + $0x158] sm:$0xff]
      %v4269 = vadd.f32 %v4225, %v4116
      %v4270 = vadd.f32 %v4226, %v4118
      %v4271 = vadd.f32 %v4227, %v4121
      %v4272 = vadd.f32 %v4228, %v4123
      %v4273 = vadd.f32 %v4229, %v4126
      %v4274 = vadd.f32 %v4230, %v4128
      %v4275 = vadd.f32 %v4231, %v4131
      %v4276 = vadd.f32 %v4232, %v4133
      %v4277 = vadd.f32 %v4233, %v4136
      %v4278 = vadd.f32 %v4234, %v4138
      %v4279 = vadd.f32 %v4235, %v4141
      %v4280 = vadd.f32 %v4236, %v4143
      %v4281 = vadd.f32 %v4237, %v4146
      %v4282 = vadd.f32 %v4238, %v4148
      %v4283 = vadd.f32 %v4239, %v4151
      %v4284 = vadd.f32 %v4240, %v4153
      %v4285 = vadd.f32 %v4241, %v4156
      %v4286 = vadd.f32 %v4242, %v4158
      %v4287 = vadd.f32 %v4243, %v4161
      %v4288 = vadd.f32 %v4244, %v4163
      %v4289 = vadd.f32 %v4245, %v4166
      %v4290 = vadd.f32 %v4246, %v4168
      %v4291 = vadd.f32 %v4247, %v4171
      %v4292 = vadd.f32 %v4248, %v4173
      %v4293 = vadd.f32 %v4249, %v4176
      %v4294 = vadd.f32 %v4250, %v4178
      %v4295 = vadd.f32 %v4251, %v4181
      %v4296 = vadd.f32 %v4252, %v4183
      %v4297 = vadd.f32 %v4253, %v4186
      %v4298 = vadd.f32 %v4254, %v4188
      %v4299 = vadd.f32 %v4255, %v4191
      %v4300 = vadd.f32 %v4256, %v4193
      %v4301 = vadd.f32 %v4257, %v4196
      %v4302 = vadd.f32 %v4258, %v4198
      %v4303 = vadd.f32 %v4259, %v4201
      %v4304 = vadd.f32 %v4260, %v4203
      %v4305 = vadd.f32 %v4261, %v4206
      %v4306 = vadd.f32 %v4262, %v4208
      %v4307 = vadd.f32 %v4263, %v4211
      %v4308 = vadd.f32 %v4264, %v4213
      %v4309 = vadd.f32 %v4265, %v4216
      %v4310 = vadd.f32 %v4266, %v4218
      %v4311 = vadd.f32 %v4267, %v4221
      %v4312 = vadd.f32 %v4268, %v4223
      %4313 = vst [vmem:[#allocation3] sm:$0xff] %v4269
      %4314 = vst [vmem:[#allocation3 + $0x8] sm:$0xff] %v4270
      %4315 = vst [vmem:[#allocation3 + $0x10] sm:$0xff] %v4271
      %4316 = vst [vmem:[#allocation3 + $0x18] sm:$0xff] %v4272
      %4317 = vst [vmem:[#allocation3 + $0x20] sm:$0xff] %v4273
      %4318 = vst [vmem:[#allocation3 + $0x28] sm:$0xff] %v4274
      %4319 = vst [vmem:[#allocation3 + $0x30] sm:$0xff] %v4275
      %4320 = vst [vmem:[#allocation3 + $0x38] sm:$0xff] %v4276
      %4321 = vst [vmem:[#allocation3 + $0x40] sm:$0xff] %v4277
      %4322 = vst [vmem:[#allocation3 + $0x48] sm:$0xff] %v4278
      %4323 = vst [vmem:[#allocation3 + $0x50] sm:$0xff] %v4279
      %4324 = vst [vmem:[#allocation3 + $0x58] sm:$0xff] %v4280
      %4325 = vst [vmem:[#allocation3 + $0x60] sm:$0xff] %v4281
      %4326 = vst [vmem:[#allocation3 + $0x68] sm:$0xff] %v4282
      %4327 = vst [vmem:[#allocation3 + $0x70] sm:$0xff] %v4283
      %4328 = vst [vmem:[#allocation3 + $0x78] sm:$0xff] %v4284
      %4329 = vst [vmem:[#allocation3 + $0x80] sm:$0xff] %v4285
      %4330 = vst [vmem:[#allocation3 + $0x88] sm:$0xff] %v4286
      %4331 = vst [vmem:[#allocation3 + $0x90] sm:$0xff] %v4287
      %4332 = vst [vmem:[#allocation3 + $0x98] sm:$0xff] %v4288
      %4333 = vst [vmem:[#allocation3 + $0xa0] sm:$0xff] %v4289
      %4334 = vst [vmem:[#allocation3 + $0xa8] sm:$0xff] %v4290
      %4335 = vst [vmem:[#allocation3 + $0xb0] sm:$0xff] %v4291
      %4336 = vst [vmem:[#allocation3 + $0xb8] sm:$0xff] %v4292
      %4337 = vst [vmem:[#allocation3 + $0xc0] sm:$0xff] %v4293
      %4338 = vst [vmem:[#allocation3 + $0xc8] sm:$0xff] %v4294
      %4339 = vst [vmem:[#allocation3 + $0xd0] sm:$0xff] %v4295
      %4340 = vst [vmem:[#allocation3 + $0xd8] sm:$0xff] %v4296
      %4341 = vst [vmem:[#allocation3 + $0xe0] sm:$0xff] %v4297
      %4342 = vst [vmem:[#allocation3 + $0xe8] sm:$0xff] %v4298
      %4343 = vst [vmem:[#allocation3 + $0xf0] sm:$0xff] %v4299
      %4344 = vst [vmem:[#allocation3 + $0xf8] sm:$0xff] %v4300
      %4345 = vst [vmem:[#allocation3 + $0x100] sm:$0xff] %v4301
      %4346 = vst [vmem:[#allocation3 + $0x108] sm:$0xff] %v4302
      %4347 = vst [vmem:[#allocation3 + $0x110] sm:$0xff] %v4303
      %4348 = vst [vmem:[#allocation3 + $0x118] sm:$0xff] %v4304
      %4349 = vst [vmem:[#allocation3 + $0x120] sm:$0xff] %v4305
      %4350 = vst [vmem:[#allocation3 + $0x128] sm:$0xff] %v4306
      %4351 = vst [vmem:[#allocation3 + $0x130] sm:$0xff] %v4307
      %4352 = vst [vmem:[#allocation3 + $0x138] sm:$0xff] %v4308
      %4353 = vst [vmem:[#allocation3 + $0x140] sm:$0xff] %v4309
      %4354 = vst [vmem:[#allocation3 + $0x148] sm:$0xff] %v4310
      %4355 = vst [vmem:[#allocation3 + $0x150] sm:$0xff] %v4311
      %4356 = vst [vmem:[#allocation3 + $0x158] sm:$0xff] %v4312
      %v4357 = vld [vmem:[#allocation2 + $0xc] sm:$0x8]
      %v4358 = vld [vmem:[#allocation2 + $0x10] sm:$0xf]
      %v4359 = vld [vmem:[#allocation2 + $0x14] sm:$0xf]
      %v4360 = vld [vmem:[#allocation2 + $0x18] sm:$0xf]
      %v4361 = vld [vmem:[#allocation2 + $0x1c] sm:$0xf]
      %v4362 = vld [vmem:[#allocation2 + $0x20] sm:$0xf]
      %v4363 = vld [vmem:[#allocation2 + $0x24] sm:$0xf]
      %v4364 = vld [vmem:[#allocation2 + $0x28] sm:$0xf]
      %v4365 = vld [vmem:[#allocation2 + $0x2c] sm:$0xf]
      %v4366 = vld [vmem:[#allocation2 + $0x30] sm:$0xf]
      %v4367 = vld [vmem:[#allocation2 + $0x34] sm:$0xf]
      %v4368 = vld [vmem:[#allocation2 + $0x38] sm:$0xf]
      %v4369 = vld [vmem:[#allocation2 + $0x3c] sm:$0xf]
      %v4370 = vld [vmem:[#allocation2 + $0x40] sm:$0xf]
      %v4371 = vld [vmem:[#allocation2 + $0x44] sm:$0xf]
      %v4372 = vld [vmem:[#allocation2 + $0x48] sm:$0xf]
      %v4373 = vld [vmem:[#allocation2 + $0x4c] sm:$0xf]
      %v4374 = vld [vmem:[#allocation2 + $0x50] sm:$0xf]
      %v4375 = vld [vmem:[#allocation2 + $0x54] sm:$0xf]
      %v4376 = vld [vmem:[#allocation2 + $0x58] sm:$0xf]
      %v4377 = vld [vmem:[#allocation2 + $0x5c] sm:$0xf]
      %v4378 = vld [vmem:[#allocation2 + $0x60] sm:$0xf]
      %v4379 = vld [vmem:[#allocation2 + $0x64] sm:$0xf]
      %v4380 = vld [vmem:[#allocation2 + $0x68] sm:$0xf]
      %v4381 = vld [vmem:[#allocation2 + $0x6c] sm:$0xf]
      %v4382 = vld [vmem:[#allocation2 + $0x70] sm:$0xf]
      %v4383 = vld [vmem:[#allocation2 + $0x74] sm:$0xf]
      %v4384 = vld [vmem:[#allocation2 + $0x78] sm:$0xf]
      %v4385 = vld [vmem:[#allocation2 + $0x7c] sm:$0xf]
      %v4386 = vld [vmem:[#allocation2 + $0x80] sm:$0xf]
      %v4387 = vld [vmem:[#allocation2 + $0x84] sm:$0xf]
      %v4388 = vld [vmem:[#allocation2 + $0x88] sm:$0xf]
      %v4389 = vld [vmem:[#allocation2 + $0x8c] sm:$0xf]
      %v4390 = vld [vmem:[#allocation2 + $0x90] sm:$0xf]
      %v4391 = vld [vmem:[#allocation2 + $0x94] sm:$0xf]
      %v4392 = vld [vmem:[#allocation2 + $0x98] sm:$0xf]
      %v4393 = vld [vmem:[#allocation2 + $0x9c] sm:$0xf]
      %v4394 = vld [vmem:[#allocation2 + $0xa0] sm:$0xf]
      %v4395 = vld [vmem:[#allocation2 + $0xa4] sm:$0xf]
      %v4396 = vld [vmem:[#allocation2 + $0xa8] sm:$0xf]
      %v4397 = vld [vmem:[#allocation2 + $0xac] sm:$0xf]
      %v4398 = vld [vmem:[#allocation2 + $0xb0] sm:$0xf]
      %v4399 = vld [vmem:[#allocation2 + $0xb4] sm:$0xf]
      %v4400 = vld [vmem:[#allocation2 + $0xb8] sm:$0xf]
      %v4401 = vld [vmem:[#allocation2 + $0xbc] sm:$0xf]
      %s4402 = scalar_lea.vmem %s3, 192
      %v4403 = vld [vmem:[%s4402] sm:$0xf]
      %v4404 = vld [vmem:[%s4402 + $0x4] sm:$0xf]
      %v4405 = vld [vmem:[%s4402 + $0x8] sm:$0xf]
      %v4406 = vld [vmem:[%s4402 + $0xc] sm:$0xf]
      %v4407 = vld [vmem:[%s4402 + $0x10] sm:$0xf]
      %v4408 = vld [vmem:[%s4402 + $0x14] sm:$0xf]
      %v4409 = vld [vmem:[%s4402 + $0x18] sm:$0xf]
      %v4410 = vld [vmem:[%s4402 + $0x1c] sm:$0xf]
      %v4411 = vld [vmem:[%s4402 + $0x20] sm:$0xf]
      %v4412 = vld [vmem:[%s4402 + $0x24] sm:$0xf]
      %v4413 = vld [vmem:[%s4402 + $0x28] sm:$0xf]
      %v4414 = vld [vmem:[%s4402 + $0x2c] sm:$0xf]
      %v4415 = vld [vmem:[%s4402 + $0x30] sm:$0xf]
      %v4416 = vld [vmem:[%s4402 + $0x34] sm:$0xf]
      %v4417 = vld [vmem:[%s4402 + $0x38] sm:$0xf]
      %v4418 = vld [vmem:[%s4402 + $0x3c] sm:$0xf]
      %v4464 = vunpack.c.l.b16 %v4357
      %v4465 = vunpack.c.l.b16 %v4358
      %v4466 = vunpack.c.l.b16 %v4359
      %v4467 = vunpack.c.l.b16 %v4360
      %v4468 = vunpack.c.l.b16 %v4361
      %v4469 = vunpack.c.l.b16 %v4362
      %v4470 = vunpack.c.l.b16 %v4363
      %v4471 = vunpack.c.l.b16 %v4364
      %v4472 = vunpack.c.l.b16 %v4365
      %v4473 = vunpack.c.l.b16 %v4366
      %v4474 = vunpack.c.l.b16 %v4367
      %v4475 = vunpack.c.l.b16 %v4368
      %v4476 = vunpack.c.l.b16 %v4369
      %v4477 = vunpack.c.l.b16 %v4370
      %v4478 = vunpack.c.l.b16 %v4371
      %v4479 = vunpack.c.l.b16 %v4372
      %v4480 = vunpack.c.l.b16 %v4373
      %v4481 = vunpack.c.l.b16 %v4374
      %v4482 = vunpack.c.l.b16 %v4375
      %v4483 = vunpack.c.l.b16 %v4376
      %v4484 = vunpack.c.l.b16 %v4377
      %v4485 = vunpack.c.l.b16 %v4378
      %v4486 = vunpack.c.l.b16 %v4379
      %v4487 = vunpack.c.l.b16 %v4380
      %v4488 = vunpack.c.l.b16 %v4381
      %v4489 = vunpack.c.l.b16 %v4382
      %v4490 = vunpack.c.l.b16 %v4383
      %v4491 = vunpack.c.l.b16 %v4384
      %v4492 = vunpack.c.l.b16 %v4385
      %v4493 = vunpack.c.l.b16 %v4386
      %v4494 = vunpack.c.l.b16 %v4387
      %v4495 = vunpack.c.l.b16 %v4388
      %v4496 = vunpack.c.l.b16 %v4389
      %v4497 = vunpack.c.l.b16 %v4390
      %v4498 = vunpack.c.l.b16 %v4391
      %v4499 = vunpack.c.l.b16 %v4392
      %v4500 = vunpack.c.l.b16 %v4393
      %v4501 = vunpack.c.l.b16 %v4394
      %v4502 = vunpack.c.l.b16 %v4395
      %v4503 = vunpack.c.l.b16 %v4396
      %v4504 = vunpack.c.l.b16 %v4397
      %v4505 = vunpack.c.l.b16 %v4398
      %v4506 = vunpack.c.l.b16 %v4399
      %v4507 = vunpack.c.l.b16 %v4400
      %v4508 = vunpack.c.l.b16 %v4401
      %v4509 = vpack.c.b16 %v4465, %v4464
      %v4510 = vpack.c.b16 %v4467, %v4466
      %v4511 = vpack.c.b16 %v4469, %v4468
      %v4512 = vpack.c.b16 %v4471, %v4470
      %v4513 = vpack.c.b16 %v4473, %v4472
      %v4514 = vpack.c.b16 %v4475, %v4474
      %v4515 = vpack.c.b16 %v4477, %v4476
      %v4516 = vpack.c.b16 %v4479, %v4478
      %v4517 = vpack.c.b16 %v4481, %v4480
      %v4518 = vpack.c.b16 %v4483, %v4482
      %v4519 = vpack.c.b16 %v4485, %v4484
      %v4520 = vpack.c.b16 %v4487, %v4486
      %v4521 = vpack.c.b16 %v4489, %v4488
      %v4522 = vpack.c.b16 %v4491, %v4490
      %v4523 = vpack.c.b16 %v4493, %v4492
      %v4524 = vpack.c.b16 %v4495, %v4494
      %v4525 = vpack.c.b16 %v4497, %v4496
      %v4526 = vpack.c.b16 %v4499, %v4498
      %v4527 = vpack.c.b16 %v4501, %v4500
      %v4528 = vpack.c.b16 %v4503, %v4502
      %v4529 = vpack.c.b16 %v4505, %v4504
      %v4530 = vpack.c.b16 %v4507, %v4506
      %v4531 = vpack.c.b16 %v4508, %v4508
      %v4533 = vshrl.u32 %v4509, 16
      %v4535 = vrot.slane %v4533, 3
      %v4536 = vshll.u32 %v4509, 16
      %v4538 = vrot.slane %v4536, 4
      %v4539 = vor.u32 %v4535, %v4538
      %v4541 = vshrl.u32 %v4510, 16
      %v4543 = vrot.slane %v4541, 3
      %v4544 = vshll.u32 %v4510, 16
      %v4546 = vrot.slane %v4544, 4
      %v4547 = vor.u32 %v4543, %v4546
      %v4548 = vsel %vm3829, %v4539, %v4547
      %v4550 = vshrl.u32 %v4511, 16
      %v4552 = vrot.slane %v4550, 3
      %v4553 = vshll.u32 %v4511, 16
      %v4555 = vrot.slane %v4553, 4
      %v4556 = vor.u32 %v4552, %v4555
      %v4557 = vsel %vm3829, %v4547, %v4556
      %v4559 = vshrl.u32 %v4512, 16
      %v4561 = vrot.slane %v4559, 3
      %v4562 = vshll.u32 %v4512, 16
      %v4564 = vrot.slane %v4562, 4
      %v4565 = vor.u32 %v4561, %v4564
      %v4566 = vsel %vm3829, %v4556, %v4565
      %v4568 = vshrl.u32 %v4513, 16
      %v4570 = vrot.slane %v4568, 3
      %v4571 = vshll.u32 %v4513, 16
      %v4573 = vrot.slane %v4571, 4
      %v4574 = vor.u32 %v4570, %v4573
      %v4575 = vsel %vm3829, %v4565, %v4574
      %v4577 = vshrl.u32 %v4514, 16
      %v4579 = vrot.slane %v4577, 3
      %v4580 = vshll.u32 %v4514, 16
      %v4582 = vrot.slane %v4580, 4
      %v4583 = vor.u32 %v4579, %v4582
      %v4584 = vsel %vm3829, %v4574, %v4583
      %v4586 = vshrl.u32 %v4515, 16
      %v4588 = vrot.slane %v4586, 3
      %v4589 = vshll.u32 %v4515, 16
      %v4591 = vrot.slane %v4589, 4
      %v4592 = vor.u32 %v4588, %v4591
      %v4593 = vsel %vm3829, %v4583, %v4592
      %v4595 = vshrl.u32 %v4516, 16
      %v4597 = vrot.slane %v4595, 3
      %v4598 = vshll.u32 %v4516, 16
      %v4600 = vrot.slane %v4598, 4
      %v4601 = vor.u32 %v4597, %v4600
      %v4602 = vsel %vm3829, %v4592, %v4601
      %v4604 = vshrl.u32 %v4517, 16
      %v4606 = vrot.slane %v4604, 3
      %v4607 = vshll.u32 %v4517, 16
      %v4609 = vrot.slane %v4607, 4
      %v4610 = vor.u32 %v4606, %v4609
      %v4611 = vsel %vm3829, %v4601, %v4610
      %v4613 = vshrl.u32 %v4518, 16
      %v4615 = vrot.slane %v4613, 3
      %v4616 = vshll.u32 %v4518, 16
      %v4618 = vrot.slane %v4616, 4
      %v4619 = vor.u32 %v4615, %v4618
      %v4620 = vsel %vm3829, %v4610, %v4619
      %v4622 = vshrl.u32 %v4519, 16
      %v4624 = vrot.slane %v4622, 3
      %v4625 = vshll.u32 %v4519, 16
      %v4627 = vrot.slane %v4625, 4
      %v4628 = vor.u32 %v4624, %v4627
      %v4629 = vsel %vm3829, %v4619, %v4628
      %v4631 = vshrl.u32 %v4520, 16
      %v4633 = vrot.slane %v4631, 3
      %v4634 = vshll.u32 %v4520, 16
      %v4636 = vrot.slane %v4634, 4
      %v4637 = vor.u32 %v4633, %v4636
      %v4638 = vsel %vm3829, %v4628, %v4637
      %v4640 = vshrl.u32 %v4521, 16
      %v4642 = vrot.slane %v4640, 3
      %v4643 = vshll.u32 %v4521, 16
      %v4645 = vrot.slane %v4643, 4
      %v4646 = vor.u32 %v4642, %v4645
      %v4647 = vsel %vm3829, %v4637, %v4646
      %v4649 = vshrl.u32 %v4522, 16
      %v4651 = vrot.slane %v4649, 3
      %v4652 = vshll.u32 %v4522, 16
      %v4654 = vrot.slane %v4652, 4
      %v4655 = vor.u32 %v4651, %v4654
      %v4656 = vsel %vm3829, %v4646, %v4655
      %v4658 = vshrl.u32 %v4523, 16
      %v4660 = vrot.slane %v4658, 3
      %v4661 = vshll.u32 %v4523, 16
      %v4663 = vrot.slane %v4661, 4
      %v4664 = vor.u32 %v4660, %v4663
      %v4665 = vsel %vm3829, %v4655, %v4664
      %v4667 = vshrl.u32 %v4524, 16
      %v4669 = vrot.slane %v4667, 3
      %v4670 = vshll.u32 %v4524, 16
      %v4672 = vrot.slane %v4670, 4
      %v4673 = vor.u32 %v4669, %v4672
      %v4674 = vsel %vm3829, %v4664, %v4673
      %v4676 = vshrl.u32 %v4525, 16
      %v4678 = vrot.slane %v4676, 3
      %v4679 = vshll.u32 %v4525, 16
      %v4681 = vrot.slane %v4679, 4
      %v4682 = vor.u32 %v4678, %v4681
      %v4683 = vsel %vm3829, %v4673, %v4682
      %v4685 = vshrl.u32 %v4526, 16
      %v4687 = vrot.slane %v4685, 3
      %v4688 = vshll.u32 %v4526, 16
      %v4690 = vrot.slane %v4688, 4
      %v4691 = vor.u32 %v4687, %v4690
      %v4692 = vsel %vm3829, %v4682, %v4691
      %v4694 = vshrl.u32 %v4527, 16
      %v4696 = vrot.slane %v4694, 3
      %v4697 = vshll.u32 %v4527, 16
      %v4699 = vrot.slane %v4697, 4
      %v4700 = vor.u32 %v4696, %v4699
      %v4701 = vsel %vm3829, %v4691, %v4700
      %v4703 = vshrl.u32 %v4528, 16
      %v4705 = vrot.slane %v4703, 3
      %v4706 = vshll.u32 %v4528, 16
      %v4708 = vrot.slane %v4706, 4
      %v4709 = vor.u32 %v4705, %v4708
      %v4710 = vsel %vm3829, %v4700, %v4709
      %v4712 = vshrl.u32 %v4529, 16
      %v4714 = vrot.slane %v4712, 3
      %v4715 = vshll.u32 %v4529, 16
      %v4717 = vrot.slane %v4715, 4
      %v4718 = vor.u32 %v4714, %v4717
      %v4719 = vsel %vm3829, %v4709, %v4718
      %v4721 = vshrl.u32 %v4530, 16
      %v4723 = vrot.slane %v4721, 3
      %v4724 = vshll.u32 %v4530, 16
      %v4726 = vrot.slane %v4724, 4
      %v4727 = vor.u32 %v4723, %v4726
      %v4728 = vsel %vm3829, %v4718, %v4727
      %v4730 = vshrl.u32 %v4531, 16
      %v4732 = vrot.slane %v4730, 3
      %v4733 = vshll.u32 %v4531, 16
      %v4735 = vrot.slane %v4733, 4
      %v4736 = vor.u32 %v4732, %v4735
      %v4737 = vsel %vm3829, %v4727, %v4736
      %v4776 = vunpack.c.l.b16 %v4403
      %v4777 = vunpack.c.l.b16 %v4404
      %v4778 = vunpack.c.l.b16 %v4405
      %v4779 = vunpack.c.l.b16 %v4406
      %v4780 = vunpack.c.l.b16 %v4407
      %v4781 = vunpack.c.l.b16 %v4408
      %v4782 = vunpack.c.l.b16 %v4409
      %v4783 = vunpack.c.l.b16 %v4410
      %v4784 = vunpack.c.l.b16 %v4411
      %v4785 = vunpack.c.l.b16 %v4412
      %v4786 = vunpack.c.l.b16 %v4413
      %v4787 = vunpack.c.l.b16 %v4414
      %v4788 = vunpack.c.l.b16 %v4415
      %v4789 = vunpack.c.l.b16 %v4416
      %v4790 = vunpack.c.l.b16 %v4417
      %v4791 = vunpack.c.l.b16 %v4418
      %v4792 = vpack.c.b16 %v4777, %v4776
      %v4793 = vpack.c.b16 %v4779, %v4778
      %v4794 = vpack.c.b16 %v4781, %v4780
      %v4795 = vpack.c.b16 %v4783, %v4782
      %v4796 = vpack.c.b16 %v4785, %v4784
      %v4797 = vpack.c.b16 %v4787, %v4786
      %v4798 = vpack.c.b16 %v4789, %v4788
      %v4799 = vpack.c.b16 %v4791, %v4790
      %4808 = vmatpush.bf16.msra.mxu0 %v4799
      %4809 = vmatpush.bf16.msra.mxu0 %v4798
      %4810 = vmatpush.bf16.msra.mxu0 %v4797
      %4811 = vmatpush.bf16.msra.mxu0 %v4796
      %4812 = vmatpush.bf16.msra.mxu0 %v4795
      %4813 = vmatpush.bf16.msra.mxu0 %v4794
      %4814 = vmatpush.bf16.msra.mxu0 %v4793
      %4815 = vmatpush.bf16.msra.mxu0 %v4792
      %4816 = vmatmul.bf16.gmra.mxu0 %v4548
      %v4817 = vpop.f32.mrf.mxu0
      %v4818 = vadd.f32 0.0, %v4817
      %v4819 = vpop.f32.mrf.mxu0
      %v4820 = vadd.f32 0.0, %v4819
      %4821 = vmatmul.bf16.gmra.mxu0 %v4557
      %v4822 = vpop.f32.mrf.mxu0
      %v4823 = vadd.f32 0.0, %v4822
      %v4824 = vpop.f32.mrf.mxu0
      %v4825 = vadd.f32 0.0, %v4824
      %4826 = vmatmul.bf16.gmra.mxu0 %v4566
      %v4827 = vpop.f32.mrf.mxu0
      %v4828 = vadd.f32 0.0, %v4827
      %v4829 = vpop.f32.mrf.mxu0
      %v4830 = vadd.f32 0.0, %v4829
      %4831 = vmatmul.bf16.gmra.mxu0 %v4575
      %v4832 = vpop.f32.mrf.mxu0
      %v4833 = vadd.f32 0.0, %v4832
      %v4834 = vpop.f32.mrf.mxu0
      %v4835 = vadd.f32 0.0, %v4834
      %4836 = vmatmul.bf16.gmra.mxu0 %v4584
      %v4837 = vpop.f32.mrf.mxu0
      %v4838 = vadd.f32 0.0, %v4837
      %v4839 = vpop.f32.mrf.mxu0
      %v4840 = vadd.f32 0.0, %v4839
      %4841 = vmatmul.bf16.gmra.mxu0 %v4593
      %v4842 = vpop.f32.mrf.mxu0
      %v4843 = vadd.f32 0.0, %v4842
      %v4844 = vpop.f32.mrf.mxu0
      %v4845 = vadd.f32 0.0, %v4844
      %4846 = vmatmul.bf16.gmra.mxu0 %v4602
      %v4847 = vpop.f32.mrf.mxu0
      %v4848 = vadd.f32 0.0, %v4847
      %v4849 = vpop.f32.mrf.mxu0
      %v4850 = vadd.f32 0.0, %v4849
      %4851 = vmatmul.bf16.gmra.mxu0 %v4611
      %v4852 = vpop.f32.mrf.mxu0
      %v4853 = vadd.f32 0.0, %v4852
      %v4854 = vpop.f32.mrf.mxu0
      %v4855 = vadd.f32 0.0, %v4854
      %4856 = vmatmul.bf16.gmra.mxu0 %v4620
      %v4857 = vpop.f32.mrf.mxu0
      %v4858 = vadd.f32 0.0, %v4857
      %v4859 = vpop.f32.mrf.mxu0
      %v4860 = vadd.f32 0.0, %v4859
      %4861 = vmatmul.bf16.gmra.mxu0 %v4629
      %v4862 = vpop.f32.mrf.mxu0
      %v4863 = vadd.f32 0.0, %v4862
      %v4864 = vpop.f32.mrf.mxu0
      %v4865 = vadd.f32 0.0, %v4864
      %4866 = vmatmul.bf16.gmra.mxu0 %v4638
      %v4867 = vpop.f32.mrf.mxu0
      %v4868 = vadd.f32 0.0, %v4867
      %v4869 = vpop.f32.mrf.mxu0
      %v4870 = vadd.f32 0.0, %v4869
      %4871 = vmatmul.bf16.gmra.mxu0 %v4647
      %v4872 = vpop.f32.mrf.mxu0
      %v4873 = vadd.f32 0.0, %v4872
      %v4874 = vpop.f32.mrf.mxu0
      %v4875 = vadd.f32 0.0, %v4874
      %4876 = vmatmul.bf16.gmra.mxu0 %v4656
      %v4877 = vpop.f32.mrf.mxu0
      %v4878 = vadd.f32 0.0, %v4877
      %v4879 = vpop.f32.mrf.mxu0
      %v4880 = vadd.f32 0.0, %v4879
      %4881 = vmatmul.bf16.gmra.mxu0 %v4665
      %v4882 = vpop.f32.mrf.mxu0
      %v4883 = vadd.f32 0.0, %v4882
      %v4884 = vpop.f32.mrf.mxu0
      %v4885 = vadd.f32 0.0, %v4884
      %4886 = vmatmul.bf16.gmra.mxu0 %v4674
      %v4887 = vpop.f32.mrf.mxu0
      %v4888 = vadd.f32 0.0, %v4887
      %v4889 = vpop.f32.mrf.mxu0
      %v4890 = vadd.f32 0.0, %v4889
      %4891 = vmatmul.bf16.gmra.mxu0 %v4683
      %v4892 = vpop.f32.mrf.mxu0
      %v4893 = vadd.f32 0.0, %v4892
      %v4894 = vpop.f32.mrf.mxu0
      %v4895 = vadd.f32 0.0, %v4894
      %4896 = vmatmul.bf16.gmra.mxu0 %v4692
      %v4897 = vpop.f32.mrf.mxu0
      %v4898 = vadd.f32 0.0, %v4897
      %v4899 = vpop.f32.mrf.mxu0
      %v4900 = vadd.f32 0.0, %v4899
      %4901 = vmatmul.bf16.gmra.mxu0 %v4701
      %v4902 = vpop.f32.mrf.mxu0
      %v4903 = vadd.f32 0.0, %v4902
      %v4904 = vpop.f32.mrf.mxu0
      %v4905 = vadd.f32 0.0, %v4904
      %4906 = vmatmul.bf16.gmra.mxu0 %v4710
      %v4907 = vpop.f32.mrf.mxu0
      %v4908 = vadd.f32 0.0, %v4907
      %v4909 = vpop.f32.mrf.mxu0
      %v4910 = vadd.f32 0.0, %v4909
      %4911 = vmatmul.bf16.gmra.mxu0 %v4719
      %v4912 = vpop.f32.mrf.mxu0
      %v4913 = vadd.f32 0.0, %v4912
      %v4914 = vpop.f32.mrf.mxu0
      %v4915 = vadd.f32 0.0, %v4914
      %4916 = vmatmul.bf16.gmra.mxu0 %v4728
      %v4917 = vpop.f32.mrf.mxu0
      %v4918 = vadd.f32 0.0, %v4917
      %v4919 = vpop.f32.mrf.mxu0
      %v4920 = vadd.f32 0.0, %v4919
      %4921 = vmatmul.bf16.gmra.mxu0 %v4737
      %v4922 = vpop.f32.mrf.mxu0
      %v4923 = vadd.f32 0.0, %v4922
      %v4924 = vpop.f32.mrf.mxu0
      %v4925 = vadd.f32 0.0, %v4924
      %4926 = vdwg.mxu0
      %v4927 = vld [vmem:[#allocation3] sm:$0xff]
      %v4928 = vld [vmem:[#allocation3 + $0x8] sm:$0xff]
      %v4929 = vld [vmem:[#allocation3 + $0x10] sm:$0xff]
      %v4930 = vld [vmem:[#allocation3 + $0x18] sm:$0xff]
      %v4931 = vld [vmem:[#allocation3 + $0x20] sm:$0xff]
      %v4932 = vld [vmem:[#allocation3 + $0x28] sm:$0xff]
      %v4933 = vld [vmem:[#allocation3 + $0x30] sm:$0xff]
      %v4934 = vld [vmem:[#allocation3 + $0x38] sm:$0xff]
      %v4935 = vld [vmem:[#allocation3 + $0x40] sm:$0xff]
      %v4936 = vld [vmem:[#allocation3 + $0x48] sm:$0xff]
      %v4937 = vld [vmem:[#allocation3 + $0x50] sm:$0xff]
      %v4938 = vld [vmem:[#allocation3 + $0x58] sm:$0xff]
      %v4939 = vld [vmem:[#allocation3 + $0x60] sm:$0xff]
      %v4940 = vld [vmem:[#allocation3 + $0x68] sm:$0xff]
      %v4941 = vld [vmem:[#allocation3 + $0x70] sm:$0xff]
      %v4942 = vld [vmem:[#allocation3 + $0x78] sm:$0xff]
      %v4943 = vld [vmem:[#allocation3 + $0x80] sm:$0xff]
      %v4944 = vld [vmem:[#allocation3 + $0x88] sm:$0xff]
      %v4945 = vld [vmem:[#allocation3 + $0x90] sm:$0xff]
      %v4946 = vld [vmem:[#allocation3 + $0x98] sm:$0xff]
      %v4947 = vld [vmem:[#allocation3 + $0xa0] sm:$0xff]
      %v4948 = vld [vmem:[#allocation3 + $0xa8] sm:$0xff]
      %v4949 = vld [vmem:[#allocation3 + $0xb0] sm:$0xff]
      %v4950 = vld [vmem:[#allocation3 + $0xb8] sm:$0xff]
      %v4951 = vld [vmem:[#allocation3 + $0xc0] sm:$0xff]
      %v4952 = vld [vmem:[#allocation3 + $0xc8] sm:$0xff]
      %v4953 = vld [vmem:[#allocation3 + $0xd0] sm:$0xff]
      %v4954 = vld [vmem:[#allocation3 + $0xd8] sm:$0xff]
      %v4955 = vld [vmem:[#allocation3 + $0xe0] sm:$0xff]
      %v4956 = vld [vmem:[#allocation3 + $0xe8] sm:$0xff]
      %v4957 = vld [vmem:[#allocation3 + $0xf0] sm:$0xff]
      %v4958 = vld [vmem:[#allocation3 + $0xf8] sm:$0xff]
      %v4959 = vld [vmem:[#allocation3 + $0x100] sm:$0xff]
      %v4960 = vld [vmem:[#allocation3 + $0x108] sm:$0xff]
      %v4961 = vld [vmem:[#allocation3 + $0x110] sm:$0xff]
      %v4962 = vld [vmem:[#allocation3 + $0x118] sm:$0xff]
      %v4963 = vld [vmem:[#allocation3 + $0x120] sm:$0xff]
      %v4964 = vld [vmem:[#allocation3 + $0x128] sm:$0xff]
      %v4965 = vld [vmem:[#allocation3 + $0x130] sm:$0xff]
      %v4966 = vld [vmem:[#allocation3 + $0x138] sm:$0xff]
      %v4967 = vld [vmem:[#allocation3 + $0x140] sm:$0xff]
      %v4968 = vld [vmem:[#allocation3 + $0x148] sm:$0xff]
      %v4969 = vld [vmem:[#allocation3 + $0x150] sm:$0xff]
      %v4970 = vld [vmem:[#allocation3 + $0x158] sm:$0xff]
      %v4971 = vadd.f32 %v4927, %v4818
      %v4972 = vadd.f32 %v4928, %v4820
      %v4973 = vadd.f32 %v4929, %v4823
      %v4974 = vadd.f32 %v4930, %v4825
      %v4975 = vadd.f32 %v4931, %v4828
      %v4976 = vadd.f32 %v4932, %v4830
      %v4977 = vadd.f32 %v4933, %v4833
      %v4978 = vadd.f32 %v4934, %v4835
      %v4979 = vadd.f32 %v4935, %v4838
      %v4980 = vadd.f32 %v4936, %v4840
      %v4981 = vadd.f32 %v4937, %v4843
      %v4982 = vadd.f32 %v4938, %v4845
      %v4983 = vadd.f32 %v4939, %v4848
      %v4984 = vadd.f32 %v4940, %v4850
      %v4985 = vadd.f32 %v4941, %v4853
      %v4986 = vadd.f32 %v4942, %v4855
      %v4987 = vadd.f32 %v4943, %v4858
      %v4988 = vadd.f32 %v4944, %v4860
      %v4989 = vadd.f32 %v4945, %v4863
      %v4990 = vadd.f32 %v4946, %v4865
      %v4991 = vadd.f32 %v4947, %v4868
      %v4992 = vadd.f32 %v4948, %v4870
      %v4993 = vadd.f32 %v4949, %v4873
      %v4994 = vadd.f32 %v4950, %v4875
      %v4995 = vadd.f32 %v4951, %v4878
      %v4996 = vadd.f32 %v4952, %v4880
      %v4997 = vadd.f32 %v4953, %v4883
      %v4998 = vadd.f32 %v4954, %v4885
      %v4999 = vadd.f32 %v4955, %v4888
      %v5000 = vadd.f32 %v4956, %v4890
      %v5001 = vadd.f32 %v4957, %v4893
      %v5002 = vadd.f32 %v4958, %v4895
      %v5003 = vadd.f32 %v4959, %v4898
      %v5004 = vadd.f32 %v4960, %v4900
      %v5005 = vadd.f32 %v4961, %v4903
      %v5006 = vadd.f32 %v4962, %v4905
      %v5007 = vadd.f32 %v4963, %v4908
      %v5008 = vadd.f32 %v4964, %v4910
      %v5009 = vadd.f32 %v4965, %v4913
      %v5010 = vadd.f32 %v4966, %v4915
      %v5011 = vadd.f32 %v4967, %v4918
      %v5012 = vadd.f32 %v4968, %v4920
      %v5013 = vadd.f32 %v4969, %v4923
      %v5014 = vadd.f32 %v4970, %v4925
      %5015 = vst [vmem:[#allocation3] sm:$0xff] %v4971
      %5016 = vst [vmem:[#allocation3 + $0x8] sm:$0xff] %v4972
      %5017 = vst [vmem:[#allocation3 + $0x10] sm:$0xff] %v4973
      %5018 = vst [vmem:[#allocation3 + $0x18] sm:$0xff] %v4974
      %5019 = vst [vmem:[#allocation3 + $0x20] sm:$0xff] %v4975
      %5020 = vst [vmem:[#allocation3 + $0x28] sm:$0xff] %v4976
      %5021 = vst [vmem:[#allocation3 + $0x30] sm:$0xff] %v4977
      %5022 = vst [vmem:[#allocation3 + $0x38] sm:$0xff] %v4978
      %5023 = vst [vmem:[#allocation3 + $0x40] sm:$0xff] %v4979
      %5024 = vst [vmem:[#allocation3 + $0x48] sm:$0xff] %v4980
      %5025 = vst [vmem:[#allocation3 + $0x50] sm:$0xff] %v4981
      %5026 = vst [vmem:[#allocation3 + $0x58] sm:$0xff] %v4982
      %5027 = vst [vmem:[#allocation3 + $0x60] sm:$0xff] %v4983
      %5028 = vst [vmem:[#allocation3 + $0x68] sm:$0xff] %v4984
      %5029 = vst [vmem:[#allocation3 + $0x70] sm:$0xff] %v4985
      %5030 = vst [vmem:[#allocation3 + $0x78] sm:$0xff] %v4986
      %5031 = vst [vmem:[#allocation3 + $0x80] sm:$0xff] %v4987
      %5032 = vst [vmem:[#allocation3 + $0x88] sm:$0xff] %v4988
      %5033 = vst [vmem:[#allocation3 + $0x90] sm:$0xff] %v4989
      %5034 = vst [vmem:[#allocation3 + $0x98] sm:$0xff] %v4990
      %5035 = vst [vmem:[#allocation3 + $0xa0] sm:$0xff] %v4991
      %5036 = vst [vmem:[#allocation3 + $0xa8] sm:$0xff] %v4992
      %5037 = vst [vmem:[#allocation3 + $0xb0] sm:$0xff] %v4993
      %5038 = vst [vmem:[#allocation3 + $0xb8] sm:$0xff] %v4994
      %5039 = vst [vmem:[#allocation3 + $0xc0] sm:$0xff] %v4995
      %5040 = vst [vmem:[#allocation3 + $0xc8] sm:$0xff] %v4996
      %5041 = vst [vmem:[#allocation3 + $0xd0] sm:$0xff] %v4997
      %5042 = vst [vmem:[#allocation3 + $0xd8] sm:$0xff] %v4998
      %5043 = vst [vmem:[#allocation3 + $0xe0] sm:$0xff] %v4999
      %5044 = vst [vmem:[#allocation3 + $0xe8] sm:$0xff] %v5000
      %5045 = vst [vmem:[#allocation3 + $0xf0] sm:$0xff] %v5001
      %5046 = vst [vmem:[#allocation3 + $0xf8] sm:$0xff] %v5002
      %5047 = vst [vmem:[#allocation3 + $0x100] sm:$0xff] %v5003
      %5048 = vst [vmem:[#allocation3 + $0x108] sm:$0xff] %v5004
      %5049 = vst [vmem:[#allocation3 + $0x110] sm:$0xff] %v5005
      %5050 = vst [vmem:[#allocation3 + $0x118] sm:$0xff] %v5006
      %5051 = vst [vmem:[#allocation3 + $0x120] sm:$0xff] %v5007
      %5052 = vst [vmem:[#allocation3 + $0x128] sm:$0xff] %v5008
      %5053 = vst [vmem:[#allocation3 + $0x130] sm:$0xff] %v5009
      %5054 = vst [vmem:[#allocation3 + $0x138] sm:$0xff] %v5010
      %5055 = vst [vmem:[#allocation3 + $0x140] sm:$0xff] %v5011
      %5056 = vst [vmem:[#allocation3 + $0x148] sm:$0xff] %v5012
      %5057 = vst [vmem:[#allocation3 + $0x150] sm:$0xff] %v5013
      %5058 = vst [vmem:[#allocation3 + $0x158] sm:$0xff] %v5014
      %v5059 = vld [vmem:[#allocation2 + $0x10] sm:$0xf]
      %v5060 = vld [vmem:[#allocation2 + $0x14] sm:$0xf]
      %v5061 = vld [vmem:[#allocation2 + $0x18] sm:$0xf]
      %v5062 = vld [vmem:[#allocation2 + $0x1c] sm:$0xf]
      %v5063 = vld [vmem:[#allocation2 + $0x20] sm:$0xf]
      %v5064 = vld [vmem:[#allocation2 + $0x24] sm:$0xf]
      %v5065 = vld [vmem:[#allocation2 + $0x28] sm:$0xf]
      %v5066 = vld [vmem:[#allocation2 + $0x2c] sm:$0xf]
      %v5067 = vld [vmem:[#allocation2 + $0x30] sm:$0xf]
      %v5068 = vld [vmem:[#allocation2 + $0x34] sm:$0xf]
      %v5069 = vld [vmem:[#allocation2 + $0x38] sm:$0xf]
      %v5070 = vld [vmem:[#allocation2 + $0x3c] sm:$0xf]
      %v5071 = vld [vmem:[#allocation2 + $0x40] sm:$0xf]
      %v5072 = vld [vmem:[#allocation2 + $0x44] sm:$0xf]
      %v5073 = vld [vmem:[#allocation2 + $0x48] sm:$0xf]
      %v5074 = vld [vmem:[#allocation2 + $0x4c] sm:$0xf]
      %v5075 = vld [vmem:[#allocation2 + $0x50] sm:$0xf]
      %v5076 = vld [vmem:[#allocation2 + $0x54] sm:$0xf]
      %v5077 = vld [vmem:[#allocation2 + $0x58] sm:$0xf]
      %v5078 = vld [vmem:[#allocation2 + $0x5c] sm:$0xf]
      %v5079 = vld [vmem:[#allocation2 + $0x60] sm:$0xf]
      %v5080 = vld [vmem:[#allocation2 + $0x64] sm:$0xf]
      %v5081 = vld [vmem:[#allocation2 + $0x68] sm:$0xf]
      %v5082 = vld [vmem:[#allocation2 + $0x6c] sm:$0xf]
      %v5083 = vld [vmem:[#allocation2 + $0x70] sm:$0xf]
      %v5084 = vld [vmem:[#allocation2 + $0x74] sm:$0xf]
      %v5085 = vld [vmem:[#allocation2 + $0x78] sm:$0xf]
      %v5086 = vld [vmem:[#allocation2 + $0x7c] sm:$0xf]
      %v5087 = vld [vmem:[#allocation2 + $0x80] sm:$0xf]
      %v5088 = vld [vmem:[#allocation2 + $0x84] sm:$0xf]
      %v5089 = vld [vmem:[#allocation2 + $0x88] sm:$0xf]
      %v5090 = vld [vmem:[#allocation2 + $0x8c] sm:$0xf]
      %v5091 = vld [vmem:[#allocation2 + $0x90] sm:$0xf]
      %v5092 = vld [vmem:[#allocation2 + $0x94] sm:$0xf]
      %v5093 = vld [vmem:[#allocation2 + $0x98] sm:$0xf]
      %v5094 = vld [vmem:[#allocation2 + $0x9c] sm:$0xf]
      %v5095 = vld [vmem:[#allocation2 + $0xa0] sm:$0xf]
      %v5096 = vld [vmem:[#allocation2 + $0xa4] sm:$0xf]
      %v5097 = vld [vmem:[#allocation2 + $0xa8] sm:$0xf]
      %v5098 = vld [vmem:[#allocation2 + $0xac] sm:$0xf]
      %v5099 = vld [vmem:[#allocation2 + $0xb0] sm:$0xf]
      %v5100 = vld [vmem:[#allocation2 + $0xb4] sm:$0xf]
      %v5101 = vld [vmem:[#allocation2 + $0xb8] sm:$0xf]
      %v5102 = vld [vmem:[#allocation2 + $0xbc] sm:$0xf]
      %s5103 = scalar_lea.vmem %s3, 256
      %v5104 = vld [vmem:[%s5103] sm:$0xf]
      %v5105 = vld [vmem:[%s5103 + $0x4] sm:$0xf]
      %v5106 = vld [vmem:[%s5103 + $0x8] sm:$0xf]
      %v5107 = vld [vmem:[%s5103 + $0xc] sm:$0xf]
      %v5108 = vld [vmem:[%s5103 + $0x10] sm:$0xf]
      %v5109 = vld [vmem:[%s5103 + $0x14] sm:$0xf]
      %v5110 = vld [vmem:[%s5103 + $0x18] sm:$0xf]
      %v5111 = vld [vmem:[%s5103 + $0x1c] sm:$0xf]
      %v5112 = vld [vmem:[%s5103 + $0x20] sm:$0xf]
      %v5113 = vld [vmem:[%s5103 + $0x24] sm:$0xf]
      %v5114 = vld [vmem:[%s5103 + $0x28] sm:$0xf]
      %v5115 = vld [vmem:[%s5103 + $0x2c] sm:$0xf]
      %v5116 = vld [vmem:[%s5103 + $0x30] sm:$0xf]
      %v5117 = vld [vmem:[%s5103 + $0x34] sm:$0xf]
      %v5118 = vld [vmem:[%s5103 + $0x38] sm:$0xf]
      %v5119 = vld [vmem:[%s5103 + $0x3c] sm:$0xf]
      %v5164 = vunpack.c.l.b16 %v5059
      %v5165 = vunpack.c.l.b16 %v5060
      %v5166 = vunpack.c.l.b16 %v5061
      %v5167 = vunpack.c.l.b16 %v5062
      %v5168 = vunpack.c.l.b16 %v5063
      %v5169 = vunpack.c.l.b16 %v5064
      %v5170 = vunpack.c.l.b16 %v5065
      %v5171 = vunpack.c.l.b16 %v5066
      %v5172 = vunpack.c.l.b16 %v5067
      %v5173 = vunpack.c.l.b16 %v5068
      %v5174 = vunpack.c.l.b16 %v5069
      %v5175 = vunpack.c.l.b16 %v5070
      %v5176 = vunpack.c.l.b16 %v5071
      %v5177 = vunpack.c.l.b16 %v5072
      %v5178 = vunpack.c.l.b16 %v5073
      %v5179 = vunpack.c.l.b16 %v5074
      %v5180 = vunpack.c.l.b16 %v5075
      %v5181 = vunpack.c.l.b16 %v5076
      %v5182 = vunpack.c.l.b16 %v5077
      %v5183 = vunpack.c.l.b16 %v5078
      %v5184 = vunpack.c.l.b16 %v5079
      %v5185 = vunpack.c.l.b16 %v5080
      %v5186 = vunpack.c.l.b16 %v5081
      %v5187 = vunpack.c.l.b16 %v5082
      %v5188 = vunpack.c.l.b16 %v5083
      %v5189 = vunpack.c.l.b16 %v5084
      %v5190 = vunpack.c.l.b16 %v5085
      %v5191 = vunpack.c.l.b16 %v5086
      %v5192 = vunpack.c.l.b16 %v5087
      %v5193 = vunpack.c.l.b16 %v5088
      %v5194 = vunpack.c.l.b16 %v5089
      %v5195 = vunpack.c.l.b16 %v5090
      %v5196 = vunpack.c.l.b16 %v5091
      %v5197 = vunpack.c.l.b16 %v5092
      %v5198 = vunpack.c.l.b16 %v5093
      %v5199 = vunpack.c.l.b16 %v5094
      %v5200 = vunpack.c.l.b16 %v5095
      %v5201 = vunpack.c.l.b16 %v5096
      %v5202 = vunpack.c.l.b16 %v5097
      %v5203 = vunpack.c.l.b16 %v5098
      %v5204 = vunpack.c.l.b16 %v5099
      %v5205 = vunpack.c.l.b16 %v5100
      %v5206 = vunpack.c.l.b16 %v5101
      %v5207 = vunpack.c.l.b16 %v5102
      %v5208 = vpack.c.b16 %v5165, %v5164
      %v5209 = vpack.c.b16 %v5167, %v5166
      %v5210 = vpack.c.b16 %v5169, %v5168
      %v5211 = vpack.c.b16 %v5171, %v5170
      %v5212 = vpack.c.b16 %v5173, %v5172
      %v5213 = vpack.c.b16 %v5175, %v5174
      %v5214 = vpack.c.b16 %v5177, %v5176
      %v5215 = vpack.c.b16 %v5179, %v5178
      %v5216 = vpack.c.b16 %v5181, %v5180
      %v5217 = vpack.c.b16 %v5183, %v5182
      %v5218 = vpack.c.b16 %v5185, %v5184
      %v5219 = vpack.c.b16 %v5187, %v5186
      %v5220 = vpack.c.b16 %v5189, %v5188
      %v5221 = vpack.c.b16 %v5191, %v5190
      %v5222 = vpack.c.b16 %v5193, %v5192
      %v5223 = vpack.c.b16 %v5195, %v5194
      %v5224 = vpack.c.b16 %v5197, %v5196
      %v5225 = vpack.c.b16 %v5199, %v5198
      %v5226 = vpack.c.b16 %v5201, %v5200
      %v5227 = vpack.c.b16 %v5203, %v5202
      %v5228 = vpack.c.b16 %v5205, %v5204
      %v5229 = vpack.c.b16 %v5207, %v5206
      %v5268 = vunpack.c.l.b16 %v5104
      %v5269 = vunpack.c.l.b16 %v5105
      %v5270 = vunpack.c.l.b16 %v5106
      %v5271 = vunpack.c.l.b16 %v5107
      %v5272 = vunpack.c.l.b16 %v5108
      %v5273 = vunpack.c.l.b16 %v5109
      %v5274 = vunpack.c.l.b16 %v5110
      %v5275 = vunpack.c.l.b16 %v5111
      %v5276 = vunpack.c.l.b16 %v5112
      %v5277 = vunpack.c.l.b16 %v5113
      %v5278 = vunpack.c.l.b16 %v5114
      %v5279 = vunpack.c.l.b16 %v5115
      %v5280 = vunpack.c.l.b16 %v5116
      %v5281 = vunpack.c.l.b16 %v5117
      %v5282 = vunpack.c.l.b16 %v5118
      %v5283 = vunpack.c.l.b16 %v5119
      %v5284 = vpack.c.b16 %v5269, %v5268
      %v5285 = vpack.c.b16 %v5271, %v5270
      %v5286 = vpack.c.b16 %v5273, %v5272
      %v5287 = vpack.c.b16 %v5275, %v5274
      %v5288 = vpack.c.b16 %v5277, %v5276
      %v5289 = vpack.c.b16 %v5279, %v5278
      %v5290 = vpack.c.b16 %v5281, %v5280
      %v5291 = vpack.c.b16 %v5283, %v5282
      %5300 = vmatpush.bf16.msra.mxu0 %v5291
      %5301 = vmatpush.bf16.msra.mxu0 %v5290
      %5302 = vmatpush.bf16.msra.mxu0 %v5289
      %5303 = vmatpush.bf16.msra.mxu0 %v5288
      %5304 = vmatpush.bf16.msra.mxu0 %v5287
      %5305 = vmatpush.bf16.msra.mxu0 %v5286
      %5306 = vmatpush.bf16.msra.mxu0 %v5285
      %5307 = vmatpush.bf16.msra.mxu0 %v5284
      %5308 = vmatmul.bf16.gmra.mxu0 %v5208
      %v5309 = vpop.f32.mrf.mxu0
      %v5310 = vadd.f32 0.0, %v5309
      %v5311 = vpop.f32.mrf.mxu0
      %v5312 = vadd.f32 0.0, %v5311
      %5313 = vmatmul.bf16.gmra.mxu0 %v5209
      %v5314 = vpop.f32.mrf.mxu0
      %v5315 = vadd.f32 0.0, %v5314
      %v5316 = vpop.f32.mrf.mxu0
      %v5317 = vadd.f32 0.0, %v5316
      %5318 = vmatmul.bf16.gmra.mxu0 %v5210
      %v5319 = vpop.f32.mrf.mxu0
      %v5320 = vadd.f32 0.0, %v5319
      %v5321 = vpop.f32.mrf.mxu0
      %v5322 = vadd.f32 0.0, %v5321
      %5323 = vmatmul.bf16.gmra.mxu0 %v5211
      %v5324 = vpop.f32.mrf.mxu0
      %v5325 = vadd.f32 0.0, %v5324
      %v5326 = vpop.f32.mrf.mxu0
      %v5327 = vadd.f32 0.0, %v5326
      %5328 = vmatmul.bf16.gmra.mxu0 %v5212
      %v5329 = vpop.f32.mrf.mxu0
      %v5330 = vadd.f32 0.0, %v5329
      %v5331 = vpop.f32.mrf.mxu0
      %v5332 = vadd.f32 0.0, %v5331
      %5333 = vmatmul.bf16.gmra.mxu0 %v5213
      %v5334 = vpop.f32.mrf.mxu0
      %v5335 = vadd.f32 0.0, %v5334
      %v5336 = vpop.f32.mrf.mxu0
      %v5337 = vadd.f32 0.0, %v5336
      %5338 = vmatmul.bf16.gmra.mxu0 %v5214
      %v5339 = vpop.f32.mrf.mxu0
      %v5340 = vadd.f32 0.0, %v5339
      %v5341 = vpop.f32.mrf.mxu0
      %v5342 = vadd.f32 0.0, %v5341
      %5343 = vmatmul.bf16.gmra.mxu0 %v5215
      %v5344 = vpop.f32.mrf.mxu0
      %v5345 = vadd.f32 0.0, %v5344
      %v5346 = vpop.f32.mrf.mxu0
      %v5347 = vadd.f32 0.0, %v5346
      %5348 = vmatmul.bf16.gmra.mxu0 %v5216
      %v5349 = vpop.f32.mrf.mxu0
      %v5350 = vadd.f32 0.0, %v5349
      %v5351 = vpop.f32.mrf.mxu0
      %v5352 = vadd.f32 0.0, %v5351
      %5353 = vmatmul.bf16.gmra.mxu0 %v5217
      %v5354 = vpop.f32.mrf.mxu0
      %v5355 = vadd.f32 0.0, %v5354
      %v5356 = vpop.f32.mrf.mxu0
      %v5357 = vadd.f32 0.0, %v5356
      %5358 = vmatmul.bf16.gmra.mxu0 %v5218
      %v5359 = vpop.f32.mrf.mxu0
      %v5360 = vadd.f32 0.0, %v5359
      %v5361 = vpop.f32.mrf.mxu0
      %v5362 = vadd.f32 0.0, %v5361
      %5363 = vmatmul.bf16.gmra.mxu0 %v5219
      %v5364 = vpop.f32.mrf.mxu0
      %v5365 = vadd.f32 0.0, %v5364
      %v5366 = vpop.f32.mrf.mxu0
      %v5367 = vadd.f32 0.0, %v5366
      %5368 = vmatmul.bf16.gmra.mxu0 %v5220
      %v5369 = vpop.f32.mrf.mxu0
      %v5370 = vadd.f32 0.0, %v5369
      %v5371 = vpop.f32.mrf.mxu0
      %v5372 = vadd.f32 0.0, %v5371
      %5373 = vmatmul.bf16.gmra.mxu0 %v5221
      %v5374 = vpop.f32.mrf.mxu0
      %v5375 = vadd.f32 0.0, %v5374
      %v5376 = vpop.f32.mrf.mxu0
      %v5377 = vadd.f32 0.0, %v5376
      %5378 = vmatmul.bf16.gmra.mxu0 %v5222
      %v5379 = vpop.f32.mrf.mxu0
      %v5380 = vadd.f32 0.0, %v5379
      %v5381 = vpop.f32.mrf.mxu0
      %v5382 = vadd.f32 0.0, %v5381
      %5383 = vmatmul.bf16.gmra.mxu0 %v5223
      %v5384 = vpop.f32.mrf.mxu0
      %v5385 = vadd.f32 0.0, %v5384
      %v5386 = vpop.f32.mrf.mxu0
      %v5387 = vadd.f32 0.0, %v5386
      %5388 = vmatmul.bf16.gmra.mxu0 %v5224
      %v5389 = vpop.f32.mrf.mxu0
      %v5390 = vadd.f32 0.0, %v5389
      %v5391 = vpop.f32.mrf.mxu0
      %v5392 = vadd.f32 0.0, %v5391
      %5393 = vmatmul.bf16.gmra.mxu0 %v5225
      %v5394 = vpop.f32.mrf.mxu0
      %v5395 = vadd.f32 0.0, %v5394
      %v5396 = vpop.f32.mrf.mxu0
      %v5397 = vadd.f32 0.0, %v5396
      %5398 = vmatmul.bf16.gmra.mxu0 %v5226
      %v5399 = vpop.f32.mrf.mxu0
      %v5400 = vadd.f32 0.0, %v5399
      %v5401 = vpop.f32.mrf.mxu0
      %v5402 = vadd.f32 0.0, %v5401
      %5403 = vmatmul.bf16.gmra.mxu0 %v5227
      %v5404 = vpop.f32.mrf.mxu0
      %v5405 = vadd.f32 0.0, %v5404
      %v5406 = vpop.f32.mrf.mxu0
      %v5407 = vadd.f32 0.0, %v5406
      %5408 = vmatmul.bf16.gmra.mxu0 %v5228
      %v5409 = vpop.f32.mrf.mxu0
      %v5410 = vadd.f32 0.0, %v5409
      %v5411 = vpop.f32.mrf.mxu0
      %v5412 = vadd.f32 0.0, %v5411
      %5413 = vmatmul.bf16.gmra.mxu0 %v5229
      %v5414 = vpop.f32.mrf.mxu0
      %v5415 = vadd.f32 0.0, %v5414
      %v5416 = vpop.f32.mrf.mxu0
      %v5417 = vadd.f32 0.0, %v5416
      %5418 = vdwg.mxu0
      %v5419 = vld [vmem:[#allocation3] sm:$0xff]
      %v5420 = vld [vmem:[#allocation3 + $0x8] sm:$0xff]
      %v5421 = vld [vmem:[#allocation3 + $0x10] sm:$0xff]
      %v5422 = vld [vmem:[#allocation3 + $0x18] sm:$0xff]
      %v5423 = vld [vmem:[#allocation3 + $0x20] sm:$0xff]
      %v5424 = vld [vmem:[#allocation3 + $0x28] sm:$0xff]
      %v5425 = vld [vmem:[#allocation3 + $0x30] sm:$0xff]
      %v5426 = vld [vmem:[#allocation3 + $0x38] sm:$0xff]
      %v5427 = vld [vmem:[#allocation3 + $0x40] sm:$0xff]
      %v5428 = vld [vmem:[#allocation3 + $0x48] sm:$0xff]
      %v5429 = vld [vmem:[#allocation3 + $0x50] sm:$0xff]
      %v5430 = vld [vmem:[#allocation3 + $0x58] sm:$0xff]
      %v5431 = vld [vmem:[#allocation3 + $0x60] sm:$0xff]
      %v5432 = vld [vmem:[#allocation3 + $0x68] sm:$0xff]
      %v5433 = vld [vmem:[#allocation3 + $0x70] sm:$0xff]
      %v5434 = vld [vmem:[#allocation3 + $0x78] sm:$0xff]
      %v5435 = vld [vmem:[#allocation3 + $0x80] sm:$0xff]
      %v5436 = vld [vmem:[#allocation3 + $0x88] sm:$0xff]
      %v5437 = vld [vmem:[#allocation3 + $0x90] sm:$0xff]
      %v5438 = vld [vmem:[#allocation3 + $0x98] sm:$0xff]
      %v5439 = vld [vmem:[#allocation3 + $0xa0] sm:$0xff]
      %v5440 = vld [vmem:[#allocation3 + $0xa8] sm:$0xff]
      %v5441 = vld [vmem:[#allocation3 + $0xb0] sm:$0xff]
      %v5442 = vld [vmem:[#allocation3 + $0xb8] sm:$0xff]
      %v5443 = vld [vmem:[#allocation3 + $0xc0] sm:$0xff]
      %v5444 = vld [vmem:[#allocation3 + $0xc8] sm:$0xff]
      %v5445 = vld [vmem:[#allocation3 + $0xd0] sm:$0xff]
      %v5446 = vld [vmem:[#allocation3 + $0xd8] sm:$0xff]
      %v5447 = vld [vmem:[#allocation3 + $0xe0] sm:$0xff]
      %v5448 = vld [vmem:[#allocation3 + $0xe8] sm:$0xff]
      %v5449 = vld [vmem:[#allocation3 + $0xf0] sm:$0xff]
      %v5450 = vld [vmem:[#allocation3 + $0xf8] sm:$0xff]
      %v5451 = vld [vmem:[#allocation3 + $0x100] sm:$0xff]
      %v5452 = vld [vmem:[#allocation3 + $0x108] sm:$0xff]
      %v5453 = vld [vmem:[#allocation3 + $0x110] sm:$0xff]
      %v5454 = vld [vmem:[#allocation3 + $0x118] sm:$0xff]
      %v5455 = vld [vmem:[#allocation3 + $0x120] sm:$0xff]
      %v5456 = vld [vmem:[#allocation3 + $0x128] sm:$0xff]
      %v5457 = vld [vmem:[#allocation3 + $0x130] sm:$0xff]
      %v5458 = vld [vmem:[#allocation3 + $0x138] sm:$0xff]
      %v5459 = vld [vmem:[#allocation3 + $0x140] sm:$0xff]
      %v5460 = vld [vmem:[#allocation3 + $0x148] sm:$0xff]
      %v5461 = vld [vmem:[#allocation3 + $0x150] sm:$0xff]
      %v5462 = vld [vmem:[#allocation3 + $0x158] sm:$0xff]
      %v5463 = vadd.f32 %v5419, %v5310
      %v5464 = vadd.f32 %v5420, %v5312
      %v5465 = vadd.f32 %v5421, %v5315
      %v5466 = vadd.f32 %v5422, %v5317
      %v5467 = vadd.f32 %v5423, %v5320
      %v5468 = vadd.f32 %v5424, %v5322
      %v5469 = vadd.f32 %v5425, %v5325
      %v5470 = vadd.f32 %v5426, %v5327
      %v5471 = vadd.f32 %v5427, %v5330
      %v5472 = vadd.f32 %v5428, %v5332
      %v5473 = vadd.f32 %v5429, %v5335
      %v5474 = vadd.f32 %v5430, %v5337
      %v5475 = vadd.f32 %v5431, %v5340
      %v5476 = vadd.f32 %v5432, %v5342
      %v5477 = vadd.f32 %v5433, %v5345
      %v5478 = vadd.f32 %v5434, %v5347
      %v5479 = vadd.f32 %v5435, %v5350
      %v5480 = vadd.f32 %v5436, %v5352
      %v5481 = vadd.f32 %v5437, %v5355
      %v5482 = vadd.f32 %v5438, %v5357
      %v5483 = vadd.f32 %v5439, %v5360
      %v5484 = vadd.f32 %v5440, %v5362
      %v5485 = vadd.f32 %v5441, %v5365
      %v5486 = vadd.f32 %v5442, %v5367
      %v5487 = vadd.f32 %v5443, %v5370
      %v5488 = vadd.f32 %v5444, %v5372
      %v5489 = vadd.f32 %v5445, %v5375
      %v5490 = vadd.f32 %v5446, %v5377
      %v5491 = vadd.f32 %v5447, %v5380
      %v5492 = vadd.f32 %v5448, %v5382
      %v5493 = vadd.f32 %v5449, %v5385
      %v5494 = vadd.f32 %v5450, %v5387
      %v5495 = vadd.f32 %v5451, %v5390
      %v5496 = vadd.f32 %v5452, %v5392
      %v5497 = vadd.f32 %v5453, %v5395
      %v5498 = vadd.f32 %v5454, %v5397
      %v5499 = vadd.f32 %v5455, %v5400
      %v5500 = vadd.f32 %v5456, %v5402
      %v5501 = vadd.f32 %v5457, %v5405
      %v5502 = vadd.f32 %v5458, %v5407
      %v5503 = vadd.f32 %v5459, %v5410
      %v5504 = vadd.f32 %v5460, %v5412
      %v5505 = vadd.f32 %v5461, %v5415
      %v5506 = vadd.f32 %v5462, %v5417
      %5507 = vst [vmem:[#allocation3] sm:$0xff] %v5463
      %5508 = vst [vmem:[#allocation3 + $0x8] sm:$0xff] %v5464
      %5509 = vst [vmem:[#allocation3 + $0x10] sm:$0xff] %v5465
      %5510 = vst [vmem:[#allocation3 + $0x18] sm:$0xff] %v5466
      %5511 = vst [vmem:[#allocation3 + $0x20] sm:$0xff] %v5467
      %5512 = vst [vmem:[#allocation3 + $0x28] sm:$0xff] %v5468
      %5513 = vst [vmem:[#allocation3 + $0x30] sm:$0xff] %v5469
      %5514 = vst [vmem:[#allocation3 + $0x38] sm:$0xff] %v5470
      %5515 = vst [vmem:[#allocation3 + $0x40] sm:$0xff] %v5471
      %5516 = vst [vmem:[#allocation3 + $0x48] sm:$0xff] %v5472
      %5517 = vst [vmem:[#allocation3 + $0x50] sm:$0xff] %v5473
      %5518 = vst [vmem:[#allocation3 + $0x58] sm:$0xff] %v5474
      %5519 = vst [vmem:[#allocation3 + $0x60] sm:$0xff] %v5475
      %5520 = vst [vmem:[#allocation3 + $0x68] sm:$0xff] %v5476
      %5521 = vst [vmem:[#allocation3 + $0x70] sm:$0xff] %v5477
      %5522 = vst [vmem:[#allocation3 + $0x78] sm:$0xff] %v5478
      %5523 = vst [vmem:[#allocation3 + $0x80] sm:$0xff] %v5479
      %5524 = vst [vmem:[#allocation3 + $0x88] sm:$0xff] %v5480
      %5525 = vst [vmem:[#allocation3 + $0x90] sm:$0xff] %v5481
      %5526 = vst [vmem:[#allocation3 + $0x98] sm:$0xff] %v5482
      %5527 = vst [vmem:[#allocation3 + $0xa0] sm:$0xff] %v5483
      %5528 = vst [vmem:[#allocation3 + $0xa8] sm:$0xff] %v5484
      %5529 = vst [vmem:[#allocation3 + $0xb0] sm:$0xff] %v5485
      %5530 = vst [vmem:[#allocation3 + $0xb8] sm:$0xff] %v5486
      %5531 = vst [vmem:[#allocation3 + $0xc0] sm:$0xff] %v5487
      %5532 = vst [vmem:[#allocation3 + $0xc8] sm:$0xff] %v5488
      %5533 = vst [vmem:[#allocation3 + $0xd0] sm:$0xff] %v5489
      %5534 = vst [vmem:[#allocation3 + $0xd8] sm:$0xff] %v5490
      %5535 = vst [vmem:[#allocation3 + $0xe0] sm:$0xff] %v5491
      %5536 = vst [vmem:[#allocation3 + $0xe8] sm:$0xff] %v5492
      %5537 = vst [vmem:[#allocation3 + $0xf0] sm:$0xff] %v5493
      %5538 = vst [vmem:[#allocation3 + $0xf8] sm:$0xff] %v5494
      %5539 = vst [vmem:[#allocation3 + $0x100] sm:$0xff] %v5495
      %5540 = vst [vmem:[#allocation3 + $0x108] sm:$0xff] %v5496
      %5541 = vst [vmem:[#allocation3 + $0x110] sm:$0xff] %v5497
      %5542 = vst [vmem:[#allocation3 + $0x118] sm:$0xff] %v5498
      %5543 = vst [vmem:[#allocation3 + $0x120] sm:$0xff] %v5499
      %5544 = vst [vmem:[#allocation3 + $0x128] sm:$0xff] %v5500
      %5545 = vst [vmem:[#allocation3 + $0x130] sm:$0xff] %v5501
      %5546 = vst [vmem:[#allocation3 + $0x138] sm:$0xff] %v5502
      %5547 = vst [vmem:[#allocation3 + $0x140] sm:$0xff] %v5503
      %5548 = vst [vmem:[#allocation3 + $0x148] sm:$0xff] %v5504
      %5549 = vst [vmem:[#allocation3 + $0x150] sm:$0xff] %v5505
      %5550 = vst [vmem:[#allocation3 + $0x158] sm:$0xff] %v5506
      %v5551 = vld [vmem:[#allocation2 + $0x10] sm:$0xf]
      %v5552 = vld [vmem:[#allocation2 + $0x14] sm:$0xf]
      %v5553 = vld [vmem:[#allocation2 + $0x18] sm:$0xf]
      %v5554 = vld [vmem:[#allocation2 + $0x1c] sm:$0xf]
      %v5555 = vld [vmem:[#allocation2 + $0x20] sm:$0xf]
      %v5556 = vld [vmem:[#allocation2 + $0x24] sm:$0xf]
      %v5557 = vld [vmem:[#allocation2 + $0x28] sm:$0xf]
      %v5558 = vld [vmem:[#allocation2 + $0x2c] sm:$0xf]
      %v5559 = vld [vmem:[#allocation2 + $0x30] sm:$0xf]
      %v5560 = vld [vmem:[#allocation2 + $0x34] sm:$0xf]
      %v5561 = vld [vmem:[#allocation2 + $0x38] sm:$0xf]
      %v5562 = vld [vmem:[#allocation2 + $0x3c] sm:$0xf]
      %v5563 = vld [vmem:[#allocation2 + $0x40] sm:$0xf]
      %v5564 = vld [vmem:[#allocation2 + $0x44] sm:$0xf]
      %v5565 = vld [vmem:[#allocation2 + $0x48] sm:$0xf]
      %v5566 = vld [vmem:[#allocation2 + $0x4c] sm:$0xf]
      %v5567 = vld [vmem:[#allocation2 + $0x50] sm:$0xf]
      %v5568 = vld [vmem:[#allocation2 + $0x54] sm:$0xf]
      %v5569 = vld [vmem:[#allocation2 + $0x58] sm:$0xf]
      %v5570 = vld [vmem:[#allocation2 + $0x5c] sm:$0xf]
      %v5571 = vld [vmem:[#allocation2 + $0x60] sm:$0xf]
      %v5572 = vld [vmem:[#allocation2 + $0x64] sm:$0xf]
      %v5573 = vld [vmem:[#allocation2 + $0x68] sm:$0xf]
      %v5574 = vld [vmem:[#allocation2 + $0x6c] sm:$0xf]
      %v5575 = vld [vmem:[#allocation2 + $0x70] sm:$0xf]
      %v5576 = vld [vmem:[#allocation2 + $0x74] sm:$0xf]
      %v5577 = vld [vmem:[#allocation2 + $0x78] sm:$0xf]
      %v5578 = vld [vmem:[#allocation2 + $0x7c] sm:$0xf]
      %v5579 = vld [vmem:[#allocation2 + $0x80] sm:$0xf]
      %v5580 = vld [vmem:[#allocation2 + $0x84] sm:$0xf]
      %v5581 = vld [vmem:[#allocation2 + $0x88] sm:$0xf]
      %v5582 = vld [vmem:[#allocation2 + $0x8c] sm:$0xf]
      %v5583 = vld [vmem:[#allocation2 + $0x90] sm:$0xf]
      %v5584 = vld [vmem:[#allocation2 + $0x94] sm:$0xf]
      %v5585 = vld [vmem:[#allocation2 + $0x98] sm:$0xf]
      %v5586 = vld [vmem:[#allocation2 + $0x9c] sm:$0xf]
      %v5587 = vld [vmem:[#allocation2 + $0xa0] sm:$0xf]
      %v5588 = vld [vmem:[#allocation2 + $0xa4] sm:$0xf]
      %v5589 = vld [vmem:[#allocation2 + $0xa8] sm:$0xf]
      %v5590 = vld [vmem:[#allocation2 + $0xac] sm:$0xf]
      %v5591 = vld [vmem:[#allocation2 + $0xb0] sm:$0xf]
      %v5592 = vld [vmem:[#allocation2 + $0xb4] sm:$0xf]
      %v5593 = vld [vmem:[#allocation2 + $0xb8] sm:$0xf]
      %v5594 = vld [vmem:[#allocation2 + $0xbc] sm:$0xf]
      %v5595 = vld [vmem:[#allocation2 + $0xc0] sm:$0x1]
      %s5596 = scalar_lea.vmem %s3, 320
      %v5597 = vld [vmem:[%s5596] sm:$0xf]
      %v5598 = vld [vmem:[%s5596 + $0x4] sm:$0xf]
      %v5599 = vld [vmem:[%s5596 + $0x8] sm:$0xf]
      %v5600 = vld [vmem:[%s5596 + $0xc] sm:$0xf]
      %v5601 = vld [vmem:[%s5596 + $0x10] sm:$0xf]
      %v5602 = vld [vmem:[%s5596 + $0x14] sm:$0xf]
      %v5603 = vld [vmem:[%s5596 + $0x18] sm:$0xf]
      %v5604 = vld [vmem:[%s5596 + $0x1c] sm:$0xf]
      %v5605 = vld [vmem:[%s5596 + $0x20] sm:$0xf]
      %v5606 = vld [vmem:[%s5596 + $0x24] sm:$0xf]
      %v5607 = vld [vmem:[%s5596 + $0x28] sm:$0xf]
      %v5608 = vld [vmem:[%s5596 + $0x2c] sm:$0xf]
      %v5609 = vld [vmem:[%s5596 + $0x30] sm:$0xf]
      %v5610 = vld [vmem:[%s5596 + $0x34] sm:$0xf]
      %v5611 = vld [vmem:[%s5596 + $0x38] sm:$0xf]
      %v5612 = vld [vmem:[%s5596 + $0x3c] sm:$0xf]
      %v5658 = vunpack.c.l.b16 %v5551
      %v5659 = vunpack.c.l.b16 %v5552
      %v5660 = vunpack.c.l.b16 %v5553
      %v5661 = vunpack.c.l.b16 %v5554
      %v5662 = vunpack.c.l.b16 %v5555
      %v5663 = vunpack.c.l.b16 %v5556
      %v5664 = vunpack.c.l.b16 %v5557
      %v5665 = vunpack.c.l.b16 %v5558
      %v5666 = vunpack.c.l.b16 %v5559
      %v5667 = vunpack.c.l.b16 %v5560
      %v5668 = vunpack.c.l.b16 %v5561
      %v5669 = vunpack.c.l.b16 %v5562
      %v5670 = vunpack.c.l.b16 %v5563
      %v5671 = vunpack.c.l.b16 %v5564
      %v5672 = vunpack.c.l.b16 %v5565
      %v5673 = vunpack.c.l.b16 %v5566
      %v5674 = vunpack.c.l.b16 %v5567
      %v5675 = vunpack.c.l.b16 %v5568
      %v5676 = vunpack.c.l.b16 %v5569
      %v5677 = vunpack.c.l.b16 %v5570
      %v5678 = vunpack.c.l.b16 %v5571
      %v5679 = vunpack.c.l.b16 %v5572
      %v5680 = vunpack.c.l.b16 %v5573
      %v5681 = vunpack.c.l.b16 %v5574
      %v5682 = vunpack.c.l.b16 %v5575
      %v5683 = vunpack.c.l.b16 %v5576
      %v5684 = vunpack.c.l.b16 %v5577
      %v5685 = vunpack.c.l.b16 %v5578
      %v5686 = vunpack.c.l.b16 %v5579
      %v5687 = vunpack.c.l.b16 %v5580
      %v5688 = vunpack.c.l.b16 %v5581
      %v5689 = vunpack.c.l.b16 %v5582
      %v5690 = vunpack.c.l.b16 %v5583
      %v5691 = vunpack.c.l.b16 %v5584
      %v5692 = vunpack.c.l.b16 %v5585
      %v5693 = vunpack.c.l.b16 %v5586
      %v5694 = vunpack.c.l.b16 %v5587
      %v5695 = vunpack.c.l.b16 %v5588
      %v5696 = vunpack.c.l.b16 %v5589
      %v5697 = vunpack.c.l.b16 %v5590
      %v5698 = vunpack.c.l.b16 %v5591
      %v5699 = vunpack.c.l.b16 %v5592
      %v5700 = vunpack.c.l.b16 %v5593
      %v5701 = vunpack.c.l.b16 %v5594
      %v5702 = vunpack.c.l.b16 %v5595
      %v5703 = vpack.c.b16 %v5659, %v5658
      %v5704 = vpack.c.b16 %v5661, %v5660
      %v5705 = vpack.c.b16 %v5663, %v5662
      %v5706 = vpack.c.b16 %v5665, %v5664
      %v5707 = vpack.c.b16 %v5667, %v5666
      %v5708 = vpack.c.b16 %v5669, %v5668
      %v5709 = vpack.c.b16 %v5671, %v5670
      %v5710 = vpack.c.b16 %v5673, %v5672
      %v5711 = vpack.c.b16 %v5675, %v5674
      %v5712 = vpack.c.b16 %v5677, %v5676
      %v5713 = vpack.c.b16 %v5679, %v5678
      %v5714 = vpack.c.b16 %v5681, %v5680
      %v5715 = vpack.c.b16 %v5683, %v5682
      %v5716 = vpack.c.b16 %v5685, %v5684
      %v5717 = vpack.c.b16 %v5687, %v5686
      %v5718 = vpack.c.b16 %v5689, %v5688
      %v5719 = vpack.c.b16 %v5691, %v5690
      %v5720 = vpack.c.b16 %v5693, %v5692
      %v5721 = vpack.c.b16 %v5695, %v5694
      %v5722 = vpack.c.b16 %v5697, %v5696
      %v5723 = vpack.c.b16 %v5699, %v5698
      %v5724 = vpack.c.b16 %v5701, %v5700
      %v5725 = vpack.c.b16 %v5702, %v5702
      %vm5726 = vsmask.f32 7424
      %v5728 = vshrl.u32 %v5703, 16
      %v5730 = vshll.u32 %v5703, 16
      %v5732 = vrot.slane %v5730, 1
      %v5733 = vor.u32 %v5728, %v5732
      %v5735 = vshll.u32 %v5704, 16
      %v5737 = vrot.slane %v5735, 1
      %v5738 = vsel %vm5726, %v5733, %v5737
      %v5739 = vshrl.u32 %v5704, 16
      %v5741 = vor.u32 %v5739, %v5737
      %v5743 = vshll.u32 %v5705, 16
      %v5745 = vrot.slane %v5743, 1
      %v5746 = vsel %vm5726, %v5741, %v5745
      %v5747 = vshrl.u32 %v5705, 16
      %v5749 = vor.u32 %v5747, %v5745
      %v5751 = vshll.u32 %v5706, 16
      %v5753 = vrot.slane %v5751, 1
      %v5754 = vsel %vm5726, %v5749, %v5753
      %v5755 = vshrl.u32 %v5706, 16
      %v5757 = vor.u32 %v5755, %v5753
      %v5759 = vshll.u32 %v5707, 16
      %v5761 = vrot.slane %v5759, 1
      %v5762 = vsel %vm5726, %v5757, %v5761
      %v5763 = vshrl.u32 %v5707, 16
      %v5765 = vor.u32 %v5763, %v5761
      %v5767 = vshll.u32 %v5708, 16
      %v5769 = vrot.slane %v5767, 1
      %v5770 = vsel %vm5726, %v5765, %v5769
      %v5771 = vshrl.u32 %v5708, 16
      %v5773 = vor.u32 %v5771, %v5769
      %v5775 = vshll.u32 %v5709, 16
      %v5777 = vrot.slane %v5775, 1
      %v5778 = vsel %vm5726, %v5773, %v5777
      %v5779 = vshrl.u32 %v5709, 16
      %v5781 = vor.u32 %v5779, %v5777
      %v5783 = vshll.u32 %v5710, 16
      %v5785 = vrot.slane %v5783, 1
      %v5786 = vsel %vm5726, %v5781, %v5785
      %v5787 = vshrl.u32 %v5710, 16
      %v5789 = vor.u32 %v5787, %v5785
      %v5791 = vshll.u32 %v5711, 16
      %v5793 = vrot.slane %v5791, 1
      %v5794 = vsel %vm5726, %v5789, %v5793
      %v5795 = vshrl.u32 %v5711, 16
      %v5797 = vor.u32 %v5795, %v5793
      %v5799 = vshll.u32 %v5712, 16
      %v5801 = vrot.slane %v5799, 1
      %v5802 = vsel %vm5726, %v5797, %v5801
      %v5803 = vshrl.u32 %v5712, 16
      %v5805 = vor.u32 %v5803, %v5801
      %v5807 = vshll.u32 %v5713, 16
      %v5809 = vrot.slane %v5807, 1
      %v5810 = vsel %vm5726, %v5805, %v5809
      %v5811 = vshrl.u32 %v5713, 16
      %v5813 = vor.u32 %v5811, %v5809
      %v5815 = vshll.u32 %v5714, 16
      %v5817 = vrot.slane %v5815, 1
      %v5818 = vsel %vm5726, %v5813, %v5817
      %v5819 = vshrl.u32 %v5714, 16
      %v5821 = vor.u32 %v5819, %v5817
      %v5823 = vshll.u32 %v5715, 16
      %v5825 = vrot.slane %v5823, 1
      %v5826 = vsel %vm5726, %v5821, %v5825
      %v5827 = vshrl.u32 %v5715, 16
      %v5829 = vor.u32 %v5827, %v5825
      %v5831 = vshll.u32 %v5716, 16
      %v5833 = vrot.slane %v5831, 1
      %v5834 = vsel %vm5726, %v5829, %v5833
      %v5835 = vshrl.u32 %v5716, 16
      %v5837 = vor.u32 %v5835, %v5833
      %v5839 = vshll.u32 %v5717, 16
      %v5841 = vrot.slane %v5839, 1
      %v5842 = vsel %vm5726, %v5837, %v5841
      %v5843 = vshrl.u32 %v5717, 16
      %v5845 = vor.u32 %v5843, %v5841
      %v5847 = vshll.u32 %v5718, 16
      %v5849 = vrot.slane %v5847, 1
      %v5850 = vsel %vm5726, %v5845, %v5849
      %v5851 = vshrl.u32 %v5718, 16
      %v5853 = vor.u32 %v5851, %v5849
      %v5855 = vshll.u32 %v5719, 16
      %v5857 = vrot.slane %v5855, 1
      %v5858 = vsel %vm5726, %v5853, %v5857
      %v5859 = vshrl.u32 %v5719, 16
      %v5861 = vor.u32 %v5859, %v5857
      %v5863 = vshll.u32 %v5720, 16
      %v5865 = vrot.slane %v5863, 1
      %v5866 = vsel %vm5726, %v5861, %v5865
      %v5867 = vshrl.u32 %v5720, 16
      %v5869 = vor.u32 %v5867, %v5865
      %v5871 = vshll.u32 %v5721, 16
      %v5873 = vrot.slane %v5871, 1
      %v5874 = vsel %vm5726, %v5869, %v5873
      %v5875 = vshrl.u32 %v5721, 16
      %v5877 = vor.u32 %v5875, %v5873
      %v5879 = vshll.u32 %v5722, 16
      %v5881 = vrot.slane %v5879, 1
      %v5882 = vsel %vm5726, %v5877, %v5881
      %v5883 = vshrl.u32 %v5722, 16
      %v5885 = vor.u32 %v5883, %v5881
      %v5887 = vshll.u32 %v5723, 16
      %v5889 = vrot.slane %v5887, 1
      %v5890 = vsel %vm5726, %v5885, %v5889
      %v5891 = vshrl.u32 %v5723, 16
      %v5893 = vor.u32 %v5891, %v5889
      %v5895 = vshll.u32 %v5724, 16
      %v5897 = vrot.slane %v5895, 1
      %v5898 = vsel %vm5726, %v5893, %v5897
      %v5899 = vshrl.u32 %v5724, 16
      %v5901 = vor.u32 %v5899, %v5897
      %v5903 = vshll.u32 %v5725, 16
      %v5905 = vrot.slane %v5903, 1
      %v5906 = vsel %vm5726, %v5901, %v5905
      %v5945 = vunpack.c.l.b16 %v5597
      %v5946 = vunpack.c.l.b16 %v5598
      %v5947 = vunpack.c.l.b16 %v5599
      %v5948 = vunpack.c.l.b16 %v5600
      %v5949 = vunpack.c.l.b16 %v5601
      %v5950 = vunpack.c.l.b16 %v5602
      %v5951 = vunpack.c.l.b16 %v5603
      %v5952 = vunpack.c.l.b16 %v5604
      %v5953 = vunpack.c.l.b16 %v5605
      %v5954 = vunpack.c.l.b16 %v5606
      %v5955 = vunpack.c.l.b16 %v5607
      %v5956 = vunpack.c.l.b16 %v5608
      %v5957 = vunpack.c.l.b16 %v5609
      %v5958 = vunpack.c.l.b16 %v5610
      %v5959 = vunpack.c.l.b16 %v5611
      %v5960 = vunpack.c.l.b16 %v5612
      %v5961 = vpack.c.b16 %v5946, %v5945
      %v5962 = vpack.c.b16 %v5948, %v5947
      %v5963 = vpack.c.b16 %v5950, %v5949
      %v5964 = vpack.c.b16 %v5952, %v5951
      %v5965 = vpack.c.b16 %v5954, %v5953
      %v5966 = vpack.c.b16 %v5956, %v5955
      %v5967 = vpack.c.b16 %v5958, %v5957
      %v5968 = vpack.c.b16 %v5960, %v5959
      %5977 = vmatpush.bf16.msra.mxu0 %v5968
      %5978 = vmatpush.bf16.msra.mxu0 %v5967
      %5979 = vmatpush.bf16.msra.mxu0 %v5966
      %5980 = vmatpush.bf16.msra.mxu0 %v5965
      %5981 = vmatpush.bf16.msra.mxu0 %v5964
      %5982 = vmatpush.bf16.msra.mxu0 %v5963
      %5983 = vmatpush.bf16.msra.mxu0 %v5962
      %5984 = vmatpush.bf16.msra.mxu0 %v5961
      %5985 = vmatmul.bf16.gmra.mxu0 %v5738
      %v5986 = vpop.f32.mrf.mxu0
      %v5987 = vadd.f32 0.0, %v5986
      %v5988 = vpop.f32.mrf.mxu0
      %v5989 = vadd.f32 0.0, %v5988
      %5990 = vmatmul.bf16.gmra.mxu0 %v5746
      %v5991 = vpop.f32.mrf.mxu0
      %v5992 = vadd.f32 0.0, %v5991
      %v5993 = vpop.f32.mrf.mxu0
      %v5994 = vadd.f32 0.0, %v5993
      %5995 = vmatmul.bf16.gmra.mxu0 %v5754
      %v5996 = vpop.f32.mrf.mxu0
      %v5997 = vadd.f32 0.0, %v5996
      %v5998 = vpop.f32.mrf.mxu0
      %v5999 = vadd.f32 0.0, %v5998
      %6000 = vmatmul.bf16.gmra.mxu0 %v5762
      %v6001 = vpop.f32.mrf.mxu0
      %v6002 = vadd.f32 0.0, %v6001
      %v6003 = vpop.f32.mrf.mxu0
      %v6004 = vadd.f32 0.0, %v6003
      %6005 = vmatmul.bf16.gmra.mxu0 %v5770
      %v6006 = vpop.f32.mrf.mxu0
      %v6007 = vadd.f32 0.0, %v6006
      %v6008 = vpop.f32.mrf.mxu0
      %v6009 = vadd.f32 0.0, %v6008
      %6010 = vmatmul.bf16.gmra.mxu0 %v5778
      %v6011 = vpop.f32.mrf.mxu0
      %v6012 = vadd.f32 0.0, %v6011
      %v6013 = vpop.f32.mrf.mxu0
      %v6014 = vadd.f32 0.0, %v6013
      %6015 = vmatmul.bf16.gmra.mxu0 %v5786
      %v6016 = vpop.f32.mrf.mxu0
      %v6017 = vadd.f32 0.0, %v6016
      %v6018 = vpop.f32.mrf.mxu0
      %v6019 = vadd.f32 0.0, %v6018
      %6020 = vmatmul.bf16.gmra.mxu0 %v5794
      %v6021 = vpop.f32.mrf.mxu0
      %v6022 = vadd.f32 0.0, %v6021
      %v6023 = vpop.f32.mrf.mxu0
      %v6024 = vadd.f32 0.0, %v6023
      %6025 = vmatmul.bf16.gmra.mxu0 %v5802
      %v6026 = vpop.f32.mrf.mxu0
      %v6027 = vadd.f32 0.0, %v6026
      %v6028 = vpop.f32.mrf.mxu0
      %v6029 = vadd.f32 0.0, %v6028
      %6030 = vmatmul.bf16.gmra.mxu0 %v5810
      %v6031 = vpop.f32.mrf.mxu0
      %v6032 = vadd.f32 0.0, %v6031
      %v6033 = vpop.f32.mrf.mxu0
      %v6034 = vadd.f32 0.0, %v6033
      %6035 = vmatmul.bf16.gmra.mxu0 %v5818
      %v6036 = vpop.f32.mrf.mxu0
      %v6037 = vadd.f32 0.0, %v6036
      %v6038 = vpop.f32.mrf.mxu0
      %v6039 = vadd.f32 0.0, %v6038
      %6040 = vmatmul.bf16.gmra.mxu0 %v5826
      %v6041 = vpop.f32.mrf.mxu0
      %v6042 = vadd.f32 0.0, %v6041
      %v6043 = vpop.f32.mrf.mxu0
      %v6044 = vadd.f32 0.0, %v6043
      %6045 = vmatmul.bf16.gmra.mxu0 %v5834
      %v6046 = vpop.f32.mrf.mxu0
      %v6047 = vadd.f32 0.0, %v6046
      %v6048 = vpop.f32.mrf.mxu0
      %v6049 = vadd.f32 0.0, %v6048
      %6050 = vmatmul.bf16.gmra.mxu0 %v5842
      %v6051 = vpop.f32.mrf.mxu0
      %v6052 = vadd.f32 0.0, %v6051
      %v6053 = vpop.f32.mrf.mxu0
      %v6054 = vadd.f32 0.0, %v6053
      %6055 = vmatmul.bf16.gmra.mxu0 %v5850
      %v6056 = vpop.f32.mrf.mxu0
      %v6057 = vadd.f32 0.0, %v6056
      %v6058 = vpop.f32.mrf.mxu0
      %v6059 = vadd.f32 0.0, %v6058
      %6060 = vmatmul.bf16.gmra.mxu0 %v5858
      %v6061 = vpop.f32.mrf.mxu0
      %v6062 = vadd.f32 0.0, %v6061
      %v6063 = vpop.f32.mrf.mxu0
      %v6064 = vadd.f32 0.0, %v6063
      %6065 = vmatmul.bf16.gmra.mxu0 %v5866
      %v6066 = vpop.f32.mrf.mxu0
      %v6067 = vadd.f32 0.0, %v6066
      %v6068 = vpop.f32.mrf.mxu0
      %v6069 = vadd.f32 0.0, %v6068
      %6070 = vmatmul.bf16.gmra.mxu0 %v5874
      %v6071 = vpop.f32.mrf.mxu0
      %v6072 = vadd.f32 0.0, %v6071
      %v6073 = vpop.f32.mrf.mxu0
      %v6074 = vadd.f32 0.0, %v6073
      %6075 = vmatmul.bf16.gmra.mxu0 %v5882
      %v6076 = vpop.f32.mrf.mxu0
      %v6077 = vadd.f32 0.0, %v6076
      %v6078 = vpop.f32.mrf.mxu0
      %v6079 = vadd.f32 0.0, %v6078
      %6080 = vmatmul.bf16.gmra.mxu0 %v5890
      %v6081 = vpop.f32.mrf.mxu0
      %v6082 = vadd.f32 0.0, %v6081
      %v6083 = vpop.f32.mrf.mxu0
      %v6084 = vadd.f32 0.0, %v6083
      %6085 = vmatmul.bf16.gmra.mxu0 %v5898
      %v6086 = vpop.f32.mrf.mxu0
      %v6087 = vadd.f32 0.0, %v6086
      %v6088 = vpop.f32.mrf.mxu0
      %v6089 = vadd.f32 0.0, %v6088
      %6090 = vmatmul.bf16.gmra.mxu0 %v5906
      %v6091 = vpop.f32.mrf.mxu0
      %v6092 = vadd.f32 0.0, %v6091
      %v6093 = vpop.f32.mrf.mxu0
      %v6094 = vadd.f32 0.0, %v6093
      %6095 = vdwg.mxu0
      %v6096 = vld [vmem:[#allocation3] sm:$0xff]
      %v6097 = vld [vmem:[#allocation3 + $0x8] sm:$0xff]
      %v6098 = vld [vmem:[#allocation3 + $0x10] sm:$0xff]
      %v6099 = vld [vmem:[#allocation3 + $0x18] sm:$0xff]
      %v6100 = vld [vmem:[#allocation3 + $0x20] sm:$0xff]
      %v6101 = vld [vmem:[#allocation3 + $0x28] sm:$0xff]
      %v6102 = vld [vmem:[#allocation3 + $0x30] sm:$0xff]
      %v6103 = vld [vmem:[#allocation3 + $0x38] sm:$0xff]
      %v6104 = vld [vmem:[#allocation3 + $0x40] sm:$0xff]
      %v6105 = vld [vmem:[#allocation3 + $0x48] sm:$0xff]
      %v6106 = vld [vmem:[#allocation3 + $0x50] sm:$0xff]
      %v6107 = vld [vmem:[#allocation3 + $0x58] sm:$0xff]
      %v6108 = vld [vmem:[#allocation3 + $0x60] sm:$0xff]
      %v6109 = vld [vmem:[#allocation3 + $0x68] sm:$0xff]
      %v6110 = vld [vmem:[#allocation3 + $0x70] sm:$0xff]
      %v6111 = vld [vmem:[#allocation3 + $0x78] sm:$0xff]
      %v6112 = vld [vmem:[#allocation3 + $0x80] sm:$0xff]
      %v6113 = vld [vmem:[#allocation3 + $0x88] sm:$0xff]
      %v6114 = vld [vmem:[#allocation3 + $0x90] sm:$0xff]
      %v6115 = vld [vmem:[#allocation3 + $0x98] sm:$0xff]
      %v6116 = vld [vmem:[#allocation3 + $0xa0] sm:$0xff]
      %v6117 = vld [vmem:[#allocation3 + $0xa8] sm:$0xff]
      %v6118 = vld [vmem:[#allocation3 + $0xb0] sm:$0xff]
      %v6119 = vld [vmem:[#allocation3 + $0xb8] sm:$0xff]
      %v6120 = vld [vmem:[#allocation3 + $0xc0] sm:$0xff]
      %v6121 = vld [vmem:[#allocation3 + $0xc8] sm:$0xff]
      %v6122 = vld [vmem:[#allocation3 + $0xd0] sm:$0xff]
      %v6123 = vld [vmem:[#allocation3 + $0xd8] sm:$0xff]
      %v6124 = vld [vmem:[#allocation3 + $0xe0] sm:$0xff]
      %v6125 = vld [vmem:[#allocation3 + $0xe8] sm:$0xff]
      %v6126 = vld [vmem:[#allocation3 + $0xf0] sm:$0xff]
      %v6127 = vld [vmem:[#allocation3 + $0xf8] sm:$0xff]
      %v6128 = vld [vmem:[#allocation3 + $0x100] sm:$0xff]
      %v6129 = vld [vmem:[#allocation3 + $0x108] sm:$0xff]
      %v6130 = vld [vmem:[#allocation3 + $0x110] sm:$0xff]
      %v6131 = vld [vmem:[#allocation3 + $0x118] sm:$0xff]
      %v6132 = vld [vmem:[#allocation3 + $0x120] sm:$0xff]
      %v6133 = vld [vmem:[#allocation3 + $0x128] sm:$0xff]
      %v6134 = vld [vmem:[#allocation3 + $0x130] sm:$0xff]
      %v6135 = vld [vmem:[#allocation3 + $0x138] sm:$0xff]
      %v6136 = vld [vmem:[#allocation3 + $0x140] sm:$0xff]
      %v6137 = vld [vmem:[#allocation3 + $0x148] sm:$0xff]
      %v6138 = vld [vmem:[#allocation3 + $0x150] sm:$0xff]
      %v6139 = vld [vmem:[#allocation3 + $0x158] sm:$0xff]
      %v6140 = vadd.f32 %v6096, %v5987
      %v6141 = vadd.f32 %v6097, %v5989
      %v6142 = vadd.f32 %v6098, %v5992
      %v6143 = vadd.f32 %v6099, %v5994
      %v6144 = vadd.f32 %v6100, %v5997
      %v6145 = vadd.f32 %v6101, %v5999
      %v6146 = vadd.f32 %v6102, %v6002
      %v6147 = vadd.f32 %v6103, %v6004
      %v6148 = vadd.f32 %v6104, %v6007
      %v6149 = vadd.f32 %v6105, %v6009
      %v6150 = vadd.f32 %v6106, %v6012
      %v6151 = vadd.f32 %v6107, %v6014
      %v6152 = vadd.f32 %v6108, %v6017
      %v6153 = vadd.f32 %v6109, %v6019
      %v6154 = vadd.f32 %v6110, %v6022
      %v6155 = vadd.f32 %v6111, %v6024
      %v6156 = vadd.f32 %v6112, %v6027
      %v6157 = vadd.f32 %v6113, %v6029
      %v6158 = vadd.f32 %v6114, %v6032
      %v6159 = vadd.f32 %v6115, %v6034
      %v6160 = vadd.f32 %v6116, %v6037
      %v6161 = vadd.f32 %v6117, %v6039
      %v6162 = vadd.f32 %v6118, %v6042
      %v6163 = vadd.f32 %v6119, %v6044
      %v6164 = vadd.f32 %v6120, %v6047
      %v6165 = vadd.f32 %v6121, %v6049
      %v6166 = vadd.f32 %v6122, %v6052
      %v6167 = vadd.f32 %v6123, %v6054
      %v6168 = vadd.f32 %v6124, %v6057
      %v6169 = vadd.f32 %v6125, %v6059
      %v6170 = vadd.f32 %v6126, %v6062
      %v6171 = vadd.f32 %v6127, %v6064
      %v6172 = vadd.f32 %v6128, %v6067
      %v6173 = vadd.f32 %v6129, %v6069
      %v6174 = vadd.f32 %v6130, %v6072
      %v6175 = vadd.f32 %v6131, %v6074
      %v6176 = vadd.f32 %v6132, %v6077
      %v6177 = vadd.f32 %v6133, %v6079
      %v6178 = vadd.f32 %v6134, %v6082
      %v6179 = vadd.f32 %v6135, %v6084
      %v6180 = vadd.f32 %v6136, %v6087
      %v6181 = vadd.f32 %v6137, %v6089
      %v6182 = vadd.f32 %v6138, %v6092
      %v6183 = vadd.f32 %v6139, %v6094
      %6184 = vst [vmem:[#allocation3] sm:$0xff] %v6140
      %6185 = vst [vmem:[#allocation3 + $0x8] sm:$0xff] %v6141
      %6186 = vst [vmem:[#allocation3 + $0x10] sm:$0xff] %v6142
      %6187 = vst [vmem:[#allocation3 + $0x18] sm:$0xff] %v6143
      %6188 = vst [vmem:[#allocation3 + $0x20] sm:$0xff] %v6144
      %6189 = vst [vmem:[#allocation3 + $0x28] sm:$0xff] %v6145
      %6190 = vst [vmem:[#allocation3 + $0x30] sm:$0xff] %v6146
      %6191 = vst [vmem:[#allocation3 + $0x38] sm:$0xff] %v6147
      %6192 = vst [vmem:[#allocation3 + $0x40] sm:$0xff] %v6148
      %6193 = vst [vmem:[#allocation3 + $0x48] sm:$0xff] %v6149
      %6194 = vst [vmem:[#allocation3 + $0x50] sm:$0xff] %v6150
      %6195 = vst [vmem:[#allocation3 + $0x58] sm:$0xff] %v6151
      %6196 = vst [vmem:[#allocation3 + $0x60] sm:$0xff] %v6152
      %6197 = vst [vmem:[#allocation3 + $0x68] sm:$0xff] %v6153
      %6198 = vst [vmem:[#allocation3 + $0x70] sm:$0xff] %v6154
      %6199 = vst [vmem:[#allocation3 + $0x78] sm:$0xff] %v6155
      %6200 = vst [vmem:[#allocation3 + $0x80] sm:$0xff] %v6156
      %6201 = vst [vmem:[#allocation3 + $0x88] sm:$0xff] %v6157
      %6202 = vst [vmem:[#allocation3 + $0x90] sm:$0xff] %v6158
      %6203 = vst [vmem:[#allocation3 + $0x98] sm:$0xff] %v6159
      %6204 = vst [vmem:[#allocation3 + $0xa0] sm:$0xff] %v6160
      %6205 = vst [vmem:[#allocation3 + $0xa8] sm:$0xff] %v6161
      %6206 = vst [vmem:[#allocation3 + $0xb0] sm:$0xff] %v6162
      %6207 = vst [vmem:[#allocation3 + $0xb8] sm:$0xff] %v6163
      %6208 = vst [vmem:[#allocation3 + $0xc0] sm:$0xff] %v6164
      %6209 = vst [vmem:[#allocation3 + $0xc8] sm:$0xff] %v6165
      %6210 = vst [vmem:[#allocation3 + $0xd0] sm:$0xff] %v6166
      %6211 = vst [vmem:[#allocation3 + $0xd8] sm:$0xff] %v6167
      %6212 = vst [vmem:[#allocation3 + $0xe0] sm:$0xff] %v6168
      %6213 = vst [vmem:[#allocation3 + $0xe8] sm:$0xff] %v6169
      %6214 = vst [vmem:[#allocation3 + $0xf0] sm:$0xff] %v6170
      %6215 = vst [vmem:[#allocation3 + $0xf8] sm:$0xff] %v6171
      %6216 = vst [vmem:[#allocation3 + $0x100] sm:$0xff] %v6172
      %6217 = vst [vmem:[#allocation3 + $0x108] sm:$0xff] %v6173
      %6218 = vst [vmem:[#allocation3 + $0x110] sm:$0xff] %v6174
      %6219 = vst [vmem:[#allocation3 + $0x118] sm:$0xff] %v6175
      %6220 = vst [vmem:[#allocation3 + $0x120] sm:$0xff] %v6176
      %6221 = vst [vmem:[#allocation3 + $0x128] sm:$0xff] %v6177
      %6222 = vst [vmem:[#allocation3 + $0x130] sm:$0xff] %v6178
      %6223 = vst [vmem:[#allocation3 + $0x138] sm:$0xff] %v6179
      %6224 = vst [vmem:[#allocation3 + $0x140] sm:$0xff] %v6180
      %6225 = vst [vmem:[#allocation3 + $0x148] sm:$0xff] %v6181
      %6226 = vst [vmem:[#allocation3 + $0x150] sm:$0xff] %v6182
      %6227 = vst [vmem:[#allocation3 + $0x158] sm:$0xff] %v6183
      %v6228 = vld [vmem:[#allocation2 + $0x18] sm:$0xf]
      %v6229 = vld [vmem:[#allocation2 + $0x1c] sm:$0xf]
      %v6230 = vld [vmem:[#allocation2 + $0x20] sm:$0xf]
      %v6231 = vld [vmem:[#allocation2 + $0x24] sm:$0xf]
      %v6232 = vld [vmem:[#allocation2 + $0x28] sm:$0xf]
      %v6233 = vld [vmem:[#allocation2 + $0x2c] sm:$0xf]
      %v6234 = vld [vmem:[#allocation2 + $0x30] sm:$0xf]
      %v6235 = vld [vmem:[#allocation2 + $0x34] sm:$0xf]
      %v6236 = vld [vmem:[#allocation2 + $0x38] sm:$0xf]
      %v6237 = vld [vmem:[#allocation2 + $0x3c] sm:$0xf]
      %v6238 = vld [vmem:[#allocation2 + $0x40] sm:$0xf]
      %v6239 = vld [vmem:[#allocation2 + $0x44] sm:$0xf]
      %v6240 = vld [vmem:[#allocation2 + $0x48] sm:$0xf]
      %v6241 = vld [vmem:[#allocation2 + $0x4c] sm:$0xf]
      %v6242 = vld [vmem:[#allocation2 + $0x50] sm:$0xf]
      %v6243 = vld [vmem:[#allocation2 + $0x54] sm:$0xf]
      %v6244 = vld [vmem:[#allocation2 + $0x58] sm:$0xf]
      %v6245 = vld [vmem:[#allocation2 + $0x5c] sm:$0xf]
      %v6246 = vld [vmem:[#allocation2 + $0x60] sm:$0xf]
      %v6247 = vld [vmem:[#allocation2 + $0x64] sm:$0xf]
      %v6248 = vld [vmem:[#allocation2 + $0x68] sm:$0xf]
      %v6249 = vld [vmem:[#allocation2 + $0x6c] sm:$0xf]
      %v6250 = vld [vmem:[#allocation2 + $0x70] sm:$0xf]
      %v6251 = vld [vmem:[#allocation2 + $0x74] sm:$0xf]
      %v6252 = vld [vmem:[#allocation2 + $0x78] sm:$0xf]
      %v6253 = vld [vmem:[#allocation2 + $0x7c] sm:$0xf]
      %v6254 = vld [vmem:[#allocation2 + $0x80] sm:$0xf]
      %v6255 = vld [vmem:[#allocation2 + $0x84] sm:$0xf]
      %v6256 = vld [vmem:[#allocation2 + $0x88] sm:$0xf]
      %v6257 = vld [vmem:[#allocation2 + $0x8c] sm:$0xf]
      %v6258 = vld [vmem:[#allocation2 + $0x90] sm:$0xf]
      %v6259 = vld [vmem:[#allocation2 + $0x94] sm:$0xf]
      %v6260 = vld [vmem:[#allocation2 + $0x98] sm:$0xf]
      %v6261 = vld [vmem:[#allocation2 + $0x9c] sm:$0xf]
      %v6262 = vld [vmem:[#allocation2 + $0xa0] sm:$0xf]
      %v6263 = vld [vmem:[#allocation2 + $0xa4] sm:$0xf]
      %v6264 = vld [vmem:[#allocation2 + $0xa8] sm:$0xf]
      %v6265 = vld [vmem:[#allocation2 + $0xac] sm:$0xf]
      %v6266 = vld [vmem:[#allocation2 + $0xb0] sm:$0xf]
      %v6267 = vld [vmem:[#allocation2 + $0xb4] sm:$0xf]
      %v6268 = vld [vmem:[#allocation2 + $0xb8] sm:$0xf]
      %v6269 = vld [vmem:[#allocation2 + $0xbc] sm:$0xf]
      %v6270 = vld [vmem:[#allocation2 + $0xc0] sm:$0xf]
      %v6271 = vld [vmem:[#allocation2 + $0xc4] sm:$0xf]
      %v6272 = vld [vmem:[#allocation2 + $0xc8] sm:$0x1]
      %s6273 = scalar_lea.vmem %s3, 384
      %v6274 = vld [vmem:[%s6273] sm:$0xf]
      %v6275 = vld [vmem:[%s6273 + $0x4] sm:$0xf]
      %v6276 = vld [vmem:[%s6273 + $0x8] sm:$0xf]
      %v6277 = vld [vmem:[%s6273 + $0xc] sm:$0xf]
      %v6278 = vld [vmem:[%s6273 + $0x10] sm:$0xf]
      %v6279 = vld [vmem:[%s6273 + $0x14] sm:$0xf]
      %v6280 = vld [vmem:[%s6273 + $0x18] sm:$0xf]
      %v6281 = vld [vmem:[%s6273 + $0x1c] sm:$0xf]
      %v6282 = vld [vmem:[%s6273 + $0x20] sm:$0xf]
      %v6283 = vld [vmem:[%s6273 + $0x24] sm:$0xf]
      %v6284 = vld [vmem:[%s6273 + $0x28] sm:$0xf]
      %v6285 = vld [vmem:[%s6273 + $0x2c] sm:$0xf]
      %v6286 = vld [vmem:[%s6273 + $0x30] sm:$0xf]
      %v6287 = vld [vmem:[%s6273 + $0x34] sm:$0xf]
      %v6288 = vld [vmem:[%s6273 + $0x38] sm:$0xf]
      %v6289 = vld [vmem:[%s6273 + $0x3c] sm:$0xf]
      %v6335 = vunpack.c.l.b16 %v6228
      %v6336 = vunpack.c.l.b16 %v6229
      %v6337 = vunpack.c.l.b16 %v6230
      %v6338 = vunpack.c.l.b16 %v6231
      %v6339 = vunpack.c.l.b16 %v6232
      %v6340 = vunpack.c.l.b16 %v6233
      %v6341 = vunpack.c.l.b16 %v6234
      %v6342 = vunpack.c.l.b16 %v6235
      %v6343 = vunpack.c.l.b16 %v6236
      %v6344 = vunpack.c.l.b16 %v6237
      %v6345 = vunpack.c.l.b16 %v6238
      %v6346 = vunpack.c.l.b16 %v6239
      %v6347 = vunpack.c.l.b16 %v6240
      %v6348 = vunpack.c.l.b16 %v6241
      %v6349 = vunpack.c.l.b16 %v6242
      %v6350 = vunpack.c.l.b16 %v6243
      %v6351 = vunpack.c.l.b16 %v6244
      %v6352 = vunpack.c.l.b16 %v6245
      %v6353 = vunpack.c.l.b16 %v6246
      %v6354 = vunpack.c.l.b16 %v6247
      %v6355 = vunpack.c.l.b16 %v6248
      %v6356 = vunpack.c.l.b16 %v6249
      %v6357 = vunpack.c.l.b16 %v6250
      %v6358 = vunpack.c.l.b16 %v6251
      %v6359 = vunpack.c.l.b16 %v6252
      %v6360 = vunpack.c.l.b16 %v6253
      %v6361 = vunpack.c.l.b16 %v6254
      %v6362 = vunpack.c.l.b16 %v6255
      %v6363 = vunpack.c.l.b16 %v6256
      %v6364 = vunpack.c.l.b16 %v6257
      %v6365 = vunpack.c.l.b16 %v6258
      %v6366 = vunpack.c.l.b16 %v6259
      %v6367 = vunpack.c.l.b16 %v6260
      %v6368 = vunpack.c.l.b16 %v6261
      %v6369 = vunpack.c.l.b16 %v6262
      %v6370 = vunpack.c.l.b16 %v6263
      %v6371 = vunpack.c.l.b16 %v6264
      %v6372 = vunpack.c.l.b16 %v6265
      %v6373 = vunpack.c.l.b16 %v6266
      %v6374 = vunpack.c.l.b16 %v6267
      %v6375 = vunpack.c.l.b16 %v6268
      %v6376 = vunpack.c.l.b16 %v6269
      %v6377 = vunpack.c.l.b16 %v6270
      %v6378 = vunpack.c.l.b16 %v6271
      %v6379 = vunpack.c.l.b16 %v6272
      %v6380 = vpack.c.b16 %v6336, %v6335
      %v6381 = vpack.c.b16 %v6338, %v6337
      %v6382 = vpack.c.b16 %v6340, %v6339
      %v6383 = vpack.c.b16 %v6342, %v6341
      %v6384 = vpack.c.b16 %v6344, %v6343
      %v6385 = vpack.c.b16 %v6346, %v6345
      %v6386 = vpack.c.b16 %v6348, %v6347
      %v6387 = vpack.c.b16 %v6350, %v6349
      %v6388 = vpack.c.b16 %v6352, %v6351
      %v6389 = vpack.c.b16 %v6354, %v6353
      %v6390 = vpack.c.b16 %v6356, %v6355
      %v6391 = vpack.c.b16 %v6358, %v6357
      %v6392 = vpack.c.b16 %v6360, %v6359
      %v6393 = vpack.c.b16 %v6362, %v6361
      %v6394 = vpack.c.b16 %v6364, %v6363
      %v6395 = vpack.c.b16 %v6366, %v6365
      %v6396 = vpack.c.b16 %v6368, %v6367
      %v6397 = vpack.c.b16 %v6370, %v6369
      %v6398 = vpack.c.b16 %v6372, %v6371
      %v6399 = vpack.c.b16 %v6374, %v6373
      %v6400 = vpack.c.b16 %v6376, %v6375
      %v6401 = vpack.c.b16 %v6378, %v6377
      %v6402 = vpack.c.b16 %v6379, %v6379
      %v6404 = vshrl.u32 %v6380, 16
      %v6406 = vshll.u32 %v6380, 16
      %v6408 = vrot.slane %v6406, 1
      %v6409 = vor.u32 %v6404, %v6408
      %v6411 = vshll.u32 %v6381, 16
      %v6413 = vrot.slane %v6411, 1
      %v6414 = vsel %vm5726, %v6409, %v6413
      %v6415 = vshrl.u32 %v6381, 16
      %v6417 = vor.u32 %v6415, %v6413
      %v6419 = vshll.u32 %v6382, 16
      %v6421 = vrot.slane %v6419, 1
      %v6422 = vsel %vm5726, %v6417, %v6421
      %v6423 = vshrl.u32 %v6382, 16
      %v6425 = vor.u32 %v6423, %v6421
      %v6427 = vshll.u32 %v6383, 16
      %v6429 = vrot.slane %v6427, 1
      %v6430 = vsel %vm5726, %v6425, %v6429
      %v6431 = vshrl.u32 %v6383, 16
      %v6433 = vor.u32 %v6431, %v6429
      %v6435 = vshll.u32 %v6384, 16
      %v6437 = vrot.slane %v6435, 1
      %v6438 = vsel %vm5726, %v6433, %v6437
      %v6439 = vshrl.u32 %v6384, 16
      %v6441 = vor.u32 %v6439, %v6437
      %v6443 = vshll.u32 %v6385, 16
      %v6445 = vrot.slane %v6443, 1
      %v6446 = vsel %vm5726, %v6441, %v6445
      %v6447 = vshrl.u32 %v6385, 16
      %v6449 = vor.u32 %v6447, %v6445
      %v6451 = vshll.u32 %v6386, 16
      %v6453 = vrot.slane %v6451, 1
      %v6454 = vsel %vm5726, %v6449, %v6453
      %v6455 = vshrl.u32 %v6386, 16
      %v6457 = vor.u32 %v6455, %v6453
      %v6459 = vshll.u32 %v6387, 16
      %v6461 = vrot.slane %v6459, 1
      %v6462 = vsel %vm5726, %v6457, %v6461
      %v6463 = vshrl.u32 %v6387, 16
      %v6465 = vor.u32 %v6463, %v6461
      %v6467 = vshll.u32 %v6388, 16
      %v6469 = vrot.slane %v6467, 1
      %v6470 = vsel %vm5726, %v6465, %v6469
      %v6471 = vshrl.u32 %v6388, 16
      %v6473 = vor.u32 %v6471, %v6469
      %v6475 = vshll.u32 %v6389, 16
      %v6477 = vrot.slane %v6475, 1
      %v6478 = vsel %vm5726, %v6473, %v6477
      %v6479 = vshrl.u32 %v6389, 16
      %v6481 = vor.u32 %v6479, %v6477
      %v6483 = vshll.u32 %v6390, 16
      %v6485 = vrot.slane %v6483, 1
      %v6486 = vsel %vm5726, %v6481, %v6485
      %v6487 = vshrl.u32 %v6390, 16
      %v6489 = vor.u32 %v6487, %v6485
      %v6491 = vshll.u32 %v6391, 16
      %v6493 = vrot.slane %v6491, 1
      %v6494 = vsel %vm5726, %v6489, %v6493
      %v6495 = vshrl.u32 %v6391, 16
      %v6497 = vor.u32 %v6495, %v6493
      %v6499 = vshll.u32 %v6392, 16
      %v6501 = vrot.slane %v6499, 1
      %v6502 = vsel %vm5726, %v6497, %v6501
      %v6503 = vshrl.u32 %v6392, 16
      %v6505 = vor.u32 %v6503, %v6501
      %v6507 = vshll.u32 %v6393, 16
      %v6509 = vrot.slane %v6507, 1
      %v6510 = vsel %vm5726, %v6505, %v6509
      %v6511 = vshrl.u32 %v6393, 16
      %v6513 = vor.u32 %v6511, %v6509
      %v6515 = vshll.u32 %v6394, 16
      %v6517 = vrot.slane %v6515, 1
      %v6518 = vsel %vm5726, %v6513, %v6517
      %v6519 = vshrl.u32 %v6394, 16
      %v6521 = vor.u32 %v6519, %v6517
      %v6523 = vshll.u32 %v6395, 16
      %v6525 = vrot.slane %v6523, 1
      %v6526 = vsel %vm5726, %v6521, %v6525
      %v6527 = vshrl.u32 %v6395, 16
      %v6529 = vor.u32 %v6527, %v6525
      %v6531 = vshll.u32 %v6396, 16
      %v6533 = vrot.slane %v6531, 1
      %v6534 = vsel %vm5726, %v6529, %v6533
      %v6535 = vshrl.u32 %v6396, 16
      %v6537 = vor.u32 %v6535, %v6533
      %v6539 = vshll.u32 %v6397, 16
      %v6541 = vrot.slane %v6539, 1
      %v6542 = vsel %vm5726, %v6537, %v6541
      %v6543 = vshrl.u32 %v6397, 16
      %v6545 = vor.u32 %v6543, %v6541
      %v6547 = vshll.u32 %v6398, 16
      %v6549 = vrot.slane %v6547, 1
      %v6550 = vsel %vm5726, %v6545, %v6549
      %v6551 = vshrl.u32 %v6398, 16
      %v6553 = vor.u32 %v6551, %v6549
      %v6555 = vshll.u32 %v6399, 16
      %v6557 = vrot.slane %v6555, 1
      %v6558 = vsel %vm5726, %v6553, %v6557
      %v6559 = vshrl.u32 %v6399, 16
      %v6561 = vor.u32 %v6559, %v6557
      %v6563 = vshll.u32 %v6400, 16
      %v6565 = vrot.slane %v6563, 1
      %v6566 = vsel %vm5726, %v6561, %v6565
      %v6567 = vshrl.u32 %v6400, 16
      %v6569 = vor.u32 %v6567, %v6565
      %v6571 = vshll.u32 %v6401, 16
      %v6573 = vrot.slane %v6571, 1
      %v6574 = vsel %vm5726, %v6569, %v6573
      %v6575 = vshrl.u32 %v6401, 16
      %v6577 = vor.u32 %v6575, %v6573
      %v6579 = vshll.u32 %v6402, 16
      %v6581 = vrot.slane %v6579, 1
      %v6582 = vsel %vm5726, %v6577, %v6581
      %v6621 = vunpack.c.l.b16 %v6274
      %v6622 = vunpack.c.l.b16 %v6275
      %v6623 = vunpack.c.l.b16 %v6276
      %v6624 = vunpack.c.l.b16 %v6277
      %v6625 = vunpack.c.l.b16 %v6278
      %v6626 = vunpack.c.l.b16 %v6279
      %v6627 = vunpack.c.l.b16 %v6280
      %v6628 = vunpack.c.l.b16 %v6281
      %v6629 = vunpack.c.l.b16 %v6282
      %v6630 = vunpack.c.l.b16 %v6283
      %v6631 = vunpack.c.l.b16 %v6284
      %v6632 = vunpack.c.l.b16 %v6285
      %v6633 = vunpack.c.l.b16 %v6286
      %v6634 = vunpack.c.l.b16 %v6287
      %v6635 = vunpack.c.l.b16 %v6288
      %v6636 = vunpack.c.l.b16 %v6289
      %v6637 = vpack.c.b16 %v6622, %v6621
      %v6638 = vpack.c.b16 %v6624, %v6623
      %v6639 = vpack.c.b16 %v6626, %v6625
      %v6640 = vpack.c.b16 %v6628, %v6627
      %v6641 = vpack.c.b16 %v6630, %v6629
      %v6642 = vpack.c.b16 %v6632, %v6631
      %v6643 = vpack.c.b16 %v6634, %v6633
      %v6644 = vpack.c.b16 %v6636, %v6635
      %6653 = vmatpush.bf16.msra.mxu0 %v6644
      %6654 = vmatpush.bf16.msra.mxu0 %v6643
      %6655 = vmatpush.bf16.msra.mxu0 %v6642
      %6656 = vmatpush.bf16.msra.mxu0 %v6641
      %6657 = vmatpush.bf16.msra.mxu0 %v6640
      %6658 = vmatpush.bf16.msra.mxu0 %v6639
      %6659 = vmatpush.bf16.msra.mxu0 %v6638
      %6660 = vmatpush.bf16.msra.mxu0 %v6637
      %6661 = vmatmul.bf16.gmra.mxu0 %v6414
      %v6662 = vpop.f32.mrf.mxu0
      %v6663 = vadd.f32 0.0, %v6662
      %v6664 = vpop.f32.mrf.mxu0
      %v6665 = vadd.f32 0.0, %v6664
      %6666 = vmatmul.bf16.gmra.mxu0 %v6422
      %v6667 = vpop.f32.mrf.mxu0
      %v6668 = vadd.f32 0.0, %v6667
      %v6669 = vpop.f32.mrf.mxu0
      %v6670 = vadd.f32 0.0, %v6669
      %6671 = vmatmul.bf16.gmra.mxu0 %v6430
      %v6672 = vpop.f32.mrf.mxu0
      %v6673 = vadd.f32 0.0, %v6672
      %v6674 = vpop.f32.mrf.mxu0
      %v6675 = vadd.f32 0.0, %v6674
      %6676 = vmatmul.bf16.gmra.mxu0 %v6438
      %v6677 = vpop.f32.mrf.mxu0
      %v6678 = vadd.f32 0.0, %v6677
      %v6679 = vpop.f32.mrf.mxu0
      %v6680 = vadd.f32 0.0, %v6679
      %6681 = vmatmul.bf16.gmra.mxu0 %v6446
      %v6682 = vpop.f32.mrf.mxu0
      %v6683 = vadd.f32 0.0, %v6682
      %v6684 = vpop.f32.mrf.mxu0
      %v6685 = vadd.f32 0.0, %v6684
      %6686 = vmatmul.bf16.gmra.mxu0 %v6454
      %v6687 = vpop.f32.mrf.mxu0
      %v6688 = vadd.f32 0.0, %v6687
      %v6689 = vpop.f32.mrf.mxu0
      %v6690 = vadd.f32 0.0, %v6689
      %6691 = vmatmul.bf16.gmra.mxu0 %v6462
      %v6692 = vpop.f32.mrf.mxu0
      %v6693 = vadd.f32 0.0, %v6692
      %v6694 = vpop.f32.mrf.mxu0
      %v6695 = vadd.f32 0.0, %v6694
      %6696 = vmatmul.bf16.gmra.mxu0 %v6470
      %v6697 = vpop.f32.mrf.mxu0
      %v6698 = vadd.f32 0.0, %v6697
      %v6699 = vpop.f32.mrf.mxu0
      %v6700 = vadd.f32 0.0, %v6699
      %6701 = vmatmul.bf16.gmra.mxu0 %v6478
      %v6702 = vpop.f32.mrf.mxu0
      %v6703 = vadd.f32 0.0, %v6702
      %v6704 = vpop.f32.mrf.mxu0
      %v6705 = vadd.f32 0.0, %v6704
      %6706 = vmatmul.bf16.gmra.mxu0 %v6486
      %v6707 = vpop.f32.mrf.mxu0
      %v6708 = vadd.f32 0.0, %v6707
      %v6709 = vpop.f32.mrf.mxu0
      %v6710 = vadd.f32 0.0, %v6709
      %6711 = vmatmul.bf16.gmra.mxu0 %v6494
      %v6712 = vpop.f32.mrf.mxu0
      %v6713 = vadd.f32 0.0, %v6712
      %v6714 = vpop.f32.mrf.mxu0
      %v6715 = vadd.f32 0.0, %v6714
      %6716 = vmatmul.bf16.gmra.mxu0 %v6502
      %v6717 = vpop.f32.mrf.mxu0
      %v6718 = vadd.f32 0.0, %v6717
      %v6719 = vpop.f32.mrf.mxu0
      %v6720 = vadd.f32 0.0, %v6719
      %6721 = vmatmul.bf16.gmra.mxu0 %v6510
      %v6722 = vpop.f32.mrf.mxu0
      %v6723 = vadd.f32 0.0, %v6722
      %v6724 = vpop.f32.mrf.mxu0
      %v6725 = vadd.f32 0.0, %v6724
      %6726 = vmatmul.bf16.gmra.mxu0 %v6518
      %v6727 = vpop.f32.mrf.mxu0
      %v6728 = vadd.f32 0.0, %v6727
      %v6729 = vpop.f32.mrf.mxu0
      %v6730 = vadd.f32 0.0, %v6729
      %6731 = vmatmul.bf16.gmra.mxu0 %v6526
      %v6732 = vpop.f32.mrf.mxu0
      %v6733 = vadd.f32 0.0, %v6732
      %v6734 = vpop.f32.mrf.mxu0
      %v6735 = vadd.f32 0.0, %v6734
      %6736 = vmatmul.bf16.gmra.mxu0 %v6534
      %v6737 = vpop.f32.mrf.mxu0
      %v6738 = vadd.f32 0.0, %v6737
      %v6739 = vpop.f32.mrf.mxu0
      %v6740 = vadd.f32 0.0, %v6739
      %6741 = vmatmul.bf16.gmra.mxu0 %v6542
      %v6742 = vpop.f32.mrf.mxu0
      %v6743 = vadd.f32 0.0, %v6742
      %v6744 = vpop.f32.mrf.mxu0
      %v6745 = vadd.f32 0.0, %v6744
      %6746 = vmatmul.bf16.gmra.mxu0 %v6550
      %v6747 = vpop.f32.mrf.mxu0
      %v6748 = vadd.f32 0.0, %v6747
      %v6749 = vpop.f32.mrf.mxu0
      %v6750 = vadd.f32 0.0, %v6749
      %6751 = vmatmul.bf16.gmra.mxu0 %v6558
      %v6752 = vpop.f32.mrf.mxu0
      %v6753 = vadd.f32 0.0, %v6752
      %v6754 = vpop.f32.mrf.mxu0
      %v6755 = vadd.f32 0.0, %v6754
      %6756 = vmatmul.bf16.gmra.mxu0 %v6566
      %v6757 = vpop.f32.mrf.mxu0
      %v6758 = vadd.f32 0.0, %v6757
      %v6759 = vpop.f32.mrf.mxu0
      %v6760 = vadd.f32 0.0, %v6759
      %6761 = vmatmul.bf16.gmra.mxu0 %v6574
      %v6762 = vpop.f32.mrf.mxu0
      %v6763 = vadd.f32 0.0, %v6762
      %v6764 = vpop.f32.mrf.mxu0
      %v6765 = vadd.f32 0.0, %v6764
      %6766 = vmatmul.bf16.gmra.mxu0 %v6582
      %v6767 = vpop.f32.mrf.mxu0
      %v6768 = vadd.f32 0.0, %v6767
      %v6769 = vpop.f32.mrf.mxu0
      %v6770 = vadd.f32 0.0, %v6769
      %6771 = vdwg.mxu0
      %v6772 = vld [vmem:[#allocation3] sm:$0xff]
      %v6773 = vld [vmem:[#allocation3 + $0x8] sm:$0xff]
      %v6774 = vld [vmem:[#allocation3 + $0x10] sm:$0xff]
      %v6775 = vld [vmem:[#allocation3 + $0x18] sm:$0xff]
      %v6776 = vld [vmem:[#allocation3 + $0x20] sm:$0xff]
      %v6777 = vld [vmem:[#allocation3 + $0x28] sm:$0xff]
      %v6778 = vld [vmem:[#allocation3 + $0x30] sm:$0xff]
      %v6779 = vld [vmem:[#allocation3 + $0x38] sm:$0xff]
      %v6780 = vld [vmem:[#allocation3 + $0x40] sm:$0xff]
      %v6781 = vld [vmem:[#allocation3 + $0x48] sm:$0xff]
      %v6782 = vld [vmem:[#allocation3 + $0x50] sm:$0xff]
      %v6783 = vld [vmem:[#allocation3 + $0x58] sm:$0xff]
      %v6784 = vld [vmem:[#allocation3 + $0x60] sm:$0xff]
      %v6785 = vld [vmem:[#allocation3 + $0x68] sm:$0xff]
      %v6786 = vld [vmem:[#allocation3 + $0x70] sm:$0xff]
      %v6787 = vld [vmem:[#allocation3 + $0x78] sm:$0xff]
      %v6788 = vld [vmem:[#allocation3 + $0x80] sm:$0xff]
      %v6789 = vld [vmem:[#allocation3 + $0x88] sm:$0xff]
      %v6790 = vld [vmem:[#allocation3 + $0x90] sm:$0xff]
      %v6791 = vld [vmem:[#allocation3 + $0x98] sm:$0xff]
      %v6792 = vld [vmem:[#allocation3 + $0xa0] sm:$0xff]
      %v6793 = vld [vmem:[#allocation3 + $0xa8] sm:$0xff]
      %v6794 = vld [vmem:[#allocation3 + $0xb0] sm:$0xff]
      %v6795 = vld [vmem:[#allocation3 + $0xb8] sm:$0xff]
      %v6796 = vld [vmem:[#allocation3 + $0xc0] sm:$0xff]
      %v6797 = vld [vmem:[#allocation3 + $0xc8] sm:$0xff]
      %v6798 = vld [vmem:[#allocation3 + $0xd0] sm:$0xff]
      %v6799 = vld [vmem:[#allocation3 + $0xd8] sm:$0xff]
      %v6800 = vld [vmem:[#allocation3 + $0xe0] sm:$0xff]
      %v6801 = vld [vmem:[#allocation3 + $0xe8] sm:$0xff]
      %v6802 = vld [vmem:[#allocation3 + $0xf0] sm:$0xff]
      %v6803 = vld [vmem:[#allocation3 + $0xf8] sm:$0xff]
      %v6804 = vld [vmem:[#allocation3 + $0x100] sm:$0xff]
      %v6805 = vld [vmem:[#allocation3 + $0x108] sm:$0xff]
      %v6806 = vld [vmem:[#allocation3 + $0x110] sm:$0xff]
      %v6807 = vld [vmem:[#allocation3 + $0x118] sm:$0xff]
      %v6808 = vld [vmem:[#allocation3 + $0x120] sm:$0xff]
      %v6809 = vld [vmem:[#allocation3 + $0x128] sm:$0xff]
      %v6810 = vld [vmem:[#allocation3 + $0x130] sm:$0xff]
      %v6811 = vld [vmem:[#allocation3 + $0x138] sm:$0xff]
      %v6812 = vld [vmem:[#allocation3 + $0x140] sm:$0xff]
      %v6813 = vld [vmem:[#allocation3 + $0x148] sm:$0xff]
      %v6814 = vld [vmem:[#allocation3 + $0x150] sm:$0xff]
      %v6815 = vld [vmem:[#allocation3 + $0x158] sm:$0xff]
      %v6816 = vadd.f32 %v6772, %v6663
      %v6817 = vadd.f32 %v6773, %v6665
      %v6818 = vadd.f32 %v6774, %v6668
      %v6819 = vadd.f32 %v6775, %v6670
      %v6820 = vadd.f32 %v6776, %v6673
      %v6821 = vadd.f32 %v6777, %v6675
      %v6822 = vadd.f32 %v6778, %v6678
      %v6823 = vadd.f32 %v6779, %v6680
      %v6824 = vadd.f32 %v6780, %v6683
      %v6825 = vadd.f32 %v6781, %v6685
      %v6826 = vadd.f32 %v6782, %v6688
      %v6827 = vadd.f32 %v6783, %v6690
      %v6828 = vadd.f32 %v6784, %v6693
      %v6829 = vadd.f32 %v6785, %v6695
      %v6830 = vadd.f32 %v6786, %v6698
      %v6831 = vadd.f32 %v6787, %v6700
      %v6832 = vadd.f32 %v6788, %v6703
      %v6833 = vadd.f32 %v6789, %v6705
      %v6834 = vadd.f32 %v6790, %v6708
      %v6835 = vadd.f32 %v6791, %v6710
      %v6836 = vadd.f32 %v6792, %v6713
      %v6837 = vadd.f32 %v6793, %v6715
      %v6838 = vadd.f32 %v6794, %v6718
      %v6839 = vadd.f32 %v6795, %v6720
      %v6840 = vadd.f32 %v6796, %v6723
      %v6841 = vadd.f32 %v6797, %v6725
      %v6842 = vadd.f32 %v6798, %v6728
      %v6843 = vadd.f32 %v6799, %v6730
      %v6844 = vadd.f32 %v6800, %v6733
      %v6845 = vadd.f32 %v6801, %v6735
      %v6846 = vadd.f32 %v6802, %v6738
      %v6847 = vadd.f32 %v6803, %v6740
      %v6848 = vadd.f32 %v6804, %v6743
      %v6849 = vadd.f32 %v6805, %v6745
      %v6850 = vadd.f32 %v6806, %v6748
      %v6851 = vadd.f32 %v6807, %v6750
      %v6852 = vadd.f32 %v6808, %v6753
      %v6853 = vadd.f32 %v6809, %v6755
      %v6854 = vadd.f32 %v6810, %v6758
      %v6855 = vadd.f32 %v6811, %v6760
      %v6856 = vadd.f32 %v6812, %v6763
      %v6857 = vadd.f32 %v6813, %v6765
      %v6858 = vadd.f32 %v6814, %v6768
      %v6859 = vadd.f32 %v6815, %v6770
      %6860 = vst [vmem:[#allocation3] sm:$0xff] %v6816
      %6861 = vst [vmem:[#allocation3 + $0x8] sm:$0xff] %v6817
      %6862 = vst [vmem:[#allocation3 + $0x10] sm:$0xff] %v6818
      %6863 = vst [vmem:[#allocation3 + $0x18] sm:$0xff] %v6819
      %6864 = vst [vmem:[#allocation3 + $0x20] sm:$0xff] %v6820
      %6865 = vst [vmem:[#allocation3 + $0x28] sm:$0xff] %v6821
      %6866 = vst [vmem:[#allocation3 + $0x30] sm:$0xff] %v6822
      %6867 = vst [vmem:[#allocation3 + $0x38] sm:$0xff] %v6823
      %6868 = vst [vmem:[#allocation3 + $0x40] sm:$0xff] %v6824
      %6869 = vst [vmem:[#allocation3 + $0x48] sm:$0xff] %v6825
      %6870 = vst [vmem:[#allocation3 + $0x50] sm:$0xff] %v6826
      %6871 = vst [vmem:[#allocation3 + $0x58] sm:$0xff] %v6827
      %6872 = vst [vmem:[#allocation3 + $0x60] sm:$0xff] %v6828
      %6873 = vst [vmem:[#allocation3 + $0x68] sm:$0xff] %v6829
      %6874 = vst [vmem:[#allocation3 + $0x70] sm:$0xff] %v6830
      %6875 = vst [vmem:[#allocation3 + $0x78] sm:$0xff] %v6831
      %6876 = vst [vmem:[#allocation3 + $0x80] sm:$0xff] %v6832
      %6877 = vst [vmem:[#allocation3 + $0x88] sm:$0xff] %v6833
      %6878 = vst [vmem:[#allocation3 + $0x90] sm:$0xff] %v6834
      %6879 = vst [vmem:[#allocation3 + $0x98] sm:$0xff] %v6835
      %6880 = vst [vmem:[#allocation3 + $0xa0] sm:$0xff] %v6836
      %6881 = vst [vmem:[#allocation3 + $0xa8] sm:$0xff] %v6837
      %6882 = vst [vmem:[#allocation3 + $0xb0] sm:$0xff] %v6838
      %6883 = vst [vmem:[#allocation3 + $0xb8] sm:$0xff] %v6839
      %6884 = vst [vmem:[#allocation3 + $0xc0] sm:$0xff] %v6840
      %6885 = vst [vmem:[#allocation3 + $0xc8] sm:$0xff] %v6841
      %6886 = vst [vmem:[#allocation3 + $0xd0] sm:$0xff] %v6842
      %6887 = vst [vmem:[#allocation3 + $0xd8] sm:$0xff] %v6843
      %6888 = vst [vmem:[#allocation3 + $0xe0] sm:$0xff] %v6844
      %6889 = vst [vmem:[#allocation3 + $0xe8] sm:$0xff] %v6845
      %6890 = vst [vmem:[#allocation3 + $0xf0] sm:$0xff] %v6846
      %6891 = vst [vmem:[#allocation3 + $0xf8] sm:$0xff] %v6847
      %6892 = vst [vmem:[#allocation3 + $0x100] sm:$0xff] %v6848
      %6893 = vst [vmem:[#allocation3 + $0x108] sm:$0xff] %v6849
      %6894 = vst [vmem:[#allocation3 + $0x110] sm:$0xff] %v6850
      %6895 = vst [vmem:[#allocation3 + $0x118] sm:$0xff] %v6851
      %6896 = vst [vmem:[#allocation3 + $0x120] sm:$0xff] %v6852
      %6897 = vst [vmem:[#allocation3 + $0x128] sm:$0xff] %v6853
      %6898 = vst [vmem:[#allocation3 + $0x130] sm:$0xff] %v6854
      %6899 = vst [vmem:[#allocation3 + $0x138] sm:$0xff] %v6855
      %6900 = vst [vmem:[#allocation3 + $0x140] sm:$0xff] %v6856
      %6901 = vst [vmem:[#allocation3 + $0x148] sm:$0xff] %v6857
      %6902 = vst [vmem:[#allocation3 + $0x150] sm:$0xff] %v6858
      %6903 = vst [vmem:[#allocation3 + $0x158] sm:$0xff] %v6859
      %v6904 = vld [vmem:[#allocation2 + $0x18] sm:$0xe]
      %v6905 = vld [vmem:[#allocation2 + $0x1c] sm:$0xf]
      %v6906 = vld [vmem:[#allocation2 + $0x20] sm:$0xf]
      %v6907 = vld [vmem:[#allocation2 + $0x24] sm:$0xf]
      %v6908 = vld [vmem:[#allocation2 + $0x28] sm:$0xf]
      %v6909 = vld [vmem:[#allocation2 + $0x2c] sm:$0xf]
      %v6910 = vld [vmem:[#allocation2 + $0x30] sm:$0xf]
      %v6911 = vld [vmem:[#allocation2 + $0x34] sm:$0xf]
      %v6912 = vld [vmem:[#allocation2 + $0x38] sm:$0xf]
      %v6913 = vld [vmem:[#allocation2 + $0x3c] sm:$0xf]
      %v6914 = vld [vmem:[#allocation2 + $0x40] sm:$0xf]
      %v6915 = vld [vmem:[#allocation2 + $0x44] sm:$0xf]
      %v6916 = vld [vmem:[#allocation2 + $0x48] sm:$0xf]
      %v6917 = vld [vmem:[#allocation2 + $0x4c] sm:$0xf]
      %v6918 = vld [vmem:[#allocation2 + $0x50] sm:$0xf]
      %v6919 = vld [vmem:[#allocation2 + $0x54] sm:$0xf]
      %v6920 = vld [vmem:[#allocation2 + $0x58] sm:$0xf]
      %v6921 = vld [vmem:[#allocation2 + $0x5c] sm:$0xf]
      %v6922 = vld [vmem:[#allocation2 + $0x60] sm:$0xf]
      %v6923 = vld [vmem:[#allocation2 + $0x64] sm:$0xf]
      %v6924 = vld [vmem:[#allocation2 + $0x68] sm:$0xf]
      %v6925 = vld [vmem:[#allocation2 + $0x6c] sm:$0xf]
      %v6926 = vld [vmem:[#allocation2 + $0x70] sm:$0xf]
      %v6927 = vld [vmem:[#allocation2 + $0x74] sm:$0xf]
      %v6928 = vld [vmem:[#allocation2 + $0x78] sm:$0xf]
      %v6929 = vld [vmem:[#allocation2 + $0x7c] sm:$0xf]
      %v6930 = vld [vmem:[#allocation2 + $0x80] sm:$0xf]
      %v6931 = vld [vmem:[#allocation2 + $0x84] sm:$0xf]
      %v6932 = vld [vmem:[#allocation2 + $0x88] sm:$0xf]
      %v6933 = vld [vmem:[#allocation2 + $0x8c] sm:$0xf]
      %v6934 = vld [vmem:[#allocation2 + $0x90] sm:$0xf]
      %v6935 = vld [vmem:[#allocation2 + $0x94] sm:$0xf]
      %v6936 = vld [vmem:[#allocation2 + $0x98] sm:$0xf]
      %v6937 = vld [vmem:[#allocation2 + $0x9c] sm:$0xf]
      %v6938 = vld [vmem:[#allocation2 + $0xa0] sm:$0xf]
      %v6939 = vld [vmem:[#allocation2 + $0xa4] sm:$0xf]
      %v6940 = vld [vmem:[#allocation2 + $0xa8] sm:$0xf]
      %v6941 = vld [vmem:[#allocation2 + $0xac] sm:$0xf]
      %v6942 = vld [vmem:[#allocation2 + $0xb0] sm:$0xf]
      %v6943 = vld [vmem:[#allocation2 + $0xb4] sm:$0xf]
      %v6944 = vld [vmem:[#allocation2 + $0xb8] sm:$0xf]
      %v6945 = vld [vmem:[#allocation2 + $0xbc] sm:$0xf]
      %v6946 = vld [vmem:[#allocation2 + $0xc0] sm:$0xf]
      %v6947 = vld [vmem:[#allocation2 + $0xc4] sm:$0xf]
      %v6948 = vld [vmem:[#allocation2 + $0xc8] sm:$0x1]
      %s6949 = scalar_lea.vmem %s3, 448
      %v6950 = vld [vmem:[%s6949] sm:$0xf]
      %v6951 = vld [vmem:[%s6949 + $0x4] sm:$0xf]
      %v6952 = vld [vmem:[%s6949 + $0x8] sm:$0xf]
      %v6953 = vld [vmem:[%s6949 + $0xc] sm:$0xf]
      %v6954 = vld [vmem:[%s6949 + $0x10] sm:$0xf]
      %v6955 = vld [vmem:[%s6949 + $0x14] sm:$0xf]
      %v6956 = vld [vmem:[%s6949 + $0x18] sm:$0xf]
      %v6957 = vld [vmem:[%s6949 + $0x1c] sm:$0xf]
      %v6958 = vld [vmem:[%s6949 + $0x20] sm:$0xf]
      %v6959 = vld [vmem:[%s6949 + $0x24] sm:$0xf]
      %v6960 = vld [vmem:[%s6949 + $0x28] sm:$0xf]
      %v6961 = vld [vmem:[%s6949 + $0x2c] sm:$0xf]
      %v6962 = vld [vmem:[%s6949 + $0x30] sm:$0xf]
      %v6963 = vld [vmem:[%s6949 + $0x34] sm:$0xf]
      %v6964 = vld [vmem:[%s6949 + $0x38] sm:$0xf]
      %v6965 = vld [vmem:[%s6949 + $0x3c] sm:$0xf]
      %v7011 = vunpack.c.l.b16 %v6904
      %v7012 = vunpack.c.l.b16 %v6905
      %v7013 = vunpack.c.l.b16 %v6906
      %v7014 = vunpack.c.l.b16 %v6907
      %v7015 = vunpack.c.l.b16 %v6908
      %v7016 = vunpack.c.l.b16 %v6909
      %v7017 = vunpack.c.l.b16 %v6910
      %v7018 = vunpack.c.l.b16 %v6911
      %v7019 = vunpack.c.l.b16 %v6912
      %v7020 = vunpack.c.l.b16 %v6913
      %v7021 = vunpack.c.l.b16 %v6914
      %v7022 = vunpack.c.l.b16 %v6915
      %v7023 = vunpack.c.l.b16 %v6916
      %v7024 = vunpack.c.l.b16 %v6917
      %v7025 = vunpack.c.l.b16 %v6918
      %v7026 = vunpack.c.l.b16 %v6919
      %v7027 = vunpack.c.l.b16 %v6920
      %v7028 = vunpack.c.l.b16 %v6921
      %v7029 = vunpack.c.l.b16 %v6922
      %v7030 = vunpack.c.l.b16 %v6923
      %v7031 = vunpack.c.l.b16 %v6924
      %v7032 = vunpack.c.l.b16 %v6925
      %v7033 = vunpack.c.l.b16 %v6926
      %v7034 = vunpack.c.l.b16 %v6927
      %v7035 = vunpack.c.l.b16 %v6928
      %v7036 = vunpack.c.l.b16 %v6929
      %v7037 = vunpack.c.l.b16 %v6930
      %v7038 = vunpack.c.l.b16 %v6931
      %v7039 = vunpack.c.l.b16 %v6932
      %v7040 = vunpack.c.l.b16 %v6933
      %v7041 = vunpack.c.l.b16 %v6934
      %v7042 = vunpack.c.l.b16 %v6935
      %v7043 = vunpack.c.l.b16 %v6936
      %v7044 = vunpack.c.l.b16 %v6937
      %v7045 = vunpack.c.l.b16 %v6938
      %v7046 = vunpack.c.l.b16 %v6939
      %v7047 = vunpack.c.l.b16 %v6940
      %v7048 = vunpack.c.l.b16 %v6941
      %v7049 = vunpack.c.l.b16 %v6942
      %v7050 = vunpack.c.l.b16 %v6943
      %v7051 = vunpack.c.l.b16 %v6944
      %v7052 = vunpack.c.l.b16 %v6945
      %v7053 = vunpack.c.l.b16 %v6946
      %v7054 = vunpack.c.l.b16 %v6947
      %v7055 = vunpack.c.l.b16 %v6948
      %v7056 = vpack.c.b16 %v7012, %v7011
      %v7057 = vpack.c.b16 %v7014, %v7013
      %v7058 = vpack.c.b16 %v7016, %v7015
      %v7059 = vpack.c.b16 %v7018, %v7017
      %v7060 = vpack.c.b16 %v7020, %v7019
      %v7061 = vpack.c.b16 %v7022, %v7021
      %v7062 = vpack.c.b16 %v7024, %v7023
      %v7063 = vpack.c.b16 %v7026, %v7025
      %v7064 = vpack.c.b16 %v7028, %v7027
      %v7065 = vpack.c.b16 %v7030, %v7029
      %v7066 = vpack.c.b16 %v7032, %v7031
      %v7067 = vpack.c.b16 %v7034, %v7033
      %v7068 = vpack.c.b16 %v7036, %v7035
      %v7069 = vpack.c.b16 %v7038, %v7037
      %v7070 = vpack.c.b16 %v7040, %v7039
      %v7071 = vpack.c.b16 %v7042, %v7041
      %v7072 = vpack.c.b16 %v7044, %v7043
      %v7073 = vpack.c.b16 %v7046, %v7045
      %v7074 = vpack.c.b16 %v7048, %v7047
      %v7075 = vpack.c.b16 %v7050, %v7049
      %v7076 = vpack.c.b16 %v7052, %v7051
      %v7077 = vpack.c.b16 %v7054, %v7053
      %v7078 = vpack.c.b16 %v7055, %v7055
      %vm7079 = vcmask 1046528
      %v7080 = vrot.slane %v7056, 1
      %v7081 = vrot.slane %v7057, 1
      %v7082 = vsel %vm7079, %v7080, %v7081
      %v7083 = vrot.slane %v7058, 1
      %v7084 = vsel %vm7079, %v7081, %v7083
      %v7085 = vrot.slane %v7059, 1
      %v7086 = vsel %vm7079, %v7083, %v7085
      %v7087 = vrot.slane %v7060, 1
      %v7088 = vsel %vm7079, %v7085, %v7087
      %v7089 = vrot.slane %v7061, 1
      %v7090 = vsel %vm7079, %v7087, %v7089
      %v7091 = vrot.slane %v7062, 1
      %v7092 = vsel %vm7079, %v7089, %v7091
      %v7093 = vrot.slane %v7063, 1
      %v7094 = vsel %vm7079, %v7091, %v7093
      %v7095 = vrot.slane %v7064, 1
      %v7096 = vsel %vm7079, %v7093, %v7095
      %v7097 = vrot.slane %v7065, 1
      %v7098 = vsel %vm7079, %v7095, %v7097
      %v7099 = vrot.slane %v7066, 1
      %v7100 = vsel %vm7079, %v7097, %v7099
      %v7101 = vrot.slane %v7067, 1
      %v7102 = vsel %vm7079, %v7099, %v7101
      %v7103 = vrot.slane %v7068, 1
      %v7104 = vsel %vm7079, %v7101, %v7103
      %v7105 = vrot.slane %v7069, 1
      %v7106 = vsel %vm7079, %v7103, %v7105
      %v7107 = vrot.slane %v7070, 1
      %v7108 = vsel %vm7079, %v7105, %v7107
      %v7109 = vrot.slane %v7071, 1
      %v7110 = vsel %vm7079, %v7107, %v7109
      %v7111 = vrot.slane %v7072, 1
      %v7112 = vsel %vm7079, %v7109, %v7111
      %v7113 = vrot.slane %v7073, 1
      %v7114 = vsel %vm7079, %v7111, %v7113
      %v7115 = vrot.slane %v7074, 1
      %v7116 = vsel %vm7079, %v7113, %v7115
      %v7117 = vrot.slane %v7075, 1
      %v7118 = vsel %vm7079, %v7115, %v7117
      %v7119 = vrot.slane %v7076, 1
      %v7120 = vsel %vm7079, %v7117, %v7119
      %v7121 = vrot.slane %v7077, 1
      %v7122 = vsel %vm7079, %v7119, %v7121
      %v7123 = vrot.slane %v7078, 1
      %v7124 = vsel %vm7079, %v7121, %v7123
      %v7163 = vunpack.c.l.b16 %v6950
      %v7164 = vunpack.c.l.b16 %v6951
      %v7165 = vunpack.c.l.b16 %v6952
      %v7166 = vunpack.c.l.b16 %v6953
      %v7167 = vunpack.c.l.b16 %v6954
      %v7168 = vunpack.c.l.b16 %v6955
      %v7169 = vunpack.c.l.b16 %v6956
      %v7170 = vunpack.c.l.b16 %v6957
      %v7171 = vunpack.c.l.b16 %v6958
      %v7172 = vunpack.c.l.b16 %v6959
      %v7173 = vunpack.c.l.b16 %v6960
      %v7174 = vunpack.c.l.b16 %v6961
      %v7175 = vunpack.c.l.b16 %v6962
      %v7176 = vunpack.c.l.b16 %v6963
      %v7177 = vunpack.c.l.b16 %v6964
      %v7178 = vunpack.c.l.b16 %v6965
      %v7179 = vpack.c.b16 %v7164, %v7163
      %v7180 = vpack.c.b16 %v7166, %v7165
      %v7181 = vpack.c.b16 %v7168, %v7167
      %v7182 = vpack.c.b16 %v7170, %v7169
      %v7183 = vpack.c.b16 %v7172, %v7171
      %v7184 = vpack.c.b16 %v7174, %v7173
      %v7185 = vpack.c.b16 %v7176, %v7175
      %v7186 = vpack.c.b16 %v7178, %v7177
      %7195 = vmatpush.bf16.msra.mxu0 %v7186
      %7196 = vmatpush.bf16.msra.mxu0 %v7185
      %7197 = vmatpush.bf16.msra.mxu0 %v7184
      %7198 = vmatpush.bf16.msra.mxu0 %v7183
      %7199 = vmatpush.bf16.msra.mxu0 %v7182
      %7200 = vmatpush.bf16.msra.mxu0 %v7181
      %7201 = vmatpush.bf16.msra.mxu0 %v7180
      %7202 = vmatpush.bf16.msra.mxu0 %v7179
      %7203 = vmatmul.bf16.gmra.mxu0 %v7082
      %v7204 = vpop.f32.mrf.mxu0
      %v7205 = vadd.f32 0.0, %v7204
      %v7206 = vpop.f32.mrf.mxu0
      %v7207 = vadd.f32 0.0, %v7206
      %7208 = vmatmul.bf16.gmra.mxu0 %v7084
      %v7209 = vpop.f32.mrf.mxu0
      %v7210 = vadd.f32 0.0, %v7209
      %v7211 = vpop.f32.mrf.mxu0
      %v7212 = vadd.f32 0.0, %v7211
      %7213 = vmatmul.bf16.gmra.mxu0 %v7086
      %v7214 = vpop.f32.mrf.mxu0
      %v7215 = vadd.f32 0.0, %v7214
      %v7216 = vpop.f32.mrf.mxu0
      %v7217 = vadd.f32 0.0, %v7216
      %7218 = vmatmul.bf16.gmra.mxu0 %v7088
      %v7219 = vpop.f32.mrf.mxu0
      %v7220 = vadd.f32 0.0, %v7219
      %v7221 = vpop.f32.mrf.mxu0
      %v7222 = vadd.f32 0.0, %v7221
      %7223 = vmatmul.bf16.gmra.mxu0 %v7090
      %v7224 = vpop.f32.mrf.mxu0
      %v7225 = vadd.f32 0.0, %v7224
      %v7226 = vpop.f32.mrf.mxu0
      %v7227 = vadd.f32 0.0, %v7226
      %7228 = vmatmul.bf16.gmra.mxu0 %v7092
      %v7229 = vpop.f32.mrf.mxu0
      %v7230 = vadd.f32 0.0, %v7229
      %v7231 = vpop.f32.mrf.mxu0
      %v7232 = vadd.f32 0.0, %v7231
      %7233 = vmatmul.bf16.gmra.mxu0 %v7094
      %v7234 = vpop.f32.mrf.mxu0
      %v7235 = vadd.f32 0.0, %v7234
      %v7236 = vpop.f32.mrf.mxu0
      %v7237 = vadd.f32 0.0, %v7236
      %7238 = vmatmul.bf16.gmra.mxu0 %v7096
      %v7239 = vpop.f32.mrf.mxu0
      %v7240 = vadd.f32 0.0, %v7239
      %v7241 = vpop.f32.mrf.mxu0
      %v7242 = vadd.f32 0.0, %v7241
      %7243 = vmatmul.bf16.gmra.mxu0 %v7098
      %v7244 = vpop.f32.mrf.mxu0
      %v7245 = vadd.f32 0.0, %v7244
      %v7246 = vpop.f32.mrf.mxu0
      %v7247 = vadd.f32 0.0, %v7246
      %7248 = vmatmul.bf16.gmra.mxu0 %v7100
      %v7249 = vpop.f32.mrf.mxu0
      %v7250 = vadd.f32 0.0, %v7249
      %v7251 = vpop.f32.mrf.mxu0
      %v7252 = vadd.f32 0.0, %v7251
      %7253 = vmatmul.bf16.gmra.mxu0 %v7102
      %v7254 = vpop.f32.mrf.mxu0
      %v7255 = vadd.f32 0.0, %v7254
      %v7256 = vpop.f32.mrf.mxu0
      %v7257 = vadd.f32 0.0, %v7256
      %7258 = vmatmul.bf16.gmra.mxu0 %v7104
      %v7259 = vpop.f32.mrf.mxu0
      %v7260 = vadd.f32 0.0, %v7259
      %v7261 = vpop.f32.mrf.mxu0
      %v7262 = vadd.f32 0.0, %v7261
      %7263 = vmatmul.bf16.gmra.mxu0 %v7106
      %v7264 = vpop.f32.mrf.mxu0
      %v7265 = vadd.f32 0.0, %v7264
      %v7266 = vpop.f32.mrf.mxu0
      %v7267 = vadd.f32 0.0, %v7266
      %7268 = vmatmul.bf16.gmra.mxu0 %v7108
      %v7269 = vpop.f32.mrf.mxu0
      %v7270 = vadd.f32 0.0, %v7269
      %v7271 = vpop.f32.mrf.mxu0
      %v7272 = vadd.f32 0.0, %v7271
      %7273 = vmatmul.bf16.gmra.mxu0 %v7110
      %v7274 = vpop.f32.mrf.mxu0
      %v7275 = vadd.f32 0.0, %v7274
      %v7276 = vpop.f32.mrf.mxu0
      %v7277 = vadd.f32 0.0, %v7276
      %7278 = vmatmul.bf16.gmra.mxu0 %v7112
      %v7279 = vpop.f32.mrf.mxu0
      %v7280 = vadd.f32 0.0, %v7279
      %v7281 = vpop.f32.mrf.mxu0
      %v7282 = vadd.f32 0.0, %v7281
      %7283 = vmatmul.bf16.gmra.mxu0 %v7114
      %v7284 = vpop.f32.mrf.mxu0
      %v7285 = vadd.f32 0.0, %v7284
      %v7286 = vpop.f32.mrf.mxu0
      %v7287 = vadd.f32 0.0, %v7286
      %7288 = vmatmul.bf16.gmra.mxu0 %v7116
      %v7289 = vpop.f32.mrf.mxu0
      %v7290 = vadd.f32 0.0, %v7289
      %v7291 = vpop.f32.mrf.mxu0
      %v7292 = vadd.f32 0.0, %v7291
      %7293 = vmatmul.bf16.gmra.mxu0 %v7118
      %v7294 = vpop.f32.mrf.mxu0
      %v7295 = vadd.f32 0.0, %v7294
      %v7296 = vpop.f32.mrf.mxu0
      %v7297 = vadd.f32 0.0, %v7296
      %7298 = vmatmul.bf16.gmra.mxu0 %v7120
      %v7299 = vpop.f32.mrf.mxu0
      %v7300 = vadd.f32 0.0, %v7299
      %v7301 = vpop.f32.mrf.mxu0
      %v7302 = vadd.f32 0.0, %v7301
      %7303 = vmatmul.bf16.gmra.mxu0 %v7122
      %v7304 = vpop.f32.mrf.mxu0
      %v7305 = vadd.f32 0.0, %v7304
      %v7306 = vpop.f32.mrf.mxu0
      %v7307 = vadd.f32 0.0, %v7306
      %7308 = vmatmul.bf16.gmra.mxu0 %v7124
      %v7309 = vpop.f32.mrf.mxu0
      %v7310 = vadd.f32 0.0, %v7309
      %v7311 = vpop.f32.mrf.mxu0
      %v7312 = vadd.f32 0.0, %v7311
      %7313 = vdwg.mxu0
      %v7314 = vld [vmem:[#allocation3] sm:$0xff]
      %v7315 = vld [vmem:[#allocation3 + $0x8] sm:$0xff]
      %v7316 = vld [vmem:[#allocation3 + $0x10] sm:$0xff]
      %v7317 = vld [vmem:[#allocation3 + $0x18] sm:$0xff]
      %v7318 = vld [vmem:[#allocation3 + $0x20] sm:$0xff]
      %v7319 = vld [vmem:[#allocation3 + $0x28] sm:$0xff]
      %v7320 = vld [vmem:[#allocation3 + $0x30] sm:$0xff]
      %v7321 = vld [vmem:[#allocation3 + $0x38] sm:$0xff]
      %v7322 = vld [vmem:[#allocation3 + $0x40] sm:$0xff]
      %v7323 = vld [vmem:[#allocation3 + $0x48] sm:$0xff]
      %v7324 = vld [vmem:[#allocation3 + $0x50] sm:$0xff]
      %v7325 = vld [vmem:[#allocation3 + $0x58] sm:$0xff]
      %v7326 = vld [vmem:[#allocation3 + $0x60] sm:$0xff]
      %v7327 = vld [vmem:[#allocation3 + $0x68] sm:$0xff]
      %v7328 = vld [vmem:[#allocation3 + $0x70] sm:$0xff]
      %v7329 = vld [vmem:[#allocation3 + $0x78] sm:$0xff]
      %v7330 = vld [vmem:[#allocation3 + $0x80] sm:$0xff]
      %v7331 = vld [vmem:[#allocation3 + $0x88] sm:$0xff]
      %v7332 = vld [vmem:[#allocation3 + $0x90] sm:$0xff]
      %v7333 = vld [vmem:[#allocation3 + $0x98] sm:$0xff]
      %v7334 = vld [vmem:[#allocation3 + $0xa0] sm:$0xff]
      %v7335 = vld [vmem:[#allocation3 + $0xa8] sm:$0xff]
      %v7336 = vld [vmem:[#allocation3 + $0xb0] sm:$0xff]
      %v7337 = vld [vmem:[#allocation3 + $0xb8] sm:$0xff]
      %v7338 = vld [vmem:[#allocation3 + $0xc0] sm:$0xff]
      %v7339 = vld [vmem:[#allocation3 + $0xc8] sm:$0xff]
      %v7340 = vld [vmem:[#allocation3 + $0xd0] sm:$0xff]
      %v7341 = vld [vmem:[#allocation3 + $0xd8] sm:$0xff]
      %v7342 = vld [vmem:[#allocation3 + $0xe0] sm:$0xff]
      %v7343 = vld [vmem:[#allocation3 + $0xe8] sm:$0xff]
      %v7344 = vld [vmem:[#allocation3 + $0xf0] sm:$0xff]
      %v7345 = vld [vmem:[#allocation3 + $0xf8] sm:$0xff]
      %v7346 = vld [vmem:[#allocation3 + $0x100] sm:$0xff]
      %v7347 = vld [vmem:[#allocation3 + $0x108] sm:$0xff]
      %v7348 = vld [vmem:[#allocation3 + $0x110] sm:$0xff]
      %v7349 = vld [vmem:[#allocation3 + $0x118] sm:$0xff]
      %v7350 = vld [vmem:[#allocation3 + $0x120] sm:$0xff]
      %v7351 = vld [vmem:[#allocation3 + $0x128] sm:$0xff]
      %v7352 = vld [vmem:[#allocation3 + $0x130] sm:$0xff]
      %v7353 = vld [vmem:[#allocation3 + $0x138] sm:$0xff]
      %v7354 = vld [vmem:[#allocation3 + $0x140] sm:$0xff]
      %v7355 = vld [vmem:[#allocation3 + $0x148] sm:$0xff]
      %v7356 = vld [vmem:[#allocation3 + $0x150] sm:$0xff]
      %v7357 = vld [vmem:[#allocation3 + $0x158] sm:$0xff]
      %v7358 = vadd.f32 %v7314, %v7205
      %v7359 = vadd.f32 %v7315, %v7207
      %v7360 = vadd.f32 %v7316, %v7210
      %v7361 = vadd.f32 %v7317, %v7212
      %v7362 = vadd.f32 %v7318, %v7215
      %v7363 = vadd.f32 %v7319, %v7217
      %v7364 = vadd.f32 %v7320, %v7220
      %v7365 = vadd.f32 %v7321, %v7222
      %v7366 = vadd.f32 %v7322, %v7225
      %v7367 = vadd.f32 %v7323, %v7227
      %v7368 = vadd.f32 %v7324, %v7230
      %v7369 = vadd.f32 %v7325, %v7232
      %v7370 = vadd.f32 %v7326, %v7235
      %v7371 = vadd.f32 %v7327, %v7237
      %v7372 = vadd.f32 %v7328, %v7240
      %v7373 = vadd.f32 %v7329, %v7242
      %v7374 = vadd.f32 %v7330, %v7245
      %v7375 = vadd.f32 %v7331, %v7247
      %v7376 = vadd.f32 %v7332, %v7250
      %v7377 = vadd.f32 %v7333, %v7252
      %v7378 = vadd.f32 %v7334, %v7255
      %v7379 = vadd.f32 %v7335, %v7257
      %v7380 = vadd.f32 %v7336, %v7260
      %v7381 = vadd.f32 %v7337, %v7262
      %v7382 = vadd.f32 %v7338, %v7265
      %v7383 = vadd.f32 %v7339, %v7267
      %v7384 = vadd.f32 %v7340, %v7270
      %v7385 = vadd.f32 %v7341, %v7272
      %v7386 = vadd.f32 %v7342, %v7275
      %v7387 = vadd.f32 %v7343, %v7277
      %v7388 = vadd.f32 %v7344, %v7280
      %v7389 = vadd.f32 %v7345, %v7282
      %v7390 = vadd.f32 %v7346, %v7285
      %v7391 = vadd.f32 %v7347, %v7287
      %v7392 = vadd.f32 %v7348, %v7290
      %v7393 = vadd.f32 %v7349, %v7292
      %v7394 = vadd.f32 %v7350, %v7295
      %v7395 = vadd.f32 %v7351, %v7297
      %v7396 = vadd.f32 %v7352, %v7300
      %v7397 = vadd.f32 %v7353, %v7302
      %v7398 = vadd.f32 %v7354, %v7305
      %v7399 = vadd.f32 %v7355, %v7307
      %v7400 = vadd.f32 %v7356, %v7310
      %v7401 = vadd.f32 %v7357, %v7312
      %7402 = vst [vmem:[#allocation3] sm:$0xff] %v7358
      %7403 = vst [vmem:[#allocation3 + $0x8] sm:$0xff] %v7359
      %7404 = vst [vmem:[#allocation3 + $0x10] sm:$0xff] %v7360
      %7405 = vst [vmem:[#allocation3 + $0x18] sm:$0xff] %v7361
      %7406 = vst [vmem:[#allocation3 + $0x20] sm:$0xff] %v7362
      %7407 = vst [vmem:[#allocation3 + $0x28] sm:$0xff] %v7363
      %7408 = vst [vmem:[#allocation3 + $0x30] sm:$0xff] %v7364
      %7409 = vst [vmem:[#allocation3 + $0x38] sm:$0xff] %v7365
      %7410 = vst [vmem:[#allocation3 + $0x40] sm:$0xff] %v7366
      %7411 = vst [vmem:[#allocation3 + $0x48] sm:$0xff] %v7367
      %7412 = vst [vmem:[#allocation3 + $0x50] sm:$0xff] %v7368
      %7413 = vst [vmem:[#allocation3 + $0x58] sm:$0xff] %v7369
      %7414 = vst [vmem:[#allocation3 + $0x60] sm:$0xff] %v7370
      %7415 = vst [vmem:[#allocation3 + $0x68] sm:$0xff] %v7371
      %7416 = vst [vmem:[#allocation3 + $0x70] sm:$0xff] %v7372
      %7417 = vst [vmem:[#allocation3 + $0x78] sm:$0xff] %v7373
      %7418 = vst [vmem:[#allocation3 + $0x80] sm:$0xff] %v7374
      %7419 = vst [vmem:[#allocation3 + $0x88] sm:$0xff] %v7375
      %7420 = vst [vmem:[#allocation3 + $0x90] sm:$0xff] %v7376
      %7421 = vst [vmem:[#allocation3 + $0x98] sm:$0xff] %v7377
      %7422 = vst [vmem:[#allocation3 + $0xa0] sm:$0xff] %v7378
      %7423 = vst [vmem:[#allocation3 + $0xa8] sm:$0xff] %v7379
      %7424 = vst [vmem:[#allocation3 + $0xb0] sm:$0xff] %v7380
      %7425 = vst [vmem:[#allocation3 + $0xb8] sm:$0xff] %v7381
      %7426 = vst [vmem:[#allocation3 + $0xc0] sm:$0xff] %v7382
      %7427 = vst [vmem:[#allocation3 + $0xc8] sm:$0xff] %v7383
      %7428 = vst [vmem:[#allocation3 + $0xd0] sm:$0xff] %v7384
      %7429 = vst [vmem:[#allocation3 + $0xd8] sm:$0xff] %v7385
      %7430 = vst [vmem:[#allocation3 + $0xe0] sm:$0xff] %v7386
      %7431 = vst [vmem:[#allocation3 + $0xe8] sm:$0xff] %v7387
      %7432 = vst [vmem:[#allocation3 + $0xf0] sm:$0xff] %v7388
      %7433 = vst [vmem:[#allocation3 + $0xf8] sm:$0xff] %v7389
      %7434 = vst [vmem:[#allocation3 + $0x100] sm:$0xff] %v7390
      %7435 = vst [vmem:[#allocation3 + $0x108] sm:$0xff] %v7391
      %7436 = vst [vmem:[#allocation3 + $0x110] sm:$0xff] %v7392
      %7437 = vst [vmem:[#allocation3 + $0x118] sm:$0xff] %v7393
      %7438 = vst [vmem:[#allocation3 + $0x120] sm:$0xff] %v7394
      %7439 = vst [vmem:[#allocation3 + $0x128] sm:$0xff] %v7395
      %7440 = vst [vmem:[#allocation3 + $0x130] sm:$0xff] %v7396
      %7441 = vst [vmem:[#allocation3 + $0x138] sm:$0xff] %v7397
      %7442 = vst [vmem:[#allocation3 + $0x140] sm:$0xff] %v7398
      %7443 = vst [vmem:[#allocation3 + $0x148] sm:$0xff] %v7399
      %7444 = vst [vmem:[#allocation3 + $0x150] sm:$0xff] %v7400
      %7445 = vst [vmem:[#allocation3 + $0x158] sm:$0xff] %v7401
      %v7446 = vld [vmem:[#allocation2 + $0x18] sm:$0xe]
      %v7447 = vld [vmem:[#allocation2 + $0x1c] sm:$0xf]
      %v7448 = vld [vmem:[#allocation2 + $0x20] sm:$0xf]
      %v7449 = vld [vmem:[#allocation2 + $0x24] sm:$0xf]
      %v7450 = vld [vmem:[#allocation2 + $0x28] sm:$0xf]
      %v7451 = vld [vmem:[#allocation2 + $0x2c] sm:$0xf]
      %v7452 = vld [vmem:[#allocation2 + $0x30] sm:$0xf]
      %v7453 = vld [vmem:[#allocation2 + $0x34] sm:$0xf]
      %v7454 = vld [vmem:[#allocation2 + $0x38] sm:$0xf]
      %v7455 = vld [vmem:[#allocation2 + $0x3c] sm:$0xf]
      %v7456 = vld [vmem:[#allocation2 + $0x40] sm:$0xf]
      %v7457 = vld [vmem:[#allocation2 + $0x44] sm:$0xf]
      %v7458 = vld [vmem:[#allocation2 + $0x48] sm:$0xf]
      %v7459 = vld [vmem:[#allocation2 + $0x4c] sm:$0xf]
      %v7460 = vld [vmem:[#allocation2 + $0x50] sm:$0xf]
      %v7461 = vld [vmem:[#allocation2 + $0x54] sm:$0xf]
      %v7462 = vld [vmem:[#allocation2 + $0x58] sm:$0xf]
      %v7463 = vld [vmem:[#allocation2 + $0x5c] sm:$0xf]
      %v7464 = vld [vmem:[#allocation2 + $0x60] sm:$0xf]
      %v7465 = vld [vmem:[#allocation2 + $0x64] sm:$0xf]
      %v7466 = vld [vmem:[#allocation2 + $0x68] sm:$0xf]
      %v7467 = vld [vmem:[#allocation2 + $0x6c] sm:$0xf]
      %v7468 = vld [vmem:[#allocation2 + $0x70] sm:$0xf]
      %v7469 = vld [vmem:[#allocation2 + $0x74] sm:$0xf]
      %v7470 = vld [vmem:[#allocation2 + $0x78] sm:$0xf]
      %v7471 = vld [vmem:[#allocation2 + $0x7c] sm:$0xf]
      %v7472 = vld [vmem:[#allocation2 + $0x80] sm:$0xf]
      %v7473 = vld [vmem:[#allocation2 + $0x84] sm:$0xf]
      %v7474 = vld [vmem:[#allocation2 + $0x88] sm:$0xf]
      %v7475 = vld [vmem:[#allocation2 + $0x8c] sm:$0xf]
      %v7476 = vld [vmem:[#allocation2 + $0x90] sm:$0xf]
      %v7477 = vld [vmem:[#allocation2 + $0x94] sm:$0xf]
      %v7478 = vld [vmem:[#allocation2 + $0x98] sm:$0xf]
      %v7479 = vld [vmem:[#allocation2 + $0x9c] sm:$0xf]
      %v7480 = vld [vmem:[#allocation2 + $0xa0] sm:$0xf]
      %v7481 = vld [vmem:[#allocation2 + $0xa4] sm:$0xf]
      %v7482 = vld [vmem:[#allocation2 + $0xa8] sm:$0xf]
      %v7483 = vld [vmem:[#allocation2 + $0xac] sm:$0xf]
      %v7484 = vld [vmem:[#allocation2 + $0xb0] sm:$0xf]
      %v7485 = vld [vmem:[#allocation2 + $0xb4] sm:$0xf]
      %v7486 = vld [vmem:[#allocation2 + $0xb8] sm:$0xf]
      %v7487 = vld [vmem:[#allocation2 + $0xbc] sm:$0xf]
      %v7488 = vld [vmem:[#allocation2 + $0xc0] sm:$0xf]
      %v7489 = vld [vmem:[#allocation2 + $0xc4] sm:$0xf]
      %v7490 = vld [vmem:[#allocation2 + $0xc8] sm:$0x3]
      %s7491 = scalar_lea.vmem %s3, 512
      %v7492 = vld [vmem:[%s7491] sm:$0xf]
      %v7493 = vld [vmem:[%s7491 + $0x4] sm:$0xf]
      %v7494 = vld [vmem:[%s7491 + $0x8] sm:$0xf]
      %v7495 = vld [vmem:[%s7491 + $0xc] sm:$0xf]
      %v7496 = vld [vmem:[%s7491 + $0x10] sm:$0xf]
      %v7497 = vld [vmem:[%s7491 + $0x14] sm:$0xf]
      %v7498 = vld [vmem:[%s7491 + $0x18] sm:$0xf]
      %v7499 = vld [vmem:[%s7491 + $0x1c] sm:$0xf]
      %v7500 = vld [vmem:[%s7491 + $0x20] sm:$0xf]
      %v7501 = vld [vmem:[%s7491 + $0x24] sm:$0xf]
      %v7502 = vld [vmem:[%s7491 + $0x28] sm:$0xf]
      %v7503 = vld [vmem:[%s7491 + $0x2c] sm:$0xf]
      %v7504 = vld [vmem:[%s7491 + $0x30] sm:$0xf]
      %v7505 = vld [vmem:[%s7491 + $0x34] sm:$0xf]
      %v7506 = vld [vmem:[%s7491 + $0x38] sm:$0xf]
      %v7507 = vld [vmem:[%s7491 + $0x3c] sm:$0xf]
      %v7553 = vunpack.c.l.b16 %v7446
      %v7554 = vunpack.c.l.b16 %v7447
      %v7555 = vunpack.c.l.b16 %v7448
      %v7556 = vunpack.c.l.b16 %v7449
      %v7557 = vunpack.c.l.b16 %v7450
      %v7558 = vunpack.c.l.b16 %v7451
      %v7559 = vunpack.c.l.b16 %v7452
      %v7560 = vunpack.c.l.b16 %v7453
      %v7561 = vunpack.c.l.b16 %v7454
      %v7562 = vunpack.c.l.b16 %v7455
      %v7563 = vunpack.c.l.b16 %v7456
      %v7564 = vunpack.c.l.b16 %v7457
      %v7565 = vunpack.c.l.b16 %v7458
      %v7566 = vunpack.c.l.b16 %v7459
      %v7567 = vunpack.c.l.b16 %v7460
      %v7568 = vunpack.c.l.b16 %v7461
      %v7569 = vunpack.c.l.b16 %v7462
      %v7570 = vunpack.c.l.b16 %v7463
      %v7571 = vunpack.c.l.b16 %v7464
      %v7572 = vunpack.c.l.b16 %v7465
      %v7573 = vunpack.c.l.b16 %v7466
      %v7574 = vunpack.c.l.b16 %v7467
      %v7575 = vunpack.c.l.b16 %v7468
      %v7576 = vunpack.c.l.b16 %v7469
      %v7577 = vunpack.c.l.b16 %v7470
      %v7578 = vunpack.c.l.b16 %v7471
      %v7579 = vunpack.c.l.b16 %v7472
      %v7580 = vunpack.c.l.b16 %v7473
      %v7581 = vunpack.c.l.b16 %v7474
      %v7582 = vunpack.c.l.b16 %v7475
      %v7583 = vunpack.c.l.b16 %v7476
      %v7584 = vunpack.c.l.b16 %v7477
      %v7585 = vunpack.c.l.b16 %v7478
      %v7586 = vunpack.c.l.b16 %v7479
      %v7587 = vunpack.c.l.b16 %v7480
      %v7588 = vunpack.c.l.b16 %v7481
      %v7589 = vunpack.c.l.b16 %v7482
      %v7590 = vunpack.c.l.b16 %v7483
      %v7591 = vunpack.c.l.b16 %v7484
      %v7592 = vunpack.c.l.b16 %v7485
      %v7593 = vunpack.c.l.b16 %v7486
      %v7594 = vunpack.c.l.b16 %v7487
      %v7595 = vunpack.c.l.b16 %v7488
      %v7596 = vunpack.c.l.b16 %v7489
      %v7597 = vunpack.c.l.b16 %v7490
      %v7598 = vpack.c.b16 %v7554, %v7553
      %v7599 = vpack.c.b16 %v7556, %v7555
      %v7600 = vpack.c.b16 %v7558, %v7557
      %v7601 = vpack.c.b16 %v7560, %v7559
      %v7602 = vpack.c.b16 %v7562, %v7561
      %v7603 = vpack.c.b16 %v7564, %v7563
      %v7604 = vpack.c.b16 %v7566, %v7565
      %v7605 = vpack.c.b16 %v7568, %v7567
      %v7606 = vpack.c.b16 %v7570, %v7569
      %v7607 = vpack.c.b16 %v7572, %v7571
      %v7608 = vpack.c.b16 %v7574, %v7573
      %v7609 = vpack.c.b16 %v7576, %v7575
      %v7610 = vpack.c.b16 %v7578, %v7577
      %v7611 = vpack.c.b16 %v7580, %v7579
      %v7612 = vpack.c.b16 %v7582, %v7581
      %v7613 = vpack.c.b16 %v7584, %v7583
      %v7614 = vpack.c.b16 %v7586, %v7585
      %v7615 = vpack.c.b16 %v7588, %v7587
      %v7616 = vpack.c.b16 %v7590, %v7589
      %v7617 = vpack.c.b16 %v7592, %v7591
      %v7618 = vpack.c.b16 %v7594, %v7593
      %v7619 = vpack.c.b16 %v7596, %v7595
      %v7620 = vpack.c.b16 %v7597, %v7597
      %vm7621 = vsmask.f32 6400
      %v7623 = vshrl.u32 %v7598, 16
      %v7625 = vrot.slane %v7623, 1
      %v7626 = vshll.u32 %v7598, 16
      %v7628 = vrot.slane %v7626, 2
      %v7629 = vor.u32 %v7625, %v7628
      %v7631 = vshrl.u32 %v7599, 16
      %v7633 = vrot.slane %v7631, 1
      %v7634 = vshll.u32 %v7599, 16
      %v7636 = vrot.slane %v7634, 2
      %v7637 = vor.u32 %v7633, %v7636
      %v7638 = vsel %vm7621, %v7629, %v7637
      %v7640 = vshrl.u32 %v7600, 16
      %v7642 = vrot.slane %v7640, 1
      %v7643 = vshll.u32 %v7600, 16
      %v7645 = vrot.slane %v7643, 2
      %v7646 = vor.u32 %v7642, %v7645
      %v7647 = vsel %vm7621, %v7637, %v7646
      %v7649 = vshrl.u32 %v7601, 16
      %v7651 = vrot.slane %v7649, 1
      %v7652 = vshll.u32 %v7601, 16
      %v7654 = vrot.slane %v7652, 2
      %v7655 = vor.u32 %v7651, %v7654
      %v7656 = vsel %vm7621, %v7646, %v7655
      %v7658 = vshrl.u32 %v7602, 16
      %v7660 = vrot.slane %v7658, 1
      %v7661 = vshll.u32 %v7602, 16
      %v7663 = vrot.slane %v7661, 2
      %v7664 = vor.u32 %v7660, %v7663
      %v7665 = vsel %vm7621, %v7655, %v7664
      %v7667 = vshrl.u32 %v7603, 16
      %v7669 = vrot.slane %v7667, 1
      %v7670 = vshll.u32 %v7603, 16
      %v7672 = vrot.slane %v7670, 2
      %v7673 = vor.u32 %v7669, %v7672
      %v7674 = vsel %vm7621, %v7664, %v7673
      %v7676 = vshrl.u32 %v7604, 16
      %v7678 = vrot.slane %v7676, 1
      %v7679 = vshll.u32 %v7604, 16
      %v7681 = vrot.slane %v7679, 2
      %v7682 = vor.u32 %v7678, %v7681
      %v7683 = vsel %vm7621, %v7673, %v7682
      %v7685 = vshrl.u32 %v7605, 16
      %v7687 = vrot.slane %v7685, 1
      %v7688 = vshll.u32 %v7605, 16
      %v7690 = vrot.slane %v7688, 2
      %v7691 = vor.u32 %v7687, %v7690
      %v7692 = vsel %vm7621, %v7682, %v7691
      %v7694 = vshrl.u32 %v7606, 16
      %v7696 = vrot.slane %v7694, 1
      %v7697 = vshll.u32 %v7606, 16
      %v7699 = vrot.slane %v7697, 2
      %v7700 = vor.u32 %v7696, %v7699
      %v7701 = vsel %vm7621, %v7691, %v7700
      %v7703 = vshrl.u32 %v7607, 16
      %v7705 = vrot.slane %v7703, 1
      %v7706 = vshll.u32 %v7607, 16
      %v7708 = vrot.slane %v7706, 2
      %v7709 = vor.u32 %v7705, %v7708
      %v7710 = vsel %vm7621, %v7700, %v7709
      %v7712 = vshrl.u32 %v7608, 16
      %v7714 = vrot.slane %v7712, 1
      %v7715 = vshll.u32 %v7608, 16
      %v7717 = vrot.slane %v7715, 2
      %v7718 = vor.u32 %v7714, %v7717
      %v7719 = vsel %vm7621, %v7709, %v7718
      %v7721 = vshrl.u32 %v7609, 16
      %v7723 = vrot.slane %v7721, 1
      %v7724 = vshll.u32 %v7609, 16
      %v7726 = vrot.slane %v7724, 2
      %v7727 = vor.u32 %v7723, %v7726
      %v7728 = vsel %vm7621, %v7718, %v7727
      %v7730 = vshrl.u32 %v7610, 16
      %v7732 = vrot.slane %v7730, 1
      %v7733 = vshll.u32 %v7610, 16
      %v7735 = vrot.slane %v7733, 2
      %v7736 = vor.u32 %v7732, %v7735
      %v7737 = vsel %vm7621, %v7727, %v7736
      %v7739 = vshrl.u32 %v7611, 16
      %v7741 = vrot.slane %v7739, 1
      %v7742 = vshll.u32 %v7611, 16
      %v7744 = vrot.slane %v7742, 2
      %v7745 = vor.u32 %v7741, %v7744
      %v7746 = vsel %vm7621, %v7736, %v7745
      %v7748 = vshrl.u32 %v7612, 16
      %v7750 = vrot.slane %v7748, 1
      %v7751 = vshll.u32 %v7612, 16
      %v7753 = vrot.slane %v7751, 2
      %v7754 = vor.u32 %v7750, %v7753
      %v7755 = vsel %vm7621, %v7745, %v7754
      %v7757 = vshrl.u32 %v7613, 16
      %v7759 = vrot.slane %v7757, 1
      %v7760 = vshll.u32 %v7613, 16
      %v7762 = vrot.slane %v7760, 2
      %v7763 = vor.u32 %v7759, %v7762
      %v7764 = vsel %vm7621, %v7754, %v7763
      %v7766 = vshrl.u32 %v7614, 16
      %v7768 = vrot.slane %v7766, 1
      %v7769 = vshll.u32 %v7614, 16
      %v7771 = vrot.slane %v7769, 2
      %v7772 = vor.u32 %v7768, %v7771
      %v7773 = vsel %vm7621, %v7763, %v7772
      %v7775 = vshrl.u32 %v7615, 16
      %v7777 = vrot.slane %v7775, 1
      %v7778 = vshll.u32 %v7615, 16
      %v7780 = vrot.slane %v7778, 2
      %v7781 = vor.u32 %v7777, %v7780
      %v7782 = vsel %vm7621, %v7772, %v7781
      %v7784 = vshrl.u32 %v7616, 16
      %v7786 = vrot.slane %v7784, 1
      %v7787 = vshll.u32 %v7616, 16
      %v7789 = vrot.slane %v7787, 2
      %v7790 = vor.u32 %v7786, %v7789
      %v7791 = vsel %vm7621, %v7781, %v7790
      %v7793 = vshrl.u32 %v7617, 16
      %v7795 = vrot.slane %v7793, 1
      %v7796 = vshll.u32 %v7617, 16
      %v7798 = vrot.slane %v7796, 2
      %v7799 = vor.u32 %v7795, %v7798
      %v7800 = vsel %vm7621, %v7790, %v7799
      %v7802 = vshrl.u32 %v7618, 16
      %v7804 = vrot.slane %v7802, 1
      %v7805 = vshll.u32 %v7618, 16
      %v7807 = vrot.slane %v7805, 2
      %v7808 = vor.u32 %v7804, %v7807
      %v7809 = vsel %vm7621, %v7799, %v7808
      %v7811 = vshrl.u32 %v7619, 16
      %v7813 = vrot.slane %v7811, 1
      %v7814 = vshll.u32 %v7619, 16
      %v7816 = vrot.slane %v7814, 2
      %v7817 = vor.u32 %v7813, %v7816
      %v7818 = vsel %vm7621, %v7808, %v7817
      %v7820 = vshrl.u32 %v7620, 16
      %v7822 = vrot.slane %v7820, 1
      %v7823 = vshll.u32 %v7620, 16
      %v7825 = vrot.slane %v7823, 2
      %v7826 = vor.u32 %v7822, %v7825
      %v7827 = vsel %vm7621, %v7817, %v7826
      %v7866 = vunpack.c.l.b16 %v7492
      %v7867 = vunpack.c.l.b16 %v7493
      %v7868 = vunpack.c.l.b16 %v7494
      %v7869 = vunpack.c.l.b16 %v7495
      %v7870 = vunpack.c.l.b16 %v7496
      %v7871 = vunpack.c.l.b16 %v7497
      %v7872 = vunpack.c.l.b16 %v7498
      %v7873 = vunpack.c.l.b16 %v7499
      %v7874 = vunpack.c.l.b16 %v7500
      %v7875 = vunpack.c.l.b16 %v7501
      %v7876 = vunpack.c.l.b16 %v7502
      %v7877 = vunpack.c.l.b16 %v7503
      %v7878 = vunpack.c.l.b16 %v7504
      %v7879 = vunpack.c.l.b16 %v7505
      %v7880 = vunpack.c.l.b16 %v7506
      %v7881 = vunpack.c.l.b16 %v7507
      %v7882 = vpack.c.b16 %v7867, %v7866
      %v7883 = vpack.c.b16 %v7869, %v7868
      %v7884 = vpack.c.b16 %v7871, %v7870
      %v7885 = vpack.c.b16 %v7873, %v7872
      %v7886 = vpack.c.b16 %v7875, %v7874
      %v7887 = vpack.c.b16 %v7877, %v7876
      %v7888 = vpack.c.b16 %v7879, %v7878
      %v7889 = vpack.c.b16 %v7881, %v7880
      %7898 = vmatpush.bf16.msra.mxu0 %v7889
      %7899 = vmatpush.bf16.msra.mxu0 %v7888
      %7900 = vmatpush.bf16.msra.mxu0 %v7887
      %7901 = vmatpush.bf16.msra.mxu0 %v7886
      %7902 = vmatpush.bf16.msra.mxu0 %v7885
      %7903 = vmatpush.bf16.msra.mxu0 %v7884
      %7904 = vmatpush.bf16.msra.mxu0 %v7883
      %7905 = vmatpush.bf16.msra.mxu0 %v7882
      %7906 = vmatmul.bf16.gmra.mxu0 %v7638
      %v7907 = vpop.f32.mrf.mxu0
      %v7908 = vadd.f32 0.0, %v7907
      %v7909 = vpop.f32.mrf.mxu0
      %v7910 = vadd.f32 0.0, %v7909
      %7911 = vmatmul.bf16.gmra.mxu0 %v7647
      %v7912 = vpop.f32.mrf.mxu0
      %v7913 = vadd.f32 0.0, %v7912
      %v7914 = vpop.f32.mrf.mxu0
      %v7915 = vadd.f32 0.0, %v7914
      %7916 = vmatmul.bf16.gmra.mxu0 %v7656
      %v7917 = vpop.f32.mrf.mxu0
      %v7918 = vadd.f32 0.0, %v7917
      %v7919 = vpop.f32.mrf.mxu0
      %v7920 = vadd.f32 0.0, %v7919
      %7921 = vmatmul.bf16.gmra.mxu0 %v7665
      %v7922 = vpop.f32.mrf.mxu0
      %v7923 = vadd.f32 0.0, %v7922
      %v7924 = vpop.f32.mrf.mxu0
      %v7925 = vadd.f32 0.0, %v7924
      %7926 = vmatmul.bf16.gmra.mxu0 %v7674
      %v7927 = vpop.f32.mrf.mxu0
      %v7928 = vadd.f32 0.0, %v7927
      %v7929 = vpop.f32.mrf.mxu0
      %v7930 = vadd.f32 0.0, %v7929
      %7931 = vmatmul.bf16.gmra.mxu0 %v7683
      %v7932 = vpop.f32.mrf.mxu0
      %v7933 = vadd.f32 0.0, %v7932
      %v7934 = vpop.f32.mrf.mxu0
      %v7935 = vadd.f32 0.0, %v7934
      %7936 = vmatmul.bf16.gmra.mxu0 %v7692
      %v7937 = vpop.f32.mrf.mxu0
      %v7938 = vadd.f32 0.0, %v7937
      %v7939 = vpop.f32.mrf.mxu0
      %v7940 = vadd.f32 0.0, %v7939
      %7941 = vmatmul.bf16.gmra.mxu0 %v7701
      %v7942 = vpop.f32.mrf.mxu0
      %v7943 = vadd.f32 0.0, %v7942
      %v7944 = vpop.f32.mrf.mxu0
      %v7945 = vadd.f32 0.0, %v7944
      %7946 = vmatmul.bf16.gmra.mxu0 %v7710
      %v7947 = vpop.f32.mrf.mxu0
      %v7948 = vadd.f32 0.0, %v7947
      %v7949 = vpop.f32.mrf.mxu0
      %v7950 = vadd.f32 0.0, %v7949
      %7951 = vmatmul.bf16.gmra.mxu0 %v7719
      %v7952 = vpop.f32.mrf.mxu0
      %v7953 = vadd.f32 0.0, %v7952
      %v7954 = vpop.f32.mrf.mxu0
      %v7955 = vadd.f32 0.0, %v7954
      %7956 = vmatmul.bf16.gmra.mxu0 %v7728
      %v7957 = vpop.f32.mrf.mxu0
      %v7958 = vadd.f32 0.0, %v7957
      %v7959 = vpop.f32.mrf.mxu0
      %v7960 = vadd.f32 0.0, %v7959
      %7961 = vmatmul.bf16.gmra.mxu0 %v7737
      %v7962 = vpop.f32.mrf.mxu0
      %v7963 = vadd.f32 0.0, %v7962
      %v7964 = vpop.f32.mrf.mxu0
      %v7965 = vadd.f32 0.0, %v7964
      %7966 = vmatmul.bf16.gmra.mxu0 %v7746
      %v7967 = vpop.f32.mrf.mxu0
      %v7968 = vadd.f32 0.0, %v7967
      %v7969 = vpop.f32.mrf.mxu0
      %v7970 = vadd.f32 0.0, %v7969
      %7971 = vmatmul.bf16.gmra.mxu0 %v7755
      %v7972 = vpop.f32.mrf.mxu0
      %v7973 = vadd.f32 0.0, %v7972
      %v7974 = vpop.f32.mrf.mxu0
      %v7975 = vadd.f32 0.0, %v7974
      %7976 = vmatmul.bf16.gmra.mxu0 %v7764
      %v7977 = vpop.f32.mrf.mxu0
      %v7978 = vadd.f32 0.0, %v7977
      %v7979 = vpop.f32.mrf.mxu0
      %v7980 = vadd.f32 0.0, %v7979
      %7981 = vmatmul.bf16.gmra.mxu0 %v7773
      %v7982 = vpop.f32.mrf.mxu0
      %v7983 = vadd.f32 0.0, %v7982
      %v7984 = vpop.f32.mrf.mxu0
      %v7985 = vadd.f32 0.0, %v7984
      %7986 = vmatmul.bf16.gmra.mxu0 %v7782
      %v7987 = vpop.f32.mrf.mxu0
      %v7988 = vadd.f32 0.0, %v7987
      %v7989 = vpop.f32.mrf.mxu0
      %v7990 = vadd.f32 0.0, %v7989
      %7991 = vmatmul.bf16.gmra.mxu0 %v7791
      %v7992 = vpop.f32.mrf.mxu0
      %v7993 = vadd.f32 0.0, %v7992
      %v7994 = vpop.f32.mrf.mxu0
      %v7995 = vadd.f32 0.0, %v7994
      %7996 = vmatmul.bf16.gmra.mxu0 %v7800
      %v7997 = vpop.f32.mrf.mxu0
      %v7998 = vadd.f32 0.0, %v7997
      %v7999 = vpop.f32.mrf.mxu0
      %v8000 = vadd.f32 0.0, %v7999
      %8001 = vmatmul.bf16.gmra.mxu0 %v7809
      %v8002 = vpop.f32.mrf.mxu0
      %v8003 = vadd.f32 0.0, %v8002
      %v8004 = vpop.f32.mrf.mxu0
      %v8005 = vadd.f32 0.0, %v8004
      %8006 = vmatmul.bf16.gmra.mxu0 %v7818
      %v8007 = vpop.f32.mrf.mxu0
      %v8008 = vadd.f32 0.0, %v8007
      %v8009 = vpop.f32.mrf.mxu0
      %v8010 = vadd.f32 0.0, %v8009
      %8011 = vmatmul.bf16.gmra.mxu0 %v7827
      %v8012 = vpop.f32.mrf.mxu0
      %v8013 = vadd.f32 0.0, %v8012
      %v8014 = vpop.f32.mrf.mxu0
      %v8015 = vadd.f32 0.0, %v8014
      %8016 = vdwg.mxu0
      %v8017 = vld [vmem:[#allocation3] sm:$0xff]
      %v8018 = vld [vmem:[#allocation3 + $0x8] sm:$0xff]
      %v8019 = vld [vmem:[#allocation3 + $0x10] sm:$0xff]
      %v8020 = vld [vmem:[#allocation3 + $0x18] sm:$0xff]
      %v8021 = vld [vmem:[#allocation3 + $0x20] sm:$0xff]
      %v8022 = vld [vmem:[#allocation3 + $0x28] sm:$0xff]
      %v8023 = vld [vmem:[#allocation3 + $0x30] sm:$0xff]
      %v8024 = vld [vmem:[#allocation3 + $0x38] sm:$0xff]
      %v8025 = vld [vmem:[#allocation3 + $0x40] sm:$0xff]
      %v8026 = vld [vmem:[#allocation3 + $0x48] sm:$0xff]
      %v8027 = vld [vmem:[#allocation3 + $0x50] sm:$0xff]
      %v8028 = vld [vmem:[#allocation3 + $0x58] sm:$0xff]
      %v8029 = vld [vmem:[#allocation3 + $0x60] sm:$0xff]
      %v8030 = vld [vmem:[#allocation3 + $0x68] sm:$0xff]
      %v8031 = vld [vmem:[#allocation3 + $0x70] sm:$0xff]
      %v8032 = vld [vmem:[#allocation3 + $0x78] sm:$0xff]
      %v8033 = vld [vmem:[#allocation3 + $0x80] sm:$0xff]
      %v8034 = vld [vmem:[#allocation3 + $0x88] sm:$0xff]
      %v8035 = vld [vmem:[#allocation3 + $0x90] sm:$0xff]
      %v8036 = vld [vmem:[#allocation3 + $0x98] sm:$0xff]
      %v8037 = vld [vmem:[#allocation3 + $0xa0] sm:$0xff]
      %v8038 = vld [vmem:[#allocation3 + $0xa8] sm:$0xff]
      %v8039 = vld [vmem:[#allocation3 + $0xb0] sm:$0xff]
      %v8040 = vld [vmem:[#allocation3 + $0xb8] sm:$0xff]
      %v8041 = vld [vmem:[#allocation3 + $0xc0] sm:$0xff]
      %v8042 = vld [vmem:[#allocation3 + $0xc8] sm:$0xff]
      %v8043 = vld [vmem:[#allocation3 + $0xd0] sm:$0xff]
      %v8044 = vld [vmem:[#allocation3 + $0xd8] sm:$0xff]
      %v8045 = vld [vmem:[#allocation3 + $0xe0] sm:$0xff]
      %v8046 = vld [vmem:[#allocation3 + $0xe8] sm:$0xff]
      %v8047 = vld [vmem:[#allocation3 + $0xf0] sm:$0xff]
      %v8048 = vld [vmem:[#allocation3 + $0xf8] sm:$0xff]
      %v8049 = vld [vmem:[#allocation3 + $0x100] sm:$0xff]
      %v8050 = vld [vmem:[#allocation3 + $0x108] sm:$0xff]
      %v8051 = vld [vmem:[#allocation3 + $0x110] sm:$0xff]
      %v8052 = vld [vmem:[#allocation3 + $0x118] sm:$0xff]
      %v8053 = vld [vmem:[#allocation3 + $0x120] sm:$0xff]
      %v8054 = vld [vmem:[#allocation3 + $0x128] sm:$0xff]
      %v8055 = vld [vmem:[#allocation3 + $0x130] sm:$0xff]
      %v8056 = vld [vmem:[#allocation3 + $0x138] sm:$0xff]
      %v8057 = vld [vmem:[#allocation3 + $0x140] sm:$0xff]
      %v8058 = vld [vmem:[#allocation3 + $0x148] sm:$0xff]
      %v8059 = vld [vmem:[#allocation3 + $0x150] sm:$0xff]
      %v8060 = vld [vmem:[#allocation3 + $0x158] sm:$0xff]
      %v8061 = vadd.f32 %v8017, %v7908
      %v8062 = vadd.f32 %v8018, %v7910
      %v8063 = vadd.f32 %v8019, %v7913
      %v8064 = vadd.f32 %v8020, %v7915
      %v8065 = vadd.f32 %v8021, %v7918
      %v8066 = vadd.f32 %v8022, %v7920
      %v8067 = vadd.f32 %v8023, %v7923
      %v8068 = vadd.f32 %v8024, %v7925
      %v8069 = vadd.f32 %v8025, %v7928
      %v8070 = vadd.f32 %v8026, %v7930
      %v8071 = vadd.f32 %v8027, %v7933
      %v8072 = vadd.f32 %v8028, %v7935
      %v8073 = vadd.f32 %v8029, %v7938
      %v8074 = vadd.f32 %v8030, %v7940
      %v8075 = vadd.f32 %v8031, %v7943
      %v8076 = vadd.f32 %v8032, %v7945
      %v8077 = vadd.f32 %v8033, %v7948
      %v8078 = vadd.f32 %v8034, %v7950
      %v8079 = vadd.f32 %v8035, %v7953
      %v8080 = vadd.f32 %v8036, %v7955
      %v8081 = vadd.f32 %v8037, %v7958
      %v8082 = vadd.f32 %v8038, %v7960
      %v8083 = vadd.f32 %v8039, %v7963
      %v8084 = vadd.f32 %v8040, %v7965
      %v8085 = vadd.f32 %v8041, %v7968
      %v8086 = vadd.f32 %v8042, %v7970
      %v8087 = vadd.f32 %v8043, %v7973
      %v8088 = vadd.f32 %v8044, %v7975
      %v8089 = vadd.f32 %v8045, %v7978
      %v8090 = vadd.f32 %v8046, %v7980
      %v8091 = vadd.f32 %v8047, %v7983
      %v8092 = vadd.f32 %v8048, %v7985
      %v8093 = vadd.f32 %v8049, %v7988
      %v8094 = vadd.f32 %v8050, %v7990
      %v8095 = vadd.f32 %v8051, %v7993
      %v8096 = vadd.f32 %v8052, %v7995
      %v8097 = vadd.f32 %v8053, %v7998
      %v8098 = vadd.f32 %v8054, %v8000
      %v8099 = vadd.f32 %v8055, %v8003
      %v8100 = vadd.f32 %v8056, %v8005
      %v8101 = vadd.f32 %v8057, %v8008
      %v8102 = vadd.f32 %v8058, %v8010
      %v8103 = vadd.f32 %v8059, %v8013
      %v8104 = vadd.f32 %v8060, %v8015
      %8105 = vst [vmem:[#allocation3] sm:$0xff] %v8061
      %8106 = vst [vmem:[#allocation3 + $0x8] sm:$0xff] %v8062
      %8107 = vst [vmem:[#allocation3 + $0x10] sm:$0xff] %v8063
      %8108 = vst [vmem:[#allocation3 + $0x18] sm:$0xff] %v8064
      %8109 = vst [vmem:[#allocation3 + $0x20] sm:$0xff] %v8065
      %8110 = vst [vmem:[#allocation3 + $0x28] sm:$0xff] %v8066
      %8111 = vst [vmem:[#allocation3 + $0x30] sm:$0xff] %v8067
      %8112 = vst [vmem:[#allocation3 + $0x38] sm:$0xff] %v8068
      %8113 = vst [vmem:[#allocation3 + $0x40] sm:$0xff] %v8069
      %8114 = vst [vmem:[#allocation3 + $0x48] sm:$0xff] %v8070
      %8115 = vst [vmem:[#allocation3 + $0x50] sm:$0xff] %v8071
      %8116 = vst [vmem:[#allocation3 + $0x58] sm:$0xff] %v8072
      %8117 = vst [vmem:[#allocation3 + $0x60] sm:$0xff] %v8073
      %8118 = vst [vmem:[#allocation3 + $0x68] sm:$0xff] %v8074
      %8119 = vst [vmem:[#allocation3 + $0x70] sm:$0xff] %v8075
      %8120 = vst [vmem:[#allocation3 + $0x78] sm:$0xff] %v8076
      %8121 = vst [vmem:[#allocation3 + $0x80] sm:$0xff] %v8077
      %8122 = vst [vmem:[#allocation3 + $0x88] sm:$0xff] %v8078
      %8123 = vst [vmem:[#allocation3 + $0x90] sm:$0xff] %v8079
      %8124 = vst [vmem:[#allocation3 + $0x98] sm:$0xff] %v8080
      %8125 = vst [vmem:[#allocation3 + $0xa0] sm:$0xff] %v8081
      %8126 = vst [vmem:[#allocation3 + $0xa8] sm:$0xff] %v8082
      %8127 = vst [vmem:[#allocation3 + $0xb0] sm:$0xff] %v8083
      %8128 = vst [vmem:[#allocation3 + $0xb8] sm:$0xff] %v8084
      %8129 = vst [vmem:[#allocation3 + $0xc0] sm:$0xff] %v8085
      %8130 = vst [vmem:[#allocation3 + $0xc8] sm:$0xff] %v8086
      %8131 = vst [vmem:[#allocation3 + $0xd0] sm:$0xff] %v8087
      %8132 = vst [vmem:[#allocation3 + $0xd8] sm:$0xff] %v8088
      %8133 = vst [vmem:[#allocation3 + $0xe0] sm:$0xff] %v8089
      %8134 = vst [vmem:[#allocation3 + $0xe8] sm:$0xff] %v8090
      %8135 = vst [vmem:[#allocation3 + $0xf0] sm:$0xff] %v8091
      %8136 = vst [vmem:[#allocation3 + $0xf8] sm:$0xff] %v8092
      %8137 = vst [vmem:[#allocation3 + $0x100] sm:$0xff] %v8093
      %8138 = vst [vmem:[#allocation3 + $0x108] sm:$0xff] %v8094
      %8139 = vst [vmem:[#allocation3 + $0x110] sm:$0xff] %v8095
      %8140 = vst [vmem:[#allocation3 + $0x118] sm:$0xff] %v8096
      %8141 = vst [vmem:[#allocation3 + $0x120] sm:$0xff] %v8097
      %8142 = vst [vmem:[#allocation3 + $0x128] sm:$0xff] %v8098
      %8143 = vst [vmem:[#allocation3 + $0x130] sm:$0xff] %v8099
      %8144 = vst [vmem:[#allocation3 + $0x138] sm:$0xff] %v8100
      %8145 = vst [vmem:[#allocation3 + $0x140] sm:$0xff] %v8101
      %8146 = vst [vmem:[#allocation3 + $0x148] sm:$0xff] %v8102
      %8147 = vst [vmem:[#allocation3 + $0x150] sm:$0xff] %v8103
      %8148 = vst [vmem:[#allocation3 + $0x158] sm:$0xff] %v8104
      %v8149 = vld [vmem:[#allocation3] sm:$0xff]
      %v8150 = vld [vmem:[#allocation3 + $0x8] sm:$0xff]
      %v8151 = vld [vmem:[#allocation3 + $0x10] sm:$0xff]
      %v8152 = vld [vmem:[#allocation3 + $0x18] sm:$0xff]
      %v8153 = vld [vmem:[#allocation3 + $0x20] sm:$0xff]
      %v8154 = vld [vmem:[#allocation3 + $0x28] sm:$0xff]
      %v8155 = vld [vmem:[#allocation3 + $0x30] sm:$0xff]
      %v8156 = vld [vmem:[#allocation3 + $0x38] sm:$0xff]
      %v8157 = vld [vmem:[#allocation3 + $0x40] sm:$0xff]
      %v8158 = vld [vmem:[#allocation3 + $0x48] sm:$0xff]
      %v8159 = vld [vmem:[#allocation3 + $0x50] sm:$0xff]
      %v8160 = vld [vmem:[#allocation3 + $0x58] sm:$0xff]
      %v8161 = vld [vmem:[#allocation3 + $0x60] sm:$0xff]
      %v8162 = vld [vmem:[#allocation3 + $0x68] sm:$0xff]
      %v8163 = vld [vmem:[#allocation3 + $0x70] sm:$0xff]
      %v8164 = vld [vmem:[#allocation3 + $0x78] sm:$0xff]
      %v8165 = vld [vmem:[#allocation3 + $0x80] sm:$0xff]
      %v8166 = vld [vmem:[#allocation3 + $0x88] sm:$0xff]
      %v8167 = vld [vmem:[#allocation3 + $0x90] sm:$0xff]
      %v8168 = vld [vmem:[#allocation3 + $0x98] sm:$0xff]
      %v8169 = vld [vmem:[#allocation3 + $0xa0] sm:$0xff]
      %v8170 = vld [vmem:[#allocation3 + $0xa8] sm:$0xff]
      %v8171 = vld [vmem:[#allocation3 + $0xb0] sm:$0xff]
      %v8172 = vld [vmem:[#allocation3 + $0xb8] sm:$0xff]
      %v8173 = vld [vmem:[#allocation3 + $0xc0] sm:$0xff]
      %v8174 = vld [vmem:[#allocation3 + $0xc8] sm:$0xff]
      %v8175 = vld [vmem:[#allocation3 + $0xd0] sm:$0xff]
      %v8176 = vld [vmem:[#allocation3 + $0xd8] sm:$0xff]
      %v8177 = vld [vmem:[#allocation3 + $0xe0] sm:$0xff]
      %v8178 = vld [vmem:[#allocation3 + $0xe8] sm:$0xff]
      %v8179 = vld [vmem:[#allocation3 + $0xf0] sm:$0xff]
      %v8180 = vld [vmem:[#allocation3 + $0xf8] sm:$0xff]
      %v8181 = vld [vmem:[#allocation3 + $0x100] sm:$0xff]
      %v8182 = vld [vmem:[#allocation3 + $0x108] sm:$0xff]
      %v8183 = vld [vmem:[#allocation3 + $0x110] sm:$0xff]
      %v8184 = vld [vmem:[#allocation3 + $0x118] sm:$0xff]
      %v8185 = vld [vmem:[#allocation3 + $0x120] sm:$0xff]
      %v8186 = vld [vmem:[#allocation3 + $0x128] sm:$0xff]
      %v8187 = vld [vmem:[#allocation3 + $0x130] sm:$0xff]
      %v8188 = vld [vmem:[#allocation3 + $0x138] sm:$0xff]
      %v8189 = vld [vmem:[#allocation3 + $0x140] sm:$0xff]
      %v8190 = vld [vmem:[#allocation3 + $0x148] sm:$0xff]
      %v8191 = vld [vmem:[#allocation3 + $0x150] sm:$0xff]
      %v8192 = vld [vmem:[#allocation3 + $0x158] sm:$0xff]
      %v8193 = vld [vmem:[%s4] sm:$0x1]
      %v8195 = vperm.slane %v8193, 0
      %v8197 = vadd.f32 %v8149, %v8195
      %v8198 = vadd.f32 %v8150, %v8195
      %v8199 = vadd.f32 %v8151, %v8195
      %v8200 = vadd.f32 %v8152, %v8195
      %v8201 = vadd.f32 %v8153, %v8195
      %v8202 = vadd.f32 %v8154, %v8195
      %v8203 = vadd.f32 %v8155, %v8195
      %v8204 = vadd.f32 %v8156, %v8195
      %v8205 = vadd.f32 %v8157, %v8195
      %v8206 = vadd.f32 %v8158, %v8195
      %v8207 = vadd.f32 %v8159, %v8195
      %v8208 = vadd.f32 %v8160, %v8195
      %v8209 = vadd.f32 %v8161, %v8195
      %v8210 = vadd.f32 %v8162, %v8195
      %v8211 = vadd.f32 %v8163, %v8195
      %v8212 = vadd.f32 %v8164, %v8195
      %v8213 = vadd.f32 %v8165, %v8195
      %v8214 = vadd.f32 %v8166, %v8195
      %v8215 = vadd.f32 %v8167, %v8195
      %v8216 = vadd.f32 %v8168, %v8195
      %v8217 = vadd.f32 %v8169, %v8195
      %v8218 = vadd.f32 %v8170, %v8195
      %v8219 = vadd.f32 %v8171, %v8195
      %v8220 = vadd.f32 %v8172, %v8195
      %v8221 = vadd.f32 %v8173, %v8195
      %v8222 = vadd.f32 %v8174, %v8195
      %v8223 = vadd.f32 %v8175, %v8195
      %v8224 = vadd.f32 %v8176, %v8195
      %v8225 = vadd.f32 %v8177, %v8195
      %v8226 = vadd.f32 %v8178, %v8195
      %v8227 = vadd.f32 %v8179, %v8195
      %v8228 = vadd.f32 %v8180, %v8195
      %v8229 = vadd.f32 %v8181, %v8195
      %v8230 = vadd.f32 %v8182, %v8195
      %v8231 = vadd.f32 %v8183, %v8195
      %v8232 = vadd.f32 %v8184, %v8195
      %v8233 = vadd.f32 %v8185, %v8195
      %v8234 = vadd.f32 %v8186, %v8195
      %v8235 = vadd.f32 %v8187, %v8195
      %v8236 = vadd.f32 %v8188, %v8195
      %v8237 = vadd.f32 %v8189, %v8195
      %v8238 = vadd.f32 %v8190, %v8195
      %v8239 = vadd.f32 %v8191, %v8195
      %v8240 = vadd.f32 %v8192, %v8195
      %v8241 = vmax.f32 %v8197, 0.0
      %v8242 = vmax.f32 %v8198, 0.0
      %v8243 = vmax.f32 %v8199, 0.0
      %v8244 = vmax.f32 %v8200, 0.0
      %v8245 = vmax.f32 %v8201, 0.0
      %v8246 = vmax.f32 %v8202, 0.0
      %v8247 = vmax.f32 %v8203, 0.0
      %v8248 = vmax.f32 %v8204, 0.0
      %v8249 = vmax.f32 %v8205, 0.0
      %v8250 = vmax.f32 %v8206, 0.0
      %v8251 = vmax.f32 %v8207, 0.0
      %v8252 = vmax.f32 %v8208, 0.0
      %v8253 = vmax.f32 %v8209, 0.0
      %v8254 = vmax.f32 %v8210, 0.0
      %v8255 = vmax.f32 %v8211, 0.0
      %v8256 = vmax.f32 %v8212, 0.0
      %v8257 = vmax.f32 %v8213, 0.0
      %v8258 = vmax.f32 %v8214, 0.0
      %v8259 = vmax.f32 %v8215, 0.0
      %v8260 = vmax.f32 %v8216, 0.0
      %v8261 = vmax.f32 %v8217, 0.0
      %v8262 = vmax.f32 %v8218, 0.0
      %v8263 = vmax.f32 %v8219, 0.0
      %v8264 = vmax.f32 %v8220, 0.0
      %v8265 = vmax.f32 %v8221, 0.0
      %v8266 = vmax.f32 %v8222, 0.0
      %v8267 = vmax.f32 %v8223, 0.0
      %v8268 = vmax.f32 %v8224, 0.0
      %v8269 = vmax.f32 %v8225, 0.0
      %v8270 = vmax.f32 %v8226, 0.0
      %v8271 = vmax.f32 %v8227, 0.0
      %v8272 = vmax.f32 %v8228, 0.0
      %v8273 = vmax.f32 %v8229, 0.0
      %v8274 = vmax.f32 %v8230, 0.0
      %v8275 = vmax.f32 %v8231, 0.0
      %v8276 = vmax.f32 %v8232, 0.0
      %v8277 = vmax.f32 %v8233, 0.0
      %v8278 = vmax.f32 %v8234, 0.0
      %v8279 = vmax.f32 %v8235, 0.0
      %v8280 = vmax.f32 %v8236, 0.0
      %v8281 = vmax.f32 %v8237, 0.0
      %v8282 = vmax.f32 %v8238, 0.0
      %v8283 = vmax.f32 %v8239, 0.0
      %v8284 = vmax.f32 %v8240, 0.0
      %v8285 = vsel %vm1911, 1, 0
      %v8286 = vsel %vm1912, 1, 0
      %v8287 = vsel %vm1913, 1, 0
      %v8288 = vsel %vm1914, 1, 0
      %v8289 = vsel %vm1915, 1, 0
      %v8290 = vsel %vm1916, 1, 0
      %v8291 = vsel %vm1917, 1, 0
      %v8292 = vsel %vm1918, 1, 0
      %v8293 = vsel %vm1919, 1, 0
      %v8294 = vsel %vm1920, 1, 0
      %v8295 = vsel %vm1921, 1, 0
      %v8296 = vsel %vm1922, 1, 0
      %v8297 = vsel %vm1923, 1, 0
      %v8298 = vsel %vm1924, 1, 0
      %v8299 = vsel %vm1925, 1, 0
      %v8300 = vsel %vm1926, 1, 0
      %v8301 = vsel %vm1927, 1, 0
      %v8302 = vsel %vm1928, 1, 0
      %v8303 = vsel %vm1929, 1, 0
      %v8304 = vsel %vm1930, 1, 0
      %v8305 = vsel %vm1931, 1, 0
      %v8306 = vsel %vm1932, 1, 0
      %v8307 = vsel %vm1933, 1, 0
      %v8308 = vsel %vm1934, 1, 0
      %v8309 = vsel %vm1935, 1, 0
      %v8310 = vsel %vm1936, 1, 0
      %v8311 = vsel %vm1937, 1, 0
      %v8312 = vsel %vm1938, 1, 0
      %v8313 = vsel %vm1939, 1, 0
      %v8314 = vsel %vm1940, 1, 0
      %v8315 = vsel %vm1941, 1, 0
      %v8316 = vsel %vm1942, 1, 0
      %v8317 = vsel %vm1943, 1, 0
      %v8318 = vsel %vm1944, 1, 0
      %v8319 = vsel %vm1945, 1, 0
      %v8320 = vsel %vm1946, 1, 0
      %v8321 = vsel %vm1947, 1, 0
      %v8322 = vsel %vm1948, 1, 0
      %v8323 = vsel %vm1949, 1, 0
      %v8324 = vsel %vm1950, 1, 0
      %v8325 = vsel %vm1951, 1, 0
      %v8326 = vsel %vm1952, 1, 0
      %v8327 = vsel %vm1953, 1, 0
      %v8328 = vsel %vm1954, 1, 0
      %vm8329 = vcmp.eq.s32.totalorder %v8285, 1
      %vm8330 = vcmp.eq.s32.totalorder %v8286, 1
      %vm8331 = vcmp.eq.s32.totalorder %v8287, 1
      %vm8332 = vcmp.eq.s32.totalorder %v8288, 1
      %vm8333 = vcmp.eq.s32.totalorder %v8289, 1
      %vm8334 = vcmp.eq.s32.totalorder %v8290, 1
      %vm8335 = vcmp.eq.s32.totalorder %v8291, 1
      %vm8336 = vcmp.eq.s32.totalorder %v8292, 1
      %vm8337 = vcmp.eq.s32.totalorder %v8293, 1
      %vm8338 = vcmp.eq.s32.totalorder %v8294, 1
      %vm8339 = vcmp.eq.s32.totalorder %v8295, 1
      %vm8340 = vcmp.eq.s32.totalorder %v8296, 1
      %vm8341 = vcmp.eq.s32.totalorder %v8297, 1
      %vm8342 = vcmp.eq.s32.totalorder %v8298, 1
      %vm8343 = vcmp.eq.s32.totalorder %v8299, 1
      %vm8344 = vcmp.eq.s32.totalorder %v8300, 1
      %vm8345 = vcmp.eq.s32.totalorder %v8301, 1
      %vm8346 = vcmp.eq.s32.totalorder %v8302, 1
      %vm8347 = vcmp.eq.s32.totalorder %v8303, 1
      %vm8348 = vcmp.eq.s32.totalorder %v8304, 1
      %vm8349 = vcmp.eq.s32.totalorder %v8305, 1
      %vm8350 = vcmp.eq.s32.totalorder %v8306, 1
      %vm8351 = vcmp.eq.s32.totalorder %v8307, 1
      %vm8352 = vcmp.eq.s32.totalorder %v8308, 1
      %vm8353 = vcmp.eq.s32.totalorder %v8309, 1
      %vm8354 = vcmp.eq.s32.totalorder %v8310, 1
      %vm8355 = vcmp.eq.s32.totalorder %v8311, 1
      %vm8356 = vcmp.eq.s32.totalorder %v8312, 1
      %vm8357 = vcmp.eq.s32.totalorder %v8313, 1
      %vm8358 = vcmp.eq.s32.totalorder %v8314, 1
      %vm8359 = vcmp.eq.s32.totalorder %v8315, 1
      %vm8360 = vcmp.eq.s32.totalorder %v8316, 1
      %vm8361 = vcmp.eq.s32.totalorder %v8317, 1
      %vm8362 = vcmp.eq.s32.totalorder %v8318, 1
      %vm8363 = vcmp.eq.s32.totalorder %v8319, 1
      %vm8364 = vcmp.eq.s32.totalorder %v8320, 1
      %vm8365 = vcmp.eq.s32.totalorder %v8321, 1
      %vm8366 = vcmp.eq.s32.totalorder %v8322, 1
      %vm8367 = vcmp.eq.s32.totalorder %v8323, 1
      %vm8368 = vcmp.eq.s32.totalorder %v8324, 1
      %vm8369 = vcmp.eq.s32.totalorder %v8325, 1
      %vm8370 = vcmp.eq.s32.totalorder %v8326, 1
      %vm8371 = vcmp.eq.s32.totalorder %v8327, 1
      %vm8372 = vcmp.eq.s32.totalorder %v8328, 1
      %v8373 = vsel %vm8329, %v8241, 0.0
      %v8374 = vsel %vm8330, %v8242, 0.0
      %v8375 = vsel %vm8331, %v8243, 0.0
      %v8376 = vsel %vm8332, %v8244, 0.0
      %v8377 = vsel %vm8333, %v8245, 0.0
      %v8378 = vsel %vm8334, %v8246, 0.0
      %v8379 = vsel %vm8335, %v8247, 0.0
      %v8380 = vsel %vm8336, %v8248, 0.0
      %v8381 = vsel %vm8337, %v8249, 0.0
      %v8382 = vsel %vm8338, %v8250, 0.0
      %v8383 = vsel %vm8339, %v8251, 0.0
      %v8384 = vsel %vm8340, %v8252, 0.0
      %v8385 = vsel %vm8341, %v8253, 0.0
      %v8386 = vsel %vm8342, %v8254, 0.0
      %v8387 = vsel %vm8343, %v8255, 0.0
      %v8388 = vsel %vm8344, %v8256, 0.0
      %v8389 = vsel %vm8345, %v8257, 0.0
      %v8390 = vsel %vm8346, %v8258, 0.0
      %v8391 = vsel %vm8347, %v8259, 0.0
      %v8392 = vsel %vm8348, %v8260, 0.0
      %v8393 = vsel %vm8349, %v8261, 0.0
      %v8394 = vsel %vm8350, %v8262, 0.0
      %v8395 = vsel %vm8351, %v8263, 0.0
      %v8396 = vsel %vm8352, %v8264, 0.0
      %v8397 = vsel %vm8353, %v8265, 0.0
      %v8398 = vsel %vm8354, %v8266, 0.0
      %v8399 = vsel %vm8355, %v8267, 0.0
      %v8400 = vsel %vm8356, %v8268, 0.0
      %v8401 = vsel %vm8357, %v8269, 0.0
      %v8402 = vsel %vm8358, %v8270, 0.0
      %v8403 = vsel %vm8359, %v8271, 0.0
      %v8404 = vsel %vm8360, %v8272, 0.0
      %v8405 = vsel %vm8361, %v8273, 0.0
      %v8406 = vsel %vm8362, %v8274, 0.0
      %v8407 = vsel %vm8363, %v8275, 0.0
      %v8408 = vsel %vm8364, %v8276, 0.0
      %v8409 = vsel %vm8365, %v8277, 0.0
      %v8410 = vsel %vm8366, %v8278, 0.0
      %v8411 = vsel %vm8367, %v8279, 0.0
      %v8412 = vsel %vm8368, %v8280, 0.0
      %v8413 = vsel %vm8369, %v8281, 0.0
      %v8414 = vsel %vm8370, %v8282, 0.0
      %v8415 = vsel %vm8371, %v8283, 0.0
      %v8416 = vsel %vm8372, %v8284, 0.0
      %v8417 = vadd.f32 %v8373, %v8374
      %v8418 = vadd.f32 %v8417, %v8375
      %v8419 = vadd.f32 %v8418, %v8376
      %v8420 = vadd.f32 %v8419, %v8377
      %v8421 = vadd.f32 %v8420, %v8378
      %v8422 = vadd.f32 %v8421, %v8379
      %v8423 = vadd.f32 %v8422, %v8380
      %v8424 = vadd.f32 %v8423, %v8381
      %v8425 = vadd.f32 %v8424, %v8382
      %v8426 = vadd.f32 %v8425, %v8383
      %v8427 = vadd.f32 %v8426, %v8384
      %v8428 = vadd.f32 %v8427, %v8385
      %v8429 = vadd.f32 %v8428, %v8386
      %v8430 = vadd.f32 %v8429, %v8387
      %v8431 = vadd.f32 %v8430, %v8388
      %v8432 = vadd.f32 %v8431, %v8389
      %v8433 = vadd.f32 %v8432, %v8390
      %v8434 = vadd.f32 %v8433, %v8391
      %v8435 = vadd.f32 %v8434, %v8392
      %v8436 = vadd.f32 %v8435, %v8393
      %v8437 = vadd.f32 %v8436, %v8394
      %v8438 = vadd.f32 %v8437, %v8395
      %v8439 = vadd.f32 %v8438, %v8396
      %v8440 = vadd.f32 %v8439, %v8397
      %v8441 = vadd.f32 %v8440, %v8398
      %v8442 = vadd.f32 %v8441, %v8399
      %v8443 = vadd.f32 %v8442, %v8400
      %v8444 = vadd.f32 %v8443, %v8401
      %v8445 = vadd.f32 %v8444, %v8402
      %v8446 = vadd.f32 %v8445, %v8403
      %v8447 = vadd.f32 %v8446, %v8404
      %v8448 = vadd.f32 %v8447, %v8405
      %v8449 = vadd.f32 %v8448, %v8406
      %v8450 = vadd.f32 %v8449, %v8407
      %v8451 = vadd.f32 %v8450, %v8408
      %v8452 = vadd.f32 %v8451, %v8409
      %v8453 = vadd.f32 %v8452, %v8410
      %v8454 = vadd.f32 %v8453, %v8411
      %v8455 = vadd.f32 %v8454, %v8412
      %v8456 = vadd.f32 %v8455, %v8413
      %v8457 = vadd.f32 %v8456, %v8414
      %v8458 = vadd.f32 %v8457, %v8415
      %v8459 = vadd.f32 %v8458, %v8416
      %v8460 = vrot.slane %v8459, 4
      %v8461 = vadd.f32 %v8459, %v8460
      %v8462 = vrot.slane %v8461, 2
      %v8463 = vadd.f32 %v8461, %v8462
      %v8464 = vrot.slane %v8463, 1
      %v8465 = vadd.f32 %v8463, %v8464
      %v8466 = vmul.f32 %v8465, 0.00390625
      %v8467 = vld [vmem:[%s5] sm:$0x1]
      %v8468 = vmul.f32 %v8466, %v8467
      %vm8469 = vcmask 1040384
      %v8470 = vsel %vm8469, %v8468, 0.0
      %8471 = vadd.xlane.f32.xlu0 %v8470
      %v8472 = vpop.xlane.xlu0 %8471
      %v8473 = vld [vmem:[#allocation4] sm:$0x1]
      %v8474 = vadd.f32 %v8472, %v8473
      %8475 = vst [vmem:[%s280] sm:$0xff] 0.0
      %8477 = vset.pattern.permute.xlu0 0
      %8478 = vperm.xlu0 %8477, %v8474
      %v8479 = vpop.permute.xlu0 %8478
      %8481 = vst [vmem:[%s280] sm:$0x1] %v8479
      %p8482 = scmp.lt.s32.totalorder %s20, 1
      %s8483 = scalar_select %p8482, %s20, 1
      %s8484 = smul.addr %s8483, 8
      %s8485 = scalar_lea.vmem %s7, %s8484
      // Predicated region
      $region49: #{net_forward.1} parent=47 // pred_check
        %p8486 = pneg %p190
      $region50: #{net_forward.1} parent=47 // pred_check_branch
        %8488 = sbr.rel (%p8486) target = $region52
      $region51: #{net_forward.1} parent=47 // pred_region
        _
      $region52: #{net_forward.1} parent=47 // pred_fallthru
        _
    $region48: #{net_forward.1} parent=5 // pred_fallthru
      _
    %p8489 = scmp.le.s32.totalorder 2, %s15
    // Predicated region
    $region53: #{net_forward.1} parent=5 // pred_check
      %p8490 = pneg %p8489
    $region54: #{net_forward.1} parent=5 // pred_check_branch
      %8492 = sbr.rel (%p8490) target = $region56
    $region55: #{net_forward.1} parent=5 // pred_region
      %s8493 = ssub.s32 %s15, 2
      // Predicated region
      $region57: #{net_forward.1} parent=55 // pred_check
        %p8494 = pneg %p196
      $region58: #{net_forward.1} parent=55 // pred_check_branch
        %8496 = sbr.rel (%p8494) target = $region60
      $region59: #{net_forward.1} parent=55 // pred_region
        %p8497 = scmp.lt.s32.totalorder %s21, 1
        %s8498 = scalar_select %p8497, %s21, 1
        %s8499 = smul.addr %s8498, 8
        %s8500 = scalar_lea.vmem %s7, %s8499
      $region60: #{net_forward.1} parent=55 // pred_fallthru
        _
    $region56: #{net_forward.1} parent=5 // pred_fallthru
      _
  $region6: #{net_forward.1} parent=0 // loop_footer
    %s19 = sadd.s32 1, %s15
  $region7: #{net_forward.1} parent=0 // loop_footer_branch
    %14 = sbr.rel target = $region3
  $region8: #{net_forward.1} parent=0 // loop_exit
    _

</llo_original>
